<compile_context>
chip_gen: v6e
topology: v6e:2x2x1
jax: 0.10.0
libtpu: 0.0.40
codegen_flags: <defaults>
</compile_context>

<pallas_src>
import functools
import math

import jax
import jax.numpy as jnp
from jax.experimental import pallas as pl
from jax.experimental.pallas import tpu as pltpu

BN_EPS = 1e-5
LANE = 128


def _rup(x, m):
    return ((x + m - 1) // m) * m


def _pad2(a, rows, cols):
    return jnp.pad(a, ((0, rows - a.shape[0]), (0, cols - a.shape[1])))


def _nbytes(x):
    return math.prod(x.shape) * jnp.dtype(x.dtype).itemsize


def _vmem_limit(block_bytes):
    # Derived from the per-step working set (double-buffered streams + headroom
    # for compiler temporaries), capped to stay inside v7x's 64 MiB VMEM.
    return int(min(max(4 * block_bytes + (8 << 20), 16 << 20), 48 << 20))


def _choose_spp(n, hw, target_rows=2048):
    """Samples per tile: whole samples per tile, ~target_rows rows, grid >= 2."""
    spp = max(1, min(n, max(1, target_rows // max(hw, 1))))
    while n % spp:
        spp -= 1
    if spp > 1 and n // spp < 2:          # keep >=2 grid steps for v7x megacore
        spp -= 1
        while spp > 1 and n % spp:
            spp -= 1
        spp = max(spp, 1)
    return spp


def _choose_hb(h, w, target_rows=256):
    """Output rows per 3x3-conv grid step (Hb | H, Hb*W ~ target_rows)."""
    hb = max(1, min(h, max(1, target_rows // max(w, 1))))
    while h % hb:
        hb -= 1
    return hb


# ---------------------------------------------------------------------------
# Kernels
# ---------------------------------------------------------------------------

def _pointwise_kernel(*refs, in_bn, side):
    """1x1 conv (matmul + bias) over one (TILE_M, C) tile.

    Optionally fuses BN+relu of the input tile (in_bn) and a second 1x1 side
    conv (side).  Emits per-tile BN partial sums (sum, sum^2) of the f32
    accumulator; rows never need masking because tiles cover whole samples.
    """
    it = iter(refs)
    x_ref = next(it)
    bn_ref = next(it) if in_bn else None
    w_ref = next(it)
    b_ref = next(it)
    if side:
        xs_ref = next(it)
        ws_ref = next(it)
        bs_ref = next(it)
    y_ref = next(it)
    skip_ref = next(it) if side else None
    st_ref = next(it)

    x = x_ref[...]
    if in_bn:
        mean = bn_ref[0:1, :]
        var = bn_ref[1:2, :]
        gam = bn_ref[2:3, :]
        bet = bn_ref[3:4, :]
        act = (x.astype(jnp.float32) - mean) * jax.lax.rsqrt(var + BN_EPS) * gam + bet
        x = jnp.maximum(act, 0.0).astype(jnp.bfloat16)

    y = jnp.dot(x, w_ref[...], preferred_element_type=jnp.float32) + b_ref[...]

    st_ref[0, :, :] = jnp.concatenate(
        [jnp.sum(y, axis=0, keepdims=True),
         jnp.sum(y * y, axis=0, keepdims=True)], axis=0)
    y_ref[...] = y.astype(y_ref.dtype)

    if side:
        s = jnp.dot(xs_ref[...], ws_ref[...],
                    preferred_element_type=jnp.float32) + bs_ref[...]
        skip_ref[...] = s.astype(skip_ref.dtype)


def _conv3x3_kernel(x_ref, bn_ref, w_ref, b_ref, y_ref, st_ref, *, H, W, Hb):
    """Hb output rows of the 3x3 conv per grid step (grid = (N, H//Hb)).

    One spatially padded sample is resident per batch element (re-fetched only
    when n changes); BN1+relu is applied on the fly; the conv zero-padding is
    re-imposed by masking the padded rows/cols of the activation; the three kw
    taps are fused into a single K=3*Cin matmul per kh.
    """
    mean = bn_ref[0:1, :]
    var = bn_ref[1:2, :]
    gam = bn_ref[2:3, :]
    bet = bn_ref[3:4, :]
    inv = jax.lax.rsqrt(var + BN_EPS)

    cin = x_ref.shape[-1]
    cout = w_ref.shape[-1]

    if Hb == H:
        h0 = 0
        slab = x_ref[0].astype(jnp.float32)                     # (H+2, W+2, Cin)
    else:
        h0 = pl.program_id(1) * Hb
        slab = x_ref[0, pl.ds(h0, Hb + 2), :, :].astype(jnp.float32)

    act = jnp.maximum((slab - mean) * inv * gam + bet, 0.0)

    # Re-impose the conv's spatial zero padding on the *activated* values.
    prow = h0 + jax.lax.broadcasted_iota(jnp.int32, (Hb + 2, 1), 0)
    row_ok = jnp.logical_and(prow >= 1, prow <= H)              # (Hb+2, 1)
    pcol = jax.lax.broadcasted_iota(jnp.int32, (W + 2, 1), 0)
    col_ok = jnp.logical_and(pcol >= 1, pcol <= W)              # (W+2, 1)
    mask = jnp.logical_and(row_ok[:, None, :], col_ok[None, :, :])  # (Hb+2,W+2,1)
    act = (act * mask.astype(jnp.float32)).astype(jnp.bfloat16)

    acc = jnp.zeros((Hb * W, cout), jnp.float32)
    for kh in range(3):
        rows = act[kh:kh + Hb]                                  # (Hb, W+2, Cin)
        taps = jnp.concatenate([rows[:, kw:kw + W, :] for kw in range(3)],
                               axis=-1)                         # (Hb, W, 3*Cin)
        acc = acc + jnp.dot(taps.reshape(Hb * W, 3 * cin), w_ref[kh],
                            preferred_element_type=jnp.float32)
    acc = acc + b_ref[...]

    st_ref[0, 0, :, :] = jnp.concatenate(
        [jnp.sum(acc, axis=0, keepdims=True),
         jnp.sum(acc * acc, axis=0, keepdims=True)], axis=0)
    y_ref[0, 0, :, :] = acc.astype(y_ref.dtype)


def _tail_kernel(y_ref, skip_ref, bn_ref, w1_ref, b1_ref, w2_ref, b2_ref, o_ref,
                 *, spp, hw):
    """Fused tail: BN3+relu, SE pooling, SE gate (two tiny matmuls + sigmoid),
    channel gating, residual add, final relu - all within one whole-sample tile
    so y3 is read from HBM exactly once."""
    mean = bn_ref[0:1, :]
    var = bn_ref[1:2, :]
    gam = bn_ref[2:3, :]
    bet = bn_ref[3:4, :]
    a = jnp.maximum((y_ref[...].astype(jnp.float32) - mean)
                    * jax.lax.rsqrt(var + BN_EPS) * gam + bet, 0.0)

    c = a.shape[-1]
    a3 = a.reshape(spp, hw, c)
    pool = jnp.sum(a3, axis=1) * (1.0 / hw)                     # (spp, C)

    h = jnp.dot(pool.astype(jnp.bfloat16), w1_ref[...],
                preferred_element_type=jnp.float32) + b1_ref[...]
    h = jnp.maximum(h, 0.0)
    z = jnp.dot(h.astype(jnp.bfloat16), w2_ref[...],
                preferred_element_type=jnp.float32) + b2_ref[...]
    gate = 1.0 / (1.0 + jnp.exp(-z))                            # (spp, C)

    skip3 = skip_ref[...].astype(jnp.float32).reshape(spp, hw, c)
    out = jnp.maximum(a3 * gate.reshape(spp, 1, c) + skip3, 0.0)
    o_ref[...] = out.reshape(spp * hw, c).astype(o_ref.dtype)


# ---------------------------------------------------------------------------
# pallas_call wrappers
# ---------------------------------------------------------------------------

def _pointwise_conv(x, w, b, bn_in=None, side=None, *, tile_m, y_dtype):
    m, k = x.shape
    c = w.shape[1]
    grid_m = m // tile_m
    y_isz = jnp.dtype(y_dtype).itemsize

    inputs = [x]
    in_specs = [pl.BlockSpec((tile_m, k), lambda i: (i, 0))]
    if bn_in is not None:
        inputs.append(bn_in)
        in_specs.append(pl.BlockSpec((4, k), lambda i: (0, 0)))
    inputs += [w, b]
    in_specs += [pl.BlockSpec((k, c), lambda i: (0, 0)),
                 pl.BlockSpec((1, c), lambda i: (0, 0))]
    flops = 2 * m * k * c
    blk = tile_m * (k * 2 + c * y_isz) + (k * c) * 2 + c * 4 + 4 * k * 4
    if side is not None:
        xs, ws, bs = side
        ks = xs.shape[1]
        inputs += [xs, ws, bs]
        in_specs += [pl.BlockSpec((tile_m, ks), lambda i: (i, 0)),
                     pl.BlockSpec((ks, c), lambda i: (0, 0)),
                     pl.BlockSpec((1, c), lambda i: (0, 0))]
        flops += 2 * m * ks * c
        blk += tile_m * (ks * 2 + c * y_isz) + (ks * c) * 2 + c * 4

    out_shape = [jax.ShapeDtypeStruct((m, c), y_dtype)]
    out_specs = [pl.BlockSpec((tile_m, c), lambda i: (i, 0))]
    if side is not None:
        out_shape.append(jax.ShapeDtypeStruct((m, c), y_dtype))
        out_specs.append(pl.BlockSpec((tile_m, c), lambda i: (i, 0)))
    out_shape.append(jax.ShapeDtypeStruct((grid_m, 2, c), jnp.float32))
    out_specs.append(pl.BlockSpec((1, 2, c), lambda i: (i, 0, 0)))

    kernel = functools.partial(_pointwise_kernel, in_bn=bn_in is not None,
                               side=side is not None)
    bytes_accessed = sum(_nbytes(a) for a in inputs) + sum(_nbytes(o) for o in out_shape)

    outs = pl.pallas_call(
        kernel,
        grid=(grid_m,),
        in_specs=in_specs,
        out_specs=tuple(out_specs),
        out_shape=tuple(out_shape),
        compiler_params=pltpu.CompilerParams(
            dimension_semantics=("parallel",),
            vmem_limit_bytes=_vmem_limit(blk)),
        cost_estimate=pl.CostEstimate(flops=flops, transcendentals=0,
                                      bytes_accessed=bytes_accessed),
    )(*inputs)

    y = outs[0]
    skip = outs[1] if side is not None else None
    stats = outs[-1].sum(axis=0)
    return y, skip, stats


def _conv3x3_conv(y1_sp, bn1, w9, b, *, n_batch, H, W, Hb, y_dtype):
    cin = y1_sp.shape[-1]
    cout = w9.shape[-1]
    nhb = H // Hb
    y_isz = jnp.dtype(y_dtype).itemsize

    in_specs = [pl.BlockSpec((1, H + 2, W + 2, cin), lambda n, hb: (n, 0, 0, 0)),
                pl.BlockSpec((4, cin), lambda n, hb: (0, 0)),
                pl.BlockSpec((3, 3 * cin, cout), lambda n, hb: (0, 0, 0)),
                pl.BlockSpec((1, cout), lambda n, hb: (0, 0))]
    out_specs = (pl.BlockSpec((1, 1, Hb * W, cout), lambda n, hb: (n, hb, 0, 0)),
                 pl.BlockSpec((1, 1, 2, cout), lambda n, hb: (n, hb, 0, 0)))
    out_shape = (jax.ShapeDtypeStruct((n_batch, nhb, Hb * W, cout), y_dtype),
                 jax.ShapeDtypeStruct((n_batch, nhb, 2, cout), jnp.float32))

    kernel = functools.partial(_conv3x3_kernel, H=H, W=W, Hb=Hb)
    flops = 2 * n_batch * H * W * 9 * cin * cout
    bytes_accessed = (_nbytes(y1_sp) + _nbytes(bn1) + _nbytes(w9) + _nbytes(b)
                      + sum(_nbytes(o) for o in out_shape))
    blk = ((H + 2) * (W + 2) * cin * 2 + 9 * cin * cout * 2
           + Hb * W * cout * (y_isz + 4) + 4 * cin * 4 + cout * 4)

    y2, st = pl.pallas_call(
        kernel,
        grid=(n_batch, nhb),
        in_specs=in_specs,
        out_specs=out_specs,
        out_shape=out_shape,
        compiler_params=pltpu.CompilerParams(
            dimension_semantics=("parallel", "arbitrary"),
            vmem_limit_bytes=_vmem_limit(blk)),
        cost_estimate=pl.CostEstimate(flops=flops, transcendentals=0,
                                      bytes_accessed=bytes_accessed),
    )(y1_sp, bn1, w9, b)
    return y2, st.sum(axis=(0, 1))


def _tail_stage(y3, skip, bn3, sw1, sb1, sw2, sb2, *, tile_m, spp, hw):
    m, c = y3.shape
    mid = sw1.shape[1]
    grid_m = m // tile_m
    kernel = functools.partial(_tail_kernel, spp=spp, hw=hw)

    in_specs = [pl.BlockSpec((tile_m, c), lambda i: (i, 0)),
                pl.BlockSpec((tile_m, c), lambda i: (i, 0)),
                pl.BlockSpec((4, c), lambda i: (0, 0)),
                pl.BlockSpec((c, mid), lambda i: (0, 0)),
                pl.BlockSpec((1, mid), lambda i: (0, 0)),
                pl.BlockSpec((mid, c), lambda i: (0, 0)),
                pl.BlockSpec((1, c), lambda i: (0, 0))]
    out_shape = jax.ShapeDtypeStruct((m, c), jnp.float32)
    bytes_accessed = (_nbytes(y3) + _nbytes(skip) + _nbytes(bn3) + _nbytes(sw1)
                      + _nbytes(sb1) + _nbytes(sw2) + _nbytes(sb2) + _nbytes(out_shape))
    blk = tile_m * c * (2 + 2 + 4) + 2 * c * mid * 2 + 8 * c * 4

    return pl.pallas_call(
        kernel,
        grid=(grid_m,),
        in_specs=in_specs,
        out_specs=pl.BlockSpec((tile_m, c), lambda i: (i, 0)),
        out_shape=out_shape,
        compiler_params=pltpu.CompilerParams(
            dimension_semantics=("parallel",),
            vmem_limit_bytes=_vmem_limit(blk)),
        cost_estimate=pl.CostEstimate(flops=6 * m * c + 4 * grid_m * spp * c * mid,
                                      transcendentals=grid_m * spp * c,
                                      bytes_accessed=bytes_accessed),
    )(y3, skip, bn3, sw1, sb1, sw2, sb2)


def _bn_pack(stats, count, gamma, beta, c_pad):
    """Finalize BatchNorm batch statistics and pack (mean, var, gamma, beta)."""
    mean = stats[0] / count
    var = jnp.maximum(stats[1] / count - mean * mean, 0.0)    # biased, like PyTorch
    g = jnp.pad(gamma, (0, c_pad - gamma.shape[0]), constant_values=1.0)
    b = jnp.pad(beta, (0, c_pad - beta.shape[0]))
    return jnp.stack([mean, var, g, b], axis=0).astype(jnp.float32)


# ---------------------------------------------------------------------------
# Forward pass
# ---------------------------------------------------------------------------

def se_block_forward(x_nchw, params, input_channels, output_channels):
    N, Cin, H, W = x_nchw.shape
    assert Cin == input_channels
    low = output_channels // 4
    mid = output_channels // 16
    assert low >= 1 and mid >= 1, "output_channels must be >= 16 (as in the PyTorch module)"

    M = N * H * W
    HW = H * W
    # Whole-sample tiles keep the SE pooling/gating loop- and mask-free.
    # TODO(synk): add a sub-sample tiling path for very large H*W or HW % 8 != 0.
    assert HW % 8 == 0 and W % 8 == 0, "spatial size must be sublane (8) aligned"

    cin_p = _rup(Cin, LANE)
    low_p = _rup(low, LANE)
    cout_p = _rup(output_channels, LANE)
    mid_p = _rup(mid, LANE)

    spp = _choose_spp(N, HW)          # samples per tile (divides N, grid >= 2)
    tile_m = spp * HW                 # divides M exactly -> no row padding anywhere
    Hb = _choose_hb(H, W)             # output rows per 3x3-conv grid step

    # glue: NCHW -> channels-last (M, C), pad channels to 128 lanes, bf16 feed.
    x_flat = jnp.transpose(x_nchw, (0, 2, 3, 1)).reshape(M, Cin)
    x_p = jnp.pad(x_flat, ((0, 0), (0, cin_p - Cin))).astype(jnp.bfloat16)

    # --- conv1: 1x1 matmul (+ per-tile BN partial sums) ---------------------
    w1 = _pad2(params["conv1_w"][:, :, 0, 0].T, cin_p, low_p).astype(jnp.bfloat16)
    b1 = _pad2(params["conv1_b"].reshape(1, -1), 1, low_p).astype(jnp.float32)
    y1_raw, _, st1 = _pointwise_conv(x_p, w1, b1, tile_m=tile_m, y_dtype=jnp.bfloat16)
    bn1 = _bn_pack(st1, M, params["bn1_g"], params["bn1_b"], low_p)

    # --- conv2: 3x3 conv with fused BN1+relu, K-fused taps, no HBM im2col ----
    y1_sp = jnp.pad(y1_raw.reshape(N, H, W, low_p), ((0, 0), (1, 1), (1, 1), (0, 0)))
    w2 = jnp.transpose(params["conv2_w"], (2, 3, 1, 0))          # (kh, kw, cin, cout)
    w2 = jnp.pad(w2, ((0, 0), (0, 0), (0, low_p - low), (0, low_p - low)))
    w2 = w2.reshape(3, 3 * low_p, low_p).astype(jnp.bfloat16)
    b2 = _pad2(params["conv2_b"].reshape(1, -1), 1, low_p).astype(jnp.float32)
    y2_raw, st2 = _conv3x3_conv(y1_sp, bn1, w2, b2, n_batch=N, H=H, W=W, Hb=Hb,
                                y_dtype=jnp.bfloat16)
    bn2 = _bn_pack(st2, M, params["bn2_g"], params["bn2_b"], low_p)

    # --- conv3 (+ fused side 1x1 conv) with fused BN2+relu, bf16 outputs -----
    y2_flat = y2_raw.reshape(M, low_p)                            # free reshape
    w3 = _pad2(params["conv3_w"][:, :, 0, 0].T, low_p, cout_p).astype(jnp.bfloat16)
    b3 = _pad2(params["conv3_b"].reshape(1, -1), 1, cout_p).astype(jnp.float32)
    if input_channels != output_channels:
        ws = _pad2(params["side_w"][:, :, 0, 0].T, cin_p, cout_p).astype(jnp.bfloat16)
        bs = _pad2(params["side_b"].reshape(1, -1), 1, cout_p).astype(jnp.float32)
        y3_raw, skip, st3 = _pointwise_conv(y2_flat, w3, b3, bn2, (x_p, ws, bs),
                                            tile_m=tile_m, y_dtype=jnp.bfloat16)
    else:
        y3_raw, _, st3 = _pointwise_conv(y2_flat, w3, b3, bn2,
                                         tile_m=tile_m, y_dtype=jnp.bfloat16)
        skip = x_p                                # cin_p == cout_p, padded lanes are 0
    bn3 = _bn_pack(st3, M, params["bn3_g"], params["bn3_b"], cout_p)

    # --- fused tail: BN3+relu, SE pool+gate, channel gating, residual, relu --
    sw1 = _pad2(params["se_w1"][:, :, 0, 0].T, cout_p, mid_p).astype(jnp.bfloat16)
    sb1 = _pad2(params["se_b1"].reshape(1, -1), 1, mid_p).astype(jnp.float32)
    sw2 = _pad2(params["se_w2"][:, :, 0, 0].T, mid_p, cout_p).astype(jnp.bfloat16)
    sb2 = _pad2(params["se_b2"].reshape(1, -1), 1, cout_p).astype(jnp.float32)
    out_flat = _tail_stage(y3_raw, skip, bn3, sw1, sb1, sw2, sb2,
                           tile_m=tile_m, spp=spp, hw=HW)

    out = out_flat[:, :output_channels].reshape(N, H, W, output_channels)
    return jnp.transpose(out, (0, 3, 1, 2))


# ---------------------------------------------------------------------------
# Pure-JAX reference (mirrors the PyTorch SEBlock forward, f32 end-to-end)
# ---------------------------------------------------------------------------

def se_block_reference(x_nchw, params, input_channels, output_channels):
    N, Cin, H, W = x_nchw.shape
    x = jnp.transpose(x_nchw, (0, 2, 3, 1))

    def bn(y, g, b):
        m = jnp.mean(y, axis=(0, 1, 2))
        v = jnp.mean(jnp.square(y - m), axis=(0, 1, 2))
        return (y - m) * jax.lax.rsqrt(v + BN_EPS) * g + b

    def conv1x1(y, w, b):
        return jnp.einsum("nhwc,oc->nhwo", y, w[:, :, 0, 0]) + b

    y1 = jax.nn.relu(bn(conv1x1(x, params["conv1_w"], params["conv1_b"]),
                        params["bn1_g"], params["bn1_b"]))
    y1p = jnp.pad(y1, ((0, 0), (1, 1), (1, 1), (0, 0)))
    w2 = params["conv2_w"]
    y2 = sum(jnp.einsum("nhwc,oc->nhwo", y1p[:, kh:kh + H, kw:kw + W, :], w2[:, :, kh, kw])
             for kh in range(3) for kw in range(3)) + params["conv2_b"]
    y2 = jax.nn.relu(bn(y2, params["bn2_g"], params["bn2_b"]))
    y3 = jax.nn.relu(bn(conv1x1(y2, params["conv3_w"], params["conv3_b"]),
                        params["bn3_g"], params["bn3_b"]))
    pool = jnp.mean(y3, axis=(1, 2), keepdims=True)
    h = jax.nn.relu(conv1x1(pool, params["se_w1"], params["se_b1"]))
    gate = jax.nn.sigmoid(conv1x1(h, params["se_w2"], params["se_b2"]))
    y3 = y3 * gate
    if input_channels != output_channels:
        skip = conv1x1(x, params["side_w"], params["side_b"])
    else:
        skip = x
    return jnp.transpose(jax.nn.relu(y3 + skip), (0, 3, 1, 2))


def init_params(key, input_channels, output_channels):
    low = output_channels // 4
    mid = output_channels // 16
    keys = jax.random.split(key, 12)

    def conv_w(k, cout, cin, ksz):
        return 0.1 * jax.random.normal(k, (cout, cin, ksz, ksz), jnp.float32)

    def conv_b(k, cout):
        return 0.05 * jax.random.normal(k, (cout,), jnp.float32)

    return {
        "conv1_w": conv_w(keys[0], low, input_channels, 1),
        "conv1_b": conv_b(keys[1], low),
        "bn1_g": jnp.ones((low,), jnp.float32),
        "bn1_b": jnp.zeros((low,), jnp.float32),
        "conv2_w": conv_w(keys[2], low, low, 3),
        "conv2_b": conv_b(keys[3], low),
        "bn2_g": jnp.ones((low,), jnp.float32),
        "bn2_b": jnp.zeros((low,), jnp.float32),
        "conv3_w": conv_w(keys[4], output_channels, low, 1),
        "conv3_b": conv_b(keys[5], output_channels),
        "bn3_g": jnp.ones((output_channels,), jnp.float32),
        "bn3_b": jnp.zeros((output_channels,), jnp.float32),
        "side_w": conv_w(keys[6], output_channels, input_channels, 1),
        "side_b": conv_b(keys[7], output_channels),
        "se_w1": conv_w(keys[8], mid, output_channels, 1),
        "se_b1": conv_b(keys[9], mid),
        "se_w2": conv_w(keys[10], output_channels, mid, 1),
        "se_b2": conv_b(keys[11], output_channels),
    }


if __name__ == "__main__":
    input_channels = 4
    output_channels = 32            # low = 8, SE mid = 2 (output_channels // 16)
    N, H, W = 2, 16, 16

    key = jax.random.PRNGKey(0)
    k_x, k_p = jax.random.split(key)
    x = jax.random.normal(k_x, (N, input_channels, H, W), jnp.float32)
    params = init_params(k_p, input_channels, output_channels)

    fwd = jax.jit(se_block_forward, static_argnums=(2, 3))
    out = jax.block_until_ready(fwd(x, params, input_channels, output_channels))

    assert out.shape == (N, output_channels, H, W)
    assert bool(jnp.all(out >= 0.0))                       # final relu

    ref = se_block_reference(x, params, input_channels, output_channels)
    assert bool(jnp.allclose(out, ref, rtol=1e-1, atol=1e-1)), \
        float(jnp.max(jnp.abs(out - ref)))

    print("KERNEL_OK")
</pallas_src>

<mosaic_0001>
module attributes {stable_mosaic.version = 11 : i64} {
  func.func @_pointwise_kernel(%arg0: i32, %arg1: memref<256x128xbf16, #tpu.memory_space<vmem>>, %arg2: memref<128x128xbf16, #tpu.memory_space<vmem>>, %arg3: memref<1x128xf32, #tpu.memory_space<vmem>>, %arg4: memref<256x128xbf16, #tpu.memory_space<vmem>>, %arg5: memref<1x2x128xf32, #tpu.memory_space<vmem>>) attributes {dimension_semantics = [#tpu.dimension_semantics<parallel>], iteration_bounds = array<i64: 2>, scalar_prefetch = 0 : i64, scratch_operands = 0 : i64, tpu.core_type = #tpu.core_type<tc>, window_params = [{transform_indices = @transform_0, window_bounds = array<i64: 256, 128>}, {pipeline_mode = #tpu.pipeline_mode<synchronous>, transform_indices = @transform_1, window_bounds = array<i64: 128, 128>}, {pipeline_mode = #tpu.pipeline_mode<synchronous>, transform_indices = @transform_2, window_bounds = array<i64: 1, 128>}, {transform_indices = @transform_3, window_bounds = array<i64: 256, 128>}, {transform_indices = @transform_4, window_bounds = array<i64: 1, 2, 128>}]} {
    %c0 = arith.constant 0 : index
    %c0_0 = arith.constant 0 : index
    %0 = vector.load %arg1[%c0, %c0_0] : memref<256x128xbf16, #tpu.memory_space<vmem>>, vector<256x128xbf16>
    %c0_1 = arith.constant 0 : index
    %c0_2 = arith.constant 0 : index
    %1 = vector.load %arg2[%c0_1, %c0_2] : memref<128x128xbf16, #tpu.memory_space<vmem>>, vector<128x128xbf16>
    %cst = arith.constant dense<0.000000e+00> : vector<256x128xf32>
    %2 = tpu.matmul %0, %1, %cst {dimension_numbers = #tpu.dot_dimension_numbers<[1], [0], [0], [1], [0, 0, 1, 1], [], []>} : vector<256x128xbf16>, vector<128x128xbf16>, vector<256x128xf32> -> vector<256x128xf32>
    %c0_3 = arith.constant 0 : index
    %c0_4 = arith.constant 0 : index
    %3 = vector.load %arg3[%c0_3, %c0_4] : memref<1x128xf32, #tpu.memory_space<vmem>>, vector<1x128xf32>
    %4 = vector.broadcast %3 : vector<1x128xf32> to vector<256x128xf32>
    %5 = arith.addf %2, %4 : vector<256x128xf32>
    %cst_5 = arith.constant dense<0.000000e+00> : vector<128xf32>
    %6 = vector.multi_reduction <add>, %5, %cst_5 [0] : vector<256x128xf32> to vector<128xf32>
    %7 = vector.shape_cast %6 : vector<128xf32> to vector<1x128xf32>
    %8 = arith.mulf %5, %5 : vector<256x128xf32>
    %cst_6 = arith.constant dense<0.000000e+00> : vector<128xf32>
    %9 = vector.multi_reduction <add>, %8, %cst_6 [0] : vector<256x128xf32> to vector<128xf32>
    %10 = vector.shape_cast %9 : vector<128xf32> to vector<1x128xf32>
    %11 = tpu.concatenate %7, %10 in 0 : vector<1x128xf32>, vector<1x128xf32> -> vector<2x128xf32>
    %c0_7 = arith.constant 0 : index
    %c0_8 = arith.constant 0 : index
    %c0_9 = arith.constant 0 : index
    %12 = vector.load %arg5[%c0_7, %c0_8, %c0_9] : memref<1x2x128xf32, #tpu.memory_space<vmem>>, vector<1x2x128xf32>
    %13 = vector.shape_cast %12 : vector<1x2x128xf32> to vector<2x128xf32>
    %14 = vector.shape_cast %11 : vector<2x128xf32> to vector<1x2x128xf32>
    tpu.vector_store %arg5[%c0_7, %c0_8, %c0_9], %14 {strides = array<i32>} : memref<1x2x128xf32, #tpu.memory_space<vmem>>, vector<1x2x128xf32>,
    %15 = arith.truncf %5 : vector<256x128xf32> to vector<256x128xbf16>
    %c0_10 = arith.constant 0 : index
    %c0_11 = arith.constant 0 : index
    %16 = vector.load %arg4[%c0_10, %c0_11] : memref<256x128xbf16, #tpu.memory_space<vmem>>, vector<256x128xbf16>
    tpu.vector_store %arg4[%c0_10, %c0_11], %15 {strides = array<i32>} : memref<256x128xbf16, #tpu.memory_space<vmem>>, vector<256x128xbf16>,
    return
  }
  func.func @transform_0(%arg0: i32) -> (i32, i32) {
    %c0_i32 = arith.constant 0 : i32
    %c0_i32_0 = arith.constant 0 : i32
    return %arg0, %c0_i32 : i32, i32
  }
  func.func @transform_1(%arg0: i32) -> (i32, i32) {
    %c0_i32 = arith.constant 0 : i32
    %c0_i32_0 = arith.constant 0 : i32
    %c0_i32_1 = arith.constant 0 : i32
    return %c0_i32, %c0_i32_0 : i32, i32
  }
  func.func @transform_2(%arg0: i32) -> (i32, i32) {
    %c0_i32 = arith.constant 0 : i32
    %c0_i32_0 = arith.constant 0 : i32
    %c0_i32_1 = arith.constant 0 : i32
    return %c0_i32, %c0_i32_0 : i32, i32
  }
  func.func @transform_3(%arg0: i32) -> (i32, i32) {
    %c0_i32 = arith.constant 0 : i32
    %c0_i32_0 = arith.constant 0 : i32
    return %arg0, %c0_i32 : i32, i32
  }
  func.func @transform_4(%arg0: i32) -> (i32, i32, i32) {
    %c0_i32 = arith.constant 0 : i32
    %c0_i32_0 = arith.constant 0 : i32
    %c0_i32_1 = arith.constant 0 : i32
    return %arg0, %c0_i32, %c0_i32_0 : i32, i32, i32
  }
}

module attributes {stable_mosaic.version = 11 : i64} {
  func.func @_conv3x3_kernel(%arg0: i32, %arg1: i32, %arg2: memref<1x18x18x128xbf16, #tpu.memory_space<vmem>>, %arg3: memref<4x128xf32, #tpu.memory_space<vmem>>, %arg4: memref<3x384x128xbf16, #tpu.memory_space<vmem>>, %arg5: memref<1x128xf32, #tpu.memory_space<vmem>>, %arg6: memref<1x1x256x128xbf16, #tpu.memory_space<vmem>>, %arg7: memref<1x1x2x128xf32, #tpu.memory_space<vmem>>) attributes {dimension_semantics = [#tpu.dimension_semantics<parallel>, #tpu.dimension_semantics<arbitrary>], iteration_bounds = array<i64: 2, 1>, scalar_prefetch = 0 : i64, scratch_operands = 0 : i64, tpu.core_type = #tpu.core_type<tc>, window_params = [{transform_indices = @transform_0, window_bounds = array<i64: 1, 18, 18, 128>}, {pipeline_mode = #tpu.pipeline_mode<synchronous>, transform_indices = @transform_1, window_bounds = array<i64: 4, 128>}, {pipeline_mode = #tpu.pipeline_mode<synchronous>, transform_indices = @transform_2, window_bounds = array<i64: 3, 384, 128>}, {pipeline_mode = #tpu.pipeline_mode<synchronous>, transform_indices = @transform_3, window_bounds = array<i64: 1, 128>}, {transform_indices = @transform_4, window_bounds = array<i64: 1, 1, 256, 128>}, {transform_indices = @transform_5, window_bounds = array<i64: 1, 1, 2, 128>}]} {
    %c0 = arith.constant 0 : index
    %c0_0 = arith.constant 0 : index
    %0 = vector.load %arg3[%c0, %c0_0] : memref<4x128xf32, #tpu.memory_space<vmem>>, vector<1x128xf32>
    %c1 = arith.constant 1 : index
    %c0_1 = arith.constant 0 : index
    %1 = vector.load %arg3[%c1, %c0_1] : memref<4x128xf32, #tpu.memory_space<vmem>>, vector<1x128xf32>
    %c2 = arith.constant 2 : index
    %c0_2 = arith.constant 0 : index
    %2 = vector.load %arg3[%c2, %c0_2] : memref<4x128xf32, #tpu.memory_space<vmem>>, vector<1x128xf32>
    %c3 = arith.constant 3 : index
    %c0_3 = arith.constant 0 : index
    %3 = vector.load %arg3[%c3, %c0_3] : memref<4x128xf32, #tpu.memory_space<vmem>>, vector<1x128xf32>
    %cst = arith.constant 9.99999974E-6 : f32
    %4 = vector.broadcast %cst : f32 to vector<1x128xf32>
    %5 = arith.addf %1, %4 : vector<1x128xf32>
    %6 = math.rsqrt %5 : vector<1x128xf32>
    %c0_4 = arith.constant 0 : index
    %c0_5 = arith.constant 0 : index
    %c0_6 = arith.constant 0 : index
    %c0_7 = arith.constant 0 : index
    %7 = vector.load %arg2[%c0_4, %c0_5, %c0_6, %c0_7] : memref<1x18x18x128xbf16, #tpu.memory_space<vmem>>, vector<1x18x18x128xbf16>
    %8 = vector.shape_cast %7 : vector<1x18x18x128xbf16> to vector<18x18x128xbf16>
    %9 = arith.extf %8 : vector<18x18x128xbf16> to vector<18x18x128xf32>
    %10 = vector.shape_cast %0 : vector<1x128xf32> to vector<1x1x128xf32>
    %11 = vector.broadcast %10 : vector<1x1x128xf32> to vector<18x18x128xf32>
    %12 = arith.subf %9, %11 : vector<18x18x128xf32>
    %13 = vector.shape_cast %6 : vector<1x128xf32> to vector<1x1x128xf32>
    %14 = vector.broadcast %13 : vector<1x1x128xf32> to vector<18x18x128xf32>
    %15 = arith.mulf %12, %14 : vector<18x18x128xf32>
    %16 = vector.shape_cast %2 : vector<1x128xf32> to vector<1x1x128xf32>
    %17 = vector.broadcast %16 : vector<1x1x128xf32> to vector<18x18x128xf32>
    %18 = arith.mulf %15, %17 : vector<18x18x128xf32>
    %19 = vector.shape_cast %3 : vector<1x128xf32> to vector<1x1x128xf32>
    %20 = vector.broadcast %19 : vector<1x1x128xf32> to vector<18x18x128xf32>
    %21 = arith.addf %18, %20 : vector<18x18x128xf32>
    %cst_8 = arith.constant 0.000000e+00 : f32
    %22 = vector.broadcast %cst_8 : f32 to vector<18x18x128xf32>
    %23 = arith.maximumf %21, %22 : vector<18x18x128xf32>
    %24 = tpu.iota {dimensions = array<i32: 0>} : vector<18x1xi32>
    %c0_i32 = arith.constant 0 : i32
    %25 = vector.broadcast %c0_i32 : i32 to vector<18x1xi32>
    %26 = arith.addi %25, %24 : vector<18x1xi32>
    %c1_i32 = arith.constant 1 : i32
    %27 = vector.broadcast %c1_i32 : i32 to vector<18x1xi32>
    %28 = arith.cmpi sge, %26, %27 : vector<18x1xi32>
    %c16_i32 = arith.constant 16 : i32
    %29 = vector.broadcast %c16_i32 : i32 to vector<18x1xi32>
    %30 = arith.cmpi sle, %26, %29 : vector<18x1xi32>
    %31 = arith.andi %28, %30 : vector<18x1xi1>
    %32 = tpu.iota {dimensions = array<i32: 0>} : vector<18x1xi32>
    %c1_i32_9 = arith.constant 1 : i32
    %33 = vector.broadcast %c1_i32_9 : i32 to vector<18x1xi32>
    %34 = arith.cmpi sge, %32, %33 : vector<18x1xi32>
    %c16_i32_10 = arith.constant 16 : i32
    %35 = vector.broadcast %c16_i32_10 : i32 to vector<18x1xi32>
    %36 = arith.cmpi sle, %32, %35 : vector<18x1xi32>
    %37 = arith.andi %34, %36 : vector<18x1xi1>
    %38 = vector.shape_cast %31 : vector<18x1xi1> to vector<18x1x1xi1>
    %39 = vector.shape_cast %37 : vector<18x1xi1> to vector<1x18x1xi1>
    %40 = vector.broadcast %38 : vector<18x1x1xi1> to vector<18x18x1xi1>
    %41 = vector.broadcast %39 : vector<1x18x1xi1> to vector<18x18x1xi1>
    %42 = arith.andi %40, %41 : vector<18x18x1xi1>
    %43 = arith.extui %42 : vector<18x18x1xi1> to vector<18x18x1xi32>
    %44 = arith.sitofp %43 : vector<18x18x1xi32> to vector<18x18x1xf32>
    %45 = vector.broadcast %44 : vector<18x18x1xf32> to vector<18x18x128xf32>
    %46 = arith.mulf %23, %45 : vector<18x18x128xf32>
    %47 = arith.truncf %46 : vector<18x18x128xf32> to vector<18x18x128xbf16>
    %cst_11 = arith.constant 0.000000e+00 : f32
    %48 = vector.broadcast %cst_11 : f32 to vector<256x128xf32>
    %49 = vector.extract_strided_slice %47 {offsets = [0, 0, 0], sizes = [16, 18, 128], strides = [1, 1, 1]} : vector<18x18x128xbf16> to vector<16x18x128xbf16>
    %50 = vector.extract_strided_slice %49 {offsets = [0, 0, 0], sizes = [16, 16, 128], strides = [1, 1, 1]} : vector<16x18x128xbf16> to vector<16x16x128xbf16>
    %51 = vector.extract_strided_slice %49 {offsets = [0, 1, 0], sizes = [16, 16, 128], strides = [1, 1, 1]} : vector<16x18x128xbf16> to vector<16x16x128xbf16>
    %52 = vector.extract_strided_slice %49 {offsets = [0, 2, 0], sizes = [16, 16, 128], strides = [1, 1, 1]} : vector<16x18x128xbf16> to vector<16x16x128xbf16>
    %53 = tpu.concatenate %50, %51, %52 in 2 : vector<16x16x128xbf16>, vector<16x16x128xbf16>, vector<16x16x128xbf16> -> vector<16x16x384xbf16>
    %54 = vector.shape_cast %53 : vector<16x16x384xbf16> to vector<256x384xbf16>
    %c0_12 = arith.constant 0 : index
    %c0_13 = arith.constant 0 : index
    %c0_14 = arith.constant 0 : index
    %55 = vector.load %arg4[%c0_12, %c0_13, %c0_14] : memref<3x384x128xbf16, #tpu.memory_space<vmem>>, vector<1x384x128xbf16>
    %56 = vector.shape_cast %55 : vector<1x384x128xbf16> to vector<384x128xbf16>
    %cst_15 = arith.constant dense<0.000000e+00> : vector<256x128xf32>
    %57 = tpu.matmul %54, %56, %cst_15 {dimension_numbers = #tpu.dot_dimension_numbers<[1], [0], [0], [1], [0, 0, 1, 1], [], []>} : vector<256x384xbf16>, vector<384x128xbf16>, vector<256x128xf32> -> vector<256x128xf32>
    %58 = arith.addf %48, %57 : vector<256x128xf32>
    %59 = vector.extract_strided_slice %47 {offsets = [1, 0, 0], sizes = [16, 18, 128], strides = [1, 1, 1]} : vector<18x18x128xbf16> to vector<16x18x128xbf16>
    %60 = vector.extract_strided_slice %59 {offsets = [0, 0, 0], sizes = [16, 16, 128], strides = [1, 1, 1]} : vector<16x18x128xbf16> to vector<16x16x128xbf16>
    %61 = vector.extract_strided_slice %59 {offsets = [0, 1, 0], sizes = [16, 16, 128], strides = [1, 1, 1]} : vector<16x18x128xbf16> to vector<16x16x128xbf16>
    %62 = vector.extract_strided_slice %59 {offsets = [0, 2, 0], sizes = [16, 16, 128], strides = [1, 1, 1]} : vector<16x18x128xbf16> to vector<16x16x128xbf16>
    %63 = tpu.concatenate %60, %61, %62 in 2 : vector<16x16x128xbf16>, vector<16x16x128xbf16>, vector<16x16x128xbf16> -> vector<16x16x384xbf16>
    %64 = vector.shape_cast %63 : vector<16x16x384xbf16> to vector<256x384xbf16>
    %c1_16 = arith.constant 1 : index
    %c0_17 = arith.constant 0 : index
    %c0_18 = arith.constant 0 : index
    %65 = vector.load %arg4[%c1_16, %c0_17, %c0_18] : memref<3x384x128xbf16, #tpu.memory_space<vmem>>, vector<1x384x128xbf16>
    %66 = vector.shape_cast %65 : vector<1x384x128xbf16> to vector<384x128xbf16>
    %cst_19 = arith.constant dense<0.000000e+00> : vector<256x128xf32>
    %67 = tpu.matmul %64, %66, %cst_19 {dimension_numbers = #tpu.dot_dimension_numbers<[1], [0], [0], [1], [0, 0, 1, 1], [], []>} : vector<256x384xbf16>, vector<384x128xbf16>, vector<256x128xf32> -> vector<256x128xf32>
    %68 = arith.addf %58, %67 : vector<256x128xf32>
    %69 = vector.extract_strided_slice %47 {offsets = [2, 0, 0], sizes = [16, 18, 128], strides = [1, 1, 1]} : vector<18x18x128xbf16> to vector<16x18x128xbf16>
    %70 = vector.extract_strided_slice %69 {offsets = [0, 0, 0], sizes = [16, 16, 128], strides = [1, 1, 1]} : vector<16x18x128xbf16> to vector<16x16x128xbf16>
    %71 = vector.extract_strided_slice %69 {offsets = [0, 1, 0], sizes = [16, 16, 128], strides = [1, 1, 1]} : vector<16x18x128xbf16> to vector<16x16x128xbf16>
    %72 = vector.extract_strided_slice %69 {offsets = [0, 2, 0], sizes = [16, 16, 128], strides = [1, 1, 1]} : vector<16x18x128xbf16> to vector<16x16x128xbf16>
    %73 = tpu.concatenate %70, %71, %72 in 2 : vector<16x16x128xbf16>, vector<16x16x128xbf16>, vector<16x16x128xbf16> -> vector<16x16x384xbf16>
    %74 = vector.shape_cast %73 : vector<16x16x384xbf16> to vector<256x384xbf16>
    %c2_20 = arith.constant 2 : index
    %c0_21 = arith.constant 0 : index
    %c0_22 = arith.constant 0 : index
    %75 = vector.load %arg4[%c2_20, %c0_21, %c0_22] : memref<3x384x128xbf16, #tpu.memory_space<vmem>>, vector<1x384x128xbf16>
    %76 = vector.shape_cast %75 : vector<1x384x128xbf16> to vector<384x128xbf16>
    %cst_23 = arith.constant dense<0.000000e+00> : vector<256x128xf32>
    %77 = tpu.matmul %74, %76, %cst_23 {dimension_numbers = #tpu.dot_dimension_numbers<[1], [0], [0], [1], [0, 0, 1, 1], [], []>} : vector<256x384xbf16>, vector<384x128xbf16>, vector<256x128xf32> -> vector<256x128xf32>
    %78 = arith.addf %68, %77 : vector<256x128xf32>
    %c0_24 = arith.constant 0 : index
    %c0_25 = arith.constant 0 : index
    %79 = vector.load %arg5[%c0_24, %c0_25] : memref<1x128xf32, #tpu.memory_space<vmem>>, vector<1x128xf32>
    %80 = vector.broadcast %79 : vector<1x128xf32> to vector<256x128xf32>
    %81 = arith.addf %78, %80 : vector<256x128xf32>
    %cst_26 = arith.constant dense<0.000000e+00> : vector<128xf32>
    %82 = vector.multi_reduction <add>, %81, %cst_26 [0] : vector<256x128xf32> to vector<128xf32>
    %83 = vector.shape_cast %82 : vector<128xf32> to vector<1x128xf32>
    %84 = arith.mulf %81, %81 : vector<256x128xf32>
    %cst_27 = arith.constant dense<0.000000e+00> : vector<128xf32>
    %85 = vector.multi_reduction <add>, %84, %cst_27 [0] : vector<256x128xf32> to vector<128xf32>
    %86 = vector.shape_cast %85 : vector<128xf32> to vector<1x128xf32>
    %87 = tpu.concatenate %83, %86 in 0 : vector<1x128xf32>, vector<1x128xf32> -> vector<2x128xf32>
    %c0_28 = arith.constant 0 : index
    %c0_29 = arith.constant 0 : index
    %c0_30 = arith.constant 0 : index
    %c0_31 = arith.constant 0 : index
    %88 = vector.load %arg7[%c0_28, %c0_29, %c0_30, %c0_31] : memref<1x1x2x128xf32, #tpu.memory_space<vmem>>, vector<1x1x2x128xf32>
    %89 = vector.shape_cast %88 : vector<1x1x2x128xf32> to vector<2x128xf32>
    %90 = vector.shape_cast %87 : vector<2x128xf32> to vector<1x1x2x128xf32>
    tpu.vector_store %arg7[%c0_28, %c0_29, %c0_30, %c0_31], %90 {strides = array<i32>} : memref<1x1x2x128xf32, #tpu.memory_space<vmem>>, vector<1x1x2x128xf32>,
    %91 = arith.truncf %81 : vector<256x128xf32> to vector<256x128xbf16>
    %c0_32 = arith.constant 0 : index
    %c0_33 = arith.constant 0 : index
    %c0_34 = arith.constant 0 : index
    %c0_35 = arith.constant 0 : index
    %92 = vector.load %arg6[%c0_32, %c0_33, %c0_34, %c0_35] : memref<1x1x256x128xbf16, #tpu.memory_space<vmem>>, vector<1x1x256x128xbf16>
    %93 = vector.shape_cast %92 : vector<1x1x256x128xbf16> to vector<256x128xbf16>
    %94 = vector.shape_cast %91 : vector<256x128xbf16> to vector<1x1x256x128xbf16>
    tpu.vector_store %arg6[%c0_32, %c0_33, %c0_34, %c0_35], %94 {strides = array<i32>} : memref<1x1x256x128xbf16, #tpu.memory_space<vmem>>, vector<1x1x256x128xbf16>,
    return
  }
  func.func @transform_0(%arg0: i32, %arg1: i32) -> (i32, i32, i32, i32) {
    %c0_i32 = arith.constant 0 : i32
    %c0_i32_0 = arith.constant 0 : i32
    %c0_i32_1 = arith.constant 0 : i32
    %c0_i32_2 = arith.constant 0 : i32
    return %arg0, %c0_i32, %c0_i32_0, %c0_i32_1 : i32, i32, i32, i32
  }
  func.func @transform_1(%arg0: i32, %arg1: i32) -> (i32, i32) {
    %c0_i32 = arith.constant 0 : i32
    %c0_i32_0 = arith.constant 0 : i32
    %c0_i32_1 = arith.constant 0 : i32
    return %c0_i32, %c0_i32_0 : i32, i32
  }
  func.func @transform_2(%arg0: i32, %arg1: i32) -> (i32, i32, i32) {
    %c0_i32 = arith.constant 0 : i32
    %c0_i32_0 = arith.constant 0 : i32
    %c0_i32_1 = arith.constant 0 : i32
    %c0_i32_2 = arith.constant 0 : i32
    return %c0_i32, %c0_i32_0, %c0_i32_1 : i32, i32, i32
  }
  func.func @transform_3(%arg0: i32, %arg1: i32) -> (i32, i32) {
    %c0_i32 = arith.constant 0 : i32
    %c0_i32_0 = arith.constant 0 : i32
    %c0_i32_1 = arith.constant 0 : i32
    return %c0_i32, %c0_i32_0 : i32, i32
  }
  func.func @transform_4(%arg0: i32, %arg1: i32) -> (i32, i32, i32, i32) {
    %c0_i32 = arith.constant 0 : i32
    %c0_i32_0 = arith.constant 0 : i32
    %c0_i32_1 = arith.constant 0 : i32
    return %arg0, %arg1, %c0_i32, %c0_i32_0 : i32, i32, i32, i32
  }
  func.func @transform_5(%arg0: i32, %arg1: i32) -> (i32, i32, i32, i32) {
    %c0_i32 = arith.constant 0 : i32
    %c0_i32_0 = arith.constant 0 : i32
    %c0_i32_1 = arith.constant 0 : i32
    return %arg0, %arg1, %c0_i32, %c0_i32_0 : i32, i32, i32, i32
  }
}

module attributes {stable_mosaic.version = 11 : i64} {
  func.func @_pointwise_kernel(%arg0: i32, %arg1: memref<256x128xbf16, #tpu.memory_space<vmem>>, %arg2: memref<4x128xf32, #tpu.memory_space<vmem>>, %arg3: memref<128x128xbf16, #tpu.memory_space<vmem>>, %arg4: memref<1x128xf32, #tpu.memory_space<vmem>>, %arg5: memref<256x128xbf16, #tpu.memory_space<vmem>>, %arg6: memref<128x128xbf16, #tpu.memory_space<vmem>>, %arg7: memref<1x128xf32, #tpu.memory_space<vmem>>, %arg8: memref<256x128xbf16, #tpu.memory_space<vmem>>, %arg9: memref<256x128xbf16, #tpu.memory_space<vmem>>, %arg10: memref<1x2x128xf32, #tpu.memory_space<vmem>>) attributes {dimension_semantics = [#tpu.dimension_semantics<parallel>], iteration_bounds = array<i64: 2>, scalar_prefetch = 0 : i64, scratch_operands = 0 : i64, tpu.core_type = #tpu.core_type<tc>, window_params = [{transform_indices = @transform_0, window_bounds = array<i64: 256, 128>}, {pipeline_mode = #tpu.pipeline_mode<synchronous>, transform_indices = @transform_1, window_bounds = array<i64: 4, 128>}, {pipeline_mode = #tpu.pipeline_mode<synchronous>, transform_indices = @transform_2, window_bounds = array<i64: 128, 128>}, {pipeline_mode = #tpu.pipeline_mode<synchronous>, transform_indices = @transform_3, window_bounds = array<i64: 1, 128>}, {transform_indices = @transform_4, window_bounds = array<i64: 256, 128>}, {pipeline_mode = #tpu.pipeline_mode<synchronous>, transform_indices = @transform_5, window_bounds = array<i64: 128, 128>}, {pipeline_mode = #tpu.pipeline_mode<synchronous>, transform_indices = @transform_6, window_bounds = array<i64: 1, 128>}, {transform_indices = @transform_7, window_bounds = array<i64: 256, 128>}, {transform_indices = @transform_8, window_bounds = array<i64: 256, 128>}, {transform_indices = @transform_9, window_bounds = array<i64: 1, 2, 128>}]} {
    %c0 = arith.constant 0 : index
    %c0_0 = arith.constant 0 : index
    %0 = vector.load %arg1[%c0, %c0_0] : memref<256x128xbf16, #tpu.memory_space<vmem>>, vector<256x128xbf16>
    %c0_1 = arith.constant 0 : index
    %c0_2 = arith.constant 0 : index
    %1 = vector.load %arg2[%c0_1, %c0_2] : memref<4x128xf32, #tpu.memory_space<vmem>>, vector<1x128xf32>
    %c1 = arith.constant 1 : index
    %c0_3 = arith.constant 0 : index
    %2 = vector.load %arg2[%c1, %c0_3] : memref<4x128xf32, #tpu.memory_space<vmem>>, vector<1x128xf32>
    %c2 = arith.constant 2 : index
    %c0_4 = arith.constant 0 : index
    %3 = vector.load %arg2[%c2, %c0_4] : memref<4x128xf32, #tpu.memory_space<vmem>>, vector<1x128xf32>
    %c3 = arith.constant 3 : index
    %c0_5 = arith.constant 0 : index
    %4 = vector.load %arg2[%c3, %c0_5] : memref<4x128xf32, #tpu.memory_space<vmem>>, vector<1x128xf32>
    %5 = arith.extf %0 : vector<256x128xbf16> to vector<256x128xf32>
    %6 = vector.broadcast %1 : vector<1x128xf32> to vector<256x128xf32>
    %7 = arith.subf %5, %6 : vector<256x128xf32>
    %cst = arith.constant 9.99999974E-6 : f32
    %8 = vector.broadcast %cst : f32 to vector<1x128xf32>
    %9 = arith.addf %2, %8 : vector<1x128xf32>
    %10 = math.rsqrt %9 : vector<1x128xf32>
    %11 = vector.broadcast %10 : vector<1x128xf32> to vector<256x128xf32>
    %12 = arith.mulf %7, %11 : vector<256x128xf32>
    %13 = vector.broadcast %3 : vector<1x128xf32> to vector<256x128xf32>
    %14 = arith.mulf %12, %13 : vector<256x128xf32>
    %15 = vector.broadcast %4 : vector<1x128xf32> to vector<256x128xf32>
    %16 = arith.addf %14, %15 : vector<256x128xf32>
    %cst_6 = arith.constant 0.000000e+00 : f32
    %17 = vector.broadcast %cst_6 : f32 to vector<256x128xf32>
    %18 = arith.maximumf %16, %17 : vector<256x128xf32>
    %19 = arith.truncf %18 : vector<256x128xf32> to vector<256x128xbf16>
    %c0_7 = arith.constant 0 : index
    %c0_8 = arith.constant 0 : index
    %20 = vector.load %arg3[%c0_7, %c0_8] : memref<128x128xbf16, #tpu.memory_space<vmem>>, vector<128x128xbf16>
    %cst_9 = arith.constant dense<0.000000e+00> : vector<256x128xf32>
    %21 = tpu.matmul %19, %20, %cst_9 {dimension_numbers = #tpu.dot_dimension_numbers<[1], [0], [0], [1], [0, 0, 1, 1], [], []>} : vector<256x128xbf16>, vector<128x128xbf16>, vector<256x128xf32> -> vector<256x128xf32>
    %c0_10 = arith.constant 0 : index
    %c0_11 = arith.constant 0 : index
    %22 = vector.load %arg4[%c0_10, %c0_11] : memref<1x128xf32, #tpu.memory_space<vmem>>, vector<1x128xf32>
    %23 = vector.broadcast %22 : vector<1x128xf32> to vector<256x128xf32>
    %24 = arith.addf %21, %23 : vector<256x128xf32>
    %cst_12 = arith.constant dense<0.000000e+00> : vector<128xf32>
    %25 = vector.multi_reduction <add>, %24, %cst_12 [0] : vector<256x128xf32> to vector<128xf32>
    %26 = vector.shape_cast %25 : vector<128xf32> to vector<1x128xf32>
    %27 = arith.mulf %24, %24 : vector<256x128xf32>
    %cst_13 = arith.constant dense<0.000000e+00> : vector<128xf32>
    %28 = vector.multi_reduction <add>, %27, %cst_13 [0] : vector<256x128xf32> to vector<128xf32>
    %29 = vector.shape_cast %28 : vector<128xf32> to vector<1x128xf32>
    %30 = tpu.concatenate %26, %29 in 0 : vector<1x128xf32>, vector<1x128xf32> -> vector<2x128xf32>
    %c0_14 = arith.constant 0 : index
    %c0_15 = arith.constant 0 : index
    %c0_16 = arith.constant 0 : index
    %31 = vector.load %arg10[%c0_14, %c0_15, %c0_16] : memref<1x2x128xf32, #tpu.memory_space<vmem>>, vector<1x2x128xf32>
    %32 = vector.shape_cast %31 : vector<1x2x128xf32> to vector<2x128xf32>
    %33 = vector.shape_cast %30 : vector<2x128xf32> to vector<1x2x128xf32>
    tpu.vector_store %arg10[%c0_14, %c0_15, %c0_16], %33 {strides = array<i32>} : memref<1x2x128xf32, #tpu.memory_space<vmem>>, vector<1x2x128xf32>,
    %34 = arith.truncf %24 : vector<256x128xf32> to vector<256x128xbf16>
    %c0_17 = arith.constant 0 : index
    %c0_18 = arith.constant 0 : index
    %35 = vector.load %arg8[%c0_17, %c0_18] : memref<256x128xbf16, #tpu.memory_space<vmem>>, vector<256x128xbf16>
    tpu.vector_store %arg8[%c0_17, %c0_18], %34 {strides = array<i32>} : memref<256x128xbf16, #tpu.memory_space<vmem>>, vector<256x128xbf16>,
    %c0_19 = arith.constant 0 : index
    %c0_20 = arith.constant 0 : index
    %36 = vector.load %arg5[%c0_19, %c0_20] : memref<256x128xbf16, #tpu.memory_space<vmem>>, vector<256x128xbf16>
    %c0_21 = arith.constant 0 : index
    %c0_22 = arith.constant 0 : index
    %37 = vector.load %arg6[%c0_21, %c0_22] : memref<128x128xbf16, #tpu.memory_space<vmem>>, vector<128x128xbf16>
    %cst_23 = arith.constant dense<0.000000e+00> : vector<256x128xf32>
    %38 = tpu.matmul %36, %37, %cst_23 {dimension_numbers = #tpu.dot_dimension_numbers<[1], [0], [0], [1], [0, 0, 1, 1], [], []>} : vector<256x128xbf16>, vector<128x128xbf16>, vector<256x128xf32> -> vector<256x128xf32>
    %c0_24 = arith.constant 0 : index
    %c0_25 = arith.constant 0 : index
    %39 = vector.load %arg7[%c0_24, %c0_25] : memref<1x128xf32, #tpu.memory_space<vmem>>, vector<1x128xf32>
    %40 = vector.broadcast %39 : vector<1x128xf32> to vector<256x128xf32>
    %41 = arith.addf %38, %40 : vector<256x128xf32>
    %42 = arith.truncf %41 : vector<256x128xf32> to vector<256x128xbf16>
    %c0_26 = arith.constant 0 : index
    %c0_27 = arith.constant 0 : index
    %43 = vector.load %arg9[%c0_26, %c0_27] : memref<256x128xbf16, #tpu.memory_space<vmem>>, vector<256x128xbf16>
    tpu.vector_store %arg9[%c0_26, %c0_27], %42 {strides = array<i32>} : memref<256x128xbf16, #tpu.memory_space<vmem>>, vector<256x128xbf16>,
    return
  }
  func.func @transform_0(%arg0: i32) -> (i32, i32) {
    %c0_i32 = arith.constant 0 : i32
    %c0_i32_0 = arith.constant 0 : i32
    return %arg0, %c0_i32 : i32, i32
  }
  func.func @transform_1(%arg0: i32) -> (i32, i32) {
    %c0_i32 = arith.constant 0 : i32
    %c0_i32_0 = arith.constant 0 : i32
    %c0_i32_1 = arith.constant 0 : i32
    return %c0_i32, %c0_i32_0 : i32, i32
  }
  func.func @transform_2(%arg0: i32) -> (i32, i32) {
    %c0_i32 = arith.constant 0 : i32
    %c0_i32_0 = arith.constant 0 : i32
    %c0_i32_1 = arith.constant 0 : i32
    return %c0_i32, %c0_i32_0 : i32, i32
  }
  func.func @transform_3(%arg0: i32) -> (i32, i32) {
    %c0_i32 = arith.constant 0 : i32
    %c0_i32_0 = arith.constant 0 : i32
    %c0_i32_1 = arith.constant 0 : i32
    return %c0_i32, %c0_i32_0 : i32, i32
  }
  func.func @transform_4(%arg0: i32) -> (i32, i32) {
    %c0_i32 = arith.constant 0 : i32
    %c0_i32_0 = arith.constant 0 : i32
    return %arg0, %c0_i32 : i32, i32
  }
  func.func @transform_5(%arg0: i32) -> (i32, i32) {
    %c0_i32 = arith.constant 0 : i32
    %c0_i32_0 = arith.constant 0 : i32
    %c0_i32_1 = arith.constant 0 : i32
    return %c0_i32, %c0_i32_0 : i32, i32
  }
  func.func @transform_6(%arg0: i32) -> (i32, i32) {
    %c0_i32 = arith.constant 0 : i32
    %c0_i32_0 = arith.constant 0 : i32
    %c0_i32_1 = arith.constant 0 : i32
    return %c0_i32, %c0_i32_0 : i32, i32
  }
  func.func @transform_7(%arg0: i32) -> (i32, i32) {
    %c0_i32 = arith.constant 0 : i32
    %c0_i32_0 = arith.constant 0 : i32
    return %arg0, %c0_i32 : i32, i32
  }
  func.func @transform_8(%arg0: i32) -> (i32, i32) {
    %c0_i32 = arith.constant 0 : i32
    %c0_i32_0 = arith.constant 0 : i32
    return %arg0, %c0_i32 : i32, i32
  }
  func.func @transform_9(%arg0: i32) -> (i32, i32, i32) {
    %c0_i32 = arith.constant 0 : i32
    %c0_i32_0 = arith.constant 0 : i32
    %c0_i32_1 = arith.constant 0 : i32
    return %arg0, %c0_i32, %c0_i32_0 : i32, i32, i32
  }
}

module attributes {stable_mosaic.version = 11 : i64} {
  func.func @_tail_kernel(%arg0: i32, %arg1: memref<256x128xbf16, #tpu.memory_space<vmem>>, %arg2: memref<256x128xbf16, #tpu.memory_space<vmem>>, %arg3: memref<4x128xf32, #tpu.memory_space<vmem>>, %arg4: memref<128x128xbf16, #tpu.memory_space<vmem>>, %arg5: memref<1x128xf32, #tpu.memory_space<vmem>>, %arg6: memref<128x128xbf16, #tpu.memory_space<vmem>>, %arg7: memref<1x128xf32, #tpu.memory_space<vmem>>, %arg8: memref<256x128xf32, #tpu.memory_space<vmem>>) attributes {dimension_semantics = [#tpu.dimension_semantics<parallel>], iteration_bounds = array<i64: 2>, scalar_prefetch = 0 : i64, scratch_operands = 0 : i64, tpu.core_type = #tpu.core_type<tc>, window_params = [{transform_indices = @transform_0, window_bounds = array<i64: 256, 128>}, {transform_indices = @transform_1, window_bounds = array<i64: 256, 128>}, {pipeline_mode = #tpu.pipeline_mode<synchronous>, transform_indices = @transform_2, window_bounds = array<i64: 4, 128>}, {pipeline_mode = #tpu.pipeline_mode<synchronous>, transform_indices = @transform_3, window_bounds = array<i64: 128, 128>}, {pipeline_mode = #tpu.pipeline_mode<synchronous>, transform_indices = @transform_4, window_bounds = array<i64: 1, 128>}, {pipeline_mode = #tpu.pipeline_mode<synchronous>, transform_indices = @transform_5, window_bounds = array<i64: 128, 128>}, {pipeline_mode = #tpu.pipeline_mode<synchronous>, transform_indices = @transform_6, window_bounds = array<i64: 1, 128>}, {transform_indices = @transform_7, window_bounds = array<i64: 256, 128>}]} {
    %c0 = arith.constant 0 : index
    %c0_0 = arith.constant 0 : index
    %0 = vector.load %arg3[%c0, %c0_0] : memref<4x128xf32, #tpu.memory_space<vmem>>, vector<1x128xf32>
    %c1 = arith.constant 1 : index
    %c0_1 = arith.constant 0 : index
    %1 = vector.load %arg3[%c1, %c0_1] : memref<4x128xf32, #tpu.memory_space<vmem>>, vector<1x128xf32>
    %c2 = arith.constant 2 : index
    %c0_2 = arith.constant 0 : index
    %2 = vector.load %arg3[%c2, %c0_2] : memref<4x128xf32, #tpu.memory_space<vmem>>, vector<1x128xf32>
    %c3 = arith.constant 3 : index
    %c0_3 = arith.constant 0 : index
    %3 = vector.load %arg3[%c3, %c0_3] : memref<4x128xf32, #tpu.memory_space<vmem>>, vector<1x128xf32>
    %c0_4 = arith.constant 0 : index
    %c0_5 = arith.constant 0 : index
    %4 = vector.load %arg1[%c0_4, %c0_5] : memref<256x128xbf16, #tpu.memory_space<vmem>>, vector<256x128xbf16>
    %5 = arith.extf %4 : vector<256x128xbf16> to vector<256x128xf32>
    %6 = vector.broadcast %0 : vector<1x128xf32> to vector<256x128xf32>
    %7 = arith.subf %5, %6 : vector<256x128xf32>
    %cst = arith.constant 9.99999974E-6 : f32
    %8 = vector.broadcast %cst : f32 to vector<1x128xf32>
    %9 = arith.addf %1, %8 : vector<1x128xf32>
    %10 = math.rsqrt %9 : vector<1x128xf32>
    %11 = vector.broadcast %10 : vector<1x128xf32> to vector<256x128xf32>
    %12 = arith.mulf %7, %11 : vector<256x128xf32>
    %13 = vector.broadcast %2 : vector<1x128xf32> to vector<256x128xf32>
    %14 = arith.mulf %12, %13 : vector<256x128xf32>
    %15 = vector.broadcast %3 : vector<1x128xf32> to vector<256x128xf32>
    %16 = arith.addf %14, %15 : vector<256x128xf32>
    %cst_6 = arith.constant 0.000000e+00 : f32
    %17 = vector.broadcast %cst_6 : f32 to vector<256x128xf32>
    %18 = arith.maximumf %16, %17 : vector<256x128xf32>
    %19 = vector.shape_cast %18 : vector<256x128xf32> to vector<1x256x128xf32>
    %cst_7 = arith.constant dense<0.000000e+00> : vector<1x128xf32>
    %20 = vector.multi_reduction <add>, %19, %cst_7 [1] : vector<1x256x128xf32> to vector<1x128xf32>
    %cst_8 = arith.constant 3.906250e-03 : f32
    %21 = vector.broadcast %cst_8 : f32 to vector<1x128xf32>
    %22 = arith.mulf %20, %21 : vector<1x128xf32>
    %23 = arith.truncf %22 : vector<1x128xf32> to vector<1x128xbf16>
    %c0_9 = arith.constant 0 : index
    %c0_10 = arith.constant 0 : index
    %24 = vector.load %arg4[%c0_9, %c0_10] : memref<128x128xbf16, #tpu.memory_space<vmem>>, vector<128x128xbf16>
    %cst_11 = arith.constant dense<0.000000e+00> : vector<1x128xf32>
    %25 = tpu.matmul %23, %24, %cst_11 {dimension_numbers = #tpu.dot_dimension_numbers<[1], [0], [0], [1], [0, 0, 1, 1], [], []>} : vector<1x128xbf16>, vector<128x128xbf16>, vector<1x128xf32> -> vector<1x128xf32>
    %c0_12 = arith.constant 0 : index
    %c0_13 = arith.constant 0 : index
    %26 = vector.load %arg5[%c0_12, %c0_13] : memref<1x128xf32, #tpu.memory_space<vmem>>, vector<1x128xf32>
    %27 = arith.addf %25, %26 : vector<1x128xf32>
    %cst_14 = arith.constant 0.000000e+00 : f32
    %28 = vector.broadcast %cst_14 : f32 to vector<1x128xf32>
    %29 = arith.maximumf %27, %28 : vector<1x128xf32>
    %30 = arith.truncf %29 : vector<1x128xf32> to vector<1x128xbf16>
    %c0_15 = arith.constant 0 : index
    %c0_16 = arith.constant 0 : index
    %31 = vector.load %arg6[%c0_15, %c0_16] : memref<128x128xbf16, #tpu.memory_space<vmem>>, vector<128x128xbf16>
    %cst_17 = arith.constant dense<0.000000e+00> : vector<1x128xf32>
    %32 = tpu.matmul %30, %31, %cst_17 {dimension_numbers = #tpu.dot_dimension_numbers<[1], [0], [0], [1], [0, 0, 1, 1], [], []>} : vector<1x128xbf16>, vector<128x128xbf16>, vector<1x128xf32> -> vector<1x128xf32>
    %c0_18 = arith.constant 0 : index
    %c0_19 = arith.constant 0 : index
    %33 = vector.load %arg7[%c0_18, %c0_19] : memref<1x128xf32, #tpu.memory_space<vmem>>, vector<1x128xf32>
    %34 = arith.addf %32, %33 : vector<1x128xf32>
    %cst_20 = arith.constant 0.000000e+00 : f32
    %35 = vector.broadcast %cst_20 : f32 to vector<1x128xf32>
    %36 = arith.subf %35, %34 : vector<1x128xf32>
    %37 = math.exp %36 : vector<1x128xf32>
    %cst_21 = arith.constant 1.000000e+00 : f32
    %38 = vector.broadcast %cst_21 : f32 to vector<1x128xf32>
    %39 = arith.addf %38, %37 : vector<1x128xf32>
    %cst_22 = arith.constant 1.000000e+00 : f32
    %40 = vector.broadcast %cst_22 : f32 to vector<1x128xf32>
    %41 = arith.divf %40, %39 : vector<1x128xf32>
    %c0_23 = arith.constant 0 : index
    %c0_24 = arith.constant 0 : index
    %42 = vector.load %arg2[%c0_23, %c0_24] : memref<256x128xbf16, #tpu.memory_space<vmem>>, vector<256x128xbf16>
    %43 = arith.extf %42 : vector<256x128xbf16> to vector<256x128xf32>
    %44 = vector.shape_cast %43 : vector<256x128xf32> to vector<1x256x128xf32>
    %45 = vector.shape_cast %41 : vector<1x128xf32> to vector<1x1x128xf32>
    %46 = vector.broadcast %45 : vector<1x1x128xf32> to vector<1x256x128xf32>
    %47 = arith.mulf %19, %46 : vector<1x256x128xf32>
    %48 = arith.addf %47, %44 : vector<1x256x128xf32>
    %cst_25 = arith.constant 0.000000e+00 : f32
    %49 = vector.broadcast %cst_25 : f32 to vector<1x256x128xf32>
    %50 = arith.maximumf %48, %49 : vector<1x256x128xf32>
    %51 = vector.shape_cast %50 : vector<1x256x128xf32> to vector<256x128xf32>
    %c0_26 = arith.constant 0 : index
    %c0_27 = arith.constant 0 : index
    %52 = vector.load %arg8[%c0_26, %c0_27] : memref<256x128xf32, #tpu.memory_space<vmem>>, vector<256x128xf32>
    tpu.vector_store %arg8[%c0_26, %c0_27], %51 {strides = array<i32>} : memref<256x128xf32, #tpu.memory_space<vmem>>, vector<256x128xf32>,
    return
  }
  func.func @transform_0(%arg0: i32) -> (i32, i32) {
    %c0_i32 = arith.constant 0 : i32
    %c0_i32_0 = arith.constant 0 : i32
    return %arg0, %c0_i32 : i32, i32
  }
  func.func @transform_1(%arg0: i32) -> (i32, i32) {
    %c0_i32 = arith.constant 0 : i32
    %c0_i32_0 = arith.constant 0 : i32
    return %arg0, %c0_i32 : i32, i32
  }
  func.func @transform_2(%arg0: i32) -> (i32, i32) {
    %c0_i32 = arith.constant 0 : i32
    %c0_i32_0 = arith.constant 0 : i32
    %c0_i32_1 = arith.constant 0 : i32
    return %c0_i32, %c0_i32_0 : i32, i32
  }
  func.func @transform_3(%arg0: i32) -> (i32, i32) {
    %c0_i32 = arith.constant 0 : i32
    %c0_i32_0 = arith.constant 0 : i32
    %c0_i32_1 = arith.constant 0 : i32
    return %c0_i32, %c0_i32_0 : i32, i32
  }
  func.func @transform_4(%arg0: i32) -> (i32, i32) {
    %c0_i32 = arith.constant 0 : i32
    %c0_i32_0 = arith.constant 0 : i32
    %c0_i32_1 = arith.constant 0 : i32
    return %c0_i32, %c0_i32_0 : i32, i32
  }
  func.func @transform_5(%arg0: i32) -> (i32, i32) {
    %c0_i32 = arith.constant 0 : i32
    %c0_i32_0 = arith.constant 0 : i32
    %c0_i32_1 = arith.constant 0 : i32
    return %c0_i32, %c0_i32_0 : i32, i32
  }
  func.func @transform_6(%arg0: i32) -> (i32, i32) {
    %c0_i32 = arith.constant 0 : i32
    %c0_i32_0 = arith.constant 0 : i32
    %c0_i32_1 = arith.constant 0 : i32
    return %c0_i32, %c0_i32_0 : i32, i32
  }
  func.func @transform_7(%arg0: i32) -> (i32, i32) {
    %c0_i32 = arith.constant 0 : i32
    %c0_i32_0 = arith.constant 0 : i32
    return %arg0, %c0_i32 : i32, i32
  }
}

</mosaic_0001>

<llo_original>
// kernel: se_block_forward.4
$region0: #{se_block_forward.4}
  #allocation0 [shape = 'u32[]', space=smem, size = 0x4, offset = 0x4, fixed_abs, tag = 'smem constant byte address 0x4 - core index']
  #allocation1 [shape = 'u32[144,128]{1,0:T(1,128)}', space=vmem, size = 0x12000, scoped, tag = 'internal scratch']
  %s0 = inlined_call_operand.vmem [shape: bf16[512,128], index: 0, kind: input, shape index: {}]
  %s1 = inlined_call_operand.vmem [shape: bf16[128,128], index: 1, kind: input, shape index: {}]
  %s2 = inlined_call_operand.vmem [shape: f32[1,128], index: 2, kind: input, shape index: {}]
  %s3 = inlined_call_operand.vmem [shape: bf16[512,128], index: 3, kind: output, shape index: {0}]
  %s4 = inlined_call_operand.vmem [shape: f32[2,2,128], index: 4, kind: output, shape index: {1}]
  %5 = xla_tuple %s3, %s4
  %s6 = sld [smem:[#allocation0]]
  $region53: #{se_block_forward.4} parent=0
    _
  %s8 = ssub.s32 1, %s6
  %s9 = scalar_select 0, %s8, %s6
  loop: start=0, step=1, limit=4
  $region2: #{se_block_forward.4} parent=0 // loop_pre_header
    _
  $region3: #{se_block_forward.4} parent=0 // loop_header
    %s11 = sphi 0, %s15
    %p12 = scmp.ge.s32.totalorder %s11, 4
    %s21 = sphi 0, %s23
    %s24 = sphi 0, %s21
    %s25 = sphi 0, %s24
    %s41 = sphi 0, %s25
    %s45 = sphi 0, %s45
    %s47 = sphi 0, %s45
    %s48 = sphi 0, %s47
    %s62 = sphi 0, %s48
    %s66 = sphi 0, %s66
    %s68 = sphi 0, %s66
    %s69 = sphi 0, %s68
    %s83 = sphi 0, %s69
    %s89 = sphi 0, %s91
    %s92 = sphi 0, %s89
    %s93 = sphi 0, %s92
    %s109 = sphi 0, %s93
    %s115 = sphi 0, %s117
    %s118 = sphi 0, %s115
    %s119 = sphi 0, %s118
    %s135 = sphi 0, %s119
  $region4: #{se_block_forward.4} parent=0 // loop_header_branch
    %14 = sbr.rel (%p12) target = $region8
  $region5: #{se_block_forward.4} parent=0 // loop_body
    %s16 = ssub.s32 %s11, 1
    %s17 = ssub.s32 %s11, 2
    %s18 = sadd.s32 %s11, 1
    %s19 = ssub.s32 %s11, %s18
    %p20 = scmp.eq.s32.totalorder %s19, 0
    %s22 = sadd.s32 %s21, 1
    %s23 = scalar_select %p20, %s21, %s22
    %p26 = pneg %p20
    %p27 = scmp.eq.s32.totalorder %s11, 1
    %p28 = por %p26, %p27
    %p29 = scmp.ne.s32.totalorder %s21, %s24
    %p30 = scmp.eq.s32.totalorder %s11, 0
    %p31 = por %p29, %p30
    %p32 = scmp.ne.s32.totalorder %s21, %s24
    %p33 = scmp.eq.s32.totalorder %s16, 1
    %p34 = por %p32, %p33
    %p35 = scmp.ne.s32.totalorder %s24, %s25
    %p36 = scmp.eq.s32.totalorder %s16, 0
    %p37 = por %p35, %p36
    %p38 = scmp.ne.s32.totalorder %s24, %s25
    %p39 = scmp.eq.s32.totalorder %s17, 1
    %p40 = por %p38, %p39
    %p42 = scmp.ne.s32.totalorder %s25, %s41
    %p43 = scmp.eq.s32.totalorder %s17, 0
    %p44 = por %p42, %p43
    %s46 = sadd.s32 %s45, 1
    %p49 = scmp.eq.s32.totalorder %s11, 1
    %p50 = scmp.ne.s32.totalorder %s45, %s47
    %p51 = scmp.eq.s32.totalorder %s11, 0
    %p52 = por %p50, %p51
    %p53 = scmp.ne.s32.totalorder %s45, %s47
    %p54 = scmp.eq.s32.totalorder %s16, 1
    %p55 = por %p53, %p54
    %p56 = scmp.ne.s32.totalorder %s47, %s48
    %p57 = scmp.eq.s32.totalorder %s16, 0
    %p58 = por %p56, %p57
    %p59 = scmp.ne.s32.totalorder %s47, %s48
    %p60 = scmp.eq.s32.totalorder %s17, 1
    %p61 = por %p59, %p60
    %p63 = scmp.ne.s32.totalorder %s48, %s62
    %p64 = scmp.eq.s32.totalorder %s17, 0
    %p65 = por %p63, %p64
    %s67 = sadd.s32 %s66, 1
    %p70 = scmp.eq.s32.totalorder %s11, 1
    %p71 = scmp.ne.s32.totalorder %s66, %s68
    %p72 = scmp.eq.s32.totalorder %s11, 0
    %p73 = por %p71, %p72
    %p74 = scmp.ne.s32.totalorder %s66, %s68
    %p75 = scmp.eq.s32.totalorder %s16, 1
    %p76 = por %p74, %p75
    %p77 = scmp.ne.s32.totalorder %s68, %s69
    %p78 = scmp.eq.s32.totalorder %s16, 0
    %p79 = por %p77, %p78
    %p80 = scmp.ne.s32.totalorder %s68, %s69
    %p81 = scmp.eq.s32.totalorder %s17, 1
    %p82 = por %p80, %p81
    %p84 = scmp.ne.s32.totalorder %s69, %s83
    %p85 = scmp.eq.s32.totalorder %s17, 0
    %p86 = por %p84, %p85
    %s87 = ssub.s32 %s11, %s18
    %p88 = scmp.eq.s32.totalorder %s87, 0
    %s90 = sadd.s32 %s89, 1
    %s91 = scalar_select %p88, %s89, %s90
    %p94 = pneg %p88
    %p95 = scmp.eq.s32.totalorder %s11, 1
    %p96 = por %p94, %p95
    %p97 = scmp.ne.s32.totalorder %s89, %s92
    %p98 = scmp.eq.s32.totalorder %s11, 0
    %p99 = por %p97, %p98
    %p100 = scmp.ne.s32.totalorder %s89, %s92
    %p101 = scmp.eq.s32.totalorder %s16, 1
    %p102 = por %p100, %p101
    %p103 = scmp.ne.s32.totalorder %s92, %s93
    %p104 = scmp.eq.s32.totalorder %s16, 0
    %p105 = por %p103, %p104
    %p106 = scmp.ne.s32.totalorder %s92, %s93
    %p107 = scmp.eq.s32.totalorder %s17, 1
    %p108 = por %p106, %p107
    %p110 = scmp.ne.s32.totalorder %s93, %s109
    %p111 = scmp.eq.s32.totalorder %s17, 0
    %p112 = por %p110, %p111
    %s113 = ssub.s32 %s11, %s18
    %p114 = scmp.eq.s32.totalorder %s113, 0
    %s116 = sadd.s32 %s115, 1
    %s117 = scalar_select %p114, %s115, %s116
    %p120 = pneg %p114
    %p121 = scmp.eq.s32.totalorder %s11, 1
    %p122 = por %p120, %p121
    %p123 = scmp.ne.s32.totalorder %s115, %s118
    %p124 = scmp.eq.s32.totalorder %s11, 0
    %p125 = por %p123, %p124
    %p126 = scmp.ne.s32.totalorder %s115, %s118
    %p127 = scmp.eq.s32.totalorder %s16, 1
    %p128 = por %p126, %p127
    %p129 = scmp.ne.s32.totalorder %s118, %s119
    %p130 = scmp.eq.s32.totalorder %s16, 0
    %p131 = por %p129, %p130
    %p132 = scmp.ne.s32.totalorder %s118, %s119
    %p133 = scmp.eq.s32.totalorder %s17, 1
    %p134 = por %p132, %p133
    %p136 = scmp.ne.s32.totalorder %s119, %s135
    %p137 = scmp.eq.s32.totalorder %s17, 0
    %p138 = por %p136, %p137
    %p139 = scmp.le.s32.totalorder 1, %s11
    %p140 = scmp.lt.s32.totalorder %s11, 3
    %p141 = pnand %p139, %p140
    %p142 = pneg %p141
    // Predicated region
    $region9: #{se_block_forward.4} parent=5 // pred_check
      _
    $region10: #{se_block_forward.4} parent=5 // pred_check_branch
      %144 = sbr.rel (%p141) target = $region12
    $region11: #{se_block_forward.4} parent=5 // pred_region
      %s145 = ssub.s32 %s11, 1
      // Predicated region
      $region13: #{se_block_forward.4} parent=11 // pred_check
        %p146 = pneg %p58
      $region14: #{se_block_forward.4} parent=11 // pred_check_branch
        %148 = sbr.rel (%p146) target = $region16
      $region15: #{se_block_forward.4} parent=11 // pred_region
        _
      $region16: #{se_block_forward.4} parent=11 // pred_fallthru
        _
      // Predicated region
      $region17: #{se_block_forward.4} parent=11 // pred_check
        %p149 = pneg %p79
      $region18: #{se_block_forward.4} parent=11 // pred_check_branch
        %151 = sbr.rel (%p149) target = $region20
      $region19: #{se_block_forward.4} parent=11 // pred_region
        _
      $region20: #{se_block_forward.4} parent=11 // pred_fallthru
        _
    $region12: #{se_block_forward.4} parent=5 // pred_fallthru
      _
    %p152 = scmp.lt.s32.totalorder %s11, 2
    // Predicated region
    $region21: #{se_block_forward.4} parent=5 // pred_check
      %p153 = pneg %p152
    $region22: #{se_block_forward.4} parent=5 // pred_check_branch
      %155 = sbr.rel (%p153) target = $region24
    $region23: #{se_block_forward.4} parent=5 // pred_region
      // Predicated region
      $region25: #{se_block_forward.4} parent=23 // pred_check
        %p156 = pneg %p31
      $region26: #{se_block_forward.4} parent=23 // pred_check_branch
        %158 = sbr.rel (%p156) target = $region28
      $region27: #{se_block_forward.4} parent=23 // pred_region
        %s159 = smul.u32 32, %s11
        %p160 = scmp.lt.s32.totalorder %s159, 63
        %s161 = scalar_select %p160, %s159, 63
        %s162 = smul.addr %s161, 4
        %s163 = scalar_lea.vmem %s0, %s162
        %s164 = smul.u32 32, %s11
      $region28: #{se_block_forward.4} parent=23 // pred_fallthru
        _
    $region24: #{se_block_forward.4} parent=5 // pred_fallthru
      _
    %p165 = scmp.le.s32.totalorder 1, %s11
    %p166 = scmp.lt.s32.totalorder %s11, 3
    %p167 = pnand %p165, %p166
    %p168 = pneg %p167
    // Predicated region
    $region29: #{se_block_forward.4} parent=5 // pred_check
      _
    $region30: #{se_block_forward.4} parent=5 // pred_check_branch
      %170 = sbr.rel (%p167) target = $region32
    $region31: #{se_block_forward.4} parent=5 // pred_region
      %s171 = ssub.s32 %s11, 1
      %s172 = smul.u32 32, %s16
      %p173 = scmp.lt.s32.totalorder %s172, 63
      %s174 = scalar_select %p173, %s172, 63
      %s175 = smul.addr %s174, 4
      %s176 = scalar_lea.vmem %s0, %s175
      %p177 = pneg %p37
      %p178 = pneg %p34
      %p179 = pneg %p58
      %p180 = pneg %p55
      %p181 = pneg %p79
      %p182 = pneg %p76
      %p183 = pneg %p105
      %p184 = pneg %p102
      %s185 = smul.u32 32, %s16
      %p186 = scmp.lt.s32.totalorder %s185, 63
      %s187 = scalar_select %p186, %s185, 63
      %s188 = smul.addr %s187, 4
      %s189 = scalar_lea.vmem %s3, %s188
      %p190 = pneg %p131
      %p191 = pneg %p128
      %p192 = scmp.lt.s32.totalorder %s16, 1
      %s193 = scalar_select %p192, %s16, 1
      %s194 = smul.addr %s193, 2
      %s195 = scalar_lea.vmem %s4, %s194
      %s196 = smul.u32 32, %s16
      %p197 = scmp.lt.s32.totalorder %s196, 63
      %s198 = scalar_select %p197, %s196, 63
      %s199 = smul.addr %s198, 4
      %s200 = scalar_lea.vmem %s0, %s199
      %s201 = smul.u32 32, %s16
      %s202 = smul.u32 32, %s16
      %p203 = scmp.lt.s32.totalorder %s202, 63
      %s204 = scalar_select %p203, %s202, 63
      %s205 = smul.addr %s204, 4
      %s206 = scalar_lea.vmem %s3, %s205
      %s207 = smul.u32 32, %s16
      %p208 = scmp.lt.s32.totalorder %s16, 1
      %s209 = scalar_select %p208, %s16, 1
      %s210 = smul.addr %s209, 2
      %s211 = scalar_lea.vmem %s4, %s210
      %v213 = vld [vmem:[%s200] sm:$0xf]
      %v214 = vld [vmem:[%s200 + $0x4] sm:$0xf]
      %v215 = vld [vmem:[%s200 + $0x8] sm:$0xf]
      %v216 = vld [vmem:[%s200 + $0xc] sm:$0xf]
      %v217 = vld [vmem:[%s200 + $0x10] sm:$0xf]
      %v218 = vld [vmem:[%s200 + $0x14] sm:$0xf]
      %v219 = vld [vmem:[%s200 + $0x18] sm:$0xf]
      %v220 = vld [vmem:[%s200 + $0x1c] sm:$0xf]
      %v221 = vld [vmem:[%s200 + $0x20] sm:$0xf]
      %v222 = vld [vmem:[%s200 + $0x24] sm:$0xf]
      %v223 = vld [vmem:[%s200 + $0x28] sm:$0xf]
      %v224 = vld [vmem:[%s200 + $0x2c] sm:$0xf]
      %v225 = vld [vmem:[%s200 + $0x30] sm:$0xf]
      %v226 = vld [vmem:[%s200 + $0x34] sm:$0xf]
      %v227 = vld [vmem:[%s200 + $0x38] sm:$0xf]
      %v228 = vld [vmem:[%s200 + $0x3c] sm:$0xf]
      %v229 = vld [vmem:[%s200 + $0x40] sm:$0xf]
      %v230 = vld [vmem:[%s200 + $0x44] sm:$0xf]
      %v231 = vld [vmem:[%s200 + $0x48] sm:$0xf]
      %v232 = vld [vmem:[%s200 + $0x4c] sm:$0xf]
      %v233 = vld [vmem:[%s200 + $0x50] sm:$0xf]
      %v234 = vld [vmem:[%s200 + $0x54] sm:$0xf]
      %v235 = vld [vmem:[%s200 + $0x58] sm:$0xf]
      %v236 = vld [vmem:[%s200 + $0x5c] sm:$0xf]
      %v237 = vld [vmem:[%s200 + $0x60] sm:$0xf]
      %v238 = vld [vmem:[%s200 + $0x64] sm:$0xf]
      %v239 = vld [vmem:[%s200 + $0x68] sm:$0xf]
      %v240 = vld [vmem:[%s200 + $0x6c] sm:$0xf]
      %v241 = vld [vmem:[%s200 + $0x70] sm:$0xf]
      %v242 = vld [vmem:[%s200 + $0x74] sm:$0xf]
      %v243 = vld [vmem:[%s200 + $0x78] sm:$0xf]
      %v244 = vld [vmem:[%s200 + $0x7c] sm:$0xf]
      %v245 = vld [vmem:[%s1] sm:$0xf]
      %v246 = vld [vmem:[%s1 + $0x4] sm:$0xf]
      %v247 = vld [vmem:[%s1 + $0x8] sm:$0xf]
      %v248 = vld [vmem:[%s1 + $0xc] sm:$0xf]
      %v249 = vld [vmem:[%s1 + $0x10] sm:$0xf]
      %v250 = vld [vmem:[%s1 + $0x14] sm:$0xf]
      %v251 = vld [vmem:[%s1 + $0x18] sm:$0xf]
      %v252 = vld [vmem:[%s1 + $0x1c] sm:$0xf]
      %v253 = vld [vmem:[%s1 + $0x20] sm:$0xf]
      %v254 = vld [vmem:[%s1 + $0x24] sm:$0xf]
      %v255 = vld [vmem:[%s1 + $0x28] sm:$0xf]
      %v256 = vld [vmem:[%s1 + $0x2c] sm:$0xf]
      %v257 = vld [vmem:[%s1 + $0x30] sm:$0xf]
      %v258 = vld [vmem:[%s1 + $0x34] sm:$0xf]
      %v259 = vld [vmem:[%s1 + $0x38] sm:$0xf]
      %v260 = vld [vmem:[%s1 + $0x3c] sm:$0xf]
      %v261 = vld [vmem:[%s2] sm:$0x1]
      %v263 = vlaneseq
      %v264 = vshrl.u32 %v263, 7
      %v265 = vsub.s32 0, %v264
      %v266 = vrot.slane %v261, %v265
      %v300 = vunpack.c.l.b16 %v213
      %v301 = vunpack.c.l.b16 %v214
      %v302 = vunpack.c.l.b16 %v215
      %v303 = vunpack.c.l.b16 %v216
      %v304 = vunpack.c.l.b16 %v217
      %v305 = vunpack.c.l.b16 %v218
      %v306 = vunpack.c.l.b16 %v219
      %v307 = vunpack.c.l.b16 %v220
      %v308 = vunpack.c.l.b16 %v221
      %v309 = vunpack.c.l.b16 %v222
      %v310 = vunpack.c.l.b16 %v223
      %v311 = vunpack.c.l.b16 %v224
      %v312 = vunpack.c.l.b16 %v225
      %v313 = vunpack.c.l.b16 %v226
      %v314 = vunpack.c.l.b16 %v227
      %v315 = vunpack.c.l.b16 %v228
      %v316 = vunpack.c.l.b16 %v229
      %v317 = vunpack.c.l.b16 %v230
      %v318 = vunpack.c.l.b16 %v231
      %v319 = vunpack.c.l.b16 %v232
      %v320 = vunpack.c.l.b16 %v233
      %v321 = vunpack.c.l.b16 %v234
      %v322 = vunpack.c.l.b16 %v235
      %v323 = vunpack.c.l.b16 %v236
      %v324 = vunpack.c.l.b16 %v237
      %v325 = vunpack.c.l.b16 %v238
      %v326 = vunpack.c.l.b16 %v239
      %v327 = vunpack.c.l.b16 %v240
      %v328 = vunpack.c.l.b16 %v241
      %v329 = vunpack.c.l.b16 %v242
      %v330 = vunpack.c.l.b16 %v243
      %v331 = vunpack.c.l.b16 %v244
      %v332 = vpack.c.b16 %v301, %v300
      %v333 = vpack.c.b16 %v303, %v302
      %v334 = vpack.c.b16 %v305, %v304
      %v335 = vpack.c.b16 %v307, %v306
      %v336 = vpack.c.b16 %v309, %v308
      %v337 = vpack.c.b16 %v311, %v310
      %v338 = vpack.c.b16 %v313, %v312
      %v339 = vpack.c.b16 %v315, %v314
      %v340 = vpack.c.b16 %v317, %v316
      %v341 = vpack.c.b16 %v319, %v318
      %v342 = vpack.c.b16 %v321, %v320
      %v343 = vpack.c.b16 %v323, %v322
      %v344 = vpack.c.b16 %v325, %v324
      %v345 = vpack.c.b16 %v327, %v326
      %v346 = vpack.c.b16 %v329, %v328
      %v347 = vpack.c.b16 %v331, %v330
      %v380 = vunpack.c.l.b16 %v245
      %v381 = vunpack.c.l.b16 %v246
      %v382 = vunpack.c.l.b16 %v247
      %v383 = vunpack.c.l.b16 %v248
      %v384 = vunpack.c.l.b16 %v249
      %v385 = vunpack.c.l.b16 %v250
      %v386 = vunpack.c.l.b16 %v251
      %v387 = vunpack.c.l.b16 %v252
      %v388 = vunpack.c.l.b16 %v253
      %v389 = vunpack.c.l.b16 %v254
      %v390 = vunpack.c.l.b16 %v255
      %v391 = vunpack.c.l.b16 %v256
      %v392 = vunpack.c.l.b16 %v257
      %v393 = vunpack.c.l.b16 %v258
      %v394 = vunpack.c.l.b16 %v259
      %v395 = vunpack.c.l.b16 %v260
      %v396 = vpack.c.b16 %v381, %v380
      %v397 = vpack.c.b16 %v383, %v382
      %v398 = vpack.c.b16 %v385, %v384
      %v399 = vpack.c.b16 %v387, %v386
      %v400 = vpack.c.b16 %v389, %v388
      %v401 = vpack.c.b16 %v391, %v390
      %v402 = vpack.c.b16 %v393, %v392
      %v403 = vpack.c.b16 %v395, %v394
      %412 = vmatprep.subr.bf16.mxu0 0
      %413 = vmatpush1.bf16.msra.mxu0 %v403
      %414 = vmatprep.subr.bf16.mxu0 0
      %415 = vmatpush1.bf16.msra.mxu0 %v402
      %416 = vmatprep.subr.bf16.mxu0 0
      %417 = vmatpush1.bf16.msra.mxu0 %v401
      %418 = vmatprep.subr.bf16.mxu0 0
      %419 = vmatpush1.bf16.msra.mxu0 %v400
      %420 = vmatprep.subr.bf16.mxu0 0
      %421 = vmatpush1.bf16.msra.mxu0 %v399
      %422 = vmatprep.subr.bf16.mxu0 0
      %423 = vmatpush1.bf16.msra.mxu0 %v398
      %424 = vmatprep.subr.bf16.mxu0 0
      %425 = vmatpush1.bf16.msra.mxu0 %v397
      %426 = vmatprep.subr.bf16.mxu0 0
      %427 = vmatpush1.bf16.msra.mxu0 %v396
      %428 = vmatprep.subr.bf16.mxu0 0
      %429 = vmatpush2.bf16.msra.mxu0 0
      %430 = vmatprep.subr.bf16.mxu0 0
      %431 = vmatpush2.bf16.msra.mxu0 0
      %432 = vmatprep.subr.bf16.mxu0 0
      %433 = vmatpush2.bf16.msra.mxu0 0
      %434 = vmatprep.subr.bf16.mxu0 0
      %435 = vmatpush2.bf16.msra.mxu0 0
      %436 = vmatprep.subr.bf16.mxu0 0
      %437 = vmatpush2.bf16.msra.mxu0 0
      %438 = vmatprep.subr.bf16.mxu0 0
      %439 = vmatpush2.bf16.msra.mxu0 0
      %440 = vmatprep.subr.bf16.mxu0 0
      %441 = vmatpush2.bf16.msra.mxu0 0
      %442 = vmatprep.subr.bf16.mxu0 0
      %443 = vmatpush2.bf16.msra.mxu0 0
      %444 = vmatprep.mubr.bf16.mxu0 0
      %445 = vmatmul.mubr.bf16.gmra.mxu0 %v332
      %v446 = vpop.f32.mrf.mxu0
      %v447 = vadd.f32 %v266, %v446
      %v448 = vpop.f32.mrf.mxu0
      %v449 = vpop.f32.mrf.mxu0
      %v450 = vadd.f32 %v266, %v449
      %v451 = vpop.f32.mrf.mxu0
      %452 = vmatprep.mubr.bf16.mxu0 0
      %453 = vmatmul.mubr.bf16.gmra.mxu0 %v333
      %v454 = vpop.f32.mrf.mxu0
      %v455 = vadd.f32 %v266, %v454
      %v456 = vpop.f32.mrf.mxu0
      %v457 = vpop.f32.mrf.mxu0
      %v458 = vadd.f32 %v266, %v457
      %v459 = vpop.f32.mrf.mxu0
      %460 = vmatprep.mubr.bf16.mxu0 0
      %461 = vmatmul.mubr.bf16.gmra.mxu0 %v334
      %v462 = vpop.f32.mrf.mxu0
      %v463 = vadd.f32 %v266, %v462
      %v464 = vpop.f32.mrf.mxu0
      %v465 = vpop.f32.mrf.mxu0
      %v466 = vadd.f32 %v266, %v465
      %v467 = vpop.f32.mrf.mxu0
      %468 = vmatprep.mubr.bf16.mxu0 0
      %469 = vmatmul.mubr.bf16.gmra.mxu0 %v335
      %v470 = vpop.f32.mrf.mxu0
      %v471 = vadd.f32 %v266, %v470
      %v472 = vpop.f32.mrf.mxu0
      %v473 = vpop.f32.mrf.mxu0
      %v474 = vadd.f32 %v266, %v473
      %v475 = vpop.f32.mrf.mxu0
      %476 = vmatprep.mubr.bf16.mxu0 0
      %477 = vmatmul.mubr.bf16.gmra.mxu0 %v336
      %v478 = vpop.f32.mrf.mxu0
      %v479 = vadd.f32 %v266, %v478
      %v480 = vpop.f32.mrf.mxu0
      %v481 = vpop.f32.mrf.mxu0
      %v482 = vadd.f32 %v266, %v481
      %v483 = vpop.f32.mrf.mxu0
      %484 = vmatprep.mubr.bf16.mxu0 0
      %485 = vmatmul.mubr.bf16.gmra.mxu0 %v337
      %v486 = vpop.f32.mrf.mxu0
      %v487 = vadd.f32 %v266, %v486
      %v488 = vpop.f32.mrf.mxu0
      %v489 = vpop.f32.mrf.mxu0
      %v490 = vadd.f32 %v266, %v489
      %v491 = vpop.f32.mrf.mxu0
      %492 = vmatprep.mubr.bf16.mxu0 0
      %493 = vmatmul.mubr.bf16.gmra.mxu0 %v338
      %v494 = vpop.f32.mrf.mxu0
      %v495 = vadd.f32 %v266, %v494
      %v496 = vpop.f32.mrf.mxu0
      %v497 = vpop.f32.mrf.mxu0
      %v498 = vadd.f32 %v266, %v497
      %v499 = vpop.f32.mrf.mxu0
      %500 = vmatprep.mubr.bf16.mxu0 0
      %501 = vmatmul.mubr.bf16.gmra.mxu0 %v339
      %v502 = vpop.f32.mrf.mxu0
      %v503 = vadd.f32 %v266, %v502
      %v504 = vpop.f32.mrf.mxu0
      %v505 = vpop.f32.mrf.mxu0
      %v506 = vadd.f32 %v266, %v505
      %v507 = vpop.f32.mrf.mxu0
      %508 = vmatprep.mubr.bf16.mxu0 0
      %509 = vmatmul.mubr.bf16.gmra.mxu0 %v340
      %v510 = vpop.f32.mrf.mxu0
      %v511 = vadd.f32 %v266, %v510
      %v512 = vpop.f32.mrf.mxu0
      %v513 = vpop.f32.mrf.mxu0
      %v514 = vadd.f32 %v266, %v513
      %v515 = vpop.f32.mrf.mxu0
      %516 = vmatprep.mubr.bf16.mxu0 0
      %517 = vmatmul.mubr.bf16.gmra.mxu0 %v341
      %v518 = vpop.f32.mrf.mxu0
      %v519 = vadd.f32 %v266, %v518
      %v520 = vpop.f32.mrf.mxu0
      %v521 = vpop.f32.mrf.mxu0
      %v522 = vadd.f32 %v266, %v521
      %v523 = vpop.f32.mrf.mxu0
      %524 = vmatprep.mubr.bf16.mxu0 0
      %525 = vmatmul.mubr.bf16.gmra.mxu0 %v342
      %v526 = vpop.f32.mrf.mxu0
      %v527 = vadd.f32 %v266, %v526
      %v528 = vpop.f32.mrf.mxu0
      %v529 = vpop.f32.mrf.mxu0
      %v530 = vadd.f32 %v266, %v529
      %v531 = vpop.f32.mrf.mxu0
      %532 = vmatprep.mubr.bf16.mxu0 0
      %533 = vmatmul.mubr.bf16.gmra.mxu0 %v343
      %v534 = vpop.f32.mrf.mxu0
      %v535 = vadd.f32 %v266, %v534
      %v536 = vpop.f32.mrf.mxu0
      %v537 = vpop.f32.mrf.mxu0
      %v538 = vadd.f32 %v266, %v537
      %v539 = vpop.f32.mrf.mxu0
      %540 = vmatprep.mubr.bf16.mxu0 0
      %541 = vmatmul.mubr.bf16.gmra.mxu0 %v344
      %v542 = vpop.f32.mrf.mxu0
      %v543 = vadd.f32 %v266, %v542
      %v544 = vpop.f32.mrf.mxu0
      %v545 = vpop.f32.mrf.mxu0
      %v546 = vadd.f32 %v266, %v545
      %v547 = vpop.f32.mrf.mxu0
      %548 = vmatprep.mubr.bf16.mxu0 0
      %549 = vmatmul.mubr.bf16.gmra.mxu0 %v345
      %v550 = vpop.f32.mrf.mxu0
      %v551 = vadd.f32 %v266, %v550
      %v552 = vpop.f32.mrf.mxu0
      %v553 = vpop.f32.mrf.mxu0
      %v554 = vadd.f32 %v266, %v553
      %v555 = vpop.f32.mrf.mxu0
      %556 = vmatprep.mubr.bf16.mxu0 0
      %557 = vmatmul.mubr.bf16.gmra.mxu0 %v346
      %v558 = vpop.f32.mrf.mxu0
      %v559 = vadd.f32 %v266, %v558
      %v560 = vpop.f32.mrf.mxu0
      %v561 = vpop.f32.mrf.mxu0
      %v562 = vadd.f32 %v266, %v561
      %v563 = vpop.f32.mrf.mxu0
      %564 = vmatprep.mubr.bf16.mxu0 0
      %565 = vmatmul.mubr.bf16.gmra.mxu0 %v347
      %v566 = vpop.f32.mrf.mxu0
      %v567 = vadd.f32 %v266, %v566
      %v568 = vpop.f32.mrf.mxu0
      %v569 = vpop.f32.mrf.mxu0
      %v570 = vadd.f32 %v266, %v569
      %v571 = vpop.f32.mrf.mxu0
      %572 = vdwg.mxu0
      %v573 = vadd.f32 %v447, %v450
      %v574 = vadd.f32 %v573, %v455
      %v575 = vadd.f32 %v574, %v458
      %v576 = vadd.f32 %v575, %v463
      %v577 = vadd.f32 %v576, %v466
      %v578 = vadd.f32 %v577, %v471
      %v579 = vadd.f32 %v578, %v474
      %v580 = vadd.f32 %v579, %v479
      %v581 = vadd.f32 %v580, %v482
      %v582 = vadd.f32 %v581, %v487
      %v583 = vadd.f32 %v582, %v490
      %v584 = vadd.f32 %v583, %v495
      %v585 = vadd.f32 %v584, %v498
      %v586 = vadd.f32 %v585, %v503
      %v587 = vadd.f32 %v586, %v506
      %v588 = vadd.f32 %v587, %v511
      %v589 = vadd.f32 %v588, %v514
      %v590 = vadd.f32 %v589, %v519
      %v591 = vadd.f32 %v590, %v522
      %v592 = vadd.f32 %v591, %v527
      %v593 = vadd.f32 %v592, %v530
      %v594 = vadd.f32 %v593, %v535
      %v595 = vadd.f32 %v594, %v538
      %v596 = vadd.f32 %v595, %v543
      %v597 = vadd.f32 %v596, %v546
      %v598 = vadd.f32 %v597, %v551
      %v599 = vadd.f32 %v598, %v554
      %v600 = vadd.f32 %v599, %v559
      %v601 = vadd.f32 %v600, %v562
      %v602 = vadd.f32 %v601, %v567
      %v603 = vadd.f32 %v602, %v570
      %v604 = vrot.slane %v603, 4
      %v605 = vadd.f32 %v603, %v604
      %v606 = vrot.slane %v605, 2
      %v607 = vadd.f32 %v605, %v606
      %v608 = vrot.slane %v607, 1
      %v609 = vadd.f32 %v607, %v608
      %v610 = vmul.f32 %v447, %v447
      %v611 = vmul.f32 %v450, %v450
      %v612 = vmul.f32 %v455, %v455
      %v613 = vmul.f32 %v458, %v458
      %v614 = vmul.f32 %v463, %v463
      %v615 = vmul.f32 %v466, %v466
      %v616 = vmul.f32 %v471, %v471
      %v617 = vmul.f32 %v474, %v474
      %v618 = vmul.f32 %v479, %v479
      %v619 = vmul.f32 %v482, %v482
      %v620 = vmul.f32 %v487, %v487
      %v621 = vmul.f32 %v490, %v490
      %v622 = vmul.f32 %v495, %v495
      %v623 = vmul.f32 %v498, %v498
      %v624 = vmul.f32 %v503, %v503
      %v625 = vmul.f32 %v506, %v506
      %v626 = vmul.f32 %v511, %v511
      %v627 = vmul.f32 %v514, %v514
      %v628 = vmul.f32 %v519, %v519
      %v629 = vmul.f32 %v522, %v522
      %v630 = vmul.f32 %v527, %v527
      %v631 = vmul.f32 %v530, %v530
      %v632 = vmul.f32 %v535, %v535
      %v633 = vmul.f32 %v538, %v538
      %v634 = vmul.f32 %v543, %v543
      %v635 = vmul.f32 %v546, %v546
      %v636 = vmul.f32 %v551, %v551
      %v637 = vmul.f32 %v554, %v554
      %v638 = vmul.f32 %v559, %v559
      %v639 = vmul.f32 %v562, %v562
      %v640 = vmul.f32 %v567, %v567
      %v641 = vmul.f32 %v570, %v570
      %v642 = vadd.f32 %v610, %v611
      %v643 = vadd.f32 %v642, %v612
      %v644 = vadd.f32 %v643, %v613
      %v645 = vadd.f32 %v644, %v614
      %v646 = vadd.f32 %v645, %v615
      %v647 = vadd.f32 %v646, %v616
      %v648 = vadd.f32 %v647, %v617
      %v649 = vadd.f32 %v648, %v618
      %v650 = vadd.f32 %v649, %v619
      %v651 = vadd.f32 %v650, %v620
      %v652 = vadd.f32 %v651, %v621
      %v653 = vadd.f32 %v652, %v622
      %v654 = vadd.f32 %v653, %v623
      %v655 = vadd.f32 %v654, %v624
      %v656 = vadd.f32 %v655, %v625
      %v657 = vadd.f32 %v656, %v626
      %v658 = vadd.f32 %v657, %v627
      %v659 = vadd.f32 %v658, %v628
      %v660 = vadd.f32 %v659, %v629
      %v661 = vadd.f32 %v660, %v630
      %v662 = vadd.f32 %v661, %v631
      %v663 = vadd.f32 %v662, %v632
      %v664 = vadd.f32 %v663, %v633
      %v665 = vadd.f32 %v664, %v634
      %v666 = vadd.f32 %v665, %v635
      %v667 = vadd.f32 %v666, %v636
      %v668 = vadd.f32 %v667, %v637
      %v669 = vadd.f32 %v668, %v638
      %v670 = vadd.f32 %v669, %v639
      %v671 = vadd.f32 %v670, %v640
      %v672 = vadd.f32 %v671, %v641
      %v673 = vrot.slane %v672, 4
      %v674 = vadd.f32 %v672, %v673
      %v675 = vrot.slane %v674, 2
      %v676 = vadd.f32 %v674, %v675
      %v677 = vrot.slane %v676, 1
      %v678 = vadd.f32 %v676, %v677
      %vm679 = vcmask 1040384
      %v680 = vsel %vm679, %v609, %v678
      %681 = vst [vmem:[%s211] sm:$0x3] %v680
      %v682 = vpack.c.bf16 %v450, %v447
      %v683 = vpack.c.bf16 %v458, %v455
      %v684 = vpack.c.bf16 %v466, %v463
      %v685 = vpack.c.bf16 %v474, %v471
      %v686 = vpack.c.bf16 %v482, %v479
      %v687 = vpack.c.bf16 %v490, %v487
      %v688 = vpack.c.bf16 %v498, %v495
      %v689 = vpack.c.bf16 %v506, %v503
      %v690 = vpack.c.bf16 %v514, %v511
      %v691 = vpack.c.bf16 %v522, %v519
      %v692 = vpack.c.bf16 %v530, %v527
      %v693 = vpack.c.bf16 %v538, %v535
      %v694 = vpack.c.bf16 %v546, %v543
      %v695 = vpack.c.bf16 %v554, %v551
      %v696 = vpack.c.bf16 %v562, %v559
      %v697 = vpack.c.bf16 %v570, %v567
      %v714 = vunpack.c.l.b16 %v682
      %v715 = vunpack.c.h.b16 %v682
      %v716 = vunpack.c.l.b16 %v683
      %v717 = vunpack.c.h.b16 %v683
      %v718 = vunpack.c.l.b16 %v684
      %v719 = vunpack.c.h.b16 %v684
      %v720 = vunpack.c.l.b16 %v685
      %v721 = vunpack.c.h.b16 %v685
      %v722 = vunpack.c.l.b16 %v686
      %v723 = vunpack.c.h.b16 %v686
      %v724 = vunpack.c.l.b16 %v687
      %v725 = vunpack.c.h.b16 %v687
      %v726 = vunpack.c.l.b16 %v688
      %v727 = vunpack.c.h.b16 %v688
      %v728 = vunpack.c.l.b16 %v689
      %v729 = vunpack.c.h.b16 %v689
      %v730 = vunpack.c.l.b16 %v690
      %v731 = vunpack.c.h.b16 %v690
      %v732 = vunpack.c.l.b16 %v691
      %v733 = vunpack.c.h.b16 %v691
      %v734 = vunpack.c.l.b16 %v692
      %v735 = vunpack.c.h.b16 %v692
      %v736 = vunpack.c.l.b16 %v693
      %v737 = vunpack.c.h.b16 %v693
      %v738 = vunpack.c.l.b16 %v694
      %v739 = vunpack.c.h.b16 %v694
      %v740 = vunpack.c.l.b16 %v695
      %v741 = vunpack.c.h.b16 %v695
      %v742 = vunpack.c.l.b16 %v696
      %v743 = vunpack.c.h.b16 %v696
      %v744 = vunpack.c.l.b16 %v697
      %v745 = vunpack.c.h.b16 %v697
      %v746 = vpack.c.b16 %v714, %v714
      %v747 = vpack.c.b16 %v715, %v715
      %v748 = vpack.c.b16 %v716, %v716
      %v749 = vpack.c.b16 %v717, %v717
      %v750 = vpack.c.b16 %v718, %v718
      %v751 = vpack.c.b16 %v719, %v719
      %v752 = vpack.c.b16 %v720, %v720
      %v753 = vpack.c.b16 %v721, %v721
      %v754 = vpack.c.b16 %v722, %v722
      %v755 = vpack.c.b16 %v723, %v723
      %v756 = vpack.c.b16 %v724, %v724
      %v757 = vpack.c.b16 %v725, %v725
      %v758 = vpack.c.b16 %v726, %v726
      %v759 = vpack.c.b16 %v727, %v727
      %v760 = vpack.c.b16 %v728, %v728
      %v761 = vpack.c.b16 %v729, %v729
      %v762 = vpack.c.b16 %v730, %v730
      %v763 = vpack.c.b16 %v731, %v731
      %v764 = vpack.c.b16 %v732, %v732
      %v765 = vpack.c.b16 %v733, %v733
      %v766 = vpack.c.b16 %v734, %v734
      %v767 = vpack.c.b16 %v735, %v735
      %v768 = vpack.c.b16 %v736, %v736
      %v769 = vpack.c.b16 %v737, %v737
      %v770 = vpack.c.b16 %v738, %v738
      %v771 = vpack.c.b16 %v739, %v739
      %v772 = vpack.c.b16 %v740, %v740
      %v773 = vpack.c.b16 %v741, %v741
      %v774 = vpack.c.b16 %v742, %v742
      %v775 = vpack.c.b16 %v743, %v743
      %v776 = vpack.c.b16 %v744, %v744
      %v777 = vpack.c.b16 %v745, %v745
      %810 = vst [vmem:[%s206] sm:$0xf] %v746
      %811 = vst [vmem:[%s206 + $0x4] sm:$0xf] %v747
      %812 = vst [vmem:[%s206 + $0x8] sm:$0xf] %v748
      %813 = vst [vmem:[%s206 + $0xc] sm:$0xf] %v749
      %814 = vst [vmem:[%s206 + $0x10] sm:$0xf] %v750
      %815 = vst [vmem:[%s206 + $0x14] sm:$0xf] %v751
      %816 = vst [vmem:[%s206 + $0x18] sm:$0xf] %v752
      %817 = vst [vmem:[%s206 + $0x1c] sm:$0xf] %v753
      %818 = vst [vmem:[%s206 + $0x20] sm:$0xf] %v754
      %819 = vst [vmem:[%s206 + $0x24] sm:$0xf] %v755
      %820 = vst [vmem:[%s206 + $0x28] sm:$0xf] %v756
      %821 = vst [vmem:[%s206 + $0x2c] sm:$0xf] %v757
      %822 = vst [vmem:[%s206 + $0x30] sm:$0xf] %v758
      %823 = vst [vmem:[%s206 + $0x34] sm:$0xf] %v759
      %824 = vst [vmem:[%s206 + $0x38] sm:$0xf] %v760
      %825 = vst [vmem:[%s206 + $0x3c] sm:$0xf] %v761
      %826 = vst [vmem:[%s206 + $0x40] sm:$0xf] %v762
      %827 = vst [vmem:[%s206 + $0x44] sm:$0xf] %v763
      %828 = vst [vmem:[%s206 + $0x48] sm:$0xf] %v764
      %829 = vst [vmem:[%s206 + $0x4c] sm:$0xf] %v765
      %830 = vst [vmem:[%s206 + $0x50] sm:$0xf] %v766
      %831 = vst [vmem:[%s206 + $0x54] sm:$0xf] %v767
      %832 = vst [vmem:[%s206 + $0x58] sm:$0xf] %v768
      %833 = vst [vmem:[%s206 + $0x5c] sm:$0xf] %v769
      %834 = vst [vmem:[%s206 + $0x60] sm:$0xf] %v770
      %835 = vst [vmem:[%s206 + $0x64] sm:$0xf] %v771
      %836 = vst [vmem:[%s206 + $0x68] sm:$0xf] %v772
      %837 = vst [vmem:[%s206 + $0x6c] sm:$0xf] %v773
      %838 = vst [vmem:[%s206 + $0x70] sm:$0xf] %v774
      %839 = vst [vmem:[%s206 + $0x74] sm:$0xf] %v775
      %840 = vst [vmem:[%s206 + $0x78] sm:$0xf] %v776
      %841 = vst [vmem:[%s206 + $0x7c] sm:$0xf] %v777
      %s842 = smul.u32 32, %s16
      %p843 = scmp.lt.s32.totalorder %s842, 63
      %s844 = scalar_select %p843, %s842, 63
      %s845 = smul.addr %s844, 4
      %s846 = scalar_lea.vmem %s3, %s845
      %p847 = scmp.lt.s32.totalorder %s16, 1
      %s848 = scalar_select %p847, %s16, 1
      %s849 = smul.addr %s848, 2
      %s850 = scalar_lea.vmem %s4, %s849
      // Predicated region
      $region33: #{se_block_forward.4} parent=31 // pred_check
        %p851 = pneg %p102
      $region34: #{se_block_forward.4} parent=31 // pred_check_branch
        %853 = sbr.rel (%p851) target = $region36
      $region35: #{se_block_forward.4} parent=31 // pred_region
        %s854 = smul.u32 32, %s16
      $region36: #{se_block_forward.4} parent=31 // pred_fallthru
        _
      // Predicated region
      $region37: #{se_block_forward.4} parent=31 // pred_check
        %p855 = pneg %p128
      $region38: #{se_block_forward.4} parent=31 // pred_check_branch
        %857 = sbr.rel (%p855) target = $region40
      $region39: #{se_block_forward.4} parent=31 // pred_region
        _
      $region40: #{se_block_forward.4} parent=31 // pred_fallthru
        _
    $region32: #{se_block_forward.4} parent=5 // pred_fallthru
      _
    %p858 = scmp.le.s32.totalorder 2, %s11
    // Predicated region
    $region41: #{se_block_forward.4} parent=5 // pred_check
      %p859 = pneg %p858
    $region42: #{se_block_forward.4} parent=5 // pred_check_branch
      %861 = sbr.rel (%p859) target = $region44
    $region43: #{se_block_forward.4} parent=5 // pred_region
      %s862 = ssub.s32 %s11, 2
      // Predicated region
      $region45: #{se_block_forward.4} parent=43 // pred_check
        %p863 = pneg %p108
      $region46: #{se_block_forward.4} parent=43 // pred_check_branch
        %865 = sbr.rel (%p863) target = $region48
      $region47: #{se_block_forward.4} parent=43 // pred_region
        %s866 = smul.u32 32, %s17
        %p867 = scmp.lt.s32.totalorder %s866, 63
        %s868 = scalar_select %p867, %s866, 63
        %s869 = smul.addr %s868, 4
        %s870 = scalar_lea.vmem %s3, %s869
      $region48: #{se_block_forward.4} parent=43 // pred_fallthru
        _
      // Predicated region
      $region49: #{se_block_forward.4} parent=43 // pred_check
        %p871 = pneg %p134
      $region50: #{se_block_forward.4} parent=43 // pred_check_branch
        %873 = sbr.rel (%p871) target = $region52
      $region51: #{se_block_forward.4} parent=43 // pred_region
        %p874 = scmp.lt.s32.totalorder %s17, 1
        %s875 = scalar_select %p874, %s17, 1
        %s876 = smul.addr %s875, 2
        %s877 = scalar_lea.vmem %s4, %s876
      $region52: #{se_block_forward.4} parent=43 // pred_fallthru
        _
    $region44: #{se_block_forward.4} parent=5 // pred_fallthru
      _
  $region6: #{se_block_forward.4} parent=0 // loop_footer
    %s15 = sadd.s32 1, %s11
  $region7: #{se_block_forward.4} parent=0 // loop_footer_branch
    %10 = sbr.rel target = $region3
  $region8: #{se_block_forward.4} parent=0 // loop_exit
    _

// kernel: se_block_forward.6
$region0: #{se_block_forward.6}
  #allocation0 [shape = 'u32[]', space=smem, size = 0x4, offset = 0x4, fixed_abs, tag = 'smem constant byte address 0x4 - core index']
  #allocation1 [shape = 'u32[144,128]{1,0:T(1,128)}', space=vmem, size = 0x12000, scoped, tag = 'internal scratch']
  %s0 = inlined_call_operand.vmem [shape: bf16[512,128], index: 0, kind: input, shape index: {}]
  %s1 = inlined_call_operand.vmem [shape: f32[4,128], index: 1, kind: input, shape index: {}]
  %s2 = inlined_call_operand.vmem [shape: bf16[128,128], index: 2, kind: input, shape index: {}]
  %s3 = inlined_call_operand.vmem [shape: f32[1,128], index: 3, kind: input, shape index: {}]
  %s4 = inlined_call_operand.vmem [shape: bf16[512,128], index: 4, kind: input, shape index: {}]
  %s5 = inlined_call_operand.vmem [shape: bf16[128,128], index: 5, kind: input, shape index: {}]
  %s6 = inlined_call_operand.vmem [shape: f32[1,128], index: 6, kind: input, shape index: {}]
  %s7 = inlined_call_operand.vmem [shape: bf16[512,128], index: 7, kind: output, shape index: {0}]
  %s8 = inlined_call_operand.vmem [shape: bf16[512,128], index: 8, kind: output, shape index: {1}]
  %s9 = inlined_call_operand.vmem [shape: f32[2,2,128], index: 9, kind: output, shape index: {2}]
  %10 = xla_tuple %s7, %s8, %s9
  %s11 = sld [smem:[#allocation0]]
  $region77: #{se_block_forward.6} parent=0
    _
  %s13 = ssub.s32 1, %s11
  %s14 = scalar_select 0, %s13, %s11
  loop: start=0, step=1, limit=4
  $region2: #{se_block_forward.6} parent=0 // loop_pre_header
    _
  $region3: #{se_block_forward.6} parent=0 // loop_header
    %s16 = sphi 0, %s20
    %p17 = scmp.ge.s32.totalorder %s16, 4
    %s26 = sphi 0, %s28
    %s29 = sphi 0, %s26
    %s30 = sphi 0, %s29
    %s46 = sphi 0, %s30
    %s50 = sphi 0, %s50
    %s52 = sphi 0, %s50
    %s53 = sphi 0, %s52
    %s67 = sphi 0, %s53
    %s71 = sphi 0, %s71
    %s73 = sphi 0, %s71
    %s74 = sphi 0, %s73
    %s88 = sphi 0, %s74
    %s92 = sphi 0, %s92
    %s94 = sphi 0, %s92
    %s95 = sphi 0, %s94
    %s109 = sphi 0, %s95
    %s115 = sphi 0, %s117
    %s118 = sphi 0, %s115
    %s119 = sphi 0, %s118
    %s135 = sphi 0, %s119
    %s139 = sphi 0, %s139
    %s141 = sphi 0, %s139
    %s142 = sphi 0, %s141
    %s156 = sphi 0, %s142
    %s160 = sphi 0, %s160
    %s162 = sphi 0, %s160
    %s163 = sphi 0, %s162
    %s177 = sphi 0, %s163
    %s183 = sphi 0, %s185
    %s186 = sphi 0, %s183
    %s187 = sphi 0, %s186
    %s203 = sphi 0, %s187
    %s209 = sphi 0, %s211
    %s212 = sphi 0, %s209
    %s213 = sphi 0, %s212
    %s229 = sphi 0, %s213
    %s235 = sphi 0, %s237
    %s238 = sphi 0, %s235
    %s239 = sphi 0, %s238
    %s255 = sphi 0, %s239
  $region4: #{se_block_forward.6} parent=0 // loop_header_branch
    %19 = sbr.rel (%p17) target = $region8
  $region5: #{se_block_forward.6} parent=0 // loop_body
    %s21 = ssub.s32 %s16, 1
    %s22 = ssub.s32 %s16, 2
    %s23 = sadd.s32 %s16, 1
    %s24 = ssub.s32 %s16, %s23
    %p25 = scmp.eq.s32.totalorder %s24, 0
    %s27 = sadd.s32 %s26, 1
    %s28 = scalar_select %p25, %s26, %s27
    %p31 = pneg %p25
    %p32 = scmp.eq.s32.totalorder %s16, 1
    %p33 = por %p31, %p32
    %p34 = scmp.ne.s32.totalorder %s26, %s29
    %p35 = scmp.eq.s32.totalorder %s16, 0
    %p36 = por %p34, %p35
    %p37 = scmp.ne.s32.totalorder %s26, %s29
    %p38 = scmp.eq.s32.totalorder %s21, 1
    %p39 = por %p37, %p38
    %p40 = scmp.ne.s32.totalorder %s29, %s30
    %p41 = scmp.eq.s32.totalorder %s21, 0
    %p42 = por %p40, %p41
    %p43 = scmp.ne.s32.totalorder %s29, %s30
    %p44 = scmp.eq.s32.totalorder %s22, 1
    %p45 = por %p43, %p44
    %p47 = scmp.ne.s32.totalorder %s30, %s46
    %p48 = scmp.eq.s32.totalorder %s22, 0
    %p49 = por %p47, %p48
    %s51 = sadd.s32 %s50, 1
    %p54 = scmp.eq.s32.totalorder %s16, 1
    %p55 = scmp.ne.s32.totalorder %s50, %s52
    %p56 = scmp.eq.s32.totalorder %s16, 0
    %p57 = por %p55, %p56
    %p58 = scmp.ne.s32.totalorder %s50, %s52
    %p59 = scmp.eq.s32.totalorder %s21, 1
    %p60 = por %p58, %p59
    %p61 = scmp.ne.s32.totalorder %s52, %s53
    %p62 = scmp.eq.s32.totalorder %s21, 0
    %p63 = por %p61, %p62
    %p64 = scmp.ne.s32.totalorder %s52, %s53
    %p65 = scmp.eq.s32.totalorder %s22, 1
    %p66 = por %p64, %p65
    %p68 = scmp.ne.s32.totalorder %s53, %s67
    %p69 = scmp.eq.s32.totalorder %s22, 0
    %p70 = por %p68, %p69
    %s72 = sadd.s32 %s71, 1
    %p75 = scmp.eq.s32.totalorder %s16, 1
    %p76 = scmp.ne.s32.totalorder %s71, %s73
    %p77 = scmp.eq.s32.totalorder %s16, 0
    %p78 = por %p76, %p77
    %p79 = scmp.ne.s32.totalorder %s71, %s73
    %p80 = scmp.eq.s32.totalorder %s21, 1
    %p81 = por %p79, %p80
    %p82 = scmp.ne.s32.totalorder %s73, %s74
    %p83 = scmp.eq.s32.totalorder %s21, 0
    %p84 = por %p82, %p83
    %p85 = scmp.ne.s32.totalorder %s73, %s74
    %p86 = scmp.eq.s32.totalorder %s22, 1
    %p87 = por %p85, %p86
    %p89 = scmp.ne.s32.totalorder %s74, %s88
    %p90 = scmp.eq.s32.totalorder %s22, 0
    %p91 = por %p89, %p90
    %s93 = sadd.s32 %s92, 1
    %p96 = scmp.eq.s32.totalorder %s16, 1
    %p97 = scmp.ne.s32.totalorder %s92, %s94
    %p98 = scmp.eq.s32.totalorder %s16, 0
    %p99 = por %p97, %p98
    %p100 = scmp.ne.s32.totalorder %s92, %s94
    %p101 = scmp.eq.s32.totalorder %s21, 1
    %p102 = por %p100, %p101
    %p103 = scmp.ne.s32.totalorder %s94, %s95
    %p104 = scmp.eq.s32.totalorder %s21, 0
    %p105 = por %p103, %p104
    %p106 = scmp.ne.s32.totalorder %s94, %s95
    %p107 = scmp.eq.s32.totalorder %s22, 1
    %p108 = por %p106, %p107
    %p110 = scmp.ne.s32.totalorder %s95, %s109
    %p111 = scmp.eq.s32.totalorder %s22, 0
    %p112 = por %p110, %p111
    %s113 = ssub.s32 %s16, %s23
    %p114 = scmp.eq.s32.totalorder %s113, 0
    %s116 = sadd.s32 %s115, 1
    %s117 = scalar_select %p114, %s115, %s116
    %p120 = pneg %p114
    %p121 = scmp.eq.s32.totalorder %s16, 1
    %p122 = por %p120, %p121
    %p123 = scmp.ne.s32.totalorder %s115, %s118
    %p124 = scmp.eq.s32.totalorder %s16, 0
    %p125 = por %p123, %p124
    %p126 = scmp.ne.s32.totalorder %s115, %s118
    %p127 = scmp.eq.s32.totalorder %s21, 1
    %p128 = por %p126, %p127
    %p129 = scmp.ne.s32.totalorder %s118, %s119
    %p130 = scmp.eq.s32.totalorder %s21, 0
    %p131 = por %p129, %p130
    %p132 = scmp.ne.s32.totalorder %s118, %s119
    %p133 = scmp.eq.s32.totalorder %s22, 1
    %p134 = por %p132, %p133
    %p136 = scmp.ne.s32.totalorder %s119, %s135
    %p137 = scmp.eq.s32.totalorder %s22, 0
    %p138 = por %p136, %p137
    %s140 = sadd.s32 %s139, 1
    %p143 = scmp.eq.s32.totalorder %s16, 1
    %p144 = scmp.ne.s32.totalorder %s139, %s141
    %p145 = scmp.eq.s32.totalorder %s16, 0
    %p146 = por %p144, %p145
    %p147 = scmp.ne.s32.totalorder %s139, %s141
    %p148 = scmp.eq.s32.totalorder %s21, 1
    %p149 = por %p147, %p148
    %p150 = scmp.ne.s32.totalorder %s141, %s142
    %p151 = scmp.eq.s32.totalorder %s21, 0
    %p152 = por %p150, %p151
    %p153 = scmp.ne.s32.totalorder %s141, %s142
    %p154 = scmp.eq.s32.totalorder %s22, 1
    %p155 = por %p153, %p154
    %p157 = scmp.ne.s32.totalorder %s142, %s156
    %p158 = scmp.eq.s32.totalorder %s22, 0
    %p159 = por %p157, %p158
    %s161 = sadd.s32 %s160, 1
    %p164 = scmp.eq.s32.totalorder %s16, 1
    %p165 = scmp.ne.s32.totalorder %s160, %s162
    %p166 = scmp.eq.s32.totalorder %s16, 0
    %p167 = por %p165, %p166
    %p168 = scmp.ne.s32.totalorder %s160, %s162
    %p169 = scmp.eq.s32.totalorder %s21, 1
    %p170 = por %p168, %p169
    %p171 = scmp.ne.s32.totalorder %s162, %s163
    %p172 = scmp.eq.s32.totalorder %s21, 0
    %p173 = por %p171, %p172
    %p174 = scmp.ne.s32.totalorder %s162, %s163
    %p175 = scmp.eq.s32.totalorder %s22, 1
    %p176 = por %p174, %p175
    %p178 = scmp.ne.s32.totalorder %s163, %s177
    %p179 = scmp.eq.s32.totalorder %s22, 0
    %p180 = por %p178, %p179
    %s181 = ssub.s32 %s16, %s23
    %p182 = scmp.eq.s32.totalorder %s181, 0
    %s184 = sadd.s32 %s183, 1
    %s185 = scalar_select %p182, %s183, %s184
    %p188 = pneg %p182
    %p189 = scmp.eq.s32.totalorder %s16, 1
    %p190 = por %p188, %p189
    %p191 = scmp.ne.s32.totalorder %s183, %s186
    %p192 = scmp.eq.s32.totalorder %s16, 0
    %p193 = por %p191, %p192
    %p194 = scmp.ne.s32.totalorder %s183, %s186
    %p195 = scmp.eq.s32.totalorder %s21, 1
    %p196 = por %p194, %p195
    %p197 = scmp.ne.s32.totalorder %s186, %s187
    %p198 = scmp.eq.s32.totalorder %s21, 0
    %p199 = por %p197, %p198
    %p200 = scmp.ne.s32.totalorder %s186, %s187
    %p201 = scmp.eq.s32.totalorder %s22, 1
    %p202 = por %p200, %p201
    %p204 = scmp.ne.s32.totalorder %s187, %s203
    %p205 = scmp.eq.s32.totalorder %s22, 0
    %p206 = por %p204, %p205
    %s207 = ssub.s32 %s16, %s23
    %p208 = scmp.eq.s32.totalorder %s207, 0
    %s210 = sadd.s32 %s209, 1
    %s211 = scalar_select %p208, %s209, %s210
    %p214 = pneg %p208
    %p215 = scmp.eq.s32.totalorder %s16, 1
    %p216 = por %p214, %p215
    %p217 = scmp.ne.s32.totalorder %s209, %s212
    %p218 = scmp.eq.s32.totalorder %s16, 0
    %p219 = por %p217, %p218
    %p220 = scmp.ne.s32.totalorder %s209, %s212
    %p221 = scmp.eq.s32.totalorder %s21, 1
    %p222 = por %p220, %p221
    %p223 = scmp.ne.s32.totalorder %s212, %s213
    %p224 = scmp.eq.s32.totalorder %s21, 0
    %p225 = por %p223, %p224
    %p226 = scmp.ne.s32.totalorder %s212, %s213
    %p227 = scmp.eq.s32.totalorder %s22, 1
    %p228 = por %p226, %p227
    %p230 = scmp.ne.s32.totalorder %s213, %s229
    %p231 = scmp.eq.s32.totalorder %s22, 0
    %p232 = por %p230, %p231
    %s233 = ssub.s32 %s16, %s23
    %p234 = scmp.eq.s32.totalorder %s233, 0
    %s236 = sadd.s32 %s235, 1
    %s237 = scalar_select %p234, %s235, %s236
    %p240 = pneg %p234
    %p241 = scmp.eq.s32.totalorder %s16, 1
    %p242 = por %p240, %p241
    %p243 = scmp.ne.s32.totalorder %s235, %s238
    %p244 = scmp.eq.s32.totalorder %s16, 0
    %p245 = por %p243, %p244
    %p246 = scmp.ne.s32.totalorder %s235, %s238
    %p247 = scmp.eq.s32.totalorder %s21, 1
    %p248 = por %p246, %p247
    %p249 = scmp.ne.s32.totalorder %s238, %s239
    %p250 = scmp.eq.s32.totalorder %s21, 0
    %p251 = por %p249, %p250
    %p252 = scmp.ne.s32.totalorder %s238, %s239
    %p253 = scmp.eq.s32.totalorder %s22, 1
    %p254 = por %p252, %p253
    %p256 = scmp.ne.s32.totalorder %s239, %s255
    %p257 = scmp.eq.s32.totalorder %s22, 0
    %p258 = por %p256, %p257
    %p259 = scmp.le.s32.totalorder 1, %s16
    %p260 = scmp.lt.s32.totalorder %s16, 3
    %p261 = pnand %p259, %p260
    %p262 = pneg %p261
    // Predicated region
    $region9: #{se_block_forward.6} parent=5 // pred_check
      _
    $region10: #{se_block_forward.6} parent=5 // pred_check_branch
      %264 = sbr.rel (%p261) target = $region12
    $region11: #{se_block_forward.6} parent=5 // pred_region
      %s265 = ssub.s32 %s16, 1
      // Predicated region
      $region13: #{se_block_forward.6} parent=11 // pred_check
        %p266 = pneg %p63
      $region14: #{se_block_forward.6} parent=11 // pred_check_branch
        %268 = sbr.rel (%p266) target = $region16
      $region15: #{se_block_forward.6} parent=11 // pred_region
        _
      $region16: #{se_block_forward.6} parent=11 // pred_fallthru
        _
      // Predicated region
      $region17: #{se_block_forward.6} parent=11 // pred_check
        %p269 = pneg %p84
      $region18: #{se_block_forward.6} parent=11 // pred_check_branch
        %271 = sbr.rel (%p269) target = $region20
      $region19: #{se_block_forward.6} parent=11 // pred_region
        _
      $region20: #{se_block_forward.6} parent=11 // pred_fallthru
        _
      // Predicated region
      $region21: #{se_block_forward.6} parent=11 // pred_check
        %p272 = pneg %p105
      $region22: #{se_block_forward.6} parent=11 // pred_check_branch
        %274 = sbr.rel (%p272) target = $region24
      $region23: #{se_block_forward.6} parent=11 // pred_region
        _
      $region24: #{se_block_forward.6} parent=11 // pred_fallthru
        _
      // Predicated region
      $region25: #{se_block_forward.6} parent=11 // pred_check
        %p275 = pneg %p152
      $region26: #{se_block_forward.6} parent=11 // pred_check_branch
        %277 = sbr.rel (%p275) target = $region28
      $region27: #{se_block_forward.6} parent=11 // pred_region
        _
      $region28: #{se_block_forward.6} parent=11 // pred_fallthru
        _
      // Predicated region
      $region29: #{se_block_forward.6} parent=11 // pred_check
        %p278 = pneg %p173
      $region30: #{se_block_forward.6} parent=11 // pred_check_branch
        %280 = sbr.rel (%p278) target = $region32
      $region31: #{se_block_forward.6} parent=11 // pred_region
        _
      $region32: #{se_block_forward.6} parent=11 // pred_fallthru
        _
    $region12: #{se_block_forward.6} parent=5 // pred_fallthru
      _
    %p281 = scmp.lt.s32.totalorder %s16, 2
    // Predicated region
    $region33: #{se_block_forward.6} parent=5 // pred_check
      %p282 = pneg %p281
    $region34: #{se_block_forward.6} parent=5 // pred_check_branch
      %284 = sbr.rel (%p282) target = $region36
    $region35: #{se_block_forward.6} parent=5 // pred_region
      // Predicated region
      $region37: #{se_block_forward.6} parent=35 // pred_check
        %p285 = pneg %p36
      $region38: #{se_block_forward.6} parent=35 // pred_check_branch
        %287 = sbr.rel (%p285) target = $region40
      $region39: #{se_block_forward.6} parent=35 // pred_region
        %s288 = smul.u32 32, %s16
        %p289 = scmp.lt.s32.totalorder %s288, 63
        %s290 = scalar_select %p289, %s288, 63
        %s291 = smul.addr %s290, 4
        %s292 = scalar_lea.vmem %s0, %s291
        %s293 = smul.u32 32, %s16
      $region40: #{se_block_forward.6} parent=35 // pred_fallthru
        _
      // Predicated region
      $region41: #{se_block_forward.6} parent=35 // pred_check
        %p294 = pneg %p125
      $region42: #{se_block_forward.6} parent=35 // pred_check_branch
        %296 = sbr.rel (%p294) target = $region44
      $region43: #{se_block_forward.6} parent=35 // pred_region
        %s297 = smul.u32 32, %s16
        %p298 = scmp.lt.s32.totalorder %s297, 63
        %s299 = scalar_select %p298, %s297, 63
        %s300 = smul.addr %s299, 4
        %s301 = scalar_lea.vmem %s4, %s300
        %s302 = smul.u32 32, %s16
      $region44: #{se_block_forward.6} parent=35 // pred_fallthru
        _
    $region36: #{se_block_forward.6} parent=5 // pred_fallthru
      _
    %p303 = scmp.le.s32.totalorder 1, %s16
    %p304 = scmp.lt.s32.totalorder %s16, 3
    %p305 = pnand %p303, %p304
    %p306 = pneg %p305
    // Predicated region
    $region45: #{se_block_forward.6} parent=5 // pred_check
      _
    $region46: #{se_block_forward.6} parent=5 // pred_check_branch
      %308 = sbr.rel (%p305) target = $region48
    $region47: #{se_block_forward.6} parent=5 // pred_region
      %s309 = ssub.s32 %s16, 1
      %s310 = smul.u32 32, %s21
      %p311 = scmp.lt.s32.totalorder %s310, 63
      %s312 = scalar_select %p311, %s310, 63
      %s313 = smul.addr %s312, 4
      %s314 = scalar_lea.vmem %s0, %s313
      %p315 = pneg %p42
      %p316 = pneg %p39
      %p317 = pneg %p63
      %p318 = pneg %p60
      %p319 = pneg %p84
      %p320 = pneg %p81
      %p321 = pneg %p105
      %p322 = pneg %p102
      %s323 = smul.u32 32, %s21
      %p324 = scmp.lt.s32.totalorder %s323, 63
      %s325 = scalar_select %p324, %s323, 63
      %s326 = smul.addr %s325, 4
      %s327 = scalar_lea.vmem %s4, %s326
      %p328 = pneg %p131
      %p329 = pneg %p128
      %p330 = pneg %p152
      %p331 = pneg %p149
      %p332 = pneg %p173
      %p333 = pneg %p170
      %p334 = pneg %p199
      %p335 = pneg %p196
      %s336 = smul.u32 32, %s21
      %p337 = scmp.lt.s32.totalorder %s336, 63
      %s338 = scalar_select %p337, %s336, 63
      %s339 = smul.addr %s338, 4
      %s340 = scalar_lea.vmem %s7, %s339
      %p341 = pneg %p225
      %p342 = pneg %p222
      %s343 = smul.u32 32, %s21
      %p344 = scmp.lt.s32.totalorder %s343, 63
      %s345 = scalar_select %p344, %s343, 63
      %s346 = smul.addr %s345, 4
      %s347 = scalar_lea.vmem %s8, %s346
      %p348 = pneg %p251
      %p349 = pneg %p248
      %p350 = scmp.lt.s32.totalorder %s21, 1
      %s351 = scalar_select %p350, %s21, 1
      %s352 = smul.addr %s351, 2
      %s353 = scalar_lea.vmem %s9, %s352
      %s354 = smul.u32 32, %s21
      %p355 = scmp.lt.s32.totalorder %s354, 63
      %s356 = scalar_select %p355, %s354, 63
      %s357 = smul.addr %s356, 4
      %s358 = scalar_lea.vmem %s0, %s357
      %s359 = smul.u32 32, %s21
      %s360 = smul.u32 32, %s21
      %p361 = scmp.lt.s32.totalorder %s360, 63
      %s362 = scalar_select %p361, %s360, 63
      %s363 = smul.addr %s362, 4
      %s364 = scalar_lea.vmem %s4, %s363
      %s365 = smul.u32 32, %s21
      %s366 = smul.u32 32, %s21
      %p367 = scmp.lt.s32.totalorder %s366, 63
      %s368 = scalar_select %p367, %s366, 63
      %s369 = smul.addr %s368, 4
      %s370 = scalar_lea.vmem %s7, %s369
      %s371 = smul.u32 32, %s21
      %s372 = smul.u32 32, %s21
      %p373 = scmp.lt.s32.totalorder %s372, 63
      %s374 = scalar_select %p373, %s372, 63
      %s375 = smul.addr %s374, 4
      %s376 = scalar_lea.vmem %s8, %s375
      %s377 = smul.u32 32, %s21
      %p378 = scmp.lt.s32.totalorder %s21, 1
      %s379 = scalar_select %p378, %s21, 1
      %s380 = smul.addr %s379, 2
      %s381 = scalar_lea.vmem %s9, %s380
      %v383 = vld [vmem:[%s358] sm:$0xf]
      %v384 = vld [vmem:[%s358 + $0x4] sm:$0xf]
      %v385 = vld [vmem:[%s358 + $0x8] sm:$0xf]
      %v386 = vld [vmem:[%s358 + $0xc] sm:$0xf]
      %v387 = vld [vmem:[%s358 + $0x10] sm:$0xf]
      %v388 = vld [vmem:[%s358 + $0x14] sm:$0xf]
      %v389 = vld [vmem:[%s358 + $0x18] sm:$0xf]
      %v390 = vld [vmem:[%s358 + $0x1c] sm:$0xf]
      %v391 = vld [vmem:[%s358 + $0x20] sm:$0xf]
      %v392 = vld [vmem:[%s358 + $0x24] sm:$0xf]
      %v393 = vld [vmem:[%s358 + $0x28] sm:$0xf]
      %v394 = vld [vmem:[%s358 + $0x2c] sm:$0xf]
      %v395 = vld [vmem:[%s358 + $0x30] sm:$0xf]
      %v396 = vld [vmem:[%s358 + $0x34] sm:$0xf]
      %v397 = vld [vmem:[%s358 + $0x38] sm:$0xf]
      %v398 = vld [vmem:[%s358 + $0x3c] sm:$0xf]
      %v399 = vld [vmem:[%s358 + $0x40] sm:$0xf]
      %v400 = vld [vmem:[%s358 + $0x44] sm:$0xf]
      %v401 = vld [vmem:[%s358 + $0x48] sm:$0xf]
      %v402 = vld [vmem:[%s358 + $0x4c] sm:$0xf]
      %v403 = vld [vmem:[%s358 + $0x50] sm:$0xf]
      %v404 = vld [vmem:[%s358 + $0x54] sm:$0xf]
      %v405 = vld [vmem:[%s358 + $0x58] sm:$0xf]
      %v406 = vld [vmem:[%s358 + $0x5c] sm:$0xf]
      %v407 = vld [vmem:[%s358 + $0x60] sm:$0xf]
      %v408 = vld [vmem:[%s358 + $0x64] sm:$0xf]
      %v409 = vld [vmem:[%s358 + $0x68] sm:$0xf]
      %v410 = vld [vmem:[%s358 + $0x6c] sm:$0xf]
      %v411 = vld [vmem:[%s358 + $0x70] sm:$0xf]
      %v412 = vld [vmem:[%s358 + $0x74] sm:$0xf]
      %v413 = vld [vmem:[%s358 + $0x78] sm:$0xf]
      %v414 = vld [vmem:[%s358 + $0x7c] sm:$0xf]
      %v415 = vld [vmem:[%s1] sm:$0x1]
      %v416 = vld [vmem:[%s1 + $0x1] sm:$0x1]
      %v417 = vld [vmem:[%s1 + $0x2] sm:$0x1]
      %v418 = vld [vmem:[%s1 + $0x3] sm:$0x1]
      %v419 = vunpack.c.l.bf16 %v383
      %v420 = vunpack.c.l.bf16 %v384
      %v421 = vunpack.c.l.bf16 %v385
      %v422 = vunpack.c.l.bf16 %v386
      %v423 = vunpack.c.l.bf16 %v387
      %v424 = vunpack.c.l.bf16 %v388
      %v425 = vunpack.c.l.bf16 %v389
      %v426 = vunpack.c.l.bf16 %v390
      %v427 = vunpack.c.l.bf16 %v391
      %v428 = vunpack.c.l.bf16 %v392
      %v429 = vunpack.c.l.bf16 %v393
      %v430 = vunpack.c.l.bf16 %v394
      %v431 = vunpack.c.l.bf16 %v395
      %v432 = vunpack.c.l.bf16 %v396
      %v433 = vunpack.c.l.bf16 %v397
      %v434 = vunpack.c.l.bf16 %v398
      %v435 = vunpack.c.l.bf16 %v399
      %v436 = vunpack.c.l.bf16 %v400
      %v437 = vunpack.c.l.bf16 %v401
      %v438 = vunpack.c.l.bf16 %v402
      %v439 = vunpack.c.l.bf16 %v403
      %v440 = vunpack.c.l.bf16 %v404
      %v441 = vunpack.c.l.bf16 %v405
      %v442 = vunpack.c.l.bf16 %v406
      %v443 = vunpack.c.l.bf16 %v407
      %v444 = vunpack.c.l.bf16 %v408
      %v445 = vunpack.c.l.bf16 %v409
      %v446 = vunpack.c.l.bf16 %v410
      %v447 = vunpack.c.l.bf16 %v411
      %v448 = vunpack.c.l.bf16 %v412
      %v449 = vunpack.c.l.bf16 %v413
      %v450 = vunpack.c.l.bf16 %v414
      %v451 = vlaneseq
      %v452 = vshrl.u32 %v451, 7
      %v453 = vsub.s32 0, %v452
      %v454 = vrot.slane %v415, %v453
      %v455 = vsub.f32 %v419, %v454
      %v456 = vsub.f32 %v420, %v454
      %v457 = vsub.f32 %v421, %v454
      %v458 = vsub.f32 %v422, %v454
      %v459 = vsub.f32 %v423, %v454
      %v460 = vsub.f32 %v424, %v454
      %v461 = vsub.f32 %v425, %v454
      %v462 = vsub.f32 %v426, %v454
      %v463 = vsub.f32 %v427, %v454
      %v464 = vsub.f32 %v428, %v454
      %v465 = vsub.f32 %v429, %v454
      %v466 = vsub.f32 %v430, %v454
      %v467 = vsub.f32 %v431, %v454
      %v468 = vsub.f32 %v432, %v454
      %v469 = vsub.f32 %v433, %v454
      %v470 = vsub.f32 %v434, %v454
      %v471 = vsub.f32 %v435, %v454
      %v472 = vsub.f32 %v436, %v454
      %v473 = vsub.f32 %v437, %v454
      %v474 = vsub.f32 %v438, %v454
      %v475 = vsub.f32 %v439, %v454
      %v476 = vsub.f32 %v440, %v454
      %v477 = vsub.f32 %v441, %v454
      %v478 = vsub.f32 %v442, %v454
      %v479 = vsub.f32 %v443, %v454
      %v480 = vsub.f32 %v444, %v454
      %v481 = vsub.f32 %v445, %v454
      %v482 = vsub.f32 %v446, %v454
      %v483 = vsub.f32 %v447, %v454
      %v484 = vsub.f32 %v448, %v454
      %v485 = vsub.f32 %v449, %v454
      %v486 = vsub.f32 %v450, %v454
      %v487 = vadd.f32 %v416, 1e-05
      %v488 = vrsqrt.pop %v487
      %v489 = vlaneseq
      %v490 = vshrl.u32 %v489, 7
      %v491 = vsub.s32 0, %v490
      %v492 = vrot.slane %v488, %v491
      %v493 = vmul.f32 %v455, %v492
      %v494 = vmul.f32 %v456, %v492
      %v495 = vmul.f32 %v457, %v492
      %v496 = vmul.f32 %v458, %v492
      %v497 = vmul.f32 %v459, %v492
      %v498 = vmul.f32 %v460, %v492
      %v499 = vmul.f32 %v461, %v492
      %v500 = vmul.f32 %v462, %v492
      %v501 = vmul.f32 %v463, %v492
      %v502 = vmul.f32 %v464, %v492
      %v503 = vmul.f32 %v465, %v492
      %v504 = vmul.f32 %v466, %v492
      %v505 = vmul.f32 %v467, %v492
      %v506 = vmul.f32 %v468, %v492
      %v507 = vmul.f32 %v469, %v492
      %v508 = vmul.f32 %v470, %v492
      %v509 = vmul.f32 %v471, %v492
      %v510 = vmul.f32 %v472, %v492
      %v511 = vmul.f32 %v473, %v492
      %v512 = vmul.f32 %v474, %v492
      %v513 = vmul.f32 %v475, %v492
      %v514 = vmul.f32 %v476, %v492
      %v515 = vmul.f32 %v477, %v492
      %v516 = vmul.f32 %v478, %v492
      %v517 = vmul.f32 %v479, %v492
      %v518 = vmul.f32 %v480, %v492
      %v519 = vmul.f32 %v481, %v492
      %v520 = vmul.f32 %v482, %v492
      %v521 = vmul.f32 %v483, %v492
      %v522 = vmul.f32 %v484, %v492
      %v523 = vmul.f32 %v485, %v492
      %v524 = vmul.f32 %v486, %v492
      %v525 = vlaneseq
      %v526 = vshrl.u32 %v525, 7
      %v527 = vsub.s32 0, %v526
      %v528 = vrot.slane %v417, %v527
      %v529 = vmul.f32 %v493, %v528
      %v530 = vmul.f32 %v494, %v528
      %v531 = vmul.f32 %v495, %v528
      %v532 = vmul.f32 %v496, %v528
      %v533 = vmul.f32 %v497, %v528
      %v534 = vmul.f32 %v498, %v528
      %v535 = vmul.f32 %v499, %v528
      %v536 = vmul.f32 %v500, %v528
      %v537 = vmul.f32 %v501, %v528
      %v538 = vmul.f32 %v502, %v528
      %v539 = vmul.f32 %v503, %v528
      %v540 = vmul.f32 %v504, %v528
      %v541 = vmul.f32 %v505, %v528
      %v542 = vmul.f32 %v506, %v528
      %v543 = vmul.f32 %v507, %v528
      %v544 = vmul.f32 %v508, %v528
      %v545 = vmul.f32 %v509, %v528
      %v546 = vmul.f32 %v510, %v528
      %v547 = vmul.f32 %v511, %v528
      %v548 = vmul.f32 %v512, %v528
      %v549 = vmul.f32 %v513, %v528
      %v550 = vmul.f32 %v514, %v528
      %v551 = vmul.f32 %v515, %v528
      %v552 = vmul.f32 %v516, %v528
      %v553 = vmul.f32 %v517, %v528
      %v554 = vmul.f32 %v518, %v528
      %v555 = vmul.f32 %v519, %v528
      %v556 = vmul.f32 %v520, %v528
      %v557 = vmul.f32 %v521, %v528
      %v558 = vmul.f32 %v522, %v528
      %v559 = vmul.f32 %v523, %v528
      %v560 = vmul.f32 %v524, %v528
      %v561 = vlaneseq
      %v562 = vshrl.u32 %v561, 7
      %v563 = vsub.s32 0, %v562
      %v564 = vrot.slane %v418, %v563
      %v565 = vadd.f32 %v529, %v564
      %v566 = vadd.f32 %v530, %v564
      %v567 = vadd.f32 %v531, %v564
      %v568 = vadd.f32 %v532, %v564
      %v569 = vadd.f32 %v533, %v564
      %v570 = vadd.f32 %v534, %v564
      %v571 = vadd.f32 %v535, %v564
      %v572 = vadd.f32 %v536, %v564
      %v573 = vadd.f32 %v537, %v564
      %v574 = vadd.f32 %v538, %v564
      %v575 = vadd.f32 %v539, %v564
      %v576 = vadd.f32 %v540, %v564
      %v577 = vadd.f32 %v541, %v564
      %v578 = vadd.f32 %v542, %v564
      %v579 = vadd.f32 %v543, %v564
      %v580 = vadd.f32 %v544, %v564
      %v581 = vadd.f32 %v545, %v564
      %v582 = vadd.f32 %v546, %v564
      %v583 = vadd.f32 %v547, %v564
      %v584 = vadd.f32 %v548, %v564
      %v585 = vadd.f32 %v549, %v564
      %v586 = vadd.f32 %v550, %v564
      %v587 = vadd.f32 %v551, %v564
      %v588 = vadd.f32 %v552, %v564
      %v589 = vadd.f32 %v553, %v564
      %v590 = vadd.f32 %v554, %v564
      %v591 = vadd.f32 %v555, %v564
      %v592 = vadd.f32 %v556, %v564
      %v593 = vadd.f32 %v557, %v564
      %v594 = vadd.f32 %v558, %v564
      %v595 = vadd.f32 %v559, %v564
      %v596 = vadd.f32 %v560, %v564
      %v597 = vmax.f32 %v565, 0.0
      %v598 = vmax.f32 %v566, 0.0
      %v599 = vmax.f32 %v567, 0.0
      %v600 = vmax.f32 %v568, 0.0
      %v601 = vmax.f32 %v569, 0.0
      %v602 = vmax.f32 %v570, 0.0
      %v603 = vmax.f32 %v571, 0.0
      %v604 = vmax.f32 %v572, 0.0
      %v605 = vmax.f32 %v573, 0.0
      %v606 = vmax.f32 %v574, 0.0
      %v607 = vmax.f32 %v575, 0.0
      %v608 = vmax.f32 %v576, 0.0
      %v609 = vmax.f32 %v577, 0.0
      %v610 = vmax.f32 %v578, 0.0
      %v611 = vmax.f32 %v579, 0.0
      %v612 = vmax.f32 %v580, 0.0
      %v613 = vmax.f32 %v581, 0.0
      %v614 = vmax.f32 %v582, 0.0
      %v615 = vmax.f32 %v583, 0.0
      %v616 = vmax.f32 %v584, 0.0
      %v617 = vmax.f32 %v585, 0.0
      %v618 = vmax.f32 %v586, 0.0
      %v619 = vmax.f32 %v587, 0.0
      %v620 = vmax.f32 %v588, 0.0
      %v621 = vmax.f32 %v589, 0.0
      %v622 = vmax.f32 %v590, 0.0
      %v623 = vmax.f32 %v591, 0.0
      %v624 = vmax.f32 %v592, 0.0
      %v625 = vmax.f32 %v593, 0.0
      %v626 = vmax.f32 %v594, 0.0
      %v627 = vmax.f32 %v595, 0.0
      %v628 = vmax.f32 %v596, 0.0
      %v629 = vpack.c.bf16 %v598, %v597
      %v630 = vpack.c.bf16 %v600, %v599
      %v631 = vpack.c.bf16 %v602, %v601
      %v632 = vpack.c.bf16 %v604, %v603
      %v633 = vpack.c.bf16 %v606, %v605
      %v634 = vpack.c.bf16 %v608, %v607
      %v635 = vpack.c.bf16 %v610, %v609
      %v636 = vpack.c.bf16 %v612, %v611
      %v637 = vpack.c.bf16 %v614, %v613
      %v638 = vpack.c.bf16 %v616, %v615
      %v639 = vpack.c.bf16 %v618, %v617
      %v640 = vpack.c.bf16 %v620, %v619
      %v641 = vpack.c.bf16 %v622, %v621
      %v642 = vpack.c.bf16 %v624, %v623
      %v643 = vpack.c.bf16 %v626, %v625
      %v644 = vpack.c.bf16 %v628, %v627
      %v645 = vld [vmem:[%s2] sm:$0xf]
      %v646 = vld [vmem:[%s2 + $0x4] sm:$0xf]
      %v647 = vld [vmem:[%s2 + $0x8] sm:$0xf]
      %v648 = vld [vmem:[%s2 + $0xc] sm:$0xf]
      %v649 = vld [vmem:[%s2 + $0x10] sm:$0xf]
      %v650 = vld [vmem:[%s2 + $0x14] sm:$0xf]
      %v651 = vld [vmem:[%s2 + $0x18] sm:$0xf]
      %v652 = vld [vmem:[%s2 + $0x1c] sm:$0xf]
      %v653 = vld [vmem:[%s2 + $0x20] sm:$0xf]
      %v654 = vld [vmem:[%s2 + $0x24] sm:$0xf]
      %v655 = vld [vmem:[%s2 + $0x28] sm:$0xf]
      %v656 = vld [vmem:[%s2 + $0x2c] sm:$0xf]
      %v657 = vld [vmem:[%s2 + $0x30] sm:$0xf]
      %v658 = vld [vmem:[%s2 + $0x34] sm:$0xf]
      %v659 = vld [vmem:[%s2 + $0x38] sm:$0xf]
      %v660 = vld [vmem:[%s2 + $0x3c] sm:$0xf]
      %v661 = vld [vmem:[%s3] sm:$0x1]
      %v663 = vlaneseq
      %v664 = vshrl.u32 %v663, 7
      %v665 = vsub.s32 0, %v664
      %v666 = vrot.slane %v661, %v665
      %v684 = vunpack.c.l.b16 %v645
      %v685 = vunpack.c.l.b16 %v646
      %v686 = vunpack.c.l.b16 %v647
      %v687 = vunpack.c.l.b16 %v648
      %v688 = vunpack.c.l.b16 %v649
      %v689 = vunpack.c.l.b16 %v650
      %v690 = vunpack.c.l.b16 %v651
      %v691 = vunpack.c.l.b16 %v652
      %v692 = vunpack.c.l.b16 %v653
      %v693 = vunpack.c.l.b16 %v654
      %v694 = vunpack.c.l.b16 %v655
      %v695 = vunpack.c.l.b16 %v656
      %v696 = vunpack.c.l.b16 %v657
      %v697 = vunpack.c.l.b16 %v658
      %v698 = vunpack.c.l.b16 %v659
      %v699 = vunpack.c.l.b16 %v660
      %v700 = vpack.c.b16 %v685, %v684
      %v701 = vpack.c.b16 %v687, %v686
      %v702 = vpack.c.b16 %v689, %v688
      %v703 = vpack.c.b16 %v691, %v690
      %v704 = vpack.c.b16 %v693, %v692
      %v705 = vpack.c.b16 %v695, %v694
      %v706 = vpack.c.b16 %v697, %v696
      %v707 = vpack.c.b16 %v699, %v698
      %716 = vmatprep.subr.bf16.mxu0 0
      %717 = vmatpush1.bf16.msra.mxu0 %v707
      %718 = vmatprep.subr.bf16.mxu0 0
      %719 = vmatpush1.bf16.msra.mxu0 %v706
      %720 = vmatprep.subr.bf16.mxu0 0
      %721 = vmatpush1.bf16.msra.mxu0 %v705
      %722 = vmatprep.subr.bf16.mxu0 0
      %723 = vmatpush1.bf16.msra.mxu0 %v704
      %724 = vmatprep.subr.bf16.mxu0 0
      %725 = vmatpush1.bf16.msra.mxu0 %v703
      %726 = vmatprep.subr.bf16.mxu0 0
      %727 = vmatpush1.bf16.msra.mxu0 %v702
      %728 = vmatprep.subr.bf16.mxu0 0
      %729 = vmatpush1.bf16.msra.mxu0 %v701
      %730 = vmatprep.subr.bf16.mxu0 0
      %731 = vmatpush1.bf16.msra.mxu0 %v700
      %732 = vmatprep.subr.bf16.mxu0 0
      %733 = vmatpush2.bf16.msra.mxu0 0
      %734 = vmatprep.subr.bf16.mxu0 0
      %735 = vmatpush2.bf16.msra.mxu0 0
      %736 = vmatprep.subr.bf16.mxu0 0
      %737 = vmatpush2.bf16.msra.mxu0 0
      %738 = vmatprep.subr.bf16.mxu0 0
      %739 = vmatpush2.bf16.msra.mxu0 0
      %740 = vmatprep.subr.bf16.mxu0 0
      %741 = vmatpush2.bf16.msra.mxu0 0
      %742 = vmatprep.subr.bf16.mxu0 0
      %743 = vmatpush2.bf16.msra.mxu0 0
      %744 = vmatprep.subr.bf16.mxu0 0
      %745 = vmatpush2.bf16.msra.mxu0 0
      %746 = vmatprep.subr.bf16.mxu0 0
      %747 = vmatpush2.bf16.msra.mxu0 0
      %748 = vmatprep.mubr.bf16.mxu0 0
      %749 = vmatmul.mubr.bf16.gmra.mxu0 %v629
      %v750 = vpop.f32.mrf.mxu0
      %v751 = vadd.f32 %v666, %v750
      %v752 = vpop.f32.mrf.mxu0
      %v753 = vpop.f32.mrf.mxu0
      %v754 = vadd.f32 %v666, %v753
      %v755 = vpop.f32.mrf.mxu0
      %756 = vmatprep.mubr.bf16.mxu0 0
      %757 = vmatmul.mubr.bf16.gmra.mxu0 %v630
      %v758 = vpop.f32.mrf.mxu0
      %v759 = vadd.f32 %v666, %v758
      %v760 = vpop.f32.mrf.mxu0
      %v761 = vpop.f32.mrf.mxu0
      %v762 = vadd.f32 %v666, %v761
      %v763 = vpop.f32.mrf.mxu0
      %764 = vmatprep.mubr.bf16.mxu0 0
      %765 = vmatmul.mubr.bf16.gmra.mxu0 %v631
      %v766 = vpop.f32.mrf.mxu0
      %v767 = vadd.f32 %v666, %v766
      %v768 = vpop.f32.mrf.mxu0
      %v769 = vpop.f32.mrf.mxu0
      %v770 = vadd.f32 %v666, %v769
      %v771 = vpop.f32.mrf.mxu0
      %772 = vmatprep.mubr.bf16.mxu0 0
      %773 = vmatmul.mubr.bf16.gmra.mxu0 %v632
      %v774 = vpop.f32.mrf.mxu0
      %v775 = vadd.f32 %v666, %v774
      %v776 = vpop.f32.mrf.mxu0
      %v777 = vpop.f32.mrf.mxu0
      %v778 = vadd.f32 %v666, %v777
      %v779 = vpop.f32.mrf.mxu0
      %780 = vmatprep.mubr.bf16.mxu0 0
      %781 = vmatmul.mubr.bf16.gmra.mxu0 %v633
      %v782 = vpop.f32.mrf.mxu0
      %v783 = vadd.f32 %v666, %v782
      %v784 = vpop.f32.mrf.mxu0
      %v785 = vpop.f32.mrf.mxu0
      %v786 = vadd.f32 %v666, %v785
      %v787 = vpop.f32.mrf.mxu0
      %788 = vmatprep.mubr.bf16.mxu0 0
      %789 = vmatmul.mubr.bf16.gmra.mxu0 %v634
      %v790 = vpop.f32.mrf.mxu0
      %v791 = vadd.f32 %v666, %v790
      %v792 = vpop.f32.mrf.mxu0
      %v793 = vpop.f32.mrf.mxu0
      %v794 = vadd.f32 %v666, %v793
      %v795 = vpop.f32.mrf.mxu0
      %796 = vmatprep.mubr.bf16.mxu0 0
      %797 = vmatmul.mubr.bf16.gmra.mxu0 %v635
      %v798 = vpop.f32.mrf.mxu0
      %v799 = vadd.f32 %v666, %v798
      %v800 = vpop.f32.mrf.mxu0
      %v801 = vpop.f32.mrf.mxu0
      %v802 = vadd.f32 %v666, %v801
      %v803 = vpop.f32.mrf.mxu0
      %804 = vmatprep.mubr.bf16.mxu0 0
      %805 = vmatmul.mubr.bf16.gmra.mxu0 %v636
      %v806 = vpop.f32.mrf.mxu0
      %v807 = vadd.f32 %v666, %v806
      %v808 = vpop.f32.mrf.mxu0
      %v809 = vpop.f32.mrf.mxu0
      %v810 = vadd.f32 %v666, %v809
      %v811 = vpop.f32.mrf.mxu0
      %812 = vmatprep.mubr.bf16.mxu0 0
      %813 = vmatmul.mubr.bf16.gmra.mxu0 %v637
      %v814 = vpop.f32.mrf.mxu0
      %v815 = vadd.f32 %v666, %v814
      %v816 = vpop.f32.mrf.mxu0
      %v817 = vpop.f32.mrf.mxu0
      %v818 = vadd.f32 %v666, %v817
      %v819 = vpop.f32.mrf.mxu0
      %820 = vmatprep.mubr.bf16.mxu0 0
      %821 = vmatmul.mubr.bf16.gmra.mxu0 %v638
      %v822 = vpop.f32.mrf.mxu0
      %v823 = vadd.f32 %v666, %v822
      %v824 = vpop.f32.mrf.mxu0
      %v825 = vpop.f32.mrf.mxu0
      %v826 = vadd.f32 %v666, %v825
      %v827 = vpop.f32.mrf.mxu0
      %828 = vmatprep.mubr.bf16.mxu0 0
      %829 = vmatmul.mubr.bf16.gmra.mxu0 %v639
      %v830 = vpop.f32.mrf.mxu0
      %v831 = vadd.f32 %v666, %v830
      %v832 = vpop.f32.mrf.mxu0
      %v833 = vpop.f32.mrf.mxu0
      %v834 = vadd.f32 %v666, %v833
      %v835 = vpop.f32.mrf.mxu0
      %836 = vmatprep.mubr.bf16.mxu0 0
      %837 = vmatmul.mubr.bf16.gmra.mxu0 %v640
      %v838 = vpop.f32.mrf.mxu0
      %v839 = vadd.f32 %v666, %v838
      %v840 = vpop.f32.mrf.mxu0
      %v841 = vpop.f32.mrf.mxu0
      %v842 = vadd.f32 %v666, %v841
      %v843 = vpop.f32.mrf.mxu0
      %844 = vmatprep.mubr.bf16.mxu0 0
      %845 = vmatmul.mubr.bf16.gmra.mxu0 %v641
      %v846 = vpop.f32.mrf.mxu0
      %v847 = vadd.f32 %v666, %v846
      %v848 = vpop.f32.mrf.mxu0
      %v849 = vpop.f32.mrf.mxu0
      %v850 = vadd.f32 %v666, %v849
      %v851 = vpop.f32.mrf.mxu0
      %852 = vmatprep.mubr.bf16.mxu0 0
      %853 = vmatmul.mubr.bf16.gmra.mxu0 %v642
      %v854 = vpop.f32.mrf.mxu0
      %v855 = vadd.f32 %v666, %v854
      %v856 = vpop.f32.mrf.mxu0
      %v857 = vpop.f32.mrf.mxu0
      %v858 = vadd.f32 %v666, %v857
      %v859 = vpop.f32.mrf.mxu0
      %860 = vmatprep.mubr.bf16.mxu0 0
      %861 = vmatmul.mubr.bf16.gmra.mxu0 %v643
      %v862 = vpop.f32.mrf.mxu0
      %v863 = vadd.f32 %v666, %v862
      %v864 = vpop.f32.mrf.mxu0
      %v865 = vpop.f32.mrf.mxu0
      %v866 = vadd.f32 %v666, %v865
      %v867 = vpop.f32.mrf.mxu0
      %868 = vmatprep.mubr.bf16.mxu0 0
      %869 = vmatmul.mubr.bf16.gmra.mxu0 %v644
      %v870 = vpop.f32.mrf.mxu0
      %v871 = vadd.f32 %v666, %v870
      %v872 = vpop.f32.mrf.mxu0
      %v873 = vpop.f32.mrf.mxu0
      %v874 = vadd.f32 %v666, %v873
      %v875 = vpop.f32.mrf.mxu0
      %876 = vdwg.mxu0
      %v877 = vadd.f32 %v751, %v754
      %v878 = vadd.f32 %v877, %v759
      %v879 = vadd.f32 %v878, %v762
      %v880 = vadd.f32 %v879, %v767
      %v881 = vadd.f32 %v880, %v770
      %v882 = vadd.f32 %v881, %v775
      %v883 = vadd.f32 %v882, %v778
      %v884 = vadd.f32 %v883, %v783
      %v885 = vadd.f32 %v884, %v786
      %v886 = vadd.f32 %v885, %v791
      %v887 = vadd.f32 %v886, %v794
      %v888 = vadd.f32 %v887, %v799
      %v889 = vadd.f32 %v888, %v802
      %v890 = vadd.f32 %v889, %v807
      %v891 = vadd.f32 %v890, %v810
      %v892 = vadd.f32 %v891, %v815
      %v893 = vadd.f32 %v892, %v818
      %v894 = vadd.f32 %v893, %v823
      %v895 = vadd.f32 %v894, %v826
      %v896 = vadd.f32 %v895, %v831
      %v897 = vadd.f32 %v896, %v834
      %v898 = vadd.f32 %v897, %v839
      %v899 = vadd.f32 %v898, %v842
      %v900 = vadd.f32 %v899, %v847
      %v901 = vadd.f32 %v900, %v850
      %v902 = vadd.f32 %v901, %v855
      %v903 = vadd.f32 %v902, %v858
      %v904 = vadd.f32 %v903, %v863
      %v905 = vadd.f32 %v904, %v866
      %v906 = vadd.f32 %v905, %v871
      %v907 = vadd.f32 %v906, %v874
      %v908 = vrot.slane %v907, 4
      %v909 = vadd.f32 %v907, %v908
      %v910 = vrot.slane %v909, 2
      %v911 = vadd.f32 %v909, %v910
      %v912 = vrot.slane %v911, 1
      %v913 = vadd.f32 %v911, %v912
      %v914 = vmul.f32 %v751, %v751
      %v915 = vmul.f32 %v754, %v754
      %v916 = vmul.f32 %v759, %v759
      %v917 = vmul.f32 %v762, %v762
      %v918 = vmul.f32 %v767, %v767
      %v919 = vmul.f32 %v770, %v770
      %v920 = vmul.f32 %v775, %v775
      %v921 = vmul.f32 %v778, %v778
      %v922 = vmul.f32 %v783, %v783
      %v923 = vmul.f32 %v786, %v786
      %v924 = vmul.f32 %v791, %v791
      %v925 = vmul.f32 %v794, %v794
      %v926 = vmul.f32 %v799, %v799
      %v927 = vmul.f32 %v802, %v802
      %v928 = vmul.f32 %v807, %v807
      %v929 = vmul.f32 %v810, %v810
      %v930 = vmul.f32 %v815, %v815
      %v931 = vmul.f32 %v818, %v818
      %v932 = vmul.f32 %v823, %v823
      %v933 = vmul.f32 %v826, %v826
      %v934 = vmul.f32 %v831, %v831
      %v935 = vmul.f32 %v834, %v834
      %v936 = vmul.f32 %v839, %v839
      %v937 = vmul.f32 %v842, %v842
      %v938 = vmul.f32 %v847, %v847
      %v939 = vmul.f32 %v850, %v850
      %v940 = vmul.f32 %v855, %v855
      %v941 = vmul.f32 %v858, %v858
      %v942 = vmul.f32 %v863, %v863
      %v943 = vmul.f32 %v866, %v866
      %v944 = vmul.f32 %v871, %v871
      %v945 = vmul.f32 %v874, %v874
      %v946 = vadd.f32 %v914, %v915
      %v947 = vadd.f32 %v946, %v916
      %v948 = vadd.f32 %v947, %v917
      %v949 = vadd.f32 %v948, %v918
      %v950 = vadd.f32 %v949, %v919
      %v951 = vadd.f32 %v950, %v920
      %v952 = vadd.f32 %v951, %v921
      %v953 = vadd.f32 %v952, %v922
      %v954 = vadd.f32 %v953, %v923
      %v955 = vadd.f32 %v954, %v924
      %v956 = vadd.f32 %v955, %v925
      %v957 = vadd.f32 %v956, %v926
      %v958 = vadd.f32 %v957, %v927
      %v959 = vadd.f32 %v958, %v928
      %v960 = vadd.f32 %v959, %v929
      %v961 = vadd.f32 %v960, %v930
      %v962 = vadd.f32 %v961, %v931
      %v963 = vadd.f32 %v962, %v932
      %v964 = vadd.f32 %v963, %v933
      %v965 = vadd.f32 %v964, %v934
      %v966 = vadd.f32 %v965, %v935
      %v967 = vadd.f32 %v966, %v936
      %v968 = vadd.f32 %v967, %v937
      %v969 = vadd.f32 %v968, %v938
      %v970 = vadd.f32 %v969, %v939
      %v971 = vadd.f32 %v970, %v940
      %v972 = vadd.f32 %v971, %v941
      %v973 = vadd.f32 %v972, %v942
      %v974 = vadd.f32 %v973, %v943
      %v975 = vadd.f32 %v974, %v944
      %v976 = vadd.f32 %v975, %v945
      %v977 = vrot.slane %v976, 4
      %v978 = vadd.f32 %v976, %v977
      %v979 = vrot.slane %v978, 2
      %v980 = vadd.f32 %v978, %v979
      %v981 = vrot.slane %v980, 1
      %v982 = vadd.f32 %v980, %v981
      %vm983 = vcmask 1040384
      %v984 = vsel %vm983, %v913, %v982
      %985 = vst [vmem:[%s381] sm:$0x3] %v984
      %v986 = vpack.c.bf16 %v754, %v751
      %v987 = vpack.c.bf16 %v762, %v759
      %v988 = vpack.c.bf16 %v770, %v767
      %v989 = vpack.c.bf16 %v778, %v775
      %v990 = vpack.c.bf16 %v786, %v783
      %v991 = vpack.c.bf16 %v794, %v791
      %v992 = vpack.c.bf16 %v802, %v799
      %v993 = vpack.c.bf16 %v810, %v807
      %v994 = vpack.c.bf16 %v818, %v815
      %v995 = vpack.c.bf16 %v826, %v823
      %v996 = vpack.c.bf16 %v834, %v831
      %v997 = vpack.c.bf16 %v842, %v839
      %v998 = vpack.c.bf16 %v850, %v847
      %v999 = vpack.c.bf16 %v858, %v855
      %v1000 = vpack.c.bf16 %v866, %v863
      %v1001 = vpack.c.bf16 %v874, %v871
      %v1018 = vunpack.c.l.b16 %v986
      %v1019 = vunpack.c.h.b16 %v986
      %v1020 = vunpack.c.l.b16 %v987
      %v1021 = vunpack.c.h.b16 %v987
      %v1022 = vunpack.c.l.b16 %v988
      %v1023 = vunpack.c.h.b16 %v988
      %v1024 = vunpack.c.l.b16 %v989
      %v1025 = vunpack.c.h.b16 %v989
      %v1026 = vunpack.c.l.b16 %v990
      %v1027 = vunpack.c.h.b16 %v990
      %v1028 = vunpack.c.l.b16 %v991
      %v1029 = vunpack.c.h.b16 %v991
      %v1030 = vunpack.c.l.b16 %v992
      %v1031 = vunpack.c.h.b16 %v992
      %v1032 = vunpack.c.l.b16 %v993
      %v1033 = vunpack.c.h.b16 %v993
      %v1034 = vunpack.c.l.b16 %v994
      %v1035 = vunpack.c.h.b16 %v994
      %v1036 = vunpack.c.l.b16 %v995
      %v1037 = vunpack.c.h.b16 %v995
      %v1038 = vunpack.c.l.b16 %v996
      %v1039 = vunpack.c.h.b16 %v996
      %v1040 = vunpack.c.l.b16 %v997
      %v1041 = vunpack.c.h.b16 %v997
      %v1042 = vunpack.c.l.b16 %v998
      %v1043 = vunpack.c.h.b16 %v998
      %v1044 = vunpack.c.l.b16 %v999
      %v1045 = vunpack.c.h.b16 %v999
      %v1046 = vunpack.c.l.b16 %v1000
      %v1047 = vunpack.c.h.b16 %v1000
      %v1048 = vunpack.c.l.b16 %v1001
      %v1049 = vunpack.c.h.b16 %v1001
      %v1050 = vpack.c.b16 %v1018, %v1018
      %v1051 = vpack.c.b16 %v1019, %v1019
      %v1052 = vpack.c.b16 %v1020, %v1020
      %v1053 = vpack.c.b16 %v1021, %v1021
      %v1054 = vpack.c.b16 %v1022, %v1022
      %v1055 = vpack.c.b16 %v1023, %v1023
      %v1056 = vpack.c.b16 %v1024, %v1024
      %v1057 = vpack.c.b16 %v1025, %v1025
      %v1058 = vpack.c.b16 %v1026, %v1026
      %v1059 = vpack.c.b16 %v1027, %v1027
      %v1060 = vpack.c.b16 %v1028, %v1028
      %v1061 = vpack.c.b16 %v1029, %v1029
      %v1062 = vpack.c.b16 %v1030, %v1030
      %v1063 = vpack.c.b16 %v1031, %v1031
      %v1064 = vpack.c.b16 %v1032, %v1032
      %v1065 = vpack.c.b16 %v1033, %v1033
      %v1066 = vpack.c.b16 %v1034, %v1034
      %v1067 = vpack.c.b16 %v1035, %v1035
      %v1068 = vpack.c.b16 %v1036, %v1036
      %v1069 = vpack.c.b16 %v1037, %v1037
      %v1070 = vpack.c.b16 %v1038, %v1038
      %v1071 = vpack.c.b16 %v1039, %v1039
      %v1072 = vpack.c.b16 %v1040, %v1040
      %v1073 = vpack.c.b16 %v1041, %v1041
      %v1074 = vpack.c.b16 %v1042, %v1042
      %v1075 = vpack.c.b16 %v1043, %v1043
      %v1076 = vpack.c.b16 %v1044, %v1044
      %v1077 = vpack.c.b16 %v1045, %v1045
      %v1078 = vpack.c.b16 %v1046, %v1046
      %v1079 = vpack.c.b16 %v1047, %v1047
      %v1080 = vpack.c.b16 %v1048, %v1048
      %v1081 = vpack.c.b16 %v1049, %v1049
      %1114 = vst [vmem:[%s370] sm:$0xf] %v1050
      %1115 = vst [vmem:[%s370 + $0x4] sm:$0xf] %v1051
      %1116 = vst [vmem:[%s370 + $0x8] sm:$0xf] %v1052
      %1117 = vst [vmem:[%s370 + $0xc] sm:$0xf] %v1053
      %1118 = vst [vmem:[%s370 + $0x10] sm:$0xf] %v1054
      %1119 = vst [vmem:[%s370 + $0x14] sm:$0xf] %v1055
      %1120 = vst [vmem:[%s370 + $0x18] sm:$0xf] %v1056
      %1121 = vst [vmem:[%s370 + $0x1c] sm:$0xf] %v1057
      %1122 = vst [vmem:[%s370 + $0x20] sm:$0xf] %v1058
      %1123 = vst [vmem:[%s370 + $0x24] sm:$0xf] %v1059
      %1124 = vst [vmem:[%s370 + $0x28] sm:$0xf] %v1060
      %1125 = vst [vmem:[%s370 + $0x2c] sm:$0xf] %v1061
      %1126 = vst [vmem:[%s370 + $0x30] sm:$0xf] %v1062
      %1127 = vst [vmem:[%s370 + $0x34] sm:$0xf] %v1063
      %1128 = vst [vmem:[%s370 + $0x38] sm:$0xf] %v1064
      %1129 = vst [vmem:[%s370 + $0x3c] sm:$0xf] %v1065
      %1130 = vst [vmem:[%s370 + $0x40] sm:$0xf] %v1066
      %1131 = vst [vmem:[%s370 + $0x44] sm:$0xf] %v1067
      %1132 = vst [vmem:[%s370 + $0x48] sm:$0xf] %v1068
      %1133 = vst [vmem:[%s370 + $0x4c] sm:$0xf] %v1069
      %1134 = vst [vmem:[%s370 + $0x50] sm:$0xf] %v1070
      %1135 = vst [vmem:[%s370 + $0x54] sm:$0xf] %v1071
      %1136 = vst [vmem:[%s370 + $0x58] sm:$0xf] %v1072
      %1137 = vst [vmem:[%s370 + $0x5c] sm:$0xf] %v1073
      %1138 = vst [vmem:[%s370 + $0x60] sm:$0xf] %v1074
      %1139 = vst [vmem:[%s370 + $0x64] sm:$0xf] %v1075
      %1140 = vst [vmem:[%s370 + $0x68] sm:$0xf] %v1076
      %1141 = vst [vmem:[%s370 + $0x6c] sm:$0xf] %v1077
      %1142 = vst [vmem:[%s370 + $0x70] sm:$0xf] %v1078
      %1143 = vst [vmem:[%s370 + $0x74] sm:$0xf] %v1079
      %1144 = vst [vmem:[%s370 + $0x78] sm:$0xf] %v1080
      %1145 = vst [vmem:[%s370 + $0x7c] sm:$0xf] %v1081
      %v1146 = vld [vmem:[%s364] sm:$0xf]
      %v1147 = vld [vmem:[%s364 + $0x4] sm:$0xf]
      %v1148 = vld [vmem:[%s364 + $0x8] sm:$0xf]
      %v1149 = vld [vmem:[%s364 + $0xc] sm:$0xf]
      %v1150 = vld [vmem:[%s364 + $0x10] sm:$0xf]
      %v1151 = vld [vmem:[%s364 + $0x14] sm:$0xf]
      %v1152 = vld [vmem:[%s364 + $0x18] sm:$0xf]
      %v1153 = vld [vmem:[%s364 + $0x1c] sm:$0xf]
      %v1154 = vld [vmem:[%s364 + $0x20] sm:$0xf]
      %v1155 = vld [vmem:[%s364 + $0x24] sm:$0xf]
      %v1156 = vld [vmem:[%s364 + $0x28] sm:$0xf]
      %v1157 = vld [vmem:[%s364 + $0x2c] sm:$0xf]
      %v1158 = vld [vmem:[%s364 + $0x30] sm:$0xf]
      %v1159 = vld [vmem:[%s364 + $0x34] sm:$0xf]
      %v1160 = vld [vmem:[%s364 + $0x38] sm:$0xf]
      %v1161 = vld [vmem:[%s364 + $0x3c] sm:$0xf]
      %v1162 = vld [vmem:[%s364 + $0x40] sm:$0xf]
      %v1163 = vld [vmem:[%s364 + $0x44] sm:$0xf]
      %v1164 = vld [vmem:[%s364 + $0x48] sm:$0xf]
      %v1165 = vld [vmem:[%s364 + $0x4c] sm:$0xf]
      %v1166 = vld [vmem:[%s364 + $0x50] sm:$0xf]
      %v1167 = vld [vmem:[%s364 + $0x54] sm:$0xf]
      %v1168 = vld [vmem:[%s364 + $0x58] sm:$0xf]
      %v1169 = vld [vmem:[%s364 + $0x5c] sm:$0xf]
      %v1170 = vld [vmem:[%s364 + $0x60] sm:$0xf]
      %v1171 = vld [vmem:[%s364 + $0x64] sm:$0xf]
      %v1172 = vld [vmem:[%s364 + $0x68] sm:$0xf]
      %v1173 = vld [vmem:[%s364 + $0x6c] sm:$0xf]
      %v1174 = vld [vmem:[%s364 + $0x70] sm:$0xf]
      %v1175 = vld [vmem:[%s364 + $0x74] sm:$0xf]
      %v1176 = vld [vmem:[%s364 + $0x78] sm:$0xf]
      %v1177 = vld [vmem:[%s364 + $0x7c] sm:$0xf]
      %v1178 = vld [vmem:[%s5] sm:$0xf]
      %v1179 = vld [vmem:[%s5 + $0x4] sm:$0xf]
      %v1180 = vld [vmem:[%s5 + $0x8] sm:$0xf]
      %v1181 = vld [vmem:[%s5 + $0xc] sm:$0xf]
      %v1182 = vld [vmem:[%s5 + $0x10] sm:$0xf]
      %v1183 = vld [vmem:[%s5 + $0x14] sm:$0xf]
      %v1184 = vld [vmem:[%s5 + $0x18] sm:$0xf]
      %v1185 = vld [vmem:[%s5 + $0x1c] sm:$0xf]
      %v1186 = vld [vmem:[%s5 + $0x20] sm:$0xf]
      %v1187 = vld [vmem:[%s5 + $0x24] sm:$0xf]
      %v1188 = vld [vmem:[%s5 + $0x28] sm:$0xf]
      %v1189 = vld [vmem:[%s5 + $0x2c] sm:$0xf]
      %v1190 = vld [vmem:[%s5 + $0x30] sm:$0xf]
      %v1191 = vld [vmem:[%s5 + $0x34] sm:$0xf]
      %v1192 = vld [vmem:[%s5 + $0x38] sm:$0xf]
      %v1193 = vld [vmem:[%s5 + $0x3c] sm:$0xf]
      %v1194 = vld [vmem:[%s6] sm:$0x1]
      %v1196 = vlaneseq
      %v1197 = vshrl.u32 %v1196, 7
      %v1198 = vsub.s32 0, %v1197
      %v1199 = vrot.slane %v1194, %v1198
      %v1233 = vunpack.c.l.b16 %v1146
      %v1234 = vunpack.c.l.b16 %v1147
      %v1235 = vunpack.c.l.b16 %v1148
      %v1236 = vunpack.c.l.b16 %v1149
      %v1237 = vunpack.c.l.b16 %v1150
      %v1238 = vunpack.c.l.b16 %v1151
      %v1239 = vunpack.c.l.b16 %v1152
      %v1240 = vunpack.c.l.b16 %v1153
      %v1241 = vunpack.c.l.b16 %v1154
      %v1242 = vunpack.c.l.b16 %v1155
      %v1243 = vunpack.c.l.b16 %v1156
      %v1244 = vunpack.c.l.b16 %v1157
      %v1245 = vunpack.c.l.b16 %v1158
      %v1246 = vunpack.c.l.b16 %v1159
      %v1247 = vunpack.c.l.b16 %v1160
      %v1248 = vunpack.c.l.b16 %v1161
      %v1249 = vunpack.c.l.b16 %v1162
      %v1250 = vunpack.c.l.b16 %v1163
      %v1251 = vunpack.c.l.b16 %v1164
      %v1252 = vunpack.c.l.b16 %v1165
      %v1253 = vunpack.c.l.b16 %v1166
      %v1254 = vunpack.c.l.b16 %v1167
      %v1255 = vunpack.c.l.b16 %v1168
      %v1256 = vunpack.c.l.b16 %v1169
      %v1257 = vunpack.c.l.b16 %v1170
      %v1258 = vunpack.c.l.b16 %v1171
      %v1259 = vunpack.c.l.b16 %v1172
      %v1260 = vunpack.c.l.b16 %v1173
      %v1261 = vunpack.c.l.b16 %v1174
      %v1262 = vunpack.c.l.b16 %v1175
      %v1263 = vunpack.c.l.b16 %v1176
      %v1264 = vunpack.c.l.b16 %v1177
      %v1265 = vpack.c.b16 %v1234, %v1233
      %v1266 = vpack.c.b16 %v1236, %v1235
      %v1267 = vpack.c.b16 %v1238, %v1237
      %v1268 = vpack.c.b16 %v1240, %v1239
      %v1269 = vpack.c.b16 %v1242, %v1241
      %v1270 = vpack.c.b16 %v1244, %v1243
      %v1271 = vpack.c.b16 %v1246, %v1245
      %v1272 = vpack.c.b16 %v1248, %v1247
      %v1273 = vpack.c.b16 %v1250, %v1249
      %v1274 = vpack.c.b16 %v1252, %v1251
      %v1275 = vpack.c.b16 %v1254, %v1253
      %v1276 = vpack.c.b16 %v1256, %v1255
      %v1277 = vpack.c.b16 %v1258, %v1257
      %v1278 = vpack.c.b16 %v1260, %v1259
      %v1279 = vpack.c.b16 %v1262, %v1261
      %v1280 = vpack.c.b16 %v1264, %v1263
      %v1313 = vunpack.c.l.b16 %v1178
      %v1314 = vunpack.c.l.b16 %v1179
      %v1315 = vunpack.c.l.b16 %v1180
      %v1316 = vunpack.c.l.b16 %v1181
      %v1317 = vunpack.c.l.b16 %v1182
      %v1318 = vunpack.c.l.b16 %v1183
      %v1319 = vunpack.c.l.b16 %v1184
      %v1320 = vunpack.c.l.b16 %v1185
      %v1321 = vunpack.c.l.b16 %v1186
      %v1322 = vunpack.c.l.b16 %v1187
      %v1323 = vunpack.c.l.b16 %v1188
      %v1324 = vunpack.c.l.b16 %v1189
      %v1325 = vunpack.c.l.b16 %v1190
      %v1326 = vunpack.c.l.b16 %v1191
      %v1327 = vunpack.c.l.b16 %v1192
      %v1328 = vunpack.c.l.b16 %v1193
      %v1329 = vpack.c.b16 %v1314, %v1313
      %v1330 = vpack.c.b16 %v1316, %v1315
      %v1331 = vpack.c.b16 %v1318, %v1317
      %v1332 = vpack.c.b16 %v1320, %v1319
      %v1333 = vpack.c.b16 %v1322, %v1321
      %v1334 = vpack.c.b16 %v1324, %v1323
      %v1335 = vpack.c.b16 %v1326, %v1325
      %v1336 = vpack.c.b16 %v1328, %v1327
      %1345 = vmatprep.subr.bf16.mxu0 0
      %1346 = vmatpush1.bf16.msra.mxu0 %v1336
      %1347 = vmatprep.subr.bf16.mxu0 0
      %1348 = vmatpush1.bf16.msra.mxu0 %v1335
      %1349 = vmatprep.subr.bf16.mxu0 0
      %1350 = vmatpush1.bf16.msra.mxu0 %v1334
      %1351 = vmatprep.subr.bf16.mxu0 0
      %1352 = vmatpush1.bf16.msra.mxu0 %v1333
      %1353 = vmatprep.subr.bf16.mxu0 0
      %1354 = vmatpush1.bf16.msra.mxu0 %v1332
      %1355 = vmatprep.subr.bf16.mxu0 0
      %1356 = vmatpush1.bf16.msra.mxu0 %v1331
      %1357 = vmatprep.subr.bf16.mxu0 0
      %1358 = vmatpush1.bf16.msra.mxu0 %v1330
      %1359 = vmatprep.subr.bf16.mxu0 0
      %1360 = vmatpush1.bf16.msra.mxu0 %v1329
      %1361 = vmatprep.subr.bf16.mxu0 0
      %1362 = vmatpush2.bf16.msra.mxu0 0
      %1363 = vmatprep.subr.bf16.mxu0 0
      %1364 = vmatpush2.bf16.msra.mxu0 0
      %1365 = vmatprep.subr.bf16.mxu0 0
      %1366 = vmatpush2.bf16.msra.mxu0 0
      %1367 = vmatprep.subr.bf16.mxu0 0
      %1368 = vmatpush2.bf16.msra.mxu0 0
      %1369 = vmatprep.subr.bf16.mxu0 0
      %1370 = vmatpush2.bf16.msra.mxu0 0
      %1371 = vmatprep.subr.bf16.mxu0 0
      %1372 = vmatpush2.bf16.msra.mxu0 0
      %1373 = vmatprep.subr.bf16.mxu0 0
      %1374 = vmatpush2.bf16.msra.mxu0 0
      %1375 = vmatprep.subr.bf16.mxu0 0
      %1376 = vmatpush2.bf16.msra.mxu0 0
      %1377 = vmatprep.mubr.bf16.mxu0 0
      %1378 = vmatmul.mubr.bf16.gmra.mxu0 %v1265
      %v1379 = vpop.f32.mrf.mxu0
      %v1380 = vadd.f32 %v1199, %v1379
      %v1381 = vpop.f32.mrf.mxu0
      %v1382 = vpop.f32.mrf.mxu0
      %v1383 = vadd.f32 %v1199, %v1382
      %v1384 = vpop.f32.mrf.mxu0
      %1385 = vmatprep.mubr.bf16.mxu0 0
      %1386 = vmatmul.mubr.bf16.gmra.mxu0 %v1266
      %v1387 = vpop.f32.mrf.mxu0
      %v1388 = vadd.f32 %v1199, %v1387
      %v1389 = vpop.f32.mrf.mxu0
      %v1390 = vpop.f32.mrf.mxu0
      %v1391 = vadd.f32 %v1199, %v1390
      %v1392 = vpop.f32.mrf.mxu0
      %1393 = vmatprep.mubr.bf16.mxu0 0
      %1394 = vmatmul.mubr.bf16.gmra.mxu0 %v1267
      %v1395 = vpop.f32.mrf.mxu0
      %v1396 = vadd.f32 %v1199, %v1395
      %v1397 = vpop.f32.mrf.mxu0
      %v1398 = vpop.f32.mrf.mxu0
      %v1399 = vadd.f32 %v1199, %v1398
      %v1400 = vpop.f32.mrf.mxu0
      %1401 = vmatprep.mubr.bf16.mxu0 0
      %1402 = vmatmul.mubr.bf16.gmra.mxu0 %v1268
      %v1403 = vpop.f32.mrf.mxu0
      %v1404 = vadd.f32 %v1199, %v1403
      %v1405 = vpop.f32.mrf.mxu0
      %v1406 = vpop.f32.mrf.mxu0
      %v1407 = vadd.f32 %v1199, %v1406
      %v1408 = vpop.f32.mrf.mxu0
      %1409 = vmatprep.mubr.bf16.mxu0 0
      %1410 = vmatmul.mubr.bf16.gmra.mxu0 %v1269
      %v1411 = vpop.f32.mrf.mxu0
      %v1412 = vadd.f32 %v1199, %v1411
      %v1413 = vpop.f32.mrf.mxu0
      %v1414 = vpop.f32.mrf.mxu0
      %v1415 = vadd.f32 %v1199, %v1414
      %v1416 = vpop.f32.mrf.mxu0
      %1417 = vmatprep.mubr.bf16.mxu0 0
      %1418 = vmatmul.mubr.bf16.gmra.mxu0 %v1270
      %v1419 = vpop.f32.mrf.mxu0
      %v1420 = vadd.f32 %v1199, %v1419
      %v1421 = vpop.f32.mrf.mxu0
      %v1422 = vpop.f32.mrf.mxu0
      %v1423 = vadd.f32 %v1199, %v1422
      %v1424 = vpop.f32.mrf.mxu0
      %1425 = vmatprep.mubr.bf16.mxu0 0
      %1426 = vmatmul.mubr.bf16.gmra.mxu0 %v1271
      %v1427 = vpop.f32.mrf.mxu0
      %v1428 = vadd.f32 %v1199, %v1427
      %v1429 = vpop.f32.mrf.mxu0
      %v1430 = vpop.f32.mrf.mxu0
      %v1431 = vadd.f32 %v1199, %v1430
      %v1432 = vpop.f32.mrf.mxu0
      %1433 = vmatprep.mubr.bf16.mxu0 0
      %1434 = vmatmul.mubr.bf16.gmra.mxu0 %v1272
      %v1435 = vpop.f32.mrf.mxu0
      %v1436 = vadd.f32 %v1199, %v1435
      %v1437 = vpop.f32.mrf.mxu0
      %v1438 = vpop.f32.mrf.mxu0
      %v1439 = vadd.f32 %v1199, %v1438
      %v1440 = vpop.f32.mrf.mxu0
      %1441 = vmatprep.mubr.bf16.mxu0 0
      %1442 = vmatmul.mubr.bf16.gmra.mxu0 %v1273
      %v1443 = vpop.f32.mrf.mxu0
      %v1444 = vadd.f32 %v1199, %v1443
      %v1445 = vpop.f32.mrf.mxu0
      %v1446 = vpop.f32.mrf.mxu0
      %v1447 = vadd.f32 %v1199, %v1446
      %v1448 = vpop.f32.mrf.mxu0
      %1449 = vmatprep.mubr.bf16.mxu0 0
      %1450 = vmatmul.mubr.bf16.gmra.mxu0 %v1274
      %v1451 = vpop.f32.mrf.mxu0
      %v1452 = vadd.f32 %v1199, %v1451
      %v1453 = vpop.f32.mrf.mxu0
      %v1454 = vpop.f32.mrf.mxu0
      %v1455 = vadd.f32 %v1199, %v1454
      %v1456 = vpop.f32.mrf.mxu0
      %1457 = vmatprep.mubr.bf16.mxu0 0
      %1458 = vmatmul.mubr.bf16.gmra.mxu0 %v1275
      %v1459 = vpop.f32.mrf.mxu0
      %v1460 = vadd.f32 %v1199, %v1459
      %v1461 = vpop.f32.mrf.mxu0
      %v1462 = vpop.f32.mrf.mxu0
      %v1463 = vadd.f32 %v1199, %v1462
      %v1464 = vpop.f32.mrf.mxu0
      %1465 = vmatprep.mubr.bf16.mxu0 0
      %1466 = vmatmul.mubr.bf16.gmra.mxu0 %v1276
      %v1467 = vpop.f32.mrf.mxu0
      %v1468 = vadd.f32 %v1199, %v1467
      %v1469 = vpop.f32.mrf.mxu0
      %v1470 = vpop.f32.mrf.mxu0
      %v1471 = vadd.f32 %v1199, %v1470
      %v1472 = vpop.f32.mrf.mxu0
      %1473 = vmatprep.mubr.bf16.mxu0 0
      %1474 = vmatmul.mubr.bf16.gmra.mxu0 %v1277
      %v1475 = vpop.f32.mrf.mxu0
      %v1476 = vadd.f32 %v1199, %v1475
      %v1477 = vpop.f32.mrf.mxu0
      %v1478 = vpop.f32.mrf.mxu0
      %v1479 = vadd.f32 %v1199, %v1478
      %v1480 = vpop.f32.mrf.mxu0
      %1481 = vmatprep.mubr.bf16.mxu0 0
      %1482 = vmatmul.mubr.bf16.gmra.mxu0 %v1278
      %v1483 = vpop.f32.mrf.mxu0
      %v1484 = vadd.f32 %v1199, %v1483
      %v1485 = vpop.f32.mrf.mxu0
      %v1486 = vpop.f32.mrf.mxu0
      %v1487 = vadd.f32 %v1199, %v1486
      %v1488 = vpop.f32.mrf.mxu0
      %1489 = vmatprep.mubr.bf16.mxu0 0
      %1490 = vmatmul.mubr.bf16.gmra.mxu0 %v1279
      %v1491 = vpop.f32.mrf.mxu0
      %v1492 = vadd.f32 %v1199, %v1491
      %v1493 = vpop.f32.mrf.mxu0
      %v1494 = vpop.f32.mrf.mxu0
      %v1495 = vadd.f32 %v1199, %v1494
      %v1496 = vpop.f32.mrf.mxu0
      %1497 = vmatprep.mubr.bf16.mxu0 0
      %1498 = vmatmul.mubr.bf16.gmra.mxu0 %v1280
      %v1499 = vpop.f32.mrf.mxu0
      %v1500 = vadd.f32 %v1199, %v1499
      %v1501 = vpop.f32.mrf.mxu0
      %v1502 = vpop.f32.mrf.mxu0
      %v1503 = vadd.f32 %v1199, %v1502
      %v1504 = vpop.f32.mrf.mxu0
      %1505 = vdwg.mxu0
      %v1506 = vpack.c.bf16 %v1383, %v1380
      %v1507 = vpack.c.bf16 %v1391, %v1388
      %v1508 = vpack.c.bf16 %v1399, %v1396
      %v1509 = vpack.c.bf16 %v1407, %v1404
      %v1510 = vpack.c.bf16 %v1415, %v1412
      %v1511 = vpack.c.bf16 %v1423, %v1420
      %v1512 = vpack.c.bf16 %v1431, %v1428
      %v1513 = vpack.c.bf16 %v1439, %v1436
      %v1514 = vpack.c.bf16 %v1447, %v1444
      %v1515 = vpack.c.bf16 %v1455, %v1452
      %v1516 = vpack.c.bf16 %v1463, %v1460
      %v1517 = vpack.c.bf16 %v1471, %v1468
      %v1518 = vpack.c.bf16 %v1479, %v1476
      %v1519 = vpack.c.bf16 %v1487, %v1484
      %v1520 = vpack.c.bf16 %v1495, %v1492
      %v1521 = vpack.c.bf16 %v1503, %v1500
      %v1538 = vunpack.c.l.b16 %v1506
      %v1539 = vunpack.c.h.b16 %v1506
      %v1540 = vunpack.c.l.b16 %v1507
      %v1541 = vunpack.c.h.b16 %v1507
      %v1542 = vunpack.c.l.b16 %v1508
      %v1543 = vunpack.c.h.b16 %v1508
      %v1544 = vunpack.c.l.b16 %v1509
      %v1545 = vunpack.c.h.b16 %v1509
      %v1546 = vunpack.c.l.b16 %v1510
      %v1547 = vunpack.c.h.b16 %v1510
      %v1548 = vunpack.c.l.b16 %v1511
      %v1549 = vunpack.c.h.b16 %v1511
      %v1550 = vunpack.c.l.b16 %v1512
      %v1551 = vunpack.c.h.b16 %v1512
      %v1552 = vunpack.c.l.b16 %v1513
      %v1553 = vunpack.c.h.b16 %v1513
      %v1554 = vunpack.c.l.b16 %v1514
      %v1555 = vunpack.c.h.b16 %v1514
      %v1556 = vunpack.c.l.b16 %v1515
      %v1557 = vunpack.c.h.b16 %v1515
      %v1558 = vunpack.c.l.b16 %v1516
      %v1559 = vunpack.c.h.b16 %v1516
      %v1560 = vunpack.c.l.b16 %v1517
      %v1561 = vunpack.c.h.b16 %v1517
      %v1562 = vunpack.c.l.b16 %v1518
      %v1563 = vunpack.c.h.b16 %v1518
      %v1564 = vunpack.c.l.b16 %v1519
      %v1565 = vunpack.c.h.b16 %v1519
      %v1566 = vunpack.c.l.b16 %v1520
      %v1567 = vunpack.c.h.b16 %v1520
      %v1568 = vunpack.c.l.b16 %v1521
      %v1569 = vunpack.c.h.b16 %v1521
      %v1570 = vpack.c.b16 %v1538, %v1538
      %v1571 = vpack.c.b16 %v1539, %v1539
      %v1572 = vpack.c.b16 %v1540, %v1540
      %v1573 = vpack.c.b16 %v1541, %v1541
      %v1574 = vpack.c.b16 %v1542, %v1542
      %v1575 = vpack.c.b16 %v1543, %v1543
      %v1576 = vpack.c.b16 %v1544, %v1544
      %v1577 = vpack.c.b16 %v1545, %v1545
      %v1578 = vpack.c.b16 %v1546, %v1546
      %v1579 = vpack.c.b16 %v1547, %v1547
      %v1580 = vpack.c.b16 %v1548, %v1548
      %v1581 = vpack.c.b16 %v1549, %v1549
      %v1582 = vpack.c.b16 %v1550, %v1550
      %v1583 = vpack.c.b16 %v1551, %v1551
      %v1584 = vpack.c.b16 %v1552, %v1552
      %v1585 = vpack.c.b16 %v1553, %v1553
      %v1586 = vpack.c.b16 %v1554, %v1554
      %v1587 = vpack.c.b16 %v1555, %v1555
      %v1588 = vpack.c.b16 %v1556, %v1556
      %v1589 = vpack.c.b16 %v1557, %v1557
      %v1590 = vpack.c.b16 %v1558, %v1558
      %v1591 = vpack.c.b16 %v1559, %v1559
      %v1592 = vpack.c.b16 %v1560, %v1560
      %v1593 = vpack.c.b16 %v1561, %v1561
      %v1594 = vpack.c.b16 %v1562, %v1562
      %v1595 = vpack.c.b16 %v1563, %v1563
      %v1596 = vpack.c.b16 %v1564, %v1564
      %v1597 = vpack.c.b16 %v1565, %v1565
      %v1598 = vpack.c.b16 %v1566, %v1566
      %v1599 = vpack.c.b16 %v1567, %v1567
      %v1600 = vpack.c.b16 %v1568, %v1568
      %v1601 = vpack.c.b16 %v1569, %v1569
      %1634 = vst [vmem:[%s376] sm:$0xf] %v1570
      %1635 = vst [vmem:[%s376 + $0x4] sm:$0xf] %v1571
      %1636 = vst [vmem:[%s376 + $0x8] sm:$0xf] %v1572
      %1637 = vst [vmem:[%s376 + $0xc] sm:$0xf] %v1573
      %1638 = vst [vmem:[%s376 + $0x10] sm:$0xf] %v1574
      %1639 = vst [vmem:[%s376 + $0x14] sm:$0xf] %v1575
      %1640 = vst [vmem:[%s376 + $0x18] sm:$0xf] %v1576
      %1641 = vst [vmem:[%s376 + $0x1c] sm:$0xf] %v1577
      %1642 = vst [vmem:[%s376 + $0x20] sm:$0xf] %v1578
      %1643 = vst [vmem:[%s376 + $0x24] sm:$0xf] %v1579
      %1644 = vst [vmem:[%s376 + $0x28] sm:$0xf] %v1580
      %1645 = vst [vmem:[%s376 + $0x2c] sm:$0xf] %v1581
      %1646 = vst [vmem:[%s376 + $0x30] sm:$0xf] %v1582
      %1647 = vst [vmem:[%s376 + $0x34] sm:$0xf] %v1583
      %1648 = vst [vmem:[%s376 + $0x38] sm:$0xf] %v1584
      %1649 = vst [vmem:[%s376 + $0x3c] sm:$0xf] %v1585
      %1650 = vst [vmem:[%s376 + $0x40] sm:$0xf] %v1586
      %1651 = vst [vmem:[%s376 + $0x44] sm:$0xf] %v1587
      %1652 = vst [vmem:[%s376 + $0x48] sm:$0xf] %v1588
      %1653 = vst [vmem:[%s376 + $0x4c] sm:$0xf] %v1589
      %1654 = vst [vmem:[%s376 + $0x50] sm:$0xf] %v1590
      %1655 = vst [vmem:[%s376 + $0x54] sm:$0xf] %v1591
      %1656 = vst [vmem:[%s376 + $0x58] sm:$0xf] %v1592
      %1657 = vst [vmem:[%s376 + $0x5c] sm:$0xf] %v1593
      %1658 = vst [vmem:[%s376 + $0x60] sm:$0xf] %v1594
      %1659 = vst [vmem:[%s376 + $0x64] sm:$0xf] %v1595
      %1660 = vst [vmem:[%s376 + $0x68] sm:$0xf] %v1596
      %1661 = vst [vmem:[%s376 + $0x6c] sm:$0xf] %v1597
      %1662 = vst [vmem:[%s376 + $0x70] sm:$0xf] %v1598
      %1663 = vst [vmem:[%s376 + $0x74] sm:$0xf] %v1599
      %1664 = vst [vmem:[%s376 + $0x78] sm:$0xf] %v1600
      %1665 = vst [vmem:[%s376 + $0x7c] sm:$0xf] %v1601
      %s1666 = smul.u32 32, %s21
      %p1667 = scmp.lt.s32.totalorder %s1666, 63
      %s1668 = scalar_select %p1667, %s1666, 63
      %s1669 = smul.addr %s1668, 4
      %s1670 = scalar_lea.vmem %s7, %s1669
      %s1671 = smul.u32 32, %s21
      %p1672 = scmp.lt.s32.totalorder %s1671, 63
      %s1673 = scalar_select %p1672, %s1671, 63
      %s1674 = smul.addr %s1673, 4
      %s1675 = scalar_lea.vmem %s8, %s1674
      %p1676 = scmp.lt.s32.totalorder %s21, 1
      %s1677 = scalar_select %p1676, %s21, 1
      %s1678 = smul.addr %s1677, 2
      %s1679 = scalar_lea.vmem %s9, %s1678
      // Predicated region
      $region49: #{se_block_forward.6} parent=47 // pred_check
        %p1680 = pneg %p196
      $region50: #{se_block_forward.6} parent=47 // pred_check_branch
        %1682 = sbr.rel (%p1680) target = $region52
      $region51: #{se_block_forward.6} parent=47 // pred_region
        %s1683 = smul.u32 32, %s21
      $region52: #{se_block_forward.6} parent=47 // pred_fallthru
        _
      // Predicated region
      $region53: #{se_block_forward.6} parent=47 // pred_check
        %p1684 = pneg %p222
      $region54: #{se_block_forward.6} parent=47 // pred_check_branch
        %1686 = sbr.rel (%p1684) target = $region56
      $region55: #{se_block_forward.6} parent=47 // pred_region
        %s1687 = smul.u32 32, %s21
      $region56: #{se_block_forward.6} parent=47 // pred_fallthru
        _
      // Predicated region
      $region57: #{se_block_forward.6} parent=47 // pred_check
        %p1688 = pneg %p248
      $region58: #{se_block_forward.6} parent=47 // pred_check_branch
        %1690 = sbr.rel (%p1688) target = $region60
      $region59: #{se_block_forward.6} parent=47 // pred_region
        _
      $region60: #{se_block_forward.6} parent=47 // pred_fallthru
        _
    $region48: #{se_block_forward.6} parent=5 // pred_fallthru
      _
    %p1691 = scmp.le.s32.totalorder 2, %s16
    // Predicated region
    $region61: #{se_block_forward.6} parent=5 // pred_check
      %p1692 = pneg %p1691
    $region62: #{se_block_forward.6} parent=5 // pred_check_branch
      %1694 = sbr.rel (%p1692) target = $region64
    $region63: #{se_block_forward.6} parent=5 // pred_region
      %s1695 = ssub.s32 %s16, 2
      // Predicated region
      $region65: #{se_block_forward.6} parent=63 // pred_check
        %p1696 = pneg %p202
      $region66: #{se_block_forward.6} parent=63 // pred_check_branch
        %1698 = sbr.rel (%p1696) target = $region68
      $region67: #{se_block_forward.6} parent=63 // pred_region
        %s1699 = smul.u32 32, %s22
        %p1700 = scmp.lt.s32.totalorder %s1699, 63
        %s1701 = scalar_select %p1700, %s1699, 63
        %s1702 = smul.addr %s1701, 4
        %s1703 = scalar_lea.vmem %s7, %s1702
      $region68: #{se_block_forward.6} parent=63 // pred_fallthru
        _
      // Predicated region
      $region69: #{se_block_forward.6} parent=63 // pred_check
        %p1704 = pneg %p228
      $region70: #{se_block_forward.6} parent=63 // pred_check_branch
        %1706 = sbr.rel (%p1704) target = $region72
      $region71: #{se_block_forward.6} parent=63 // pred_region
        %s1707 = smul.u32 32, %s22
        %p1708 = scmp.lt.s32.totalorder %s1707, 63
        %s1709 = scalar_select %p1708, %s1707, 63
        %s1710 = smul.addr %s1709, 4
        %s1711 = scalar_lea.vmem %s8, %s1710
      $region72: #{se_block_forward.6} parent=63 // pred_fallthru
        _
      // Predicated region
      $region73: #{se_block_forward.6} parent=63 // pred_check
        %p1712 = pneg %p254
      $region74: #{se_block_forward.6} parent=63 // pred_check_branch
        %1714 = sbr.rel (%p1712) target = $region76
      $region75: #{se_block_forward.6} parent=63 // pred_region
        %p1715 = scmp.lt.s32.totalorder %s22, 1
        %s1716 = scalar_select %p1715, %s22, 1
        %s1717 = smul.addr %s1716, 2
        %s1718 = scalar_lea.vmem %s9, %s1717
      $region76: #{se_block_forward.6} parent=63 // pred_fallthru
        _
    $region64: #{se_block_forward.6} parent=5 // pred_fallthru
      _
  $region6: #{se_block_forward.6} parent=0 // loop_footer
    %s20 = sadd.s32 1, %s16
  $region7: #{se_block_forward.6} parent=0 // loop_footer_branch
    %15 = sbr.rel target = $region3
  $region8: #{se_block_forward.6} parent=0 // loop_exit
    _

// kernel: se_block_forward.5
$region0: #{se_block_forward.5}
  #allocation0 [shape = 'u32[]', space=smem, size = 0x4, offset = 0x4, fixed_abs, tag = 'smem constant byte address 0x4 - core index']
  #allocation1 [shape = 'u32[144,128]{1,0:T(1,128)}', space=vmem, size = 0x12000, scoped, tag = 'internal scratch']
  %s0 = inlined_call_operand.vmem [shape: bf16[2,18,18,128], index: 0, kind: input, shape index: {}]
  %s1 = inlined_call_operand.vmem [shape: f32[4,128], index: 1, kind: input, shape index: {}]
  %s2 = inlined_call_operand.vmem [shape: bf16[3,384,128], index: 2, kind: input, shape index: {}]
  %s3 = inlined_call_operand.vmem [shape: f32[1,128], index: 3, kind: input, shape index: {}]
  %s4 = inlined_call_operand.vmem [shape: bf16[2,1,256,128], index: 4, kind: output, shape index: {0}]
  %s5 = inlined_call_operand.vmem [shape: f32[2,1,2,128], index: 5, kind: output, shape index: {1}]
  %6 = xla_tuple %s4, %s5
  %s7 = sld [smem:[#allocation0]]
  $region57: #{se_block_forward.5} parent=0
    _
  %s9 = ssub.s32 1, %s7
  %s10 = scalar_select 0, %s9, %s7
  loop: start=0, step=1, limit=4
  $region2: #{se_block_forward.5} parent=0 // loop_pre_header
    _
  $region3: #{se_block_forward.5} parent=0 // loop_header
    %s12 = sphi 0, %s16
    %p13 = scmp.ge.s32.totalorder %s12, 4
    %s19 = sphi 0, %s31
    %s20 = sphi 0, %s27
    %s21 = sphi 0, %s19
    %s22 = sphi 0, %s20
    %s23 = sphi 0, %s21
    %s24 = sphi 0, %s22
    %s34 = sphi 0, %s36
    %s37 = sphi 0, %s34
    %s38 = sphi 0, %s37
    %s54 = sphi 0, %s38
    %s58 = sphi 0, %s58
    %s60 = sphi 0, %s58
    %s61 = sphi 0, %s60
    %s75 = sphi 0, %s61
    %s79 = sphi 0, %s79
    %s81 = sphi 0, %s79
    %s82 = sphi 0, %s81
    %s96 = sphi 0, %s82
    %s100 = sphi 0, %s100
    %s102 = sphi 0, %s100
    %s103 = sphi 0, %s102
    %s117 = sphi 0, %s103
    %s125 = sphi 0, %s127
    %s128 = sphi 0, %s125
    %s129 = sphi 0, %s128
    %s145 = sphi 0, %s129
    %s153 = sphi 0, %s155
    %s156 = sphi 0, %s153
    %s157 = sphi 0, %s156
    %s173 = sphi 0, %s157
  $region4: #{se_block_forward.5} parent=0 // loop_header_branch
    %15 = sbr.rel (%p13) target = $region8
  $region5: #{se_block_forward.5} parent=0 // loop_body
    %s17 = ssub.s32 %s12, 1
    %s18 = ssub.s32 %s12, 2
    %s25 = sadd.s32 1, %s20
    %p26 = scmp.ge.s32.totalorder %s25, 1
    %s27 = scalar_select %p26, 0, %s25
    %s28 = sadd.s32 1, %s19
    %s29 = scalar_select %p26, %s28, %s19
    %p30 = scmp.ge.s32.totalorder %s29, 2
    %s31 = scalar_select %p30, 0, %s29
    %s32 = ssub.s32 %s19, %s31
    %p33 = scmp.eq.s32.totalorder %s32, 0
    %s35 = sadd.s32 %s34, 1
    %s36 = scalar_select %p33, %s34, %s35
    %p39 = pneg %p33
    %p40 = scmp.eq.s32.totalorder %s12, 1
    %p41 = por %p39, %p40
    %p42 = scmp.ne.s32.totalorder %s34, %s37
    %p43 = scmp.eq.s32.totalorder %s12, 0
    %p44 = por %p42, %p43
    %p45 = scmp.ne.s32.totalorder %s34, %s37
    %p46 = scmp.eq.s32.totalorder %s17, 1
    %p47 = por %p45, %p46
    %p48 = scmp.ne.s32.totalorder %s37, %s38
    %p49 = scmp.eq.s32.totalorder %s17, 0
    %p50 = por %p48, %p49
    %p51 = scmp.ne.s32.totalorder %s37, %s38
    %p52 = scmp.eq.s32.totalorder %s18, 1
    %p53 = por %p51, %p52
    %p55 = scmp.ne.s32.totalorder %s38, %s54
    %p56 = scmp.eq.s32.totalorder %s18, 0
    %p57 = por %p55, %p56
    %s59 = sadd.s32 %s58, 1
    %p62 = scmp.eq.s32.totalorder %s12, 1
    %p63 = scmp.ne.s32.totalorder %s58, %s60
    %p64 = scmp.eq.s32.totalorder %s12, 0
    %p65 = por %p63, %p64
    %p66 = scmp.ne.s32.totalorder %s58, %s60
    %p67 = scmp.eq.s32.totalorder %s17, 1
    %p68 = por %p66, %p67
    %p69 = scmp.ne.s32.totalorder %s60, %s61
    %p70 = scmp.eq.s32.totalorder %s17, 0
    %p71 = por %p69, %p70
    %p72 = scmp.ne.s32.totalorder %s60, %s61
    %p73 = scmp.eq.s32.totalorder %s18, 1
    %p74 = por %p72, %p73
    %p76 = scmp.ne.s32.totalorder %s61, %s75
    %p77 = scmp.eq.s32.totalorder %s18, 0
    %p78 = por %p76, %p77
    %s80 = sadd.s32 %s79, 1
    %p83 = scmp.eq.s32.totalorder %s12, 1
    %p84 = scmp.ne.s32.totalorder %s79, %s81
    %p85 = scmp.eq.s32.totalorder %s12, 0
    %p86 = por %p84, %p85
    %p87 = scmp.ne.s32.totalorder %s79, %s81
    %p88 = scmp.eq.s32.totalorder %s17, 1
    %p89 = por %p87, %p88
    %p90 = scmp.ne.s32.totalorder %s81, %s82
    %p91 = scmp.eq.s32.totalorder %s17, 0
    %p92 = por %p90, %p91
    %p93 = scmp.ne.s32.totalorder %s81, %s82
    %p94 = scmp.eq.s32.totalorder %s18, 1
    %p95 = por %p93, %p94
    %p97 = scmp.ne.s32.totalorder %s82, %s96
    %p98 = scmp.eq.s32.totalorder %s18, 0
    %p99 = por %p97, %p98
    %s101 = sadd.s32 %s100, 1
    %p104 = scmp.eq.s32.totalorder %s12, 1
    %p105 = scmp.ne.s32.totalorder %s100, %s102
    %p106 = scmp.eq.s32.totalorder %s12, 0
    %p107 = por %p105, %p106
    %p108 = scmp.ne.s32.totalorder %s100, %s102
    %p109 = scmp.eq.s32.totalorder %s17, 1
    %p110 = por %p108, %p109
    %p111 = scmp.ne.s32.totalorder %s102, %s103
    %p112 = scmp.eq.s32.totalorder %s17, 0
    %p113 = por %p111, %p112
    %p114 = scmp.ne.s32.totalorder %s102, %s103
    %p115 = scmp.eq.s32.totalorder %s18, 1
    %p116 = por %p114, %p115
    %p118 = scmp.ne.s32.totalorder %s103, %s117
    %p119 = scmp.eq.s32.totalorder %s18, 0
    %p120 = por %p118, %p119
    %s121 = ssub.s32 %s19, %s31
    %s122 = ssub.s32 %s20, %s27
    %s123 = sor.u32 %s121, %s122
    %p124 = scmp.eq.s32.totalorder %s123, 0
    %s126 = sadd.s32 %s125, 1
    %s127 = scalar_select %p124, %s125, %s126
    %p130 = pneg %p124
    %p131 = scmp.eq.s32.totalorder %s12, 1
    %p132 = por %p130, %p131
    %p133 = scmp.ne.s32.totalorder %s125, %s128
    %p134 = scmp.eq.s32.totalorder %s12, 0
    %p135 = por %p133, %p134
    %p136 = scmp.ne.s32.totalorder %s125, %s128
    %p137 = scmp.eq.s32.totalorder %s17, 1
    %p138 = por %p136, %p137
    %p139 = scmp.ne.s32.totalorder %s128, %s129
    %p140 = scmp.eq.s32.totalorder %s17, 0
    %p141 = por %p139, %p140
    %p142 = scmp.ne.s32.totalorder %s128, %s129
    %p143 = scmp.eq.s32.totalorder %s18, 1
    %p144 = por %p142, %p143
    %p146 = scmp.ne.s32.totalorder %s129, %s145
    %p147 = scmp.eq.s32.totalorder %s18, 0
    %p148 = por %p146, %p147
    %s149 = ssub.s32 %s19, %s31
    %s150 = ssub.s32 %s20, %s27
    %s151 = sor.u32 %s149, %s150
    %p152 = scmp.eq.s32.totalorder %s151, 0
    %s154 = sadd.s32 %s153, 1
    %s155 = scalar_select %p152, %s153, %s154
    %p158 = pneg %p152
    %p159 = scmp.eq.s32.totalorder %s12, 1
    %p160 = por %p158, %p159
    %p161 = scmp.ne.s32.totalorder %s153, %s156
    %p162 = scmp.eq.s32.totalorder %s12, 0
    %p163 = por %p161, %p162
    %p164 = scmp.ne.s32.totalorder %s153, %s156
    %p165 = scmp.eq.s32.totalorder %s17, 1
    %p166 = por %p164, %p165
    %p167 = scmp.ne.s32.totalorder %s156, %s157
    %p168 = scmp.eq.s32.totalorder %s17, 0
    %p169 = por %p167, %p168
    %p170 = scmp.ne.s32.totalorder %s156, %s157
    %p171 = scmp.eq.s32.totalorder %s18, 1
    %p172 = por %p170, %p171
    %p174 = scmp.ne.s32.totalorder %s157, %s173
    %p175 = scmp.eq.s32.totalorder %s18, 0
    %p176 = por %p174, %p175
    %p177 = scmp.le.s32.totalorder 1, %s12
    %p178 = scmp.lt.s32.totalorder %s12, 3
    %p179 = pnand %p177, %p178
    %p180 = pneg %p179
    // Predicated region
    $region9: #{se_block_forward.5} parent=5 // pred_check
      _
    $region10: #{se_block_forward.5} parent=5 // pred_check_branch
      %182 = sbr.rel (%p179) target = $region12
    $region11: #{se_block_forward.5} parent=5 // pred_region
      %s183 = ssub.s32 %s12, 1
      // Predicated region
      $region13: #{se_block_forward.5} parent=11 // pred_check
        %p184 = pneg %p71
      $region14: #{se_block_forward.5} parent=11 // pred_check_branch
        %186 = sbr.rel (%p184) target = $region16
      $region15: #{se_block_forward.5} parent=11 // pred_region
        _
      $region16: #{se_block_forward.5} parent=11 // pred_fallthru
        _
      // Predicated region
      $region17: #{se_block_forward.5} parent=11 // pred_check
        %p187 = pneg %p92
      $region18: #{se_block_forward.5} parent=11 // pred_check_branch
        %189 = sbr.rel (%p187) target = $region20
      $region19: #{se_block_forward.5} parent=11 // pred_region
        _
      $region20: #{se_block_forward.5} parent=11 // pred_fallthru
        _
      // Predicated region
      $region21: #{se_block_forward.5} parent=11 // pred_check
        %p190 = pneg %p113
      $region22: #{se_block_forward.5} parent=11 // pred_check_branch
        %192 = sbr.rel (%p190) target = $region24
      $region23: #{se_block_forward.5} parent=11 // pred_region
        _
      $region24: #{se_block_forward.5} parent=11 // pred_fallthru
        _
    $region12: #{se_block_forward.5} parent=5 // pred_fallthru
      _
    %p193 = scmp.lt.s32.totalorder %s12, 2
    // Predicated region
    $region25: #{se_block_forward.5} parent=5 // pred_check
      %p194 = pneg %p193
    $region26: #{se_block_forward.5} parent=5 // pred_check_branch
      %196 = sbr.rel (%p194) target = $region28
    $region27: #{se_block_forward.5} parent=5 // pred_region
      // Predicated region
      $region29: #{se_block_forward.5} parent=27 // pred_check
        %p197 = pneg %p44
      $region30: #{se_block_forward.5} parent=27 // pred_check_branch
        %199 = sbr.rel (%p197) target = $region32
      $region31: #{se_block_forward.5} parent=27 // pred_region
        %p200 = scmp.lt.s32.totalorder %s19, 1
        %s201 = scalar_select %p200, %s19, 1
        %s202 = smul.addr %s201, 54
        %s203 = smul.addr %s202, 4
        %s204 = scalar_lea.vmem %s0, %s203
      $region32: #{se_block_forward.5} parent=27 // pred_fallthru
        _
    $region28: #{se_block_forward.5} parent=5 // pred_fallthru
      _
    %p205 = scmp.le.s32.totalorder 1, %s12
    %p206 = scmp.lt.s32.totalorder %s12, 3
    %p207 = pnand %p205, %p206
    %p208 = pneg %p207
    // Predicated region
    $region33: #{se_block_forward.5} parent=5 // pred_check
      _
    $region34: #{se_block_forward.5} parent=5 // pred_check_branch
      %210 = sbr.rel (%p207) target = $region36
    $region35: #{se_block_forward.5} parent=5 // pred_region
      %s211 = ssub.s32 %s12, 1
      %p212 = scmp.lt.s32.totalorder %s21, 1
      %s213 = scalar_select %p212, %s21, 1
      %s214 = smul.addr %s213, 54
      %s215 = smul.addr %s214, 4
      %s216 = scalar_lea.vmem %s0, %s215
      %p217 = pneg %p50
      %p218 = pneg %p47
      %p219 = pneg %p71
      %p220 = pneg %p68
      %p221 = pneg %p92
      %p222 = pneg %p89
      %p223 = pneg %p113
      %p224 = pneg %p110
      %p225 = pneg %p141
      %p226 = pneg %p138
      %p227 = scmp.lt.s32.totalorder %s21, 1
      %s228 = scalar_select %p227, %s21, 1
      %p229 = scmp.lt.s32.totalorder %s22, 0
      %s230 = scalar_select %p229, %s22, 0
      %s231 = smul.addr %s230, 32
      %s232 = smul.addr %s228, 32
      %s233 = sadd.s32 %s231, %s232
      %s234 = smul.addr %s233, 4
      %s235 = scalar_lea.vmem %s4, %s234
      %p236 = pneg %p169
      %p237 = pneg %p166
      %p238 = scmp.lt.s32.totalorder %s21, 1
      %s239 = scalar_select %p238, %s21, 1
      %p240 = scmp.lt.s32.totalorder %s22, 0
      %s241 = scalar_select %p240, %s22, 0
      %s242 = sadd.s32 %s241, %s239
      %s243 = smul.addr %s242, 2
      %s244 = scalar_lea.vmem %s5, %s243
      %p245 = scmp.lt.s32.totalorder %s21, 1
      %s246 = scalar_select %p245, %s21, 1
      %s247 = smul.addr %s246, 54
      %s248 = smul.addr %s247, 4
      %s249 = scalar_lea.vmem %s0, %s248
      %p250 = scmp.lt.s32.totalorder %s21, 1
      %s251 = scalar_select %p250, %s21, 1
      %p252 = scmp.lt.s32.totalorder %s22, 0
      %s253 = scalar_select %p252, %s22, 0
      %s254 = smul.addr %s253, 32
      %s255 = smul.addr %s251, 32
      %s256 = sadd.s32 %s254, %s255
      %s257 = smul.addr %s256, 4
      %s258 = scalar_lea.vmem %s4, %s257
      %p259 = scmp.lt.s32.totalorder %s21, 1
      %s260 = scalar_select %p259, %s21, 1
      %p261 = scmp.lt.s32.totalorder %s22, 0
      %s262 = scalar_select %p261, %s22, 0
      %s263 = sadd.s32 %s262, %s260
      %s264 = smul.addr %s263, 2
      %s265 = scalar_lea.vmem %s5, %s264
      %v267 = vld [vmem:[%s1] sm:$0x1]
      %v268 = vld [vmem:[%s1 + $0x1] sm:$0x1]
      %v269 = vld [vmem:[%s1 + $0x2] sm:$0x1]
      %v270 = vld [vmem:[%s1 + $0x3] sm:$0x1]
      %v271 = vadd.f32 %v268, 1e-05
      %v272 = vrsqrt.pop %v271
      %v273 = vld [vmem:[%s249] sm:$0xf]
      %v274 = vld [vmem:[%s249 + $0x4] sm:$0xf]
      %v275 = vld [vmem:[%s249 + $0x8] sm:$0x1]
      %v276 = vld [vmem:[%s249 + $0xc] sm:$0xf]
      %v277 = vld [vmem:[%s249 + $0x10] sm:$0xf]
      %v278 = vld [vmem:[%s249 + $0x14] sm:$0x1]
      %v279 = vld [vmem:[%s249 + $0x18] sm:$0xf]
      %v280 = vld [vmem:[%s249 + $0x1c] sm:$0xf]
      %v281 = vld [vmem:[%s249 + $0x20] sm:$0x1]
      %v282 = vld [vmem:[%s249 + $0x24] sm:$0xf]
      %v283 = vld [vmem:[%s249 + $0x28] sm:$0xf]
      %v284 = vld [vmem:[%s249 + $0x2c] sm:$0x1]
      %v285 = vld [vmem:[%s249 + $0x30] sm:$0xf]
      %v286 = vld [vmem:[%s249 + $0x34] sm:$0xf]
      %v287 = vld [vmem:[%s249 + $0x38] sm:$0x1]
      %v288 = vld [vmem:[%s249 + $0x3c] sm:$0xf]
      %v289 = vld [vmem:[%s249 + $0x40] sm:$0xf]
      %v290 = vld [vmem:[%s249 + $0x44] sm:$0x1]
      %v291 = vld [vmem:[%s249 + $0x48] sm:$0xf]
      %v292 = vld [vmem:[%s249 + $0x4c] sm:$0xf]
      %v293 = vld [vmem:[%s249 + $0x50] sm:$0x1]
      %v294 = vld [vmem:[%s249 + $0x54] sm:$0xf]
      %v295 = vld [vmem:[%s249 + $0x58] sm:$0xf]
      %v296 = vld [vmem:[%s249 + $0x5c] sm:$0x1]
      %v297 = vld [vmem:[%s249 + $0x60] sm:$0xf]
      %v298 = vld [vmem:[%s249 + $0x64] sm:$0xf]
      %v299 = vld [vmem:[%s249 + $0x68] sm:$0x1]
      %v300 = vld [vmem:[%s249 + $0x6c] sm:$0xf]
      %v301 = vld [vmem:[%s249 + $0x70] sm:$0xf]
      %v302 = vld [vmem:[%s249 + $0x74] sm:$0x1]
      %v303 = vld [vmem:[%s249 + $0x78] sm:$0xf]
      %v304 = vld [vmem:[%s249 + $0x7c] sm:$0xf]
      %v305 = vld [vmem:[%s249 + $0x80] sm:$0x1]
      %v306 = vld [vmem:[%s249 + $0x84] sm:$0xf]
      %v307 = vld [vmem:[%s249 + $0x88] sm:$0xf]
      %v308 = vld [vmem:[%s249 + $0x8c] sm:$0x1]
      %v309 = vld [vmem:[%s249 + $0x90] sm:$0xf]
      %v310 = vld [vmem:[%s249 + $0x94] sm:$0xf]
      %v311 = vld [vmem:[%s249 + $0x98] sm:$0x1]
      %v312 = vld [vmem:[%s249 + $0x9c] sm:$0xf]
      %v313 = vld [vmem:[%s249 + $0xa0] sm:$0xf]
      %v314 = vld [vmem:[%s249 + $0xa4] sm:$0x1]
      %v315 = vld [vmem:[%s249 + $0xa8] sm:$0xf]
      %v316 = vld [vmem:[%s249 + $0xac] sm:$0xf]
      %v317 = vld [vmem:[%s249 + $0xb0] sm:$0x1]
      %v318 = vld [vmem:[%s249 + $0xb4] sm:$0xf]
      %v319 = vld [vmem:[%s249 + $0xb8] sm:$0xf]
      %v320 = vld [vmem:[%s249 + $0xbc] sm:$0x1]
      %v321 = vld [vmem:[%s249 + $0xc0] sm:$0xf]
      %v322 = vld [vmem:[%s249 + $0xc4] sm:$0xf]
      %v323 = vld [vmem:[%s249 + $0xc8] sm:$0x1]
      %v324 = vld [vmem:[%s249 + $0xcc] sm:$0xf]
      %v325 = vld [vmem:[%s249 + $0xd0] sm:$0xf]
      %v326 = vld [vmem:[%s249 + $0xd4] sm:$0x1]
      %v327 = vunpack.c.l.bf16 %v273
      %v328 = vunpack.c.l.bf16 %v274
      %v329 = vunpack.c.l.bf16 %v275
      %v330 = vunpack.c.l.bf16 %v276
      %v331 = vunpack.c.l.bf16 %v277
      %v332 = vunpack.c.l.bf16 %v278
      %v333 = vunpack.c.l.bf16 %v279
      %v334 = vunpack.c.l.bf16 %v280
      %v335 = vunpack.c.l.bf16 %v281
      %v336 = vunpack.c.l.bf16 %v282
      %v337 = vunpack.c.l.bf16 %v283
      %v338 = vunpack.c.l.bf16 %v284
      %v339 = vunpack.c.l.bf16 %v285
      %v340 = vunpack.c.l.bf16 %v286
      %v341 = vunpack.c.l.bf16 %v287
      %v342 = vunpack.c.l.bf16 %v288
      %v343 = vunpack.c.l.bf16 %v289
      %v344 = vunpack.c.l.bf16 %v290
      %v345 = vunpack.c.l.bf16 %v291
      %v346 = vunpack.c.l.bf16 %v292
      %v347 = vunpack.c.l.bf16 %v293
      %v348 = vunpack.c.l.bf16 %v294
      %v349 = vunpack.c.l.bf16 %v295
      %v350 = vunpack.c.l.bf16 %v296
      %v351 = vunpack.c.l.bf16 %v297
      %v352 = vunpack.c.l.bf16 %v298
      %v353 = vunpack.c.l.bf16 %v299
      %v354 = vunpack.c.l.bf16 %v300
      %v355 = vunpack.c.l.bf16 %v301
      %v356 = vunpack.c.l.bf16 %v302
      %v357 = vunpack.c.l.bf16 %v303
      %v358 = vunpack.c.l.bf16 %v304
      %v359 = vunpack.c.l.bf16 %v305
      %v360 = vunpack.c.l.bf16 %v306
      %v361 = vunpack.c.l.bf16 %v307
      %v362 = vunpack.c.l.bf16 %v308
      %v363 = vunpack.c.l.bf16 %v309
      %v364 = vunpack.c.l.bf16 %v310
      %v365 = vunpack.c.l.bf16 %v311
      %v366 = vunpack.c.l.bf16 %v312
      %v367 = vunpack.c.l.bf16 %v313
      %v368 = vunpack.c.l.bf16 %v314
      %v369 = vunpack.c.l.bf16 %v315
      %v370 = vunpack.c.l.bf16 %v316
      %v371 = vunpack.c.l.bf16 %v317
      %v372 = vunpack.c.l.bf16 %v318
      %v373 = vunpack.c.l.bf16 %v319
      %v374 = vunpack.c.l.bf16 %v320
      %v375 = vunpack.c.l.bf16 %v321
      %v376 = vunpack.c.l.bf16 %v322
      %v377 = vunpack.c.l.bf16 %v323
      %v378 = vunpack.c.l.bf16 %v324
      %v379 = vunpack.c.l.bf16 %v325
      %v380 = vunpack.c.l.bf16 %v326
      %v381 = vlaneseq
      %v382 = vshrl.u32 %v381, 7
      %v383 = vsub.s32 0, %v382
      %v384 = vrot.slane %v267, %v383
      %v385 = vsub.f32 %v327, %v384
      %v386 = vsub.f32 %v328, %v384
      %v387 = vsub.f32 %v329, %v384
      %v388 = vsub.f32 %v330, %v384
      %v389 = vsub.f32 %v331, %v384
      %v390 = vsub.f32 %v332, %v384
      %v391 = vsub.f32 %v333, %v384
      %v392 = vsub.f32 %v334, %v384
      %v393 = vsub.f32 %v335, %v384
      %v394 = vsub.f32 %v336, %v384
      %v395 = vsub.f32 %v337, %v384
      %v396 = vsub.f32 %v338, %v384
      %v397 = vsub.f32 %v339, %v384
      %v398 = vsub.f32 %v340, %v384
      %v399 = vsub.f32 %v341, %v384
      %v400 = vsub.f32 %v342, %v384
      %v401 = vsub.f32 %v343, %v384
      %v402 = vsub.f32 %v344, %v384
      %v403 = vsub.f32 %v345, %v384
      %v404 = vsub.f32 %v346, %v384
      %v405 = vsub.f32 %v347, %v384
      %v406 = vsub.f32 %v348, %v384
      %v407 = vsub.f32 %v349, %v384
      %v408 = vsub.f32 %v350, %v384
      %v409 = vsub.f32 %v351, %v384
      %v410 = vsub.f32 %v352, %v384
      %v411 = vsub.f32 %v353, %v384
      %v412 = vsub.f32 %v354, %v384
      %v413 = vsub.f32 %v355, %v384
      %v414 = vsub.f32 %v356, %v384
      %v415 = vsub.f32 %v357, %v384
      %v416 = vsub.f32 %v358, %v384
      %v417 = vsub.f32 %v359, %v384
      %v418 = vsub.f32 %v360, %v384
      %v419 = vsub.f32 %v361, %v384
      %v420 = vsub.f32 %v362, %v384
      %v421 = vsub.f32 %v363, %v384
      %v422 = vsub.f32 %v364, %v384
      %v423 = vsub.f32 %v365, %v384
      %v424 = vsub.f32 %v366, %v384
      %v425 = vsub.f32 %v367, %v384
      %v426 = vsub.f32 %v368, %v384
      %v427 = vsub.f32 %v369, %v384
      %v428 = vsub.f32 %v370, %v384
      %v429 = vsub.f32 %v371, %v384
      %v430 = vsub.f32 %v372, %v384
      %v431 = vsub.f32 %v373, %v384
      %v432 = vsub.f32 %v374, %v384
      %v433 = vsub.f32 %v375, %v384
      %v434 = vsub.f32 %v376, %v384
      %v435 = vsub.f32 %v377, %v384
      %v436 = vsub.f32 %v378, %v384
      %v437 = vsub.f32 %v379, %v384
      %v438 = vsub.f32 %v380, %v384
      %v439 = vlaneseq
      %v440 = vshrl.u32 %v439, 7
      %v441 = vsub.s32 0, %v440
      %v442 = vrot.slane %v272, %v441
      %v443 = vmul.f32 %v385, %v442
      %v444 = vmul.f32 %v386, %v442
      %v445 = vmul.f32 %v387, %v442
      %v446 = vmul.f32 %v388, %v442
      %v447 = vmul.f32 %v389, %v442
      %v448 = vmul.f32 %v390, %v442
      %v449 = vmul.f32 %v391, %v442
      %v450 = vmul.f32 %v392, %v442
      %v451 = vmul.f32 %v393, %v442
      %v452 = vmul.f32 %v394, %v442
      %v453 = vmul.f32 %v395, %v442
      %v454 = vmul.f32 %v396, %v442
      %v455 = vmul.f32 %v397, %v442
      %v456 = vmul.f32 %v398, %v442
      %v457 = vmul.f32 %v399, %v442
      %v458 = vmul.f32 %v400, %v442
      %v459 = vmul.f32 %v401, %v442
      %v460 = vmul.f32 %v402, %v442
      %v461 = vmul.f32 %v403, %v442
      %v462 = vmul.f32 %v404, %v442
      %v463 = vmul.f32 %v405, %v442
      %v464 = vmul.f32 %v406, %v442
      %v465 = vmul.f32 %v407, %v442
      %v466 = vmul.f32 %v408, %v442
      %v467 = vmul.f32 %v409, %v442
      %v468 = vmul.f32 %v410, %v442
      %v469 = vmul.f32 %v411, %v442
      %v470 = vmul.f32 %v412, %v442
      %v471 = vmul.f32 %v413, %v442
      %v472 = vmul.f32 %v414, %v442
      %v473 = vmul.f32 %v415, %v442
      %v474 = vmul.f32 %v416, %v442
      %v475 = vmul.f32 %v417, %v442
      %v476 = vmul.f32 %v418, %v442
      %v477 = vmul.f32 %v419, %v442
      %v478 = vmul.f32 %v420, %v442
      %v479 = vmul.f32 %v421, %v442
      %v480 = vmul.f32 %v422, %v442
      %v481 = vmul.f32 %v423, %v442
      %v482 = vmul.f32 %v424, %v442
      %v483 = vmul.f32 %v425, %v442
      %v484 = vmul.f32 %v426, %v442
      %v485 = vmul.f32 %v427, %v442
      %v486 = vmul.f32 %v428, %v442
      %v487 = vmul.f32 %v429, %v442
      %v488 = vmul.f32 %v430, %v442
      %v489 = vmul.f32 %v431, %v442
      %v490 = vmul.f32 %v432, %v442
      %v491 = vmul.f32 %v433, %v442
      %v492 = vmul.f32 %v434, %v442
      %v493 = vmul.f32 %v435, %v442
      %v494 = vmul.f32 %v436, %v442
      %v495 = vmul.f32 %v437, %v442
      %v496 = vmul.f32 %v438, %v442
      %v497 = vlaneseq
      %v498 = vshrl.u32 %v497, 7
      %v499 = vsub.s32 0, %v498
      %v500 = vrot.slane %v269, %v499
      %v501 = vmul.f32 %v443, %v500
      %v502 = vmul.f32 %v444, %v500
      %v503 = vmul.f32 %v445, %v500
      %v504 = vmul.f32 %v446, %v500
      %v505 = vmul.f32 %v447, %v500
      %v506 = vmul.f32 %v448, %v500
      %v507 = vmul.f32 %v449, %v500
      %v508 = vmul.f32 %v450, %v500
      %v509 = vmul.f32 %v451, %v500
      %v510 = vmul.f32 %v452, %v500
      %v511 = vmul.f32 %v453, %v500
      %v512 = vmul.f32 %v454, %v500
      %v513 = vmul.f32 %v455, %v500
      %v514 = vmul.f32 %v456, %v500
      %v515 = vmul.f32 %v457, %v500
      %v516 = vmul.f32 %v458, %v500
      %v517 = vmul.f32 %v459, %v500
      %v518 = vmul.f32 %v460, %v500
      %v519 = vmul.f32 %v461, %v500
      %v520 = vmul.f32 %v462, %v500
      %v521 = vmul.f32 %v463, %v500
      %v522 = vmul.f32 %v464, %v500
      %v523 = vmul.f32 %v465, %v500
      %v524 = vmul.f32 %v466, %v500
      %v525 = vmul.f32 %v467, %v500
      %v526 = vmul.f32 %v468, %v500
      %v527 = vmul.f32 %v469, %v500
      %v528 = vmul.f32 %v470, %v500
      %v529 = vmul.f32 %v471, %v500
      %v530 = vmul.f32 %v472, %v500
      %v531 = vmul.f32 %v473, %v500
      %v532 = vmul.f32 %v474, %v500
      %v533 = vmul.f32 %v475, %v500
      %v534 = vmul.f32 %v476, %v500
      %v535 = vmul.f32 %v477, %v500
      %v536 = vmul.f32 %v478, %v500
      %v537 = vmul.f32 %v479, %v500
      %v538 = vmul.f32 %v480, %v500
      %v539 = vmul.f32 %v481, %v500
      %v540 = vmul.f32 %v482, %v500
      %v541 = vmul.f32 %v483, %v500
      %v542 = vmul.f32 %v484, %v500
      %v543 = vmul.f32 %v485, %v500
      %v544 = vmul.f32 %v486, %v500
      %v545 = vmul.f32 %v487, %v500
      %v546 = vmul.f32 %v488, %v500
      %v547 = vmul.f32 %v489, %v500
      %v548 = vmul.f32 %v490, %v500
      %v549 = vmul.f32 %v491, %v500
      %v550 = vmul.f32 %v492, %v500
      %v551 = vmul.f32 %v493, %v500
      %v552 = vmul.f32 %v494, %v500
      %v553 = vmul.f32 %v495, %v500
      %v554 = vmul.f32 %v496, %v500
      %v555 = vlaneseq
      %v556 = vshrl.u32 %v555, 7
      %v557 = vsub.s32 0, %v556
      %v558 = vrot.slane %v270, %v557
      %v559 = vadd.f32 %v501, %v558
      %v560 = vadd.f32 %v502, %v558
      %v561 = vadd.f32 %v503, %v558
      %v562 = vadd.f32 %v504, %v558
      %v563 = vadd.f32 %v505, %v558
      %v564 = vadd.f32 %v506, %v558
      %v565 = vadd.f32 %v507, %v558
      %v566 = vadd.f32 %v508, %v558
      %v567 = vadd.f32 %v509, %v558
      %v568 = vadd.f32 %v510, %v558
      %v569 = vadd.f32 %v511, %v558
      %v570 = vadd.f32 %v512, %v558
      %v571 = vadd.f32 %v513, %v558
      %v572 = vadd.f32 %v514, %v558
      %v573 = vadd.f32 %v515, %v558
      %v574 = vadd.f32 %v516, %v558
      %v575 = vadd.f32 %v517, %v558
      %v576 = vadd.f32 %v518, %v558
      %v577 = vadd.f32 %v519, %v558
      %v578 = vadd.f32 %v520, %v558
      %v579 = vadd.f32 %v521, %v558
      %v580 = vadd.f32 %v522, %v558
      %v581 = vadd.f32 %v523, %v558
      %v582 = vadd.f32 %v524, %v558
      %v583 = vadd.f32 %v525, %v558
      %v584 = vadd.f32 %v526, %v558
      %v585 = vadd.f32 %v527, %v558
      %v586 = vadd.f32 %v528, %v558
      %v587 = vadd.f32 %v529, %v558
      %v588 = vadd.f32 %v530, %v558
      %v589 = vadd.f32 %v531, %v558
      %v590 = vadd.f32 %v532, %v558
      %v591 = vadd.f32 %v533, %v558
      %v592 = vadd.f32 %v534, %v558
      %v593 = vadd.f32 %v535, %v558
      %v594 = vadd.f32 %v536, %v558
      %v595 = vadd.f32 %v537, %v558
      %v596 = vadd.f32 %v538, %v558
      %v597 = vadd.f32 %v539, %v558
      %v598 = vadd.f32 %v540, %v558
      %v599 = vadd.f32 %v541, %v558
      %v600 = vadd.f32 %v542, %v558
      %v601 = vadd.f32 %v543, %v558
      %v602 = vadd.f32 %v544, %v558
      %v603 = vadd.f32 %v545, %v558
      %v604 = vadd.f32 %v546, %v558
      %v605 = vadd.f32 %v547, %v558
      %v606 = vadd.f32 %v548, %v558
      %v607 = vadd.f32 %v549, %v558
      %v608 = vadd.f32 %v550, %v558
      %v609 = vadd.f32 %v551, %v558
      %v610 = vadd.f32 %v552, %v558
      %v611 = vadd.f32 %v553, %v558
      %v612 = vadd.f32 %v554, %v558
      %v613 = vmax.f32 %v559, 0.0
      %v614 = vmax.f32 %v560, 0.0
      %v615 = vmax.f32 %v561, 0.0
      %v616 = vmax.f32 %v562, 0.0
      %v617 = vmax.f32 %v563, 0.0
      %v618 = vmax.f32 %v564, 0.0
      %v619 = vmax.f32 %v565, 0.0
      %v620 = vmax.f32 %v566, 0.0
      %v621 = vmax.f32 %v567, 0.0
      %v622 = vmax.f32 %v568, 0.0
      %v623 = vmax.f32 %v569, 0.0
      %v624 = vmax.f32 %v570, 0.0
      %v625 = vmax.f32 %v571, 0.0
      %v626 = vmax.f32 %v572, 0.0
      %v627 = vmax.f32 %v573, 0.0
      %v628 = vmax.f32 %v574, 0.0
      %v629 = vmax.f32 %v575, 0.0
      %v630 = vmax.f32 %v576, 0.0
      %v631 = vmax.f32 %v577, 0.0
      %v632 = vmax.f32 %v578, 0.0
      %v633 = vmax.f32 %v579, 0.0
      %v634 = vmax.f32 %v580, 0.0
      %v635 = vmax.f32 %v581, 0.0
      %v636 = vmax.f32 %v582, 0.0
      %v637 = vmax.f32 %v583, 0.0
      %v638 = vmax.f32 %v584, 0.0
      %v639 = vmax.f32 %v585, 0.0
      %v640 = vmax.f32 %v586, 0.0
      %v641 = vmax.f32 %v587, 0.0
      %v642 = vmax.f32 %v588, 0.0
      %v643 = vmax.f32 %v589, 0.0
      %v644 = vmax.f32 %v590, 0.0
      %v645 = vmax.f32 %v591, 0.0
      %v646 = vmax.f32 %v592, 0.0
      %v647 = vmax.f32 %v593, 0.0
      %v648 = vmax.f32 %v594, 0.0
      %v649 = vmax.f32 %v595, 0.0
      %v650 = vmax.f32 %v596, 0.0
      %v651 = vmax.f32 %v597, 0.0
      %v652 = vmax.f32 %v598, 0.0
      %v653 = vmax.f32 %v599, 0.0
      %v654 = vmax.f32 %v600, 0.0
      %v655 = vmax.f32 %v601, 0.0
      %v656 = vmax.f32 %v602, 0.0
      %v657 = vmax.f32 %v603, 0.0
      %v658 = vmax.f32 %v604, 0.0
      %v659 = vmax.f32 %v605, 0.0
      %v660 = vmax.f32 %v606, 0.0
      %v661 = vmax.f32 %v607, 0.0
      %v662 = vmax.f32 %v608, 0.0
      %v663 = vmax.f32 %v609, 0.0
      %v664 = vmax.f32 %v610, 0.0
      %v665 = vmax.f32 %v611, 0.0
      %v666 = vmax.f32 %v612, 0.0
      %v667 = vlaneseq
      %v668 = vshrl.u32 %v667, 7
      %v669 = vadd.s32 %v668, 8
      %v670 = vadd.s32 %v668, 16
      %vm671 = vcmp.ge.s32.totalorder %v668, 1
      %vm672 = vcmp.ge.s32.totalorder %v669, 1
      %vm673 = vcmp.ge.s32.totalorder %v670, 1
      %vm674 = vcmp.le.s32.totalorder %v668, 16
      %vm675 = vcmp.le.s32.totalorder %v669, 16
      %vm676 = vcmp.le.s32.totalorder %v670, 16
      %vm677 = vmand %vm671, %vm674
      %vm678 = vmand %vm672, %vm675
      %vm679 = vmand %vm673, %vm676
      %v680 = vsel %vm677, 1, 0
      %v681 = vsel %vm678, 1, 0
      %v682 = vsel %vm679, 1, 0
      %v683 = vlaneseq
      %v684 = vshrl.u32 %v683, 7
      %v685 = vsub.s32 0, %v684
      %v686 = vrot.slane %v680, %v685
      %v687 = vlaneseq
      %v688 = vshrl.u32 %v687, 7
      %v689 = vsub.s32 1, %v688
      %v690 = vrot.slane %v680, %v689
      %v691 = vlaneseq
      %v692 = vshrl.u32 %v691, 7
      %v693 = vsub.s32 2, %v692
      %v694 = vrot.slane %v680, %v693
      %v695 = vlaneseq
      %v696 = vshrl.u32 %v695, 7
      %v697 = vsub.s32 3, %v696
      %v698 = vrot.slane %v680, %v697
      %v699 = vlaneseq
      %v700 = vshrl.u32 %v699, 7
      %v701 = vsub.s32 4, %v700
      %v702 = vrot.slane %v680, %v701
      %v703 = vlaneseq
      %v704 = vshrl.u32 %v703, 7
      %v705 = vsub.s32 5, %v704
      %v706 = vrot.slane %v680, %v705
      %v707 = vlaneseq
      %v708 = vshrl.u32 %v707, 7
      %v709 = vsub.s32 6, %v708
      %v710 = vrot.slane %v680, %v709
      %v711 = vlaneseq
      %v712 = vshrl.u32 %v711, 7
      %v713 = vsub.s32 7, %v712
      %v714 = vrot.slane %v680, %v713
      %v715 = vlaneseq
      %v716 = vshrl.u32 %v715, 7
      %v717 = vsub.s32 0, %v716
      %v718 = vrot.slane %v681, %v717
      %v719 = vlaneseq
      %v720 = vshrl.u32 %v719, 7
      %v721 = vsub.s32 1, %v720
      %v722 = vrot.slane %v681, %v721
      %v723 = vlaneseq
      %v724 = vshrl.u32 %v723, 7
      %v725 = vsub.s32 2, %v724
      %v726 = vrot.slane %v681, %v725
      %v727 = vlaneseq
      %v728 = vshrl.u32 %v727, 7
      %v729 = vsub.s32 3, %v728
      %v730 = vrot.slane %v681, %v729
      %v731 = vlaneseq
      %v732 = vshrl.u32 %v731, 7
      %v733 = vsub.s32 4, %v732
      %v734 = vrot.slane %v681, %v733
      %v735 = vlaneseq
      %v736 = vshrl.u32 %v735, 7
      %v737 = vsub.s32 5, %v736
      %v738 = vrot.slane %v681, %v737
      %v739 = vlaneseq
      %v740 = vshrl.u32 %v739, 7
      %v741 = vsub.s32 6, %v740
      %v742 = vrot.slane %v681, %v741
      %v743 = vlaneseq
      %v744 = vshrl.u32 %v743, 7
      %v745 = vsub.s32 7, %v744
      %v746 = vrot.slane %v681, %v745
      %v747 = vlaneseq
      %v748 = vshrl.u32 %v747, 7
      %v749 = vsub.s32 0, %v748
      %v750 = vrot.slane %v682, %v749
      %v751 = vlaneseq
      %v752 = vshrl.u32 %v751, 7
      %v753 = vsub.s32 1, %v752
      %v754 = vrot.slane %v682, %v753
      %vm755 = vcmp.ne.s32.totalorder %v686, 0
      %vm756 = vcmp.ne.s32.totalorder %v690, 0
      %vm757 = vcmp.ne.s32.totalorder %v694, 0
      %vm758 = vcmp.ne.s32.totalorder %v698, 0
      %vm759 = vcmp.ne.s32.totalorder %v702, 0
      %vm760 = vcmp.ne.s32.totalorder %v706, 0
      %vm761 = vcmp.ne.s32.totalorder %v710, 0
      %vm762 = vcmp.ne.s32.totalorder %v714, 0
      %vm763 = vcmp.ne.s32.totalorder %v718, 0
      %vm764 = vcmp.ne.s32.totalorder %v722, 0
      %vm765 = vcmp.ne.s32.totalorder %v726, 0
      %vm766 = vcmp.ne.s32.totalorder %v730, 0
      %vm767 = vcmp.ne.s32.totalorder %v734, 0
      %vm768 = vcmp.ne.s32.totalorder %v738, 0
      %vm769 = vcmp.ne.s32.totalorder %v742, 0
      %vm770 = vcmp.ne.s32.totalorder %v746, 0
      %vm771 = vcmp.ne.s32.totalorder %v750, 0
      %vm772 = vcmp.ne.s32.totalorder %v754, 0
      %v773 = vsel %vm755, 1, 0
      %v774 = vsel %vm756, 1, 0
      %v775 = vsel %vm757, 1, 0
      %v776 = vsel %vm758, 1, 0
      %v777 = vsel %vm759, 1, 0
      %v778 = vsel %vm760, 1, 0
      %v779 = vsel %vm761, 1, 0
      %v780 = vsel %vm762, 1, 0
      %v781 = vsel %vm763, 1, 0
      %v782 = vsel %vm764, 1, 0
      %v783 = vsel %vm765, 1, 0
      %v784 = vsel %vm766, 1, 0
      %v785 = vsel %vm767, 1, 0
      %v786 = vsel %vm768, 1, 0
      %v787 = vsel %vm769, 1, 0
      %v788 = vsel %vm770, 1, 0
      %v789 = vsel %vm771, 1, 0
      %v790 = vsel %vm772, 1, 0
      %vm791 = vcmp.eq.s32.totalorder %v773, 1
      %vm792 = vcmp.eq.s32.totalorder %v774, 1
      %vm793 = vcmp.eq.s32.totalorder %v775, 1
      %vm794 = vcmp.eq.s32.totalorder %v776, 1
      %vm795 = vcmp.eq.s32.totalorder %v777, 1
      %vm796 = vcmp.eq.s32.totalorder %v778, 1
      %vm797 = vcmp.eq.s32.totalorder %v779, 1
      %vm798 = vcmp.eq.s32.totalorder %v780, 1
      %vm799 = vcmp.eq.s32.totalorder %v781, 1
      %vm800 = vcmp.eq.s32.totalorder %v782, 1
      %vm801 = vcmp.eq.s32.totalorder %v783, 1
      %vm802 = vcmp.eq.s32.totalorder %v784, 1
      %vm803 = vcmp.eq.s32.totalorder %v785, 1
      %vm804 = vcmp.eq.s32.totalorder %v786, 1
      %vm805 = vcmp.eq.s32.totalorder %v787, 1
      %vm806 = vcmp.eq.s32.totalorder %v788, 1
      %vm807 = vcmp.eq.s32.totalorder %v789, 1
      %vm808 = vcmp.eq.s32.totalorder %v790, 1
      %vm809 = vcmp.eq.s32.totalorder %v680, 1
      %vm810 = vcmp.eq.s32.totalorder %v681, 1
      %vm811 = vcmp.eq.s32.totalorder %v682, 1
      %vm812 = vmand %vm791, %vm809
      %vm813 = vmand %vm791, %vm810
      %vm814 = vmand %vm791, %vm811
      %vm815 = vmand %vm792, %vm809
      %vm816 = vmand %vm792, %vm810
      %vm817 = vmand %vm792, %vm811
      %vm818 = vmand %vm793, %vm809
      %vm819 = vmand %vm793, %vm810
      %vm820 = vmand %vm793, %vm811
      %vm821 = vmand %vm794, %vm809
      %vm822 = vmand %vm794, %vm810
      %vm823 = vmand %vm794, %vm811
      %vm824 = vmand %vm795, %vm809
      %vm825 = vmand %vm795, %vm810
      %vm826 = vmand %vm795, %vm811
      %vm827 = vmand %vm796, %vm809
      %vm828 = vmand %vm796, %vm810
      %vm829 = vmand %vm796, %vm811
      %vm830 = vmand %vm797, %vm809
      %vm831 = vmand %vm797, %vm810
      %vm832 = vmand %vm797, %vm811
      %vm833 = vmand %vm798, %vm809
      %vm834 = vmand %vm798, %vm810
      %vm835 = vmand %vm798, %vm811
      %vm836 = vmand %vm799, %vm809
      %vm837 = vmand %vm799, %vm810
      %vm838 = vmand %vm799, %vm811
      %vm839 = vmand %vm800, %vm809
      %vm840 = vmand %vm800, %vm810
      %vm841 = vmand %vm800, %vm811
      %vm842 = vmand %vm801, %vm809
      %vm843 = vmand %vm801, %vm810
      %vm844 = vmand %vm801, %vm811
      %vm845 = vmand %vm802, %vm809
      %vm846 = vmand %vm802, %vm810
      %vm847 = vmand %vm802, %vm811
      %vm848 = vmand %vm803, %vm809
      %vm849 = vmand %vm803, %vm810
      %vm850 = vmand %vm803, %vm811
      %vm851 = vmand %vm804, %vm809
      %vm852 = vmand %vm804, %vm810
      %vm853 = vmand %vm804, %vm811
      %vm854 = vmand %vm805, %vm809
      %vm855 = vmand %vm805, %vm810
      %vm856 = vmand %vm805, %vm811
      %vm857 = vmand %vm806, %vm809
      %vm858 = vmand %vm806, %vm810
      %vm859 = vmand %vm806, %vm811
      %vm860 = vmand %vm807, %vm809
      %vm861 = vmand %vm807, %vm810
      %vm862 = vmand %vm807, %vm811
      %vm863 = vmand %vm808, %vm809
      %vm864 = vmand %vm808, %vm810
      %vm865 = vmand %vm808, %vm811
      %v866 = vsel %vm812, 1, 0
      %v867 = vsel %vm813, 1, 0
      %v868 = vsel %vm814, 1, 0
      %v869 = vsel %vm815, 1, 0
      %v870 = vsel %vm816, 1, 0
      %v871 = vsel %vm817, 1, 0
      %v872 = vsel %vm818, 1, 0
      %v873 = vsel %vm819, 1, 0
      %v874 = vsel %vm820, 1, 0
      %v875 = vsel %vm821, 1, 0
      %v876 = vsel %vm822, 1, 0
      %v877 = vsel %vm823, 1, 0
      %v878 = vsel %vm824, 1, 0
      %v879 = vsel %vm825, 1, 0
      %v880 = vsel %vm826, 1, 0
      %v881 = vsel %vm827, 1, 0
      %v882 = vsel %vm828, 1, 0
      %v883 = vsel %vm829, 1, 0
      %v884 = vsel %vm830, 1, 0
      %v885 = vsel %vm831, 1, 0
      %v886 = vsel %vm832, 1, 0
      %v887 = vsel %vm833, 1, 0
      %v888 = vsel %vm834, 1, 0
      %v889 = vsel %vm835, 1, 0
      %v890 = vsel %vm836, 1, 0
      %v891 = vsel %vm837, 1, 0
      %v892 = vsel %vm838, 1, 0
      %v893 = vsel %vm839, 1, 0
      %v894 = vsel %vm840, 1, 0
      %v895 = vsel %vm841, 1, 0
      %v896 = vsel %vm842, 1, 0
      %v897 = vsel %vm843, 1, 0
      %v898 = vsel %vm844, 1, 0
      %v899 = vsel %vm845, 1, 0
      %v900 = vsel %vm846, 1, 0
      %v901 = vsel %vm847, 1, 0
      %v902 = vsel %vm848, 1, 0
      %v903 = vsel %vm849, 1, 0
      %v904 = vsel %vm850, 1, 0
      %v905 = vsel %vm851, 1, 0
      %v906 = vsel %vm852, 1, 0
      %v907 = vsel %vm853, 1, 0
      %v908 = vsel %vm854, 1, 0
      %v909 = vsel %vm855, 1, 0
      %v910 = vsel %vm856, 1, 0
      %v911 = vsel %vm857, 1, 0
      %v912 = vsel %vm858, 1, 0
      %v913 = vsel %vm859, 1, 0
      %v914 = vsel %vm860, 1, 0
      %v915 = vsel %vm861, 1, 0
      %v916 = vsel %vm862, 1, 0
      %v917 = vsel %vm863, 1, 0
      %v918 = vsel %vm864, 1, 0
      %v919 = vsel %vm865, 1, 0
      %v920 = vcvt.s32.f32 %v866
      %v921 = vcvt.s32.f32 %v867
      %v922 = vcvt.s32.f32 %v868
      %v923 = vcvt.s32.f32 %v869
      %v924 = vcvt.s32.f32 %v870
      %v925 = vcvt.s32.f32 %v871
      %v926 = vcvt.s32.f32 %v872
      %v927 = vcvt.s32.f32 %v873
      %v928 = vcvt.s32.f32 %v874
      %v929 = vcvt.s32.f32 %v875
      %v930 = vcvt.s32.f32 %v876
      %v931 = vcvt.s32.f32 %v877
      %v932 = vcvt.s32.f32 %v878
      %v933 = vcvt.s32.f32 %v879
      %v934 = vcvt.s32.f32 %v880
      %v935 = vcvt.s32.f32 %v881
      %v936 = vcvt.s32.f32 %v882
      %v937 = vcvt.s32.f32 %v883
      %v938 = vcvt.s32.f32 %v884
      %v939 = vcvt.s32.f32 %v885
      %v940 = vcvt.s32.f32 %v886
      %v941 = vcvt.s32.f32 %v887
      %v942 = vcvt.s32.f32 %v888
      %v943 = vcvt.s32.f32 %v889
      %v944 = vcvt.s32.f32 %v890
      %v945 = vcvt.s32.f32 %v891
      %v946 = vcvt.s32.f32 %v892
      %v947 = vcvt.s32.f32 %v893
      %v948 = vcvt.s32.f32 %v894
      %v949 = vcvt.s32.f32 %v895
      %v950 = vcvt.s32.f32 %v896
      %v951 = vcvt.s32.f32 %v897
      %v952 = vcvt.s32.f32 %v898
      %v953 = vcvt.s32.f32 %v899
      %v954 = vcvt.s32.f32 %v900
      %v955 = vcvt.s32.f32 %v901
      %v956 = vcvt.s32.f32 %v902
      %v957 = vcvt.s32.f32 %v903
      %v958 = vcvt.s32.f32 %v904
      %v959 = vcvt.s32.f32 %v905
      %v960 = vcvt.s32.f32 %v906
      %v961 = vcvt.s32.f32 %v907
      %v962 = vcvt.s32.f32 %v908
      %v963 = vcvt.s32.f32 %v909
      %v964 = vcvt.s32.f32 %v910
      %v965 = vcvt.s32.f32 %v911
      %v966 = vcvt.s32.f32 %v912
      %v967 = vcvt.s32.f32 %v913
      %v968 = vcvt.s32.f32 %v914
      %v969 = vcvt.s32.f32 %v915
      %v970 = vcvt.s32.f32 %v916
      %v971 = vcvt.s32.f32 %v917
      %v972 = vcvt.s32.f32 %v918
      %v973 = vcvt.s32.f32 %v919
      %v974 = vmul.f32 %v613, %v920
      %v975 = vmul.f32 %v614, %v921
      %v976 = vmul.f32 %v615, %v922
      %v977 = vmul.f32 %v616, %v923
      %v978 = vmul.f32 %v617, %v924
      %v979 = vmul.f32 %v618, %v925
      %v980 = vmul.f32 %v619, %v926
      %v981 = vmul.f32 %v620, %v927
      %v982 = vmul.f32 %v621, %v928
      %v983 = vmul.f32 %v622, %v929
      %v984 = vmul.f32 %v623, %v930
      %v985 = vmul.f32 %v624, %v931
      %v986 = vmul.f32 %v625, %v932
      %v987 = vmul.f32 %v626, %v933
      %v988 = vmul.f32 %v627, %v934
      %v989 = vmul.f32 %v628, %v935
      %v990 = vmul.f32 %v629, %v936
      %v991 = vmul.f32 %v630, %v937
      %v992 = vmul.f32 %v631, %v938
      %v993 = vmul.f32 %v632, %v939
      %v994 = vmul.f32 %v633, %v940
      %v995 = vmul.f32 %v634, %v941
      %v996 = vmul.f32 %v635, %v942
      %v997 = vmul.f32 %v636, %v943
      %v998 = vmul.f32 %v637, %v944
      %v999 = vmul.f32 %v638, %v945
      %v1000 = vmul.f32 %v639, %v946
      %v1001 = vmul.f32 %v640, %v947
      %v1002 = vmul.f32 %v641, %v948
      %v1003 = vmul.f32 %v642, %v949
      %v1004 = vmul.f32 %v643, %v950
      %v1005 = vmul.f32 %v644, %v951
      %v1006 = vmul.f32 %v645, %v952
      %v1007 = vmul.f32 %v646, %v953
      %v1008 = vmul.f32 %v647, %v954
      %v1009 = vmul.f32 %v648, %v955
      %v1010 = vmul.f32 %v649, %v956
      %v1011 = vmul.f32 %v650, %v957
      %v1012 = vmul.f32 %v651, %v958
      %v1013 = vmul.f32 %v652, %v959
      %v1014 = vmul.f32 %v653, %v960
      %v1015 = vmul.f32 %v654, %v961
      %v1016 = vmul.f32 %v655, %v962
      %v1017 = vmul.f32 %v656, %v963
      %v1018 = vmul.f32 %v657, %v964
      %v1019 = vmul.f32 %v658, %v965
      %v1020 = vmul.f32 %v659, %v966
      %v1021 = vmul.f32 %v660, %v967
      %v1022 = vmul.f32 %v661, %v968
      %v1023 = vmul.f32 %v662, %v969
      %v1024 = vmul.f32 %v663, %v970
      %v1025 = vmul.f32 %v664, %v971
      %v1026 = vmul.f32 %v665, %v972
      %v1027 = vmul.f32 %v666, %v973
      %v1028 = vpack.c.bf16 %v975, %v974
      %v1029 = vpack.c.bf16 %v976, %v976
      %v1030 = vpack.c.bf16 %v978, %v977
      %v1031 = vpack.c.bf16 %v979, %v979
      %v1032 = vpack.c.bf16 %v981, %v980
      %v1033 = vpack.c.bf16 %v982, %v982
      %v1034 = vpack.c.bf16 %v984, %v983
      %v1035 = vpack.c.bf16 %v985, %v985
      %v1036 = vpack.c.bf16 %v987, %v986
      %v1037 = vpack.c.bf16 %v988, %v988
      %v1038 = vpack.c.bf16 %v990, %v989
      %v1039 = vpack.c.bf16 %v991, %v991
      %v1040 = vpack.c.bf16 %v993, %v992
      %v1041 = vpack.c.bf16 %v994, %v994
      %v1042 = vpack.c.bf16 %v996, %v995
      %v1043 = vpack.c.bf16 %v997, %v997
      %v1044 = vpack.c.bf16 %v999, %v998
      %v1045 = vpack.c.bf16 %v1000, %v1000
      %v1046 = vpack.c.bf16 %v1002, %v1001
      %v1047 = vpack.c.bf16 %v1003, %v1003
      %v1048 = vpack.c.bf16 %v1005, %v1004
      %v1049 = vpack.c.bf16 %v1006, %v1006
      %v1050 = vpack.c.bf16 %v1008, %v1007
      %v1051 = vpack.c.bf16 %v1009, %v1009
      %v1052 = vpack.c.bf16 %v1011, %v1010
      %v1053 = vpack.c.bf16 %v1012, %v1012
      %v1054 = vpack.c.bf16 %v1014, %v1013
      %v1055 = vpack.c.bf16 %v1015, %v1015
      %v1056 = vpack.c.bf16 %v1017, %v1016
      %v1057 = vpack.c.bf16 %v1018, %v1018
      %v1058 = vpack.c.bf16 %v1020, %v1019
      %v1059 = vpack.c.bf16 %v1021, %v1021
      %v1060 = vpack.c.bf16 %v1023, %v1022
      %v1061 = vpack.c.bf16 %v1024, %v1024
      %v1062 = vpack.c.bf16 %v1026, %v1025
      %v1063 = vpack.c.bf16 %v1027, %v1027
      %vm1064 = vsmask.f32 7424
      %v1066 = vshrl.u32 %v1028, 16
      %v1068 = vshll.u32 %v1028, 16
      %v1070 = vrot.slane %v1068, 1
      %v1071 = vor.u32 %v1066, %v1070
      %v1073 = vshll.u32 %v1029, 16
      %v1075 = vrot.slane %v1073, 1
      %v1076 = vsel %vm1064, %v1071, %v1075
      %v1078 = vshrl.u32 %v1030, 16
      %v1080 = vshll.u32 %v1030, 16
      %v1082 = vrot.slane %v1080, 1
      %v1083 = vor.u32 %v1078, %v1082
      %v1085 = vshll.u32 %v1031, 16
      %v1087 = vrot.slane %v1085, 1
      %v1088 = vsel %vm1064, %v1083, %v1087
      %v1090 = vshrl.u32 %v1032, 16
      %v1092 = vshll.u32 %v1032, 16
      %v1094 = vrot.slane %v1092, 1
      %v1095 = vor.u32 %v1090, %v1094
      %v1097 = vshll.u32 %v1033, 16
      %v1099 = vrot.slane %v1097, 1
      %v1100 = vsel %vm1064, %v1095, %v1099
      %v1102 = vshrl.u32 %v1034, 16
      %v1104 = vshll.u32 %v1034, 16
      %v1106 = vrot.slane %v1104, 1
      %v1107 = vor.u32 %v1102, %v1106
      %v1109 = vshll.u32 %v1035, 16
      %v1111 = vrot.slane %v1109, 1
      %v1112 = vsel %vm1064, %v1107, %v1111
      %v1114 = vshrl.u32 %v1036, 16
      %v1116 = vshll.u32 %v1036, 16
      %v1118 = vrot.slane %v1116, 1
      %v1119 = vor.u32 %v1114, %v1118
      %v1121 = vshll.u32 %v1037, 16
      %v1123 = vrot.slane %v1121, 1
      %v1124 = vsel %vm1064, %v1119, %v1123
      %v1126 = vshrl.u32 %v1038, 16
      %v1128 = vshll.u32 %v1038, 16
      %v1130 = vrot.slane %v1128, 1
      %v1131 = vor.u32 %v1126, %v1130
      %v1133 = vshll.u32 %v1039, 16
      %v1135 = vrot.slane %v1133, 1
      %v1136 = vsel %vm1064, %v1131, %v1135
      %v1138 = vshrl.u32 %v1040, 16
      %v1140 = vshll.u32 %v1040, 16
      %v1142 = vrot.slane %v1140, 1
      %v1143 = vor.u32 %v1138, %v1142
      %v1145 = vshll.u32 %v1041, 16
      %v1147 = vrot.slane %v1145, 1
      %v1148 = vsel %vm1064, %v1143, %v1147
      %v1150 = vshrl.u32 %v1042, 16
      %v1152 = vshll.u32 %v1042, 16
      %v1154 = vrot.slane %v1152, 1
      %v1155 = vor.u32 %v1150, %v1154
      %v1157 = vshll.u32 %v1043, 16
      %v1159 = vrot.slane %v1157, 1
      %v1160 = vsel %vm1064, %v1155, %v1159
      %v1162 = vshrl.u32 %v1044, 16
      %v1164 = vshll.u32 %v1044, 16
      %v1166 = vrot.slane %v1164, 1
      %v1167 = vor.u32 %v1162, %v1166
      %v1169 = vshll.u32 %v1045, 16
      %v1171 = vrot.slane %v1169, 1
      %v1172 = vsel %vm1064, %v1167, %v1171
      %v1174 = vshrl.u32 %v1046, 16
      %v1176 = vshll.u32 %v1046, 16
      %v1178 = vrot.slane %v1176, 1
      %v1179 = vor.u32 %v1174, %v1178
      %v1181 = vshll.u32 %v1047, 16
      %v1183 = vrot.slane %v1181, 1
      %v1184 = vsel %vm1064, %v1179, %v1183
      %v1186 = vshrl.u32 %v1048, 16
      %v1188 = vshll.u32 %v1048, 16
      %v1190 = vrot.slane %v1188, 1
      %v1191 = vor.u32 %v1186, %v1190
      %v1193 = vshll.u32 %v1049, 16
      %v1195 = vrot.slane %v1193, 1
      %v1196 = vsel %vm1064, %v1191, %v1195
      %v1198 = vshrl.u32 %v1050, 16
      %v1200 = vshll.u32 %v1050, 16
      %v1202 = vrot.slane %v1200, 1
      %v1203 = vor.u32 %v1198, %v1202
      %v1205 = vshll.u32 %v1051, 16
      %v1207 = vrot.slane %v1205, 1
      %v1208 = vsel %vm1064, %v1203, %v1207
      %v1210 = vshrl.u32 %v1052, 16
      %v1212 = vshll.u32 %v1052, 16
      %v1214 = vrot.slane %v1212, 1
      %v1215 = vor.u32 %v1210, %v1214
      %v1217 = vshll.u32 %v1053, 16
      %v1219 = vrot.slane %v1217, 1
      %v1220 = vsel %vm1064, %v1215, %v1219
      %v1222 = vshrl.u32 %v1054, 16
      %v1224 = vshll.u32 %v1054, 16
      %v1226 = vrot.slane %v1224, 1
      %v1227 = vor.u32 %v1222, %v1226
      %v1229 = vshll.u32 %v1055, 16
      %v1231 = vrot.slane %v1229, 1
      %v1232 = vsel %vm1064, %v1227, %v1231
      %v1234 = vshrl.u32 %v1056, 16
      %v1236 = vshll.u32 %v1056, 16
      %v1238 = vrot.slane %v1236, 1
      %v1239 = vor.u32 %v1234, %v1238
      %v1241 = vshll.u32 %v1057, 16
      %v1243 = vrot.slane %v1241, 1
      %v1244 = vsel %vm1064, %v1239, %v1243
      %v1246 = vshrl.u32 %v1058, 16
      %v1248 = vshll.u32 %v1058, 16
      %v1250 = vrot.slane %v1248, 1
      %v1251 = vor.u32 %v1246, %v1250
      %v1253 = vshll.u32 %v1059, 16
      %v1255 = vrot.slane %v1253, 1
      %v1256 = vsel %vm1064, %v1251, %v1255
      %vm1305 = vcmask 1046528
      %v1306 = vrot.slane %v1028, 1
      %v1307 = vrot.slane %v1029, 1
      %v1308 = vsel %vm1305, %v1306, %v1307
      %v1309 = vrot.slane %v1030, 1
      %v1310 = vrot.slane %v1031, 1
      %v1311 = vsel %vm1305, %v1309, %v1310
      %v1312 = vrot.slane %v1032, 1
      %v1313 = vrot.slane %v1033, 1
      %v1314 = vsel %vm1305, %v1312, %v1313
      %v1315 = vrot.slane %v1034, 1
      %v1316 = vrot.slane %v1035, 1
      %v1317 = vsel %vm1305, %v1315, %v1316
      %v1318 = vrot.slane %v1036, 1
      %v1319 = vrot.slane %v1037, 1
      %v1320 = vsel %vm1305, %v1318, %v1319
      %v1321 = vrot.slane %v1038, 1
      %v1322 = vrot.slane %v1039, 1
      %v1323 = vsel %vm1305, %v1321, %v1322
      %v1324 = vrot.slane %v1040, 1
      %v1325 = vrot.slane %v1041, 1
      %v1326 = vsel %vm1305, %v1324, %v1325
      %v1327 = vrot.slane %v1042, 1
      %v1328 = vrot.slane %v1043, 1
      %v1329 = vsel %vm1305, %v1327, %v1328
      %v1330 = vrot.slane %v1044, 1
      %v1331 = vrot.slane %v1045, 1
      %v1332 = vsel %vm1305, %v1330, %v1331
      %v1333 = vrot.slane %v1046, 1
      %v1334 = vrot.slane %v1047, 1
      %v1335 = vsel %vm1305, %v1333, %v1334
      %v1336 = vrot.slane %v1048, 1
      %v1337 = vrot.slane %v1049, 1
      %v1338 = vsel %vm1305, %v1336, %v1337
      %v1339 = vrot.slane %v1050, 1
      %v1340 = vrot.slane %v1051, 1
      %v1341 = vsel %vm1305, %v1339, %v1340
      %v1342 = vrot.slane %v1052, 1
      %v1343 = vrot.slane %v1053, 1
      %v1344 = vsel %vm1305, %v1342, %v1343
      %v1345 = vrot.slane %v1054, 1
      %v1346 = vrot.slane %v1055, 1
      %v1347 = vsel %vm1305, %v1345, %v1346
      %v1348 = vrot.slane %v1056, 1
      %v1349 = vrot.slane %v1057, 1
      %v1350 = vsel %vm1305, %v1348, %v1349
      %v1351 = vrot.slane %v1058, 1
      %v1352 = vrot.slane %v1059, 1
      %v1353 = vsel %vm1305, %v1351, %v1352
      %v1370 = vld [vmem:[%s2] sm:$0xf]
      %v1371 = vld [vmem:[%s2 + $0x4] sm:$0xf]
      %v1372 = vld [vmem:[%s2 + $0x8] sm:$0xf]
      %v1373 = vld [vmem:[%s2 + $0xc] sm:$0xf]
      %v1374 = vld [vmem:[%s2 + $0x10] sm:$0xf]
      %v1375 = vld [vmem:[%s2 + $0x14] sm:$0xf]
      %v1376 = vld [vmem:[%s2 + $0x18] sm:$0xf]
      %v1377 = vld [vmem:[%s2 + $0x1c] sm:$0xf]
      %v1378 = vld [vmem:[%s2 + $0x20] sm:$0xf]
      %v1379 = vld [vmem:[%s2 + $0x24] sm:$0xf]
      %v1380 = vld [vmem:[%s2 + $0x28] sm:$0xf]
      %v1381 = vld [vmem:[%s2 + $0x2c] sm:$0xf]
      %v1382 = vld [vmem:[%s2 + $0x30] sm:$0xf]
      %v1383 = vld [vmem:[%s2 + $0x34] sm:$0xf]
      %v1384 = vld [vmem:[%s2 + $0x38] sm:$0xf]
      %v1385 = vld [vmem:[%s2 + $0x3c] sm:$0xf]
      %v1386 = vld [vmem:[%s2 + $0x40] sm:$0xf]
      %v1387 = vld [vmem:[%s2 + $0x44] sm:$0xf]
      %v1388 = vld [vmem:[%s2 + $0x48] sm:$0xf]
      %v1389 = vld [vmem:[%s2 + $0x4c] sm:$0xf]
      %v1390 = vld [vmem:[%s2 + $0x50] sm:$0xf]
      %v1391 = vld [vmem:[%s2 + $0x54] sm:$0xf]
      %v1392 = vld [vmem:[%s2 + $0x58] sm:$0xf]
      %v1393 = vld [vmem:[%s2 + $0x5c] sm:$0xf]
      %v1394 = vld [vmem:[%s2 + $0x60] sm:$0xf]
      %v1395 = vld [vmem:[%s2 + $0x64] sm:$0xf]
      %v1396 = vld [vmem:[%s2 + $0x68] sm:$0xf]
      %v1397 = vld [vmem:[%s2 + $0x6c] sm:$0xf]
      %v1398 = vld [vmem:[%s2 + $0x70] sm:$0xf]
      %v1399 = vld [vmem:[%s2 + $0x74] sm:$0xf]
      %v1400 = vld [vmem:[%s2 + $0x78] sm:$0xf]
      %v1401 = vld [vmem:[%s2 + $0x7c] sm:$0xf]
      %v1402 = vld [vmem:[%s2 + $0x80] sm:$0xf]
      %v1403 = vld [vmem:[%s2 + $0x84] sm:$0xf]
      %v1404 = vld [vmem:[%s2 + $0x88] sm:$0xf]
      %v1405 = vld [vmem:[%s2 + $0x8c] sm:$0xf]
      %v1406 = vld [vmem:[%s2 + $0x90] sm:$0xf]
      %v1407 = vld [vmem:[%s2 + $0x94] sm:$0xf]
      %v1408 = vld [vmem:[%s2 + $0x98] sm:$0xf]
      %v1409 = vld [vmem:[%s2 + $0x9c] sm:$0xf]
      %v1410 = vld [vmem:[%s2 + $0xa0] sm:$0xf]
      %v1411 = vld [vmem:[%s2 + $0xa4] sm:$0xf]
      %v1412 = vld [vmem:[%s2 + $0xa8] sm:$0xf]
      %v1413 = vld [vmem:[%s2 + $0xac] sm:$0xf]
      %v1414 = vld [vmem:[%s2 + $0xb0] sm:$0xf]
      %v1415 = vld [vmem:[%s2 + $0xb4] sm:$0xf]
      %v1416 = vld [vmem:[%s2 + $0xb8] sm:$0xf]
      %v1417 = vld [vmem:[%s2 + $0xbc] sm:$0xf]
      %v1419 = vshrl.u32 %v1060, 16
      %v1421 = vshll.u32 %v1060, 16
      %v1423 = vrot.slane %v1421, 1
      %v1424 = vor.u32 %v1419, %v1423
      %v1426 = vshll.u32 %v1061, 16
      %v1428 = vrot.slane %v1426, 1
      %v1429 = vsel %vm1064, %v1424, %v1428
      %v1433 = vrot.slane %v1060, 1
      %v1434 = vrot.slane %v1061, 1
      %v1435 = vsel %vm1305, %v1433, %v1434
      %s1437 = scalar_lea.vmem %s2, 192
      %v1438 = vld [vmem:[%s1437] sm:$0xf]
      %v1439 = vld [vmem:[%s1437 + $0x4] sm:$0xf]
      %v1440 = vld [vmem:[%s1437 + $0x8] sm:$0xf]
      %v1441 = vld [vmem:[%s1437 + $0xc] sm:$0xf]
      %v1442 = vld [vmem:[%s1437 + $0x10] sm:$0xf]
      %v1443 = vld [vmem:[%s1437 + $0x14] sm:$0xf]
      %v1444 = vld [vmem:[%s1437 + $0x18] sm:$0xf]
      %v1445 = vld [vmem:[%s1437 + $0x1c] sm:$0xf]
      %v1446 = vld [vmem:[%s1437 + $0x20] sm:$0xf]
      %v1447 = vld [vmem:[%s1437 + $0x24] sm:$0xf]
      %v1448 = vld [vmem:[%s1437 + $0x28] sm:$0xf]
      %v1449 = vld [vmem:[%s1437 + $0x2c] sm:$0xf]
      %v1450 = vld [vmem:[%s1437 + $0x30] sm:$0xf]
      %v1451 = vld [vmem:[%s1437 + $0x34] sm:$0xf]
      %v1452 = vld [vmem:[%s1437 + $0x38] sm:$0xf]
      %v1453 = vld [vmem:[%s1437 + $0x3c] sm:$0xf]
      %v1454 = vld [vmem:[%s1437 + $0x40] sm:$0xf]
      %v1455 = vld [vmem:[%s1437 + $0x44] sm:$0xf]
      %v1456 = vld [vmem:[%s1437 + $0x48] sm:$0xf]
      %v1457 = vld [vmem:[%s1437 + $0x4c] sm:$0xf]
      %v1458 = vld [vmem:[%s1437 + $0x50] sm:$0xf]
      %v1459 = vld [vmem:[%s1437 + $0x54] sm:$0xf]
      %v1460 = vld [vmem:[%s1437 + $0x58] sm:$0xf]
      %v1461 = vld [vmem:[%s1437 + $0x5c] sm:$0xf]
      %v1462 = vld [vmem:[%s1437 + $0x60] sm:$0xf]
      %v1463 = vld [vmem:[%s1437 + $0x64] sm:$0xf]
      %v1464 = vld [vmem:[%s1437 + $0x68] sm:$0xf]
      %v1465 = vld [vmem:[%s1437 + $0x6c] sm:$0xf]
      %v1466 = vld [vmem:[%s1437 + $0x70] sm:$0xf]
      %v1467 = vld [vmem:[%s1437 + $0x74] sm:$0xf]
      %v1468 = vld [vmem:[%s1437 + $0x78] sm:$0xf]
      %v1469 = vld [vmem:[%s1437 + $0x7c] sm:$0xf]
      %v1470 = vld [vmem:[%s1437 + $0x80] sm:$0xf]
      %v1471 = vld [vmem:[%s1437 + $0x84] sm:$0xf]
      %v1472 = vld [vmem:[%s1437 + $0x88] sm:$0xf]
      %v1473 = vld [vmem:[%s1437 + $0x8c] sm:$0xf]
      %v1474 = vld [vmem:[%s1437 + $0x90] sm:$0xf]
      %v1475 = vld [vmem:[%s1437 + $0x94] sm:$0xf]
      %v1476 = vld [vmem:[%s1437 + $0x98] sm:$0xf]
      %v1477 = vld [vmem:[%s1437 + $0x9c] sm:$0xf]
      %v1478 = vld [vmem:[%s1437 + $0xa0] sm:$0xf]
      %v1479 = vld [vmem:[%s1437 + $0xa4] sm:$0xf]
      %v1480 = vld [vmem:[%s1437 + $0xa8] sm:$0xf]
      %v1481 = vld [vmem:[%s1437 + $0xac] sm:$0xf]
      %v1482 = vld [vmem:[%s1437 + $0xb0] sm:$0xf]
      %v1483 = vld [vmem:[%s1437 + $0xb4] sm:$0xf]
      %v1484 = vld [vmem:[%s1437 + $0xb8] sm:$0xf]
      %v1485 = vld [vmem:[%s1437 + $0xbc] sm:$0xf]
      %v1534 = vunpack.c.l.b16 %v1438
      %v1535 = vunpack.c.l.b16 %v1439
      %v1536 = vunpack.c.l.b16 %v1440
      %v1537 = vunpack.c.l.b16 %v1441
      %v1538 = vunpack.c.l.b16 %v1442
      %v1539 = vunpack.c.l.b16 %v1443
      %v1540 = vunpack.c.l.b16 %v1444
      %v1541 = vunpack.c.l.b16 %v1445
      %v1542 = vunpack.c.l.b16 %v1446
      %v1543 = vunpack.c.l.b16 %v1447
      %v1544 = vunpack.c.l.b16 %v1448
      %v1545 = vunpack.c.l.b16 %v1449
      %v1546 = vunpack.c.l.b16 %v1450
      %v1547 = vunpack.c.l.b16 %v1451
      %v1548 = vunpack.c.l.b16 %v1452
      %v1549 = vunpack.c.l.b16 %v1453
      %v1550 = vunpack.c.l.b16 %v1454
      %v1551 = vunpack.c.l.b16 %v1455
      %v1552 = vunpack.c.l.b16 %v1456
      %v1553 = vunpack.c.l.b16 %v1457
      %v1554 = vunpack.c.l.b16 %v1458
      %v1555 = vunpack.c.l.b16 %v1459
      %v1556 = vunpack.c.l.b16 %v1460
      %v1557 = vunpack.c.l.b16 %v1461
      %v1558 = vunpack.c.l.b16 %v1462
      %v1559 = vunpack.c.l.b16 %v1463
      %v1560 = vunpack.c.l.b16 %v1464
      %v1561 = vunpack.c.l.b16 %v1465
      %v1562 = vunpack.c.l.b16 %v1466
      %v1563 = vunpack.c.l.b16 %v1467
      %v1564 = vunpack.c.l.b16 %v1468
      %v1565 = vunpack.c.l.b16 %v1469
      %v1566 = vunpack.c.l.b16 %v1470
      %v1567 = vunpack.c.l.b16 %v1471
      %v1568 = vunpack.c.l.b16 %v1472
      %v1569 = vunpack.c.l.b16 %v1473
      %v1570 = vunpack.c.l.b16 %v1474
      %v1571 = vunpack.c.l.b16 %v1475
      %v1572 = vunpack.c.l.b16 %v1476
      %v1573 = vunpack.c.l.b16 %v1477
      %v1574 = vunpack.c.l.b16 %v1478
      %v1575 = vunpack.c.l.b16 %v1479
      %v1576 = vunpack.c.l.b16 %v1480
      %v1577 = vunpack.c.l.b16 %v1481
      %v1578 = vunpack.c.l.b16 %v1482
      %v1579 = vunpack.c.l.b16 %v1483
      %v1580 = vunpack.c.l.b16 %v1484
      %v1581 = vunpack.c.l.b16 %v1485
      %v1582 = vpack.c.b16 %v1535, %v1534
      %v1583 = vpack.c.b16 %v1537, %v1536
      %v1584 = vpack.c.b16 %v1539, %v1538
      %v1585 = vpack.c.b16 %v1541, %v1540
      %v1586 = vpack.c.b16 %v1543, %v1542
      %v1587 = vpack.c.b16 %v1545, %v1544
      %v1588 = vpack.c.b16 %v1547, %v1546
      %v1589 = vpack.c.b16 %v1549, %v1548
      %v1590 = vpack.c.b16 %v1551, %v1550
      %v1591 = vpack.c.b16 %v1553, %v1552
      %v1592 = vpack.c.b16 %v1555, %v1554
      %v1593 = vpack.c.b16 %v1557, %v1556
      %v1594 = vpack.c.b16 %v1559, %v1558
      %v1595 = vpack.c.b16 %v1561, %v1560
      %v1596 = vpack.c.b16 %v1563, %v1562
      %v1597 = vpack.c.b16 %v1565, %v1564
      %v1598 = vpack.c.b16 %v1567, %v1566
      %v1599 = vpack.c.b16 %v1569, %v1568
      %v1600 = vpack.c.b16 %v1571, %v1570
      %v1601 = vpack.c.b16 %v1573, %v1572
      %v1602 = vpack.c.b16 %v1575, %v1574
      %v1603 = vpack.c.b16 %v1577, %v1576
      %v1604 = vpack.c.b16 %v1579, %v1578
      %v1605 = vpack.c.b16 %v1581, %v1580
      %1630 = vmatprep.subr.bf16.mxu0 0
      %1631 = vmatpush1.bf16.msra.mxu0 %v1589
      %1632 = vmatprep.subr.bf16.mxu0 0
      %1633 = vmatpush1.bf16.msra.mxu0 %v1588
      %1634 = vmatprep.subr.bf16.mxu0 0
      %1635 = vmatpush1.bf16.msra.mxu0 %v1587
      %1636 = vmatprep.subr.bf16.mxu0 0
      %1637 = vmatpush1.bf16.msra.mxu0 %v1586
      %1638 = vmatprep.subr.bf16.mxu0 0
      %1639 = vmatpush1.bf16.msra.mxu0 %v1585
      %1640 = vmatprep.subr.bf16.mxu0 0
      %1641 = vmatpush1.bf16.msra.mxu0 %v1584
      %1642 = vmatprep.subr.bf16.mxu0 0
      %1643 = vmatpush1.bf16.msra.mxu0 %v1583
      %1644 = vmatprep.subr.bf16.mxu0 0
      %1645 = vmatpush1.bf16.msra.mxu0 %v1582
      %1646 = vmatprep.subr.bf16.mxu0 0
      %1647 = vmatpush2.bf16.msra.mxu0 %v1597
      %1648 = vmatprep.subr.bf16.mxu0 0
      %1649 = vmatpush2.bf16.msra.mxu0 %v1596
      %1650 = vmatprep.subr.bf16.mxu0 0
      %1651 = vmatpush2.bf16.msra.mxu0 %v1595
      %1652 = vmatprep.subr.bf16.mxu0 0
      %1653 = vmatpush2.bf16.msra.mxu0 %v1594
      %1654 = vmatprep.subr.bf16.mxu0 0
      %1655 = vmatpush2.bf16.msra.mxu0 %v1593
      %1656 = vmatprep.subr.bf16.mxu0 0
      %1657 = vmatpush2.bf16.msra.mxu0 %v1592
      %1658 = vmatprep.subr.bf16.mxu0 0
      %1659 = vmatpush2.bf16.msra.mxu0 %v1591
      %1660 = vmatprep.subr.bf16.mxu0 0
      %1661 = vmatpush2.bf16.msra.mxu0 %v1590
      %1662 = vmatprep.mubr.bf16.mxu0 %v1088
      %1663 = vmatmul.mubr.bf16.gmra.mxu0 %v1030
      %v1664 = vpop.f32.mrf.mxu0
      %v1665 = vadd.f32 0.0, %v1664
      %v1666 = vpop.f32.mrf.mxu0
      %v1667 = vpop.f32.mrf.mxu0
      %v1668 = vadd.f32 0.0, %v1667
      %v1669 = vpop.f32.mrf.mxu0
      %1670 = vmatprep.mubr.bf16.mxu0 %v1100
      %1671 = vmatmul.mubr.bf16.gmra.mxu0 %v1032
      %v1672 = vpop.f32.mrf.mxu0
      %v1673 = vadd.f32 0.0, %v1672
      %v1674 = vpop.f32.mrf.mxu0
      %v1675 = vpop.f32.mrf.mxu0
      %v1676 = vadd.f32 0.0, %v1675
      %v1677 = vpop.f32.mrf.mxu0
      %1678 = vmatprep.mubr.bf16.mxu0 %v1112
      %1679 = vmatmul.mubr.bf16.gmra.mxu0 %v1034
      %v1680 = vpop.f32.mrf.mxu0
      %v1681 = vadd.f32 0.0, %v1680
      %v1682 = vpop.f32.mrf.mxu0
      %v1683 = vpop.f32.mrf.mxu0
      %v1684 = vadd.f32 0.0, %v1683
      %v1685 = vpop.f32.mrf.mxu0
      %1686 = vmatprep.mubr.bf16.mxu0 %v1124
      %1687 = vmatmul.mubr.bf16.gmra.mxu0 %v1036
      %v1688 = vpop.f32.mrf.mxu0
      %v1689 = vadd.f32 0.0, %v1688
      %v1690 = vpop.f32.mrf.mxu0
      %v1691 = vpop.f32.mrf.mxu0
      %v1692 = vadd.f32 0.0, %v1691
      %v1693 = vpop.f32.mrf.mxu0
      %1694 = vmatprep.mubr.bf16.mxu0 %v1136
      %1695 = vmatmul.mubr.bf16.gmra.mxu0 %v1038
      %v1696 = vpop.f32.mrf.mxu0
      %v1697 = vadd.f32 0.0, %v1696
      %v1698 = vpop.f32.mrf.mxu0
      %v1699 = vpop.f32.mrf.mxu0
      %v1700 = vadd.f32 0.0, %v1699
      %v1701 = vpop.f32.mrf.mxu0
      %1702 = vmatprep.mubr.bf16.mxu0 %v1148
      %1703 = vmatmul.mubr.bf16.gmra.mxu0 %v1040
      %v1704 = vpop.f32.mrf.mxu0
      %v1705 = vadd.f32 0.0, %v1704
      %v1706 = vpop.f32.mrf.mxu0
      %v1707 = vpop.f32.mrf.mxu0
      %v1708 = vadd.f32 0.0, %v1707
      %v1709 = vpop.f32.mrf.mxu0
      %1710 = vmatprep.mubr.bf16.mxu0 %v1160
      %1711 = vmatmul.mubr.bf16.gmra.mxu0 %v1042
      %v1712 = vpop.f32.mrf.mxu0
      %v1713 = vadd.f32 0.0, %v1712
      %v1714 = vpop.f32.mrf.mxu0
      %v1715 = vpop.f32.mrf.mxu0
      %v1716 = vadd.f32 0.0, %v1715
      %v1717 = vpop.f32.mrf.mxu0
      %1718 = vmatprep.mubr.bf16.mxu0 %v1172
      %1719 = vmatmul.mubr.bf16.gmra.mxu0 %v1044
      %v1720 = vpop.f32.mrf.mxu0
      %v1721 = vadd.f32 0.0, %v1720
      %v1722 = vpop.f32.mrf.mxu0
      %v1723 = vpop.f32.mrf.mxu0
      %v1724 = vadd.f32 0.0, %v1723
      %v1725 = vpop.f32.mrf.mxu0
      %1726 = vmatprep.mubr.bf16.mxu0 %v1184
      %1727 = vmatmul.mubr.bf16.gmra.mxu0 %v1046
      %v1728 = vpop.f32.mrf.mxu0
      %v1729 = vadd.f32 0.0, %v1728
      %v1730 = vpop.f32.mrf.mxu0
      %v1731 = vpop.f32.mrf.mxu0
      %v1732 = vadd.f32 0.0, %v1731
      %v1733 = vpop.f32.mrf.mxu0
      %1734 = vmatprep.mubr.bf16.mxu0 %v1196
      %1735 = vmatmul.mubr.bf16.gmra.mxu0 %v1048
      %v1736 = vpop.f32.mrf.mxu0
      %v1737 = vadd.f32 0.0, %v1736
      %v1738 = vpop.f32.mrf.mxu0
      %v1739 = vpop.f32.mrf.mxu0
      %v1740 = vadd.f32 0.0, %v1739
      %v1741 = vpop.f32.mrf.mxu0
      %1742 = vmatprep.mubr.bf16.mxu0 %v1208
      %1743 = vmatmul.mubr.bf16.gmra.mxu0 %v1050
      %v1744 = vpop.f32.mrf.mxu0
      %v1745 = vadd.f32 0.0, %v1744
      %v1746 = vpop.f32.mrf.mxu0
      %v1747 = vpop.f32.mrf.mxu0
      %v1748 = vadd.f32 0.0, %v1747
      %v1749 = vpop.f32.mrf.mxu0
      %1750 = vmatprep.mubr.bf16.mxu0 %v1220
      %1751 = vmatmul.mubr.bf16.gmra.mxu0 %v1052
      %v1752 = vpop.f32.mrf.mxu0
      %v1753 = vadd.f32 0.0, %v1752
      %v1754 = vpop.f32.mrf.mxu0
      %v1755 = vpop.f32.mrf.mxu0
      %v1756 = vadd.f32 0.0, %v1755
      %v1757 = vpop.f32.mrf.mxu0
      %1758 = vmatprep.mubr.bf16.mxu0 %v1232
      %1759 = vmatmul.mubr.bf16.gmra.mxu0 %v1054
      %v1760 = vpop.f32.mrf.mxu0
      %v1761 = vadd.f32 0.0, %v1760
      %v1762 = vpop.f32.mrf.mxu0
      %v1763 = vpop.f32.mrf.mxu0
      %v1764 = vadd.f32 0.0, %v1763
      %v1765 = vpop.f32.mrf.mxu0
      %1766 = vmatprep.mubr.bf16.mxu0 %v1244
      %1767 = vmatmul.mubr.bf16.gmra.mxu0 %v1056
      %v1768 = vpop.f32.mrf.mxu0
      %v1769 = vadd.f32 0.0, %v1768
      %v1770 = vpop.f32.mrf.mxu0
      %v1771 = vpop.f32.mrf.mxu0
      %v1772 = vadd.f32 0.0, %v1771
      %v1773 = vpop.f32.mrf.mxu0
      %1774 = vmatprep.mubr.bf16.mxu0 %v1256
      %1775 = vmatmul.mubr.bf16.gmra.mxu0 %v1058
      %v1776 = vpop.f32.mrf.mxu0
      %v1777 = vadd.f32 0.0, %v1776
      %v1778 = vpop.f32.mrf.mxu0
      %v1779 = vpop.f32.mrf.mxu0
      %v1780 = vadd.f32 0.0, %v1779
      %v1781 = vpop.f32.mrf.mxu0
      %1782 = vmatprep.mubr.bf16.mxu0 %v1429
      %1783 = vmatmul.mubr.bf16.gmra.mxu0 %v1060
      %v1784 = vpop.f32.mrf.mxu0
      %v1785 = vadd.f32 0.0, %v1784
      %v1786 = vpop.f32.mrf.mxu0
      %v1787 = vpop.f32.mrf.mxu0
      %v1788 = vadd.f32 0.0, %v1787
      %v1789 = vpop.f32.mrf.mxu0
      %1790 = vdwg.mxu0
      %1791 = vmatprep.subr.bf16.mxu0 0
      %1792 = vmatpush1.bf16.msra.mxu0 %v1605
      %1793 = vmatprep.subr.bf16.mxu0 0
      %1794 = vmatpush1.bf16.msra.mxu0 %v1604
      %1795 = vmatprep.subr.bf16.mxu0 0
      %1796 = vmatpush1.bf16.msra.mxu0 %v1603
      %1797 = vmatprep.subr.bf16.mxu0 0
      %1798 = vmatpush1.bf16.msra.mxu0 %v1602
      %1799 = vmatprep.subr.bf16.mxu0 0
      %1800 = vmatpush1.bf16.msra.mxu0 %v1601
      %1801 = vmatprep.subr.bf16.mxu0 0
      %1802 = vmatpush1.bf16.msra.mxu0 %v1600
      %1803 = vmatprep.subr.bf16.mxu0 0
      %1804 = vmatpush1.bf16.msra.mxu0 %v1599
      %1805 = vmatprep.subr.bf16.mxu0 0
      %1806 = vmatpush1.bf16.msra.mxu0 %v1598
      %1807 = vmatprep.subr.bf16.mxu0 0
      %1808 = vmatpush2.bf16.msra.mxu0 0
      %1809 = vmatprep.subr.bf16.mxu0 0
      %1810 = vmatpush2.bf16.msra.mxu0 0
      %1811 = vmatprep.subr.bf16.mxu0 0
      %1812 = vmatpush2.bf16.msra.mxu0 0
      %1813 = vmatprep.subr.bf16.mxu0 0
      %1814 = vmatpush2.bf16.msra.mxu0 0
      %1815 = vmatprep.subr.bf16.mxu0 0
      %1816 = vmatpush2.bf16.msra.mxu0 0
      %1817 = vmatprep.subr.bf16.mxu0 0
      %1818 = vmatpush2.bf16.msra.mxu0 0
      %1819 = vmatprep.subr.bf16.mxu0 0
      %1820 = vmatpush2.bf16.msra.mxu0 0
      %1821 = vmatprep.subr.bf16.mxu0 0
      %1822 = vmatpush2.bf16.msra.mxu0 0
      %1823 = vmatprep.mubr.bf16.mxu0 0
      %1824 = vmatmul.mubr.bf16.gmra.mxu0 %v1311
      %v1825 = vpop.f32.mrf.mxu0
      %v1826 = vadd.f32 %v1665, %v1825
      %v1827 = vpop.f32.mrf.mxu0
      %v1828 = vpop.f32.mrf.mxu0
      %v1829 = vadd.f32 %v1668, %v1828
      %v1830 = vpop.f32.mrf.mxu0
      %1831 = vmatprep.mubr.bf16.mxu0 0
      %1832 = vmatmul.mubr.bf16.gmra.mxu0 %v1314
      %v1833 = vpop.f32.mrf.mxu0
      %v1834 = vadd.f32 %v1673, %v1833
      %v1835 = vpop.f32.mrf.mxu0
      %v1836 = vpop.f32.mrf.mxu0
      %v1837 = vadd.f32 %v1676, %v1836
      %v1838 = vpop.f32.mrf.mxu0
      %1839 = vmatprep.mubr.bf16.mxu0 0
      %1840 = vmatmul.mubr.bf16.gmra.mxu0 %v1317
      %v1841 = vpop.f32.mrf.mxu0
      %v1842 = vadd.f32 %v1681, %v1841
      %v1843 = vpop.f32.mrf.mxu0
      %v1844 = vpop.f32.mrf.mxu0
      %v1845 = vadd.f32 %v1684, %v1844
      %v1846 = vpop.f32.mrf.mxu0
      %1847 = vmatprep.mubr.bf16.mxu0 0
      %1848 = vmatmul.mubr.bf16.gmra.mxu0 %v1320
      %v1849 = vpop.f32.mrf.mxu0
      %v1850 = vadd.f32 %v1689, %v1849
      %v1851 = vpop.f32.mrf.mxu0
      %v1852 = vpop.f32.mrf.mxu0
      %v1853 = vadd.f32 %v1692, %v1852
      %v1854 = vpop.f32.mrf.mxu0
      %1855 = vmatprep.mubr.bf16.mxu0 0
      %1856 = vmatmul.mubr.bf16.gmra.mxu0 %v1323
      %v1857 = vpop.f32.mrf.mxu0
      %v1858 = vadd.f32 %v1697, %v1857
      %v1859 = vpop.f32.mrf.mxu0
      %v1860 = vpop.f32.mrf.mxu0
      %v1861 = vadd.f32 %v1700, %v1860
      %v1862 = vpop.f32.mrf.mxu0
      %1863 = vmatprep.mubr.bf16.mxu0 0
      %1864 = vmatmul.mubr.bf16.gmra.mxu0 %v1326
      %v1865 = vpop.f32.mrf.mxu0
      %v1866 = vadd.f32 %v1705, %v1865
      %v1867 = vpop.f32.mrf.mxu0
      %v1868 = vpop.f32.mrf.mxu0
      %v1869 = vadd.f32 %v1708, %v1868
      %v1870 = vpop.f32.mrf.mxu0
      %1871 = vmatprep.mubr.bf16.mxu0 0
      %1872 = vmatmul.mubr.bf16.gmra.mxu0 %v1329
      %v1873 = vpop.f32.mrf.mxu0
      %v1874 = vadd.f32 %v1713, %v1873
      %v1875 = vpop.f32.mrf.mxu0
      %v1876 = vpop.f32.mrf.mxu0
      %v1877 = vadd.f32 %v1716, %v1876
      %v1878 = vpop.f32.mrf.mxu0
      %1879 = vmatprep.mubr.bf16.mxu0 0
      %1880 = vmatmul.mubr.bf16.gmra.mxu0 %v1332
      %v1881 = vpop.f32.mrf.mxu0
      %v1882 = vadd.f32 %v1721, %v1881
      %v1883 = vpop.f32.mrf.mxu0
      %v1884 = vpop.f32.mrf.mxu0
      %v1885 = vadd.f32 %v1724, %v1884
      %v1886 = vpop.f32.mrf.mxu0
      %1887 = vmatprep.mubr.bf16.mxu0 0
      %1888 = vmatmul.mubr.bf16.gmra.mxu0 %v1335
      %v1889 = vpop.f32.mrf.mxu0
      %v1890 = vadd.f32 %v1729, %v1889
      %v1891 = vpop.f32.mrf.mxu0
      %v1892 = vpop.f32.mrf.mxu0
      %v1893 = vadd.f32 %v1732, %v1892
      %v1894 = vpop.f32.mrf.mxu0
      %1895 = vmatprep.mubr.bf16.mxu0 0
      %1896 = vmatmul.mubr.bf16.gmra.mxu0 %v1338
      %v1897 = vpop.f32.mrf.mxu0
      %v1898 = vadd.f32 %v1737, %v1897
      %v1899 = vpop.f32.mrf.mxu0
      %v1900 = vpop.f32.mrf.mxu0
      %v1901 = vadd.f32 %v1740, %v1900
      %v1902 = vpop.f32.mrf.mxu0
      %1903 = vmatprep.mubr.bf16.mxu0 0
      %1904 = vmatmul.mubr.bf16.gmra.mxu0 %v1341
      %v1905 = vpop.f32.mrf.mxu0
      %v1906 = vadd.f32 %v1745, %v1905
      %v1907 = vpop.f32.mrf.mxu0
      %v1908 = vpop.f32.mrf.mxu0
      %v1909 = vadd.f32 %v1748, %v1908
      %v1910 = vpop.f32.mrf.mxu0
      %1911 = vmatprep.mubr.bf16.mxu0 0
      %1912 = vmatmul.mubr.bf16.gmra.mxu0 %v1344
      %v1913 = vpop.f32.mrf.mxu0
      %v1914 = vadd.f32 %v1753, %v1913
      %v1915 = vpop.f32.mrf.mxu0
      %v1916 = vpop.f32.mrf.mxu0
      %v1917 = vadd.f32 %v1756, %v1916
      %v1918 = vpop.f32.mrf.mxu0
      %1919 = vmatprep.mubr.bf16.mxu0 0
      %1920 = vmatmul.mubr.bf16.gmra.mxu0 %v1347
      %v1921 = vpop.f32.mrf.mxu0
      %v1922 = vadd.f32 %v1761, %v1921
      %v1923 = vpop.f32.mrf.mxu0
      %v1924 = vpop.f32.mrf.mxu0
      %v1925 = vadd.f32 %v1764, %v1924
      %v1926 = vpop.f32.mrf.mxu0
      %1927 = vmatprep.mubr.bf16.mxu0 0
      %1928 = vmatmul.mubr.bf16.gmra.mxu0 %v1350
      %v1929 = vpop.f32.mrf.mxu0
      %v1930 = vadd.f32 %v1769, %v1929
      %v1931 = vpop.f32.mrf.mxu0
      %v1932 = vpop.f32.mrf.mxu0
      %v1933 = vadd.f32 %v1772, %v1932
      %v1934 = vpop.f32.mrf.mxu0
      %1935 = vmatprep.mubr.bf16.mxu0 0
      %1936 = vmatmul.mubr.bf16.gmra.mxu0 %v1353
      %v1937 = vpop.f32.mrf.mxu0
      %v1938 = vadd.f32 %v1777, %v1937
      %v1939 = vpop.f32.mrf.mxu0
      %v1940 = vpop.f32.mrf.mxu0
      %v1941 = vadd.f32 %v1780, %v1940
      %v1942 = vpop.f32.mrf.mxu0
      %1943 = vmatprep.mubr.bf16.mxu0 0
      %1944 = vmatmul.mubr.bf16.gmra.mxu0 %v1435
      %v1945 = vpop.f32.mrf.mxu0
      %v1946 = vadd.f32 %v1785, %v1945
      %v1947 = vpop.f32.mrf.mxu0
      %v1948 = vpop.f32.mrf.mxu0
      %v1949 = vadd.f32 %v1788, %v1948
      %v1950 = vpop.f32.mrf.mxu0
      %1951 = vdwg.mxu0
      %v2000 = vunpack.c.l.b16 %v1370
      %v2001 = vunpack.c.l.b16 %v1371
      %v2002 = vunpack.c.l.b16 %v1372
      %v2003 = vunpack.c.l.b16 %v1373
      %v2004 = vunpack.c.l.b16 %v1374
      %v2005 = vunpack.c.l.b16 %v1375
      %v2006 = vunpack.c.l.b16 %v1376
      %v2007 = vunpack.c.l.b16 %v1377
      %v2008 = vunpack.c.l.b16 %v1378
      %v2009 = vunpack.c.l.b16 %v1379
      %v2010 = vunpack.c.l.b16 %v1380
      %v2011 = vunpack.c.l.b16 %v1381
      %v2012 = vunpack.c.l.b16 %v1382
      %v2013 = vunpack.c.l.b16 %v1383
      %v2014 = vunpack.c.l.b16 %v1384
      %v2015 = vunpack.c.l.b16 %v1385
      %v2016 = vunpack.c.l.b16 %v1386
      %v2017 = vunpack.c.l.b16 %v1387
      %v2018 = vunpack.c.l.b16 %v1388
      %v2019 = vunpack.c.l.b16 %v1389
      %v2020 = vunpack.c.l.b16 %v1390
      %v2021 = vunpack.c.l.b16 %v1391
      %v2022 = vunpack.c.l.b16 %v1392
      %v2023 = vunpack.c.l.b16 %v1393
      %v2024 = vunpack.c.l.b16 %v1394
      %v2025 = vunpack.c.l.b16 %v1395
      %v2026 = vunpack.c.l.b16 %v1396
      %v2027 = vunpack.c.l.b16 %v1397
      %v2028 = vunpack.c.l.b16 %v1398
      %v2029 = vunpack.c.l.b16 %v1399
      %v2030 = vunpack.c.l.b16 %v1400
      %v2031 = vunpack.c.l.b16 %v1401
      %v2032 = vunpack.c.l.b16 %v1402
      %v2033 = vunpack.c.l.b16 %v1403
      %v2034 = vunpack.c.l.b16 %v1404
      %v2035 = vunpack.c.l.b16 %v1405
      %v2036 = vunpack.c.l.b16 %v1406
      %v2037 = vunpack.c.l.b16 %v1407
      %v2038 = vunpack.c.l.b16 %v1408
      %v2039 = vunpack.c.l.b16 %v1409
      %v2040 = vunpack.c.l.b16 %v1410
      %v2041 = vunpack.c.l.b16 %v1411
      %v2042 = vunpack.c.l.b16 %v1412
      %v2043 = vunpack.c.l.b16 %v1413
      %v2044 = vunpack.c.l.b16 %v1414
      %v2045 = vunpack.c.l.b16 %v1415
      %v2046 = vunpack.c.l.b16 %v1416
      %v2047 = vunpack.c.l.b16 %v1417
      %v2048 = vpack.c.b16 %v2001, %v2000
      %v2049 = vpack.c.b16 %v2003, %v2002
      %v2050 = vpack.c.b16 %v2005, %v2004
      %v2051 = vpack.c.b16 %v2007, %v2006
      %v2052 = vpack.c.b16 %v2009, %v2008
      %v2053 = vpack.c.b16 %v2011, %v2010
      %v2054 = vpack.c.b16 %v2013, %v2012
      %v2055 = vpack.c.b16 %v2015, %v2014
      %v2056 = vpack.c.b16 %v2017, %v2016
      %v2057 = vpack.c.b16 %v2019, %v2018
      %v2058 = vpack.c.b16 %v2021, %v2020
      %v2059 = vpack.c.b16 %v2023, %v2022
      %v2060 = vpack.c.b16 %v2025, %v2024
      %v2061 = vpack.c.b16 %v2027, %v2026
      %v2062 = vpack.c.b16 %v2029, %v2028
      %v2063 = vpack.c.b16 %v2031, %v2030
      %v2064 = vpack.c.b16 %v2033, %v2032
      %v2065 = vpack.c.b16 %v2035, %v2034
      %v2066 = vpack.c.b16 %v2037, %v2036
      %v2067 = vpack.c.b16 %v2039, %v2038
      %v2068 = vpack.c.b16 %v2041, %v2040
      %v2069 = vpack.c.b16 %v2043, %v2042
      %v2070 = vpack.c.b16 %v2045, %v2044
      %v2071 = vpack.c.b16 %v2047, %v2046
      %2096 = vmatprep.subr.bf16.mxu0 0
      %2097 = vmatpush1.bf16.msra.mxu0 %v2055
      %2098 = vmatprep.subr.bf16.mxu0 0
      %2099 = vmatpush1.bf16.msra.mxu0 %v2054
      %2100 = vmatprep.subr.bf16.mxu0 0
      %2101 = vmatpush1.bf16.msra.mxu0 %v2053
      %2102 = vmatprep.subr.bf16.mxu0 0
      %2103 = vmatpush1.bf16.msra.mxu0 %v2052
      %2104 = vmatprep.subr.bf16.mxu0 0
      %2105 = vmatpush1.bf16.msra.mxu0 %v2051
      %2106 = vmatprep.subr.bf16.mxu0 0
      %2107 = vmatpush1.bf16.msra.mxu0 %v2050
      %2108 = vmatprep.subr.bf16.mxu0 0
      %2109 = vmatpush1.bf16.msra.mxu0 %v2049
      %2110 = vmatprep.subr.bf16.mxu0 0
      %2111 = vmatpush1.bf16.msra.mxu0 %v2048
      %2112 = vmatprep.subr.bf16.mxu0 0
      %2113 = vmatpush2.bf16.msra.mxu0 %v2063
      %2114 = vmatprep.subr.bf16.mxu0 0
      %2115 = vmatpush2.bf16.msra.mxu0 %v2062
      %2116 = vmatprep.subr.bf16.mxu0 0
      %2117 = vmatpush2.bf16.msra.mxu0 %v2061
      %2118 = vmatprep.subr.bf16.mxu0 0
      %2119 = vmatpush2.bf16.msra.mxu0 %v2060
      %2120 = vmatprep.subr.bf16.mxu0 0
      %2121 = vmatpush2.bf16.msra.mxu0 %v2059
      %2122 = vmatprep.subr.bf16.mxu0 0
      %2123 = vmatpush2.bf16.msra.mxu0 %v2058
      %2124 = vmatprep.subr.bf16.mxu0 0
      %2125 = vmatpush2.bf16.msra.mxu0 %v2057
      %2126 = vmatprep.subr.bf16.mxu0 0
      %2127 = vmatpush2.bf16.msra.mxu0 %v2056
      %2128 = vmatprep.mubr.bf16.mxu0 %v1076
      %2129 = vmatmul.mubr.bf16.gmra.mxu0 %v1028
      %v2130 = vpop.f32.mrf.mxu0
      %v2131 = vadd.f32 %v1826, %v2130
      %v2132 = vpop.f32.mrf.mxu0
      %v2133 = vpop.f32.mrf.mxu0
      %v2134 = vadd.f32 %v1829, %v2133
      %v2135 = vpop.f32.mrf.mxu0
      %2136 = vmatprep.mubr.bf16.mxu0 %v1088
      %2137 = vmatmul.mubr.bf16.gmra.mxu0 %v1030
      %v2138 = vpop.f32.mrf.mxu0
      %v2139 = vadd.f32 %v1834, %v2138
      %v2140 = vpop.f32.mrf.mxu0
      %v2141 = vpop.f32.mrf.mxu0
      %v2142 = vadd.f32 %v1837, %v2141
      %v2143 = vpop.f32.mrf.mxu0
      %2144 = vmatprep.mubr.bf16.mxu0 %v1100
      %2145 = vmatmul.mubr.bf16.gmra.mxu0 %v1032
      %v2146 = vpop.f32.mrf.mxu0
      %v2147 = vadd.f32 %v1842, %v2146
      %v2148 = vpop.f32.mrf.mxu0
      %v2149 = vpop.f32.mrf.mxu0
      %v2150 = vadd.f32 %v1845, %v2149
      %v2151 = vpop.f32.mrf.mxu0
      %2152 = vmatprep.mubr.bf16.mxu0 %v1112
      %2153 = vmatmul.mubr.bf16.gmra.mxu0 %v1034
      %v2154 = vpop.f32.mrf.mxu0
      %v2155 = vadd.f32 %v1850, %v2154
      %v2156 = vpop.f32.mrf.mxu0
      %v2157 = vpop.f32.mrf.mxu0
      %v2158 = vadd.f32 %v1853, %v2157
      %v2159 = vpop.f32.mrf.mxu0
      %2160 = vmatprep.mubr.bf16.mxu0 %v1124
      %2161 = vmatmul.mubr.bf16.gmra.mxu0 %v1036
      %v2162 = vpop.f32.mrf.mxu0
      %v2163 = vadd.f32 %v1858, %v2162
      %v2164 = vpop.f32.mrf.mxu0
      %v2165 = vpop.f32.mrf.mxu0
      %v2166 = vadd.f32 %v1861, %v2165
      %v2167 = vpop.f32.mrf.mxu0
      %2168 = vmatprep.mubr.bf16.mxu0 %v1136
      %2169 = vmatmul.mubr.bf16.gmra.mxu0 %v1038
      %v2170 = vpop.f32.mrf.mxu0
      %v2171 = vadd.f32 %v1866, %v2170
      %v2172 = vpop.f32.mrf.mxu0
      %v2173 = vpop.f32.mrf.mxu0
      %v2174 = vadd.f32 %v1869, %v2173
      %v2175 = vpop.f32.mrf.mxu0
      %2176 = vmatprep.mubr.bf16.mxu0 %v1148
      %2177 = vmatmul.mubr.bf16.gmra.mxu0 %v1040
      %v2178 = vpop.f32.mrf.mxu0
      %v2179 = vadd.f32 %v1874, %v2178
      %v2180 = vpop.f32.mrf.mxu0
      %v2181 = vpop.f32.mrf.mxu0
      %v2182 = vadd.f32 %v1877, %v2181
      %v2183 = vpop.f32.mrf.mxu0
      %2184 = vmatprep.mubr.bf16.mxu0 %v1160
      %2185 = vmatmul.mubr.bf16.gmra.mxu0 %v1042
      %v2186 = vpop.f32.mrf.mxu0
      %v2187 = vadd.f32 %v1882, %v2186
      %v2188 = vpop.f32.mrf.mxu0
      %v2189 = vpop.f32.mrf.mxu0
      %v2190 = vadd.f32 %v1885, %v2189
      %v2191 = vpop.f32.mrf.mxu0
      %2192 = vmatprep.mubr.bf16.mxu0 %v1172
      %2193 = vmatmul.mubr.bf16.gmra.mxu0 %v1044
      %v2194 = vpop.f32.mrf.mxu0
      %v2195 = vadd.f32 %v1890, %v2194
      %v2196 = vpop.f32.mrf.mxu0
      %v2197 = vpop.f32.mrf.mxu0
      %v2198 = vadd.f32 %v1893, %v2197
      %v2199 = vpop.f32.mrf.mxu0
      %2200 = vmatprep.mubr.bf16.mxu0 %v1184
      %2201 = vmatmul.mubr.bf16.gmra.mxu0 %v1046
      %v2202 = vpop.f32.mrf.mxu0
      %v2203 = vadd.f32 %v1898, %v2202
      %v2204 = vpop.f32.mrf.mxu0
      %v2205 = vpop.f32.mrf.mxu0
      %v2206 = vadd.f32 %v1901, %v2205
      %v2207 = vpop.f32.mrf.mxu0
      %2208 = vmatprep.mubr.bf16.mxu0 %v1196
      %2209 = vmatmul.mubr.bf16.gmra.mxu0 %v1048
      %v2210 = vpop.f32.mrf.mxu0
      %v2211 = vadd.f32 %v1906, %v2210
      %v2212 = vpop.f32.mrf.mxu0
      %v2213 = vpop.f32.mrf.mxu0
      %v2214 = vadd.f32 %v1909, %v2213
      %v2215 = vpop.f32.mrf.mxu0
      %2216 = vmatprep.mubr.bf16.mxu0 %v1208
      %2217 = vmatmul.mubr.bf16.gmra.mxu0 %v1050
      %v2218 = vpop.f32.mrf.mxu0
      %v2219 = vadd.f32 %v1914, %v2218
      %v2220 = vpop.f32.mrf.mxu0
      %v2221 = vpop.f32.mrf.mxu0
      %v2222 = vadd.f32 %v1917, %v2221
      %v2223 = vpop.f32.mrf.mxu0
      %2224 = vmatprep.mubr.bf16.mxu0 %v1220
      %2225 = vmatmul.mubr.bf16.gmra.mxu0 %v1052
      %v2226 = vpop.f32.mrf.mxu0
      %v2227 = vadd.f32 %v1922, %v2226
      %v2228 = vpop.f32.mrf.mxu0
      %v2229 = vpop.f32.mrf.mxu0
      %v2230 = vadd.f32 %v1925, %v2229
      %v2231 = vpop.f32.mrf.mxu0
      %2232 = vmatprep.mubr.bf16.mxu0 %v1232
      %2233 = vmatmul.mubr.bf16.gmra.mxu0 %v1054
      %v2234 = vpop.f32.mrf.mxu0
      %v2235 = vadd.f32 %v1930, %v2234
      %v2236 = vpop.f32.mrf.mxu0
      %v2237 = vpop.f32.mrf.mxu0
      %v2238 = vadd.f32 %v1933, %v2237
      %v2239 = vpop.f32.mrf.mxu0
      %2240 = vmatprep.mubr.bf16.mxu0 %v1244
      %2241 = vmatmul.mubr.bf16.gmra.mxu0 %v1056
      %v2242 = vpop.f32.mrf.mxu0
      %v2243 = vadd.f32 %v1938, %v2242
      %v2244 = vpop.f32.mrf.mxu0
      %v2245 = vpop.f32.mrf.mxu0
      %v2246 = vadd.f32 %v1941, %v2245
      %v2247 = vpop.f32.mrf.mxu0
      %2248 = vmatprep.mubr.bf16.mxu0 %v1256
      %2249 = vmatmul.mubr.bf16.gmra.mxu0 %v1058
      %v2250 = vpop.f32.mrf.mxu0
      %v2251 = vadd.f32 %v1946, %v2250
      %v2252 = vpop.f32.mrf.mxu0
      %v2253 = vpop.f32.mrf.mxu0
      %v2254 = vadd.f32 %v1949, %v2253
      %v2255 = vpop.f32.mrf.mxu0
      %2256 = vdwg.mxu0
      %2257 = vmatprep.subr.bf16.mxu0 0
      %2258 = vmatpush1.bf16.msra.mxu0 %v2071
      %2259 = vmatprep.subr.bf16.mxu0 0
      %2260 = vmatpush1.bf16.msra.mxu0 %v2070
      %2261 = vmatprep.subr.bf16.mxu0 0
      %2262 = vmatpush1.bf16.msra.mxu0 %v2069
      %2263 = vmatprep.subr.bf16.mxu0 0
      %2264 = vmatpush1.bf16.msra.mxu0 %v2068
      %2265 = vmatprep.subr.bf16.mxu0 0
      %2266 = vmatpush1.bf16.msra.mxu0 %v2067
      %2267 = vmatprep.subr.bf16.mxu0 0
      %2268 = vmatpush1.bf16.msra.mxu0 %v2066
      %2269 = vmatprep.subr.bf16.mxu0 0
      %2270 = vmatpush1.bf16.msra.mxu0 %v2065
      %2271 = vmatprep.subr.bf16.mxu0 0
      %2272 = vmatpush1.bf16.msra.mxu0 %v2064
      %2273 = vmatprep.subr.bf16.mxu0 0
      %2274 = vmatpush2.bf16.msra.mxu0 0
      %2275 = vmatprep.subr.bf16.mxu0 0
      %2276 = vmatpush2.bf16.msra.mxu0 0
      %2277 = vmatprep.subr.bf16.mxu0 0
      %2278 = vmatpush2.bf16.msra.mxu0 0
      %2279 = vmatprep.subr.bf16.mxu0 0
      %2280 = vmatpush2.bf16.msra.mxu0 0
      %2281 = vmatprep.subr.bf16.mxu0 0
      %2282 = vmatpush2.bf16.msra.mxu0 0
      %2283 = vmatprep.subr.bf16.mxu0 0
      %2284 = vmatpush2.bf16.msra.mxu0 0
      %2285 = vmatprep.subr.bf16.mxu0 0
      %2286 = vmatpush2.bf16.msra.mxu0 0
      %2287 = vmatprep.subr.bf16.mxu0 0
      %2288 = vmatpush2.bf16.msra.mxu0 0
      %2289 = vmatprep.mubr.bf16.mxu0 0
      %2290 = vmatmul.mubr.bf16.gmra.mxu0 %v1308
      %v2291 = vpop.f32.mrf.mxu0
      %v2292 = vadd.f32 %v2131, %v2291
      %v2293 = vpop.f32.mrf.mxu0
      %v2294 = vpop.f32.mrf.mxu0
      %v2295 = vadd.f32 %v2134, %v2294
      %v2296 = vpop.f32.mrf.mxu0
      %2297 = vmatprep.mubr.bf16.mxu0 0
      %2298 = vmatmul.mubr.bf16.gmra.mxu0 %v1311
      %v2299 = vpop.f32.mrf.mxu0
      %v2300 = vadd.f32 %v2139, %v2299
      %v2301 = vpop.f32.mrf.mxu0
      %v2302 = vpop.f32.mrf.mxu0
      %v2303 = vadd.f32 %v2142, %v2302
      %v2304 = vpop.f32.mrf.mxu0
      %2305 = vmatprep.mubr.bf16.mxu0 0
      %2306 = vmatmul.mubr.bf16.gmra.mxu0 %v1314
      %v2307 = vpop.f32.mrf.mxu0
      %v2308 = vadd.f32 %v2147, %v2307
      %v2309 = vpop.f32.mrf.mxu0
      %v2310 = vpop.f32.mrf.mxu0
      %v2311 = vadd.f32 %v2150, %v2310
      %v2312 = vpop.f32.mrf.mxu0
      %2313 = vmatprep.mubr.bf16.mxu0 0
      %2314 = vmatmul.mubr.bf16.gmra.mxu0 %v1317
      %v2315 = vpop.f32.mrf.mxu0
      %v2316 = vadd.f32 %v2155, %v2315
      %v2317 = vpop.f32.mrf.mxu0
      %v2318 = vpop.f32.mrf.mxu0
      %v2319 = vadd.f32 %v2158, %v2318
      %v2320 = vpop.f32.mrf.mxu0
      %2321 = vmatprep.mubr.bf16.mxu0 0
      %2322 = vmatmul.mubr.bf16.gmra.mxu0 %v1320
      %v2323 = vpop.f32.mrf.mxu0
      %v2324 = vadd.f32 %v2163, %v2323
      %v2325 = vpop.f32.mrf.mxu0
      %v2326 = vpop.f32.mrf.mxu0
      %v2327 = vadd.f32 %v2166, %v2326
      %v2328 = vpop.f32.mrf.mxu0
      %2329 = vmatprep.mubr.bf16.mxu0 0
      %2330 = vmatmul.mubr.bf16.gmra.mxu0 %v1323
      %v2331 = vpop.f32.mrf.mxu0
      %v2332 = vadd.f32 %v2171, %v2331
      %v2333 = vpop.f32.mrf.mxu0
      %v2334 = vpop.f32.mrf.mxu0
      %v2335 = vadd.f32 %v2174, %v2334
      %v2336 = vpop.f32.mrf.mxu0
      %2337 = vmatprep.mubr.bf16.mxu0 0
      %2338 = vmatmul.mubr.bf16.gmra.mxu0 %v1326
      %v2339 = vpop.f32.mrf.mxu0
      %v2340 = vadd.f32 %v2179, %v2339
      %v2341 = vpop.f32.mrf.mxu0
      %v2342 = vpop.f32.mrf.mxu0
      %v2343 = vadd.f32 %v2182, %v2342
      %v2344 = vpop.f32.mrf.mxu0
      %2345 = vmatprep.mubr.bf16.mxu0 0
      %2346 = vmatmul.mubr.bf16.gmra.mxu0 %v1329
      %v2347 = vpop.f32.mrf.mxu0
      %v2348 = vadd.f32 %v2187, %v2347
      %v2349 = vpop.f32.mrf.mxu0
      %v2350 = vpop.f32.mrf.mxu0
      %v2351 = vadd.f32 %v2190, %v2350
      %v2352 = vpop.f32.mrf.mxu0
      %2353 = vmatprep.mubr.bf16.mxu0 0
      %2354 = vmatmul.mubr.bf16.gmra.mxu0 %v1332
      %v2355 = vpop.f32.mrf.mxu0
      %v2356 = vadd.f32 %v2195, %v2355
      %v2357 = vpop.f32.mrf.mxu0
      %v2358 = vpop.f32.mrf.mxu0
      %v2359 = vadd.f32 %v2198, %v2358
      %v2360 = vpop.f32.mrf.mxu0
      %2361 = vmatprep.mubr.bf16.mxu0 0
      %2362 = vmatmul.mubr.bf16.gmra.mxu0 %v1335
      %v2363 = vpop.f32.mrf.mxu0
      %v2364 = vadd.f32 %v2203, %v2363
      %v2365 = vpop.f32.mrf.mxu0
      %v2366 = vpop.f32.mrf.mxu0
      %v2367 = vadd.f32 %v2206, %v2366
      %v2368 = vpop.f32.mrf.mxu0
      %2369 = vmatprep.mubr.bf16.mxu0 0
      %2370 = vmatmul.mubr.bf16.gmra.mxu0 %v1338
      %v2371 = vpop.f32.mrf.mxu0
      %v2372 = vadd.f32 %v2211, %v2371
      %v2373 = vpop.f32.mrf.mxu0
      %v2374 = vpop.f32.mrf.mxu0
      %v2375 = vadd.f32 %v2214, %v2374
      %v2376 = vpop.f32.mrf.mxu0
      %2377 = vmatprep.mubr.bf16.mxu0 0
      %2378 = vmatmul.mubr.bf16.gmra.mxu0 %v1341
      %v2379 = vpop.f32.mrf.mxu0
      %v2380 = vadd.f32 %v2219, %v2379
      %v2381 = vpop.f32.mrf.mxu0
      %v2382 = vpop.f32.mrf.mxu0
      %v2383 = vadd.f32 %v2222, %v2382
      %v2384 = vpop.f32.mrf.mxu0
      %2385 = vmatprep.mubr.bf16.mxu0 0
      %2386 = vmatmul.mubr.bf16.gmra.mxu0 %v1344
      %v2387 = vpop.f32.mrf.mxu0
      %v2388 = vadd.f32 %v2227, %v2387
      %v2389 = vpop.f32.mrf.mxu0
      %v2390 = vpop.f32.mrf.mxu0
      %v2391 = vadd.f32 %v2230, %v2390
      %v2392 = vpop.f32.mrf.mxu0
      %2393 = vmatprep.mubr.bf16.mxu0 0
      %2394 = vmatmul.mubr.bf16.gmra.mxu0 %v1347
      %v2395 = vpop.f32.mrf.mxu0
      %v2396 = vadd.f32 %v2235, %v2395
      %v2397 = vpop.f32.mrf.mxu0
      %v2398 = vpop.f32.mrf.mxu0
      %v2399 = vadd.f32 %v2238, %v2398
      %v2400 = vpop.f32.mrf.mxu0
      %2401 = vmatprep.mubr.bf16.mxu0 0
      %2402 = vmatmul.mubr.bf16.gmra.mxu0 %v1350
      %v2403 = vpop.f32.mrf.mxu0
      %v2404 = vadd.f32 %v2243, %v2403
      %v2405 = vpop.f32.mrf.mxu0
      %v2406 = vpop.f32.mrf.mxu0
      %v2407 = vadd.f32 %v2246, %v2406
      %v2408 = vpop.f32.mrf.mxu0
      %2409 = vmatprep.mubr.bf16.mxu0 0
      %2410 = vmatmul.mubr.bf16.gmra.mxu0 %v1353
      %v2411 = vpop.f32.mrf.mxu0
      %v2412 = vadd.f32 %v2251, %v2411
      %v2413 = vpop.f32.mrf.mxu0
      %v2414 = vpop.f32.mrf.mxu0
      %v2415 = vadd.f32 %v2254, %v2414
      %v2416 = vpop.f32.mrf.mxu0
      %2417 = vdwg.mxu0
      %v2419 = vshrl.u32 %v1062, 16
      %v2421 = vshll.u32 %v1062, 16
      %v2423 = vrot.slane %v2421, 1
      %v2424 = vor.u32 %v2419, %v2423
      %v2426 = vshll.u32 %v1063, 16
      %v2428 = vrot.slane %v2426, 1
      %v2429 = vsel %vm1064, %v2424, %v2428
      %v2433 = vrot.slane %v1062, 1
      %v2434 = vrot.slane %v1063, 1
      %v2435 = vsel %vm1305, %v2433, %v2434
      %s2437 = scalar_lea.vmem %s2, 384
      %v2438 = vld [vmem:[%s2437] sm:$0xf]
      %v2439 = vld [vmem:[%s2437 + $0x4] sm:$0xf]
      %v2440 = vld [vmem:[%s2437 + $0x8] sm:$0xf]
      %v2441 = vld [vmem:[%s2437 + $0xc] sm:$0xf]
      %v2442 = vld [vmem:[%s2437 + $0x10] sm:$0xf]
      %v2443 = vld [vmem:[%s2437 + $0x14] sm:$0xf]
      %v2444 = vld [vmem:[%s2437 + $0x18] sm:$0xf]
      %v2445 = vld [vmem:[%s2437 + $0x1c] sm:$0xf]
      %v2446 = vld [vmem:[%s2437 + $0x20] sm:$0xf]
      %v2447 = vld [vmem:[%s2437 + $0x24] sm:$0xf]
      %v2448 = vld [vmem:[%s2437 + $0x28] sm:$0xf]
      %v2449 = vld [vmem:[%s2437 + $0x2c] sm:$0xf]
      %v2450 = vld [vmem:[%s2437 + $0x30] sm:$0xf]
      %v2451 = vld [vmem:[%s2437 + $0x34] sm:$0xf]
      %v2452 = vld [vmem:[%s2437 + $0x38] sm:$0xf]
      %v2453 = vld [vmem:[%s2437 + $0x3c] sm:$0xf]
      %v2454 = vld [vmem:[%s2437 + $0x40] sm:$0xf]
      %v2455 = vld [vmem:[%s2437 + $0x44] sm:$0xf]
      %v2456 = vld [vmem:[%s2437 + $0x48] sm:$0xf]
      %v2457 = vld [vmem:[%s2437 + $0x4c] sm:$0xf]
      %v2458 = vld [vmem:[%s2437 + $0x50] sm:$0xf]
      %v2459 = vld [vmem:[%s2437 + $0x54] sm:$0xf]
      %v2460 = vld [vmem:[%s2437 + $0x58] sm:$0xf]
      %v2461 = vld [vmem:[%s2437 + $0x5c] sm:$0xf]
      %v2462 = vld [vmem:[%s2437 + $0x60] sm:$0xf]
      %v2463 = vld [vmem:[%s2437 + $0x64] sm:$0xf]
      %v2464 = vld [vmem:[%s2437 + $0x68] sm:$0xf]
      %v2465 = vld [vmem:[%s2437 + $0x6c] sm:$0xf]
      %v2466 = vld [vmem:[%s2437 + $0x70] sm:$0xf]
      %v2467 = vld [vmem:[%s2437 + $0x74] sm:$0xf]
      %v2468 = vld [vmem:[%s2437 + $0x78] sm:$0xf]
      %v2469 = vld [vmem:[%s2437 + $0x7c] sm:$0xf]
      %v2470 = vld [vmem:[%s2437 + $0x80] sm:$0xf]
      %v2471 = vld [vmem:[%s2437 + $0x84] sm:$0xf]
      %v2472 = vld [vmem:[%s2437 + $0x88] sm:$0xf]
      %v2473 = vld [vmem:[%s2437 + $0x8c] sm:$0xf]
      %v2474 = vld [vmem:[%s2437 + $0x90] sm:$0xf]
      %v2475 = vld [vmem:[%s2437 + $0x94] sm:$0xf]
      %v2476 = vld [vmem:[%s2437 + $0x98] sm:$0xf]
      %v2477 = vld [vmem:[%s2437 + $0x9c] sm:$0xf]
      %v2478 = vld [vmem:[%s2437 + $0xa0] sm:$0xf]
      %v2479 = vld [vmem:[%s2437 + $0xa4] sm:$0xf]
      %v2480 = vld [vmem:[%s2437 + $0xa8] sm:$0xf]
      %v2481 = vld [vmem:[%s2437 + $0xac] sm:$0xf]
      %v2482 = vld [vmem:[%s2437 + $0xb0] sm:$0xf]
      %v2483 = vld [vmem:[%s2437 + $0xb4] sm:$0xf]
      %v2484 = vld [vmem:[%s2437 + $0xb8] sm:$0xf]
      %v2485 = vld [vmem:[%s2437 + $0xbc] sm:$0xf]
      %v2534 = vunpack.c.l.b16 %v2438
      %v2535 = vunpack.c.l.b16 %v2439
      %v2536 = vunpack.c.l.b16 %v2440
      %v2537 = vunpack.c.l.b16 %v2441
      %v2538 = vunpack.c.l.b16 %v2442
      %v2539 = vunpack.c.l.b16 %v2443
      %v2540 = vunpack.c.l.b16 %v2444
      %v2541 = vunpack.c.l.b16 %v2445
      %v2542 = vunpack.c.l.b16 %v2446
      %v2543 = vunpack.c.l.b16 %v2447
      %v2544 = vunpack.c.l.b16 %v2448
      %v2545 = vunpack.c.l.b16 %v2449
      %v2546 = vunpack.c.l.b16 %v2450
      %v2547 = vunpack.c.l.b16 %v2451
      %v2548 = vunpack.c.l.b16 %v2452
      %v2549 = vunpack.c.l.b16 %v2453
      %v2550 = vunpack.c.l.b16 %v2454
      %v2551 = vunpack.c.l.b16 %v2455
      %v2552 = vunpack.c.l.b16 %v2456
      %v2553 = vunpack.c.l.b16 %v2457
      %v2554 = vunpack.c.l.b16 %v2458
      %v2555 = vunpack.c.l.b16 %v2459
      %v2556 = vunpack.c.l.b16 %v2460
      %v2557 = vunpack.c.l.b16 %v2461
      %v2558 = vunpack.c.l.b16 %v2462
      %v2559 = vunpack.c.l.b16 %v2463
      %v2560 = vunpack.c.l.b16 %v2464
      %v2561 = vunpack.c.l.b16 %v2465
      %v2562 = vunpack.c.l.b16 %v2466
      %v2563 = vunpack.c.l.b16 %v2467
      %v2564 = vunpack.c.l.b16 %v2468
      %v2565 = vunpack.c.l.b16 %v2469
      %v2566 = vunpack.c.l.b16 %v2470
      %v2567 = vunpack.c.l.b16 %v2471
      %v2568 = vunpack.c.l.b16 %v2472
      %v2569 = vunpack.c.l.b16 %v2473
      %v2570 = vunpack.c.l.b16 %v2474
      %v2571 = vunpack.c.l.b16 %v2475
      %v2572 = vunpack.c.l.b16 %v2476
      %v2573 = vunpack.c.l.b16 %v2477
      %v2574 = vunpack.c.l.b16 %v2478
      %v2575 = vunpack.c.l.b16 %v2479
      %v2576 = vunpack.c.l.b16 %v2480
      %v2577 = vunpack.c.l.b16 %v2481
      %v2578 = vunpack.c.l.b16 %v2482
      %v2579 = vunpack.c.l.b16 %v2483
      %v2580 = vunpack.c.l.b16 %v2484
      %v2581 = vunpack.c.l.b16 %v2485
      %v2582 = vpack.c.b16 %v2535, %v2534
      %v2583 = vpack.c.b16 %v2537, %v2536
      %v2584 = vpack.c.b16 %v2539, %v2538
      %v2585 = vpack.c.b16 %v2541, %v2540
      %v2586 = vpack.c.b16 %v2543, %v2542
      %v2587 = vpack.c.b16 %v2545, %v2544
      %v2588 = vpack.c.b16 %v2547, %v2546
      %v2589 = vpack.c.b16 %v2549, %v2548
      %v2590 = vpack.c.b16 %v2551, %v2550
      %v2591 = vpack.c.b16 %v2553, %v2552
      %v2592 = vpack.c.b16 %v2555, %v2554
      %v2593 = vpack.c.b16 %v2557, %v2556
      %v2594 = vpack.c.b16 %v2559, %v2558
      %v2595 = vpack.c.b16 %v2561, %v2560
      %v2596 = vpack.c.b16 %v2563, %v2562
      %v2597 = vpack.c.b16 %v2565, %v2564
      %v2598 = vpack.c.b16 %v2567, %v2566
      %v2599 = vpack.c.b16 %v2569, %v2568
      %v2600 = vpack.c.b16 %v2571, %v2570
      %v2601 = vpack.c.b16 %v2573, %v2572
      %v2602 = vpack.c.b16 %v2575, %v2574
      %v2603 = vpack.c.b16 %v2577, %v2576
      %v2604 = vpack.c.b16 %v2579, %v2578
      %v2605 = vpack.c.b16 %v2581, %v2580
      %2630 = vmatprep.subr.bf16.mxu0 0
      %2631 = vmatpush1.bf16.msra.mxu0 %v2589
      %2632 = vmatprep.subr.bf16.mxu0 0
      %2633 = vmatpush1.bf16.msra.mxu0 %v2588
      %2634 = vmatprep.subr.bf16.mxu0 0
      %2635 = vmatpush1.bf16.msra.mxu0 %v2587
      %2636 = vmatprep.subr.bf16.mxu0 0
      %2637 = vmatpush1.bf16.msra.mxu0 %v2586
      %2638 = vmatprep.subr.bf16.mxu0 0
      %2639 = vmatpush1.bf16.msra.mxu0 %v2585
      %2640 = vmatprep.subr.bf16.mxu0 0
      %2641 = vmatpush1.bf16.msra.mxu0 %v2584
      %2642 = vmatprep.subr.bf16.mxu0 0
      %2643 = vmatpush1.bf16.msra.mxu0 %v2583
      %2644 = vmatprep.subr.bf16.mxu0 0
      %2645 = vmatpush1.bf16.msra.mxu0 %v2582
      %2646 = vmatprep.subr.bf16.mxu0 0
      %2647 = vmatpush2.bf16.msra.mxu0 %v2597
      %2648 = vmatprep.subr.bf16.mxu0 0
      %2649 = vmatpush2.bf16.msra.mxu0 %v2596
      %2650 = vmatprep.subr.bf16.mxu0 0
      %2651 = vmatpush2.bf16.msra.mxu0 %v2595
      %2652 = vmatprep.subr.bf16.mxu0 0
      %2653 = vmatpush2.bf16.msra.mxu0 %v2594
      %2654 = vmatprep.subr.bf16.mxu0 0
      %2655 = vmatpush2.bf16.msra.mxu0 %v2593
      %2656 = vmatprep.subr.bf16.mxu0 0
      %2657 = vmatpush2.bf16.msra.mxu0 %v2592
      %2658 = vmatprep.subr.bf16.mxu0 0
      %2659 = vmatpush2.bf16.msra.mxu0 %v2591
      %2660 = vmatprep.subr.bf16.mxu0 0
      %2661 = vmatpush2.bf16.msra.mxu0 %v2590
      %2662 = vmatprep.mubr.bf16.mxu0 %v1100
      %2663 = vmatmul.mubr.bf16.gmra.mxu0 %v1032
      %v2664 = vpop.f32.mrf.mxu0
      %v2665 = vadd.f32 0.0, %v2664
      %v2666 = vpop.f32.mrf.mxu0
      %v2667 = vpop.f32.mrf.mxu0
      %v2668 = vadd.f32 0.0, %v2667
      %v2669 = vpop.f32.mrf.mxu0
      %2670 = vmatprep.mubr.bf16.mxu0 %v1112
      %2671 = vmatmul.mubr.bf16.gmra.mxu0 %v1034
      %v2672 = vpop.f32.mrf.mxu0
      %v2673 = vadd.f32 0.0, %v2672
      %v2674 = vpop.f32.mrf.mxu0
      %v2675 = vpop.f32.mrf.mxu0
      %v2676 = vadd.f32 0.0, %v2675
      %v2677 = vpop.f32.mrf.mxu0
      %2678 = vmatprep.mubr.bf16.mxu0 %v1124
      %2679 = vmatmul.mubr.bf16.gmra.mxu0 %v1036
      %v2680 = vpop.f32.mrf.mxu0
      %v2681 = vadd.f32 0.0, %v2680
      %v2682 = vpop.f32.mrf.mxu0
      %v2683 = vpop.f32.mrf.mxu0
      %v2684 = vadd.f32 0.0, %v2683
      %v2685 = vpop.f32.mrf.mxu0
      %2686 = vmatprep.mubr.bf16.mxu0 %v1136
      %2687 = vmatmul.mubr.bf16.gmra.mxu0 %v1038
      %v2688 = vpop.f32.mrf.mxu0
      %v2689 = vadd.f32 0.0, %v2688
      %v2690 = vpop.f32.mrf.mxu0
      %v2691 = vpop.f32.mrf.mxu0
      %v2692 = vadd.f32 0.0, %v2691
      %v2693 = vpop.f32.mrf.mxu0
      %2694 = vmatprep.mubr.bf16.mxu0 %v1148
      %2695 = vmatmul.mubr.bf16.gmra.mxu0 %v1040
      %v2696 = vpop.f32.mrf.mxu0
      %v2697 = vadd.f32 0.0, %v2696
      %v2698 = vpop.f32.mrf.mxu0
      %v2699 = vpop.f32.mrf.mxu0
      %v2700 = vadd.f32 0.0, %v2699
      %v2701 = vpop.f32.mrf.mxu0
      %2702 = vmatprep.mubr.bf16.mxu0 %v1160
      %2703 = vmatmul.mubr.bf16.gmra.mxu0 %v1042
      %v2704 = vpop.f32.mrf.mxu0
      %v2705 = vadd.f32 0.0, %v2704
      %v2706 = vpop.f32.mrf.mxu0
      %v2707 = vpop.f32.mrf.mxu0
      %v2708 = vadd.f32 0.0, %v2707
      %v2709 = vpop.f32.mrf.mxu0
      %2710 = vmatprep.mubr.bf16.mxu0 %v1172
      %2711 = vmatmul.mubr.bf16.gmra.mxu0 %v1044
      %v2712 = vpop.f32.mrf.mxu0
      %v2713 = vadd.f32 0.0, %v2712
      %v2714 = vpop.f32.mrf.mxu0
      %v2715 = vpop.f32.mrf.mxu0
      %v2716 = vadd.f32 0.0, %v2715
      %v2717 = vpop.f32.mrf.mxu0
      %2718 = vmatprep.mubr.bf16.mxu0 %v1184
      %2719 = vmatmul.mubr.bf16.gmra.mxu0 %v1046
      %v2720 = vpop.f32.mrf.mxu0
      %v2721 = vadd.f32 0.0, %v2720
      %v2722 = vpop.f32.mrf.mxu0
      %v2723 = vpop.f32.mrf.mxu0
      %v2724 = vadd.f32 0.0, %v2723
      %v2725 = vpop.f32.mrf.mxu0
      %2726 = vmatprep.mubr.bf16.mxu0 %v1196
      %2727 = vmatmul.mubr.bf16.gmra.mxu0 %v1048
      %v2728 = vpop.f32.mrf.mxu0
      %v2729 = vadd.f32 0.0, %v2728
      %v2730 = vpop.f32.mrf.mxu0
      %v2731 = vpop.f32.mrf.mxu0
      %v2732 = vadd.f32 0.0, %v2731
      %v2733 = vpop.f32.mrf.mxu0
      %2734 = vmatprep.mubr.bf16.mxu0 %v1208
      %2735 = vmatmul.mubr.bf16.gmra.mxu0 %v1050
      %v2736 = vpop.f32.mrf.mxu0
      %v2737 = vadd.f32 0.0, %v2736
      %v2738 = vpop.f32.mrf.mxu0
      %v2739 = vpop.f32.mrf.mxu0
      %v2740 = vadd.f32 0.0, %v2739
      %v2741 = vpop.f32.mrf.mxu0
      %2742 = vmatprep.mubr.bf16.mxu0 %v1220
      %2743 = vmatmul.mubr.bf16.gmra.mxu0 %v1052
      %v2744 = vpop.f32.mrf.mxu0
      %v2745 = vadd.f32 0.0, %v2744
      %v2746 = vpop.f32.mrf.mxu0
      %v2747 = vpop.f32.mrf.mxu0
      %v2748 = vadd.f32 0.0, %v2747
      %v2749 = vpop.f32.mrf.mxu0
      %2750 = vmatprep.mubr.bf16.mxu0 %v1232
      %2751 = vmatmul.mubr.bf16.gmra.mxu0 %v1054
      %v2752 = vpop.f32.mrf.mxu0
      %v2753 = vadd.f32 0.0, %v2752
      %v2754 = vpop.f32.mrf.mxu0
      %v2755 = vpop.f32.mrf.mxu0
      %v2756 = vadd.f32 0.0, %v2755
      %v2757 = vpop.f32.mrf.mxu0
      %2758 = vmatprep.mubr.bf16.mxu0 %v1244
      %2759 = vmatmul.mubr.bf16.gmra.mxu0 %v1056
      %v2760 = vpop.f32.mrf.mxu0
      %v2761 = vadd.f32 0.0, %v2760
      %v2762 = vpop.f32.mrf.mxu0
      %v2763 = vpop.f32.mrf.mxu0
      %v2764 = vadd.f32 0.0, %v2763
      %v2765 = vpop.f32.mrf.mxu0
      %2766 = vmatprep.mubr.bf16.mxu0 %v1256
      %2767 = vmatmul.mubr.bf16.gmra.mxu0 %v1058
      %v2768 = vpop.f32.mrf.mxu0
      %v2769 = vadd.f32 0.0, %v2768
      %v2770 = vpop.f32.mrf.mxu0
      %v2771 = vpop.f32.mrf.mxu0
      %v2772 = vadd.f32 0.0, %v2771
      %v2773 = vpop.f32.mrf.mxu0
      %2774 = vmatprep.mubr.bf16.mxu0 %v1429
      %2775 = vmatmul.mubr.bf16.gmra.mxu0 %v1060
      %v2776 = vpop.f32.mrf.mxu0
      %v2777 = vadd.f32 0.0, %v2776
      %v2778 = vpop.f32.mrf.mxu0
      %v2779 = vpop.f32.mrf.mxu0
      %v2780 = vadd.f32 0.0, %v2779
      %v2781 = vpop.f32.mrf.mxu0
      %2782 = vmatprep.mubr.bf16.mxu0 %v2429
      %2783 = vmatmul.mubr.bf16.gmra.mxu0 %v1062
      %v2784 = vpop.f32.mrf.mxu0
      %v2785 = vadd.f32 0.0, %v2784
      %v2786 = vpop.f32.mrf.mxu0
      %v2787 = vpop.f32.mrf.mxu0
      %v2788 = vadd.f32 0.0, %v2787
      %v2789 = vpop.f32.mrf.mxu0
      %2790 = vdwg.mxu0
      %2791 = vmatprep.subr.bf16.mxu0 0
      %2792 = vmatpush1.bf16.msra.mxu0 %v2605
      %2793 = vmatprep.subr.bf16.mxu0 0
      %2794 = vmatpush1.bf16.msra.mxu0 %v2604
      %2795 = vmatprep.subr.bf16.mxu0 0
      %2796 = vmatpush1.bf16.msra.mxu0 %v2603
      %2797 = vmatprep.subr.bf16.mxu0 0
      %2798 = vmatpush1.bf16.msra.mxu0 %v2602
      %2799 = vmatprep.subr.bf16.mxu0 0
      %2800 = vmatpush1.bf16.msra.mxu0 %v2601
      %2801 = vmatprep.subr.bf16.mxu0 0
      %2802 = vmatpush1.bf16.msra.mxu0 %v2600
      %2803 = vmatprep.subr.bf16.mxu0 0
      %2804 = vmatpush1.bf16.msra.mxu0 %v2599
      %2805 = vmatprep.subr.bf16.mxu0 0
      %2806 = vmatpush1.bf16.msra.mxu0 %v2598
      %2807 = vmatprep.subr.bf16.mxu0 0
      %2808 = vmatpush2.bf16.msra.mxu0 0
      %2809 = vmatprep.subr.bf16.mxu0 0
      %2810 = vmatpush2.bf16.msra.mxu0 0
      %2811 = vmatprep.subr.bf16.mxu0 0
      %2812 = vmatpush2.bf16.msra.mxu0 0
      %2813 = vmatprep.subr.bf16.mxu0 0
      %2814 = vmatpush2.bf16.msra.mxu0 0
      %2815 = vmatprep.subr.bf16.mxu0 0
      %2816 = vmatpush2.bf16.msra.mxu0 0
      %2817 = vmatprep.subr.bf16.mxu0 0
      %2818 = vmatpush2.bf16.msra.mxu0 0
      %2819 = vmatprep.subr.bf16.mxu0 0
      %2820 = vmatpush2.bf16.msra.mxu0 0
      %2821 = vmatprep.subr.bf16.mxu0 0
      %2822 = vmatpush2.bf16.msra.mxu0 0
      %2823 = vmatprep.mubr.bf16.mxu0 0
      %2824 = vmatmul.mubr.bf16.gmra.mxu0 %v1314
      %v2825 = vpop.f32.mrf.mxu0
      %v2826 = vadd.f32 %v2665, %v2825
      %v2827 = vpop.f32.mrf.mxu0
      %v2828 = vpop.f32.mrf.mxu0
      %v2829 = vadd.f32 %v2668, %v2828
      %v2830 = vpop.f32.mrf.mxu0
      %2831 = vmatprep.mubr.bf16.mxu0 0
      %2832 = vmatmul.mubr.bf16.gmra.mxu0 %v1317
      %v2833 = vpop.f32.mrf.mxu0
      %v2834 = vadd.f32 %v2673, %v2833
      %v2835 = vpop.f32.mrf.mxu0
      %v2836 = vpop.f32.mrf.mxu0
      %v2837 = vadd.f32 %v2676, %v2836
      %v2838 = vpop.f32.mrf.mxu0
      %2839 = vmatprep.mubr.bf16.mxu0 0
      %2840 = vmatmul.mubr.bf16.gmra.mxu0 %v1320
      %v2841 = vpop.f32.mrf.mxu0
      %v2842 = vadd.f32 %v2681, %v2841
      %v2843 = vpop.f32.mrf.mxu0
      %v2844 = vpop.f32.mrf.mxu0
      %v2845 = vadd.f32 %v2684, %v2844
      %v2846 = vpop.f32.mrf.mxu0
      %2847 = vmatprep.mubr.bf16.mxu0 0
      %2848 = vmatmul.mubr.bf16.gmra.mxu0 %v1323
      %v2849 = vpop.f32.mrf.mxu0
      %v2850 = vadd.f32 %v2689, %v2849
      %v2851 = vpop.f32.mrf.mxu0
      %v2852 = vpop.f32.mrf.mxu0
      %v2853 = vadd.f32 %v2692, %v2852
      %v2854 = vpop.f32.mrf.mxu0
      %2855 = vmatprep.mubr.bf16.mxu0 0
      %2856 = vmatmul.mubr.bf16.gmra.mxu0 %v1326
      %v2857 = vpop.f32.mrf.mxu0
      %v2858 = vadd.f32 %v2697, %v2857
      %v2859 = vpop.f32.mrf.mxu0
      %v2860 = vpop.f32.mrf.mxu0
      %v2861 = vadd.f32 %v2700, %v2860
      %v2862 = vpop.f32.mrf.mxu0
      %2863 = vmatprep.mubr.bf16.mxu0 0
      %2864 = vmatmul.mubr.bf16.gmra.mxu0 %v1329
      %v2865 = vpop.f32.mrf.mxu0
      %v2866 = vadd.f32 %v2705, %v2865
      %v2867 = vpop.f32.mrf.mxu0
      %v2868 = vpop.f32.mrf.mxu0
      %v2869 = vadd.f32 %v2708, %v2868
      %v2870 = vpop.f32.mrf.mxu0
      %2871 = vmatprep.mubr.bf16.mxu0 0
      %2872 = vmatmul.mubr.bf16.gmra.mxu0 %v1332
      %v2873 = vpop.f32.mrf.mxu0
      %v2874 = vadd.f32 %v2713, %v2873
      %v2875 = vpop.f32.mrf.mxu0
      %v2876 = vpop.f32.mrf.mxu0
      %v2877 = vadd.f32 %v2716, %v2876
      %v2878 = vpop.f32.mrf.mxu0
      %2879 = vmatprep.mubr.bf16.mxu0 0
      %2880 = vmatmul.mubr.bf16.gmra.mxu0 %v1335
      %v2881 = vpop.f32.mrf.mxu0
      %v2882 = vadd.f32 %v2721, %v2881
      %v2883 = vpop.f32.mrf.mxu0
      %v2884 = vpop.f32.mrf.mxu0
      %v2885 = vadd.f32 %v2724, %v2884
      %v2886 = vpop.f32.mrf.mxu0
      %2887 = vmatprep.mubr.bf16.mxu0 0
      %2888 = vmatmul.mubr.bf16.gmra.mxu0 %v1338
      %v2889 = vpop.f32.mrf.mxu0
      %v2890 = vadd.f32 %v2729, %v2889
      %v2891 = vpop.f32.mrf.mxu0
      %v2892 = vpop.f32.mrf.mxu0
      %v2893 = vadd.f32 %v2732, %v2892
      %v2894 = vpop.f32.mrf.mxu0
      %2895 = vmatprep.mubr.bf16.mxu0 0
      %2896 = vmatmul.mubr.bf16.gmra.mxu0 %v1341
      %v2897 = vpop.f32.mrf.mxu0
      %v2898 = vadd.f32 %v2737, %v2897
      %v2899 = vpop.f32.mrf.mxu0
      %v2900 = vpop.f32.mrf.mxu0
      %v2901 = vadd.f32 %v2740, %v2900
      %v2902 = vpop.f32.mrf.mxu0
      %2903 = vmatprep.mubr.bf16.mxu0 0
      %2904 = vmatmul.mubr.bf16.gmra.mxu0 %v1344
      %v2905 = vpop.f32.mrf.mxu0
      %v2906 = vadd.f32 %v2745, %v2905
      %v2907 = vpop.f32.mrf.mxu0
      %v2908 = vpop.f32.mrf.mxu0
      %v2909 = vadd.f32 %v2748, %v2908
      %v2910 = vpop.f32.mrf.mxu0
      %2911 = vmatprep.mubr.bf16.mxu0 0
      %2912 = vmatmul.mubr.bf16.gmra.mxu0 %v1347
      %v2913 = vpop.f32.mrf.mxu0
      %v2914 = vadd.f32 %v2753, %v2913
      %v2915 = vpop.f32.mrf.mxu0
      %v2916 = vpop.f32.mrf.mxu0
      %v2917 = vadd.f32 %v2756, %v2916
      %v2918 = vpop.f32.mrf.mxu0
      %2919 = vmatprep.mubr.bf16.mxu0 0
      %2920 = vmatmul.mubr.bf16.gmra.mxu0 %v1350
      %v2921 = vpop.f32.mrf.mxu0
      %v2922 = vadd.f32 %v2761, %v2921
      %v2923 = vpop.f32.mrf.mxu0
      %v2924 = vpop.f32.mrf.mxu0
      %v2925 = vadd.f32 %v2764, %v2924
      %v2926 = vpop.f32.mrf.mxu0
      %2927 = vmatprep.mubr.bf16.mxu0 0
      %2928 = vmatmul.mubr.bf16.gmra.mxu0 %v1353
      %v2929 = vpop.f32.mrf.mxu0
      %v2930 = vadd.f32 %v2769, %v2929
      %v2931 = vpop.f32.mrf.mxu0
      %v2932 = vpop.f32.mrf.mxu0
      %v2933 = vadd.f32 %v2772, %v2932
      %v2934 = vpop.f32.mrf.mxu0
      %2935 = vmatprep.mubr.bf16.mxu0 0
      %2936 = vmatmul.mubr.bf16.gmra.mxu0 %v1435
      %v2937 = vpop.f32.mrf.mxu0
      %v2938 = vadd.f32 %v2777, %v2937
      %v2939 = vpop.f32.mrf.mxu0
      %v2940 = vpop.f32.mrf.mxu0
      %v2941 = vadd.f32 %v2780, %v2940
      %v2942 = vpop.f32.mrf.mxu0
      %2943 = vmatprep.mubr.bf16.mxu0 0
      %2944 = vmatmul.mubr.bf16.gmra.mxu0 %v2435
      %v2945 = vpop.f32.mrf.mxu0
      %v2946 = vadd.f32 %v2785, %v2945
      %v2947 = vpop.f32.mrf.mxu0
      %v2948 = vpop.f32.mrf.mxu0
      %v2949 = vadd.f32 %v2788, %v2948
      %v2950 = vpop.f32.mrf.mxu0
      %2951 = vdwg.mxu0
      %v2952 = vadd.f32 %v2292, %v2826
      %v2953 = vadd.f32 %v2295, %v2829
      %v2954 = vadd.f32 %v2300, %v2834
      %v2955 = vadd.f32 %v2303, %v2837
      %v2956 = vadd.f32 %v2308, %v2842
      %v2957 = vadd.f32 %v2311, %v2845
      %v2958 = vadd.f32 %v2316, %v2850
      %v2959 = vadd.f32 %v2319, %v2853
      %v2960 = vadd.f32 %v2324, %v2858
      %v2961 = vadd.f32 %v2327, %v2861
      %v2962 = vadd.f32 %v2332, %v2866
      %v2963 = vadd.f32 %v2335, %v2869
      %v2964 = vadd.f32 %v2340, %v2874
      %v2965 = vadd.f32 %v2343, %v2877
      %v2966 = vadd.f32 %v2348, %v2882
      %v2967 = vadd.f32 %v2351, %v2885
      %v2968 = vadd.f32 %v2356, %v2890
      %v2969 = vadd.f32 %v2359, %v2893
      %v2970 = vadd.f32 %v2364, %v2898
      %v2971 = vadd.f32 %v2367, %v2901
      %v2972 = vadd.f32 %v2372, %v2906
      %v2973 = vadd.f32 %v2375, %v2909
      %v2974 = vadd.f32 %v2380, %v2914
      %v2975 = vadd.f32 %v2383, %v2917
      %v2976 = vadd.f32 %v2388, %v2922
      %v2977 = vadd.f32 %v2391, %v2925
      %v2978 = vadd.f32 %v2396, %v2930
      %v2979 = vadd.f32 %v2399, %v2933
      %v2980 = vadd.f32 %v2404, %v2938
      %v2981 = vadd.f32 %v2407, %v2941
      %v2982 = vadd.f32 %v2412, %v2946
      %v2983 = vadd.f32 %v2415, %v2949
      %v2984 = vld [vmem:[%s3] sm:$0x1]
      %v2986 = vlaneseq
      %v2987 = vshrl.u32 %v2986, 7
      %v2988 = vsub.s32 0, %v2987
      %v2989 = vrot.slane %v2984, %v2988
      %v2991 = vadd.f32 %v2952, %v2989
      %v2992 = vadd.f32 %v2953, %v2989
      %v2993 = vadd.f32 %v2954, %v2989
      %v2994 = vadd.f32 %v2955, %v2989
      %v2995 = vadd.f32 %v2956, %v2989
      %v2996 = vadd.f32 %v2957, %v2989
      %v2997 = vadd.f32 %v2958, %v2989
      %v2998 = vadd.f32 %v2959, %v2989
      %v2999 = vadd.f32 %v2960, %v2989
      %v3000 = vadd.f32 %v2961, %v2989
      %v3001 = vadd.f32 %v2962, %v2989
      %v3002 = vadd.f32 %v2963, %v2989
      %v3003 = vadd.f32 %v2964, %v2989
      %v3004 = vadd.f32 %v2965, %v2989
      %v3005 = vadd.f32 %v2966, %v2989
      %v3006 = vadd.f32 %v2967, %v2989
      %v3007 = vadd.f32 %v2968, %v2989
      %v3008 = vadd.f32 %v2969, %v2989
      %v3009 = vadd.f32 %v2970, %v2989
      %v3010 = vadd.f32 %v2971, %v2989
      %v3011 = vadd.f32 %v2972, %v2989
      %v3012 = vadd.f32 %v2973, %v2989
      %v3013 = vadd.f32 %v2974, %v2989
      %v3014 = vadd.f32 %v2975, %v2989
      %v3015 = vadd.f32 %v2976, %v2989
      %v3016 = vadd.f32 %v2977, %v2989
      %v3017 = vadd.f32 %v2978, %v2989
      %v3018 = vadd.f32 %v2979, %v2989
      %v3019 = vadd.f32 %v2980, %v2989
      %v3020 = vadd.f32 %v2981, %v2989
      %v3021 = vadd.f32 %v2982, %v2989
      %v3022 = vadd.f32 %v2983, %v2989
      %v3023 = vadd.f32 %v2991, %v2992
      %v3024 = vadd.f32 %v3023, %v2993
      %v3025 = vadd.f32 %v3024, %v2994
      %v3026 = vadd.f32 %v3025, %v2995
      %v3027 = vadd.f32 %v3026, %v2996
      %v3028 = vadd.f32 %v3027, %v2997
      %v3029 = vadd.f32 %v3028, %v2998
      %v3030 = vadd.f32 %v3029, %v2999
      %v3031 = vadd.f32 %v3030, %v3000
      %v3032 = vadd.f32 %v3031, %v3001
      %v3033 = vadd.f32 %v3032, %v3002
      %v3034 = vadd.f32 %v3033, %v3003
      %v3035 = vadd.f32 %v3034, %v3004
      %v3036 = vadd.f32 %v3035, %v3005
      %v3037 = vadd.f32 %v3036, %v3006
      %v3038 = vadd.f32 %v3037, %v3007
      %v3039 = vadd.f32 %v3038, %v3008
      %v3040 = vadd.f32 %v3039, %v3009
      %v3041 = vadd.f32 %v3040, %v3010
      %v3042 = vadd.f32 %v3041, %v3011
      %v3043 = vadd.f32 %v3042, %v3012
      %v3044 = vadd.f32 %v3043, %v3013
      %v3045 = vadd.f32 %v3044, %v3014
      %v3046 = vadd.f32 %v3045, %v3015
      %v3047 = vadd.f32 %v3046, %v3016
      %v3048 = vadd.f32 %v3047, %v3017
      %v3049 = vadd.f32 %v3048, %v3018
      %v3050 = vadd.f32 %v3049, %v3019
      %v3051 = vadd.f32 %v3050, %v3020
      %v3052 = vadd.f32 %v3051, %v3021
      %v3053 = vadd.f32 %v3052, %v3022
      %v3054 = vrot.slane %v3053, 4
      %v3055 = vadd.f32 %v3053, %v3054
      %v3056 = vrot.slane %v3055, 2
      %v3057 = vadd.f32 %v3055, %v3056
      %v3058 = vrot.slane %v3057, 1
      %v3059 = vadd.f32 %v3057, %v3058
      %v3060 = vmul.f32 %v2991, %v2991
      %v3061 = vmul.f32 %v2992, %v2992
      %v3062 = vmul.f32 %v2993, %v2993
      %v3063 = vmul.f32 %v2994, %v2994
      %v3064 = vmul.f32 %v2995, %v2995
      %v3065 = vmul.f32 %v2996, %v2996
      %v3066 = vmul.f32 %v2997, %v2997
      %v3067 = vmul.f32 %v2998, %v2998
      %v3068 = vmul.f32 %v2999, %v2999
      %v3069 = vmul.f32 %v3000, %v3000
      %v3070 = vmul.f32 %v3001, %v3001
      %v3071 = vmul.f32 %v3002, %v3002
      %v3072 = vmul.f32 %v3003, %v3003
      %v3073 = vmul.f32 %v3004, %v3004
      %v3074 = vmul.f32 %v3005, %v3005
      %v3075 = vmul.f32 %v3006, %v3006
      %v3076 = vmul.f32 %v3007, %v3007
      %v3077 = vmul.f32 %v3008, %v3008
      %v3078 = vmul.f32 %v3009, %v3009
      %v3079 = vmul.f32 %v3010, %v3010
      %v3080 = vmul.f32 %v3011, %v3011
      %v3081 = vmul.f32 %v3012, %v3012
      %v3082 = vmul.f32 %v3013, %v3013
      %v3083 = vmul.f32 %v3014, %v3014
      %v3084 = vmul.f32 %v3015, %v3015
      %v3085 = vmul.f32 %v3016, %v3016
      %v3086 = vmul.f32 %v3017, %v3017
      %v3087 = vmul.f32 %v3018, %v3018
      %v3088 = vmul.f32 %v3019, %v3019
      %v3089 = vmul.f32 %v3020, %v3020
      %v3090 = vmul.f32 %v3021, %v3021
      %v3091 = vmul.f32 %v3022, %v3022
      %v3092 = vadd.f32 %v3060, %v3061
      %v3093 = vadd.f32 %v3092, %v3062
      %v3094 = vadd.f32 %v3093, %v3063
      %v3095 = vadd.f32 %v3094, %v3064
      %v3096 = vadd.f32 %v3095, %v3065
      %v3097 = vadd.f32 %v3096, %v3066
      %v3098 = vadd.f32 %v3097, %v3067
      %v3099 = vadd.f32 %v3098, %v3068
      %v3100 = vadd.f32 %v3099, %v3069
      %v3101 = vadd.f32 %v3100, %v3070
      %v3102 = vadd.f32 %v3101, %v3071
      %v3103 = vadd.f32 %v3102, %v3072
      %v3104 = vadd.f32 %v3103, %v3073
      %v3105 = vadd.f32 %v3104, %v3074
      %v3106 = vadd.f32 %v3105, %v3075
      %v3107 = vadd.f32 %v3106, %v3076
      %v3108 = vadd.f32 %v3107, %v3077
      %v3109 = vadd.f32 %v3108, %v3078
      %v3110 = vadd.f32 %v3109, %v3079
      %v3111 = vadd.f32 %v3110, %v3080
      %v3112 = vadd.f32 %v3111, %v3081
      %v3113 = vadd.f32 %v3112, %v3082
      %v3114 = vadd.f32 %v3113, %v3083
      %v3115 = vadd.f32 %v3114, %v3084
      %v3116 = vadd.f32 %v3115, %v3085
      %v3117 = vadd.f32 %v3116, %v3086
      %v3118 = vadd.f32 %v3117, %v3087
      %v3119 = vadd.f32 %v3118, %v3088
      %v3120 = vadd.f32 %v3119, %v3089
      %v3121 = vadd.f32 %v3120, %v3090
      %v3122 = vadd.f32 %v3121, %v3091
      %v3123 = vrot.slane %v3122, 4
      %v3124 = vadd.f32 %v3122, %v3123
      %v3125 = vrot.slane %v3124, 2
      %v3126 = vadd.f32 %v3124, %v3125
      %v3127 = vrot.slane %v3126, 1
      %v3128 = vadd.f32 %v3126, %v3127
      %vm3129 = vcmask 1040384
      %v3130 = vsel %vm3129, %v3059, %v3128
      %3131 = vst [vmem:[%s265] sm:$0x3] %v3130
      %v3132 = vpack.c.bf16 %v2992, %v2991
      %v3133 = vpack.c.bf16 %v2994, %v2993
      %v3134 = vpack.c.bf16 %v2996, %v2995
      %v3135 = vpack.c.bf16 %v2998, %v2997
      %v3136 = vpack.c.bf16 %v3000, %v2999
      %v3137 = vpack.c.bf16 %v3002, %v3001
      %v3138 = vpack.c.bf16 %v3004, %v3003
      %v3139 = vpack.c.bf16 %v3006, %v3005
      %v3140 = vpack.c.bf16 %v3008, %v3007
      %v3141 = vpack.c.bf16 %v3010, %v3009
      %v3142 = vpack.c.bf16 %v3012, %v3011
      %v3143 = vpack.c.bf16 %v3014, %v3013
      %v3144 = vpack.c.bf16 %v3016, %v3015
      %v3145 = vpack.c.bf16 %v3018, %v3017
      %v3146 = vpack.c.bf16 %v3020, %v3019
      %v3147 = vpack.c.bf16 %v3022, %v3021
      %v3164 = vunpack.c.l.b16 %v3132
      %v3165 = vunpack.c.h.b16 %v3132
      %v3166 = vunpack.c.l.b16 %v3133
      %v3167 = vunpack.c.h.b16 %v3133
      %v3168 = vunpack.c.l.b16 %v3134
      %v3169 = vunpack.c.h.b16 %v3134
      %v3170 = vunpack.c.l.b16 %v3135
      %v3171 = vunpack.c.h.b16 %v3135
      %v3172 = vunpack.c.l.b16 %v3136
      %v3173 = vunpack.c.h.b16 %v3136
      %v3174 = vunpack.c.l.b16 %v3137
      %v3175 = vunpack.c.h.b16 %v3137
      %v3176 = vunpack.c.l.b16 %v3138
      %v3177 = vunpack.c.h.b16 %v3138
      %v3178 = vunpack.c.l.b16 %v3139
      %v3179 = vunpack.c.h.b16 %v3139
      %v3180 = vunpack.c.l.b16 %v3140
      %v3181 = vunpack.c.h.b16 %v3140
      %v3182 = vunpack.c.l.b16 %v3141
      %v3183 = vunpack.c.h.b16 %v3141
      %v3184 = vunpack.c.l.b16 %v3142
      %v3185 = vunpack.c.h.b16 %v3142
      %v3186 = vunpack.c.l.b16 %v3143
      %v3187 = vunpack.c.h.b16 %v3143
      %v3188 = vunpack.c.l.b16 %v3144
      %v3189 = vunpack.c.h.b16 %v3144
      %v3190 = vunpack.c.l.b16 %v3145
      %v3191 = vunpack.c.h.b16 %v3145
      %v3192 = vunpack.c.l.b16 %v3146
      %v3193 = vunpack.c.h.b16 %v3146
      %v3194 = vunpack.c.l.b16 %v3147
      %v3195 = vunpack.c.h.b16 %v3147
      %v3196 = vpack.c.b16 %v3164, %v3164
      %v3197 = vpack.c.b16 %v3165, %v3165
      %v3198 = vpack.c.b16 %v3166, %v3166
      %v3199 = vpack.c.b16 %v3167, %v3167
      %v3200 = vpack.c.b16 %v3168, %v3168
      %v3201 = vpack.c.b16 %v3169, %v3169
      %v3202 = vpack.c.b16 %v3170, %v3170
      %v3203 = vpack.c.b16 %v3171, %v3171
      %v3204 = vpack.c.b16 %v3172, %v3172
      %v3205 = vpack.c.b16 %v3173, %v3173
      %v3206 = vpack.c.b16 %v3174, %v3174
      %v3207 = vpack.c.b16 %v3175, %v3175
      %v3208 = vpack.c.b16 %v3176, %v3176
      %v3209 = vpack.c.b16 %v3177, %v3177
      %v3210 = vpack.c.b16 %v3178, %v3178
      %v3211 = vpack.c.b16 %v3179, %v3179
      %v3212 = vpack.c.b16 %v3180, %v3180
      %v3213 = vpack.c.b16 %v3181, %v3181
      %v3214 = vpack.c.b16 %v3182, %v3182
      %v3215 = vpack.c.b16 %v3183, %v3183
      %v3216 = vpack.c.b16 %v3184, %v3184
      %v3217 = vpack.c.b16 %v3185, %v3185
      %v3218 = vpack.c.b16 %v3186, %v3186
      %v3219 = vpack.c.b16 %v3187, %v3187
      %v3220 = vpack.c.b16 %v3188, %v3188
      %v3221 = vpack.c.b16 %v3189, %v3189
      %v3222 = vpack.c.b16 %v3190, %v3190
      %v3223 = vpack.c.b16 %v3191, %v3191
      %v3224 = vpack.c.b16 %v3192, %v3192
      %v3225 = vpack.c.b16 %v3193, %v3193
      %v3226 = vpack.c.b16 %v3194, %v3194
      %v3227 = vpack.c.b16 %v3195, %v3195
      %3260 = vst [vmem:[%s258] sm:$0xf] %v3196
      %3261 = vst [vmem:[%s258 + $0x4] sm:$0xf] %v3197
      %3262 = vst [vmem:[%s258 + $0x8] sm:$0xf] %v3198
      %3263 = vst [vmem:[%s258 + $0xc] sm:$0xf] %v3199
      %3264 = vst [vmem:[%s258 + $0x10] sm:$0xf] %v3200
      %3265 = vst [vmem:[%s258 + $0x14] sm:$0xf] %v3201
      %3266 = vst [vmem:[%s258 + $0x18] sm:$0xf] %v3202
      %3267 = vst [vmem:[%s258 + $0x1c] sm:$0xf] %v3203
      %3268 = vst [vmem:[%s258 + $0x20] sm:$0xf] %v3204
      %3269 = vst [vmem:[%s258 + $0x24] sm:$0xf] %v3205
      %3270 = vst [vmem:[%s258 + $0x28] sm:$0xf] %v3206
      %3271 = vst [vmem:[%s258 + $0x2c] sm:$0xf] %v3207
      %3272 = vst [vmem:[%s258 + $0x30] sm:$0xf] %v3208
      %3273 = vst [vmem:[%s258 + $0x34] sm:$0xf] %v3209
      %3274 = vst [vmem:[%s258 + $0x38] sm:$0xf] %v3210
      %3275 = vst [vmem:[%s258 + $0x3c] sm:$0xf] %v3211
      %3276 = vst [vmem:[%s258 + $0x40] sm:$0xf] %v3212
      %3277 = vst [vmem:[%s258 + $0x44] sm:$0xf] %v3213
      %3278 = vst [vmem:[%s258 + $0x48] sm:$0xf] %v3214
      %3279 = vst [vmem:[%s258 + $0x4c] sm:$0xf] %v3215
      %3280 = vst [vmem:[%s258 + $0x50] sm:$0xf] %v3216
      %3281 = vst [vmem:[%s258 + $0x54] sm:$0xf] %v3217
      %3282 = vst [vmem:[%s258 + $0x58] sm:$0xf] %v3218
      %3283 = vst [vmem:[%s258 + $0x5c] sm:$0xf] %v3219
      %3284 = vst [vmem:[%s258 + $0x60] sm:$0xf] %v3220
      %3285 = vst [vmem:[%s258 + $0x64] sm:$0xf] %v3221
      %3286 = vst [vmem:[%s258 + $0x68] sm:$0xf] %v3222
      %3287 = vst [vmem:[%s258 + $0x6c] sm:$0xf] %v3223
      %3288 = vst [vmem:[%s258 + $0x70] sm:$0xf] %v3224
      %3289 = vst [vmem:[%s258 + $0x74] sm:$0xf] %v3225
      %3290 = vst [vmem:[%s258 + $0x78] sm:$0xf] %v3226
      %3291 = vst [vmem:[%s258 + $0x7c] sm:$0xf] %v3227
      %p3292 = scmp.lt.s32.totalorder %s21, 1
      %s3293 = scalar_select %p3292, %s21, 1
      %p3294 = scmp.lt.s32.totalorder %s22, 0
      %s3295 = scalar_select %p3294, %s22, 0
      %s3296 = smul.addr %s3295, 32
      %s3297 = smul.addr %s3293, 32
      %s3298 = sadd.s32 %s3296, %s3297
      %s3299 = smul.addr %s3298, 4
      %s3300 = scalar_lea.vmem %s4, %s3299
      %p3301 = scmp.lt.s32.totalorder %s21, 1
      %s3302 = scalar_select %p3301, %s21, 1
      %p3303 = scmp.lt.s32.totalorder %s22, 0
      %s3304 = scalar_select %p3303, %s22, 0
      %s3305 = sadd.s32 %s3304, %s3302
      %s3306 = smul.addr %s3305, 2
      %s3307 = scalar_lea.vmem %s5, %s3306
      // Predicated region
      $region37: #{se_block_forward.5} parent=35 // pred_check
        %p3308 = pneg %p138
      $region38: #{se_block_forward.5} parent=35 // pred_check_branch
        %3310 = sbr.rel (%p3308) target = $region40
      $region39: #{se_block_forward.5} parent=35 // pred_region
        _
      $region40: #{se_block_forward.5} parent=35 // pred_fallthru
        _
      // Predicated region
      $region41: #{se_block_forward.5} parent=35 // pred_check
        %p3311 = pneg %p166
      $region42: #{se_block_forward.5} parent=35 // pred_check_branch
        %3313 = sbr.rel (%p3311) target = $region44
      $region43: #{se_block_forward.5} parent=35 // pred_region
        _
      $region44: #{se_block_forward.5} parent=35 // pred_fallthru
        _
    $region36: #{se_block_forward.5} parent=5 // pred_fallthru
      _
    %p3314 = scmp.le.s32.totalorder 2, %s12
    // Predicated region
    $region45: #{se_block_forward.5} parent=5 // pred_check
      %p3315 = pneg %p3314
    $region46: #{se_block_forward.5} parent=5 // pred_check_branch
      %3317 = sbr.rel (%p3315) target = $region48
    $region47: #{se_block_forward.5} parent=5 // pred_region
      %s3318 = ssub.s32 %s12, 2
      // Predicated region
      $region49: #{se_block_forward.5} parent=47 // pred_check
        %p3319 = pneg %p144
      $region50: #{se_block_forward.5} parent=47 // pred_check_branch
        %3321 = sbr.rel (%p3319) target = $region52
      $region51: #{se_block_forward.5} parent=47 // pred_region
        %p3322 = scmp.lt.s32.totalorder %s23, 1
        %s3323 = scalar_select %p3322, %s23, 1
        %p3324 = scmp.lt.s32.totalorder %s24, 0
        %s3325 = scalar_select %p3324, %s24, 0
        %s3326 = smul.addr %s3325, 32
        %s3327 = smul.addr %s3323, 32
        %s3328 = sadd.s32 %s3326, %s3327
        %s3329 = smul.addr %s3328, 4
        %s3330 = scalar_lea.vmem %s4, %s3329
      $region52: #{se_block_forward.5} parent=47 // pred_fallthru
        _
      // Predicated region
      $region53: #{se_block_forward.5} parent=47 // pred_check
        %p3331 = pneg %p172
      $region54: #{se_block_forward.5} parent=47 // pred_check_branch
        %3333 = sbr.rel (%p3331) target = $region56
      $region55: #{se_block_forward.5} parent=47 // pred_region
        %p3334 = scmp.lt.s32.totalorder %s23, 1
        %s3335 = scalar_select %p3334, %s23, 1
        %p3336 = scmp.lt.s32.totalorder %s24, 0
        %s3337 = scalar_select %p3336, %s24, 0
        %s3338 = sadd.s32 %s3337, %s3335
        %s3339 = smul.addr %s3338, 2
        %s3340 = scalar_lea.vmem %s5, %s3339
      $region56: #{se_block_forward.5} parent=47 // pred_fallthru
        _
    $region48: #{se_block_forward.5} parent=5 // pred_fallthru
      _
  $region6: #{se_block_forward.5} parent=0 // loop_footer
    %s16 = sadd.s32 1, %s12
  $region7: #{se_block_forward.5} parent=0 // loop_footer_branch
    %11 = sbr.rel target = $region3
  $region8: #{se_block_forward.5} parent=0 // loop_exit
    _

// kernel: se_block_forward.7
$region0: #{se_block_forward.7}
  #allocation0 [shape = 'u32[]', space=smem, size = 0x4, offset = 0x4, fixed_abs, tag = 'smem constant byte address 0x4 - core index']
  #allocation1 [shape = 'u32[144,128]{1,0:T(1,128)}', space=vmem, size = 0x12000, scoped, tag = 'internal scratch']
  %s0 = inlined_call_operand.vmem [shape: bf16[512,128], index: 0, kind: input, shape index: {}]
  %s1 = inlined_call_operand.vmem [shape: bf16[512,128], index: 1, kind: input, shape index: {}]
  %s2 = inlined_call_operand.vmem [shape: f32[4,128], index: 2, kind: input, shape index: {}]
  %s3 = inlined_call_operand.vmem [shape: bf16[128,128], index: 3, kind: input, shape index: {}]
  %s4 = inlined_call_operand.vmem [shape: f32[1,128], index: 4, kind: input, shape index: {}]
  %s5 = inlined_call_operand.vmem [shape: bf16[128,128], index: 5, kind: input, shape index: {}]
  %s6 = inlined_call_operand.vmem [shape: f32[1,128], index: 6, kind: input, shape index: {}]
  %s7 = inlined_call_operand.hbm [shape: f32[512,128], index: 7, kind: output, shape index: {}]
  %s8 = sld [smem:[#allocation0]]
  $region61: #{se_block_forward.7} parent=0
    _
  %s10 = ssub.s32 1, %s8
  %s11 = scalar_select 0, %s10, %s8
  $region1: #{se_block_forward.7} parent=0
    #allocation2 [shape = 'u8[262144]{0}', space=vmem, size = 0x40000, scoped, tag = 'output window, operand 0']
    #allocation3 [shape = 's32[2]{0}', space=sflag, size = 0x8, scoped, tag = 'scoped memory for se_block_forward.7']
    %12 = vsyncpa [#allocation3], 0
    %s13 = scalar_lea.sflag [#allocation3], 1
    %14 = vsyncpa %s13, 0
    loop: start=0, step=1, limit=4
    $region2: #{se_block_forward.7} parent=1 // loop_pre_header
      _
    $region3: #{se_block_forward.7} parent=1 // loop_header
      %s16 = sphi 0, %s20
      %p17 = scmp.ge.s32.totalorder %s16, 4
      %s26 = sphi 0, %s28
      %s29 = sphi 0, %s26
      %s30 = sphi 0, %s29
      %s46 = sphi 0, %s30
      %s52 = sphi 0, %s54
      %s55 = sphi 0, %s52
      %s56 = sphi 0, %s55
      %s72 = sphi 0, %s56
      %s76 = sphi 0, %s76
      %s78 = sphi 0, %s76
      %s79 = sphi 0, %s78
      %s93 = sphi 0, %s79
      %s97 = sphi 0, %s97
      %s99 = sphi 0, %s97
      %s100 = sphi 0, %s99
      %s114 = sphi 0, %s100
      %s118 = sphi 0, %s118
      %s120 = sphi 0, %s118
      %s121 = sphi 0, %s120
      %s135 = sphi 0, %s121
      %s139 = sphi 0, %s139
      %s141 = sphi 0, %s139
      %s142 = sphi 0, %s141
      %s156 = sphi 0, %s142
      %s160 = sphi 0, %s160
      %s162 = sphi 0, %s160
      %s163 = sphi 0, %s162
      %s177 = sphi 0, %s163
      %s183 = sphi 0, %s185
      %s186 = sphi 0, %s183
      %s187 = sphi 0, %s186
      %s203 = sphi 0, %s187
    $region4: #{se_block_forward.7} parent=1 // loop_header_branch
      %19 = sbr.rel (%p17) target = $region8
    $region5: #{se_block_forward.7} parent=1 // loop_body
      %s21 = ssub.s32 %s16, 1
      %s22 = ssub.s32 %s16, 2
      %s23 = sadd.s32 %s16, 1
      %s24 = ssub.s32 %s16, %s23
      %p25 = scmp.eq.s32.totalorder %s24, 0
      %s27 = sadd.s32 %s26, 1
      %s28 = scalar_select %p25, %s26, %s27
      %p31 = pneg %p25
      %p32 = scmp.eq.s32.totalorder %s16, 1
      %p33 = por %p31, %p32
      %p34 = scmp.ne.s32.totalorder %s26, %s29
      %p35 = scmp.eq.s32.totalorder %s16, 0
      %p36 = por %p34, %p35
      %p37 = scmp.ne.s32.totalorder %s26, %s29
      %p38 = scmp.eq.s32.totalorder %s21, 1
      %p39 = por %p37, %p38
      %p40 = scmp.ne.s32.totalorder %s29, %s30
      %p41 = scmp.eq.s32.totalorder %s21, 0
      %p42 = por %p40, %p41
      %p43 = scmp.ne.s32.totalorder %s29, %s30
      %p44 = scmp.eq.s32.totalorder %s22, 1
      %p45 = por %p43, %p44
      %p47 = scmp.ne.s32.totalorder %s30, %s46
      %p48 = scmp.eq.s32.totalorder %s22, 0
      %p49 = por %p47, %p48
      %s50 = ssub.s32 %s16, %s23
      %p51 = scmp.eq.s32.totalorder %s50, 0
      %s53 = sadd.s32 %s52, 1
      %s54 = scalar_select %p51, %s52, %s53
      %p57 = pneg %p51
      %p58 = scmp.eq.s32.totalorder %s16, 1
      %p59 = por %p57, %p58
      %p60 = scmp.ne.s32.totalorder %s52, %s55
      %p61 = scmp.eq.s32.totalorder %s16, 0
      %p62 = por %p60, %p61
      %p63 = scmp.ne.s32.totalorder %s52, %s55
      %p64 = scmp.eq.s32.totalorder %s21, 1
      %p65 = por %p63, %p64
      %p66 = scmp.ne.s32.totalorder %s55, %s56
      %p67 = scmp.eq.s32.totalorder %s21, 0
      %p68 = por %p66, %p67
      %p69 = scmp.ne.s32.totalorder %s55, %s56
      %p70 = scmp.eq.s32.totalorder %s22, 1
      %p71 = por %p69, %p70
      %p73 = scmp.ne.s32.totalorder %s56, %s72
      %p74 = scmp.eq.s32.totalorder %s22, 0
      %p75 = por %p73, %p74
      %s77 = sadd.s32 %s76, 1
      %p80 = scmp.eq.s32.totalorder %s16, 1
      %p81 = scmp.ne.s32.totalorder %s76, %s78
      %p82 = scmp.eq.s32.totalorder %s16, 0
      %p83 = por %p81, %p82
      %p84 = scmp.ne.s32.totalorder %s76, %s78
      %p85 = scmp.eq.s32.totalorder %s21, 1
      %p86 = por %p84, %p85
      %p87 = scmp.ne.s32.totalorder %s78, %s79
      %p88 = scmp.eq.s32.totalorder %s21, 0
      %p89 = por %p87, %p88
      %p90 = scmp.ne.s32.totalorder %s78, %s79
      %p91 = scmp.eq.s32.totalorder %s22, 1
      %p92 = por %p90, %p91
      %p94 = scmp.ne.s32.totalorder %s79, %s93
      %p95 = scmp.eq.s32.totalorder %s22, 0
      %p96 = por %p94, %p95
      %s98 = sadd.s32 %s97, 1
      %p101 = scmp.eq.s32.totalorder %s16, 1
      %p102 = scmp.ne.s32.totalorder %s97, %s99
      %p103 = scmp.eq.s32.totalorder %s16, 0
      %p104 = por %p102, %p103
      %p105 = scmp.ne.s32.totalorder %s97, %s99
      %p106 = scmp.eq.s32.totalorder %s21, 1
      %p107 = por %p105, %p106
      %p108 = scmp.ne.s32.totalorder %s99, %s100
      %p109 = scmp.eq.s32.totalorder %s21, 0
      %p110 = por %p108, %p109
      %p111 = scmp.ne.s32.totalorder %s99, %s100
      %p112 = scmp.eq.s32.totalorder %s22, 1
      %p113 = por %p111, %p112
      %p115 = scmp.ne.s32.totalorder %s100, %s114
      %p116 = scmp.eq.s32.totalorder %s22, 0
      %p117 = por %p115, %p116
      %s119 = sadd.s32 %s118, 1
      %p122 = scmp.eq.s32.totalorder %s16, 1
      %p123 = scmp.ne.s32.totalorder %s118, %s120
      %p124 = scmp.eq.s32.totalorder %s16, 0
      %p125 = por %p123, %p124
      %p126 = scmp.ne.s32.totalorder %s118, %s120
      %p127 = scmp.eq.s32.totalorder %s21, 1
      %p128 = por %p126, %p127
      %p129 = scmp.ne.s32.totalorder %s120, %s121
      %p130 = scmp.eq.s32.totalorder %s21, 0
      %p131 = por %p129, %p130
      %p132 = scmp.ne.s32.totalorder %s120, %s121
      %p133 = scmp.eq.s32.totalorder %s22, 1
      %p134 = por %p132, %p133
      %p136 = scmp.ne.s32.totalorder %s121, %s135
      %p137 = scmp.eq.s32.totalorder %s22, 0
      %p138 = por %p136, %p137
      %s140 = sadd.s32 %s139, 1
      %p143 = scmp.eq.s32.totalorder %s16, 1
      %p144 = scmp.ne.s32.totalorder %s139, %s141
      %p145 = scmp.eq.s32.totalorder %s16, 0
      %p146 = por %p144, %p145
      %p147 = scmp.ne.s32.totalorder %s139, %s141
      %p148 = scmp.eq.s32.totalorder %s21, 1
      %p149 = por %p147, %p148
      %p150 = scmp.ne.s32.totalorder %s141, %s142
      %p151 = scmp.eq.s32.totalorder %s21, 0
      %p152 = por %p150, %p151
      %p153 = scmp.ne.s32.totalorder %s141, %s142
      %p154 = scmp.eq.s32.totalorder %s22, 1
      %p155 = por %p153, %p154
      %p157 = scmp.ne.s32.totalorder %s142, %s156
      %p158 = scmp.eq.s32.totalorder %s22, 0
      %p159 = por %p157, %p158
      %s161 = sadd.s32 %s160, 1
      %p164 = scmp.eq.s32.totalorder %s16, 1
      %p165 = scmp.ne.s32.totalorder %s160, %s162
      %p166 = scmp.eq.s32.totalorder %s16, 0
      %p167 = por %p165, %p166
      %p168 = scmp.ne.s32.totalorder %s160, %s162
      %p169 = scmp.eq.s32.totalorder %s21, 1
      %p170 = por %p168, %p169
      %p171 = scmp.ne.s32.totalorder %s162, %s163
      %p172 = scmp.eq.s32.totalorder %s21, 0
      %p173 = por %p171, %p172
      %p174 = scmp.ne.s32.totalorder %s162, %s163
      %p175 = scmp.eq.s32.totalorder %s22, 1
      %p176 = por %p174, %p175
      %p178 = scmp.ne.s32.totalorder %s163, %s177
      %p179 = scmp.eq.s32.totalorder %s22, 0
      %p180 = por %p178, %p179
      %s181 = ssub.s32 %s16, %s23
      %p182 = scmp.eq.s32.totalorder %s181, 0
      %s184 = sadd.s32 %s183, 1
      %s185 = scalar_select %p182, %s183, %s184
      %p188 = pneg %p182
      %p189 = scmp.eq.s32.totalorder %s16, 1
      %p190 = por %p188, %p189
      %p191 = scmp.ne.s32.totalorder %s183, %s186
      %p192 = scmp.eq.s32.totalorder %s16, 0
      %p193 = por %p191, %p192
      %p194 = scmp.ne.s32.totalorder %s183, %s186
      %p195 = scmp.eq.s32.totalorder %s21, 1
      %p196 = por %p194, %p195
      %p197 = scmp.ne.s32.totalorder %s186, %s187
      %p198 = scmp.eq.s32.totalorder %s21, 0
      %p199 = por %p197, %p198
      %p200 = scmp.ne.s32.totalorder %s186, %s187
      %p201 = scmp.eq.s32.totalorder %s22, 1
      %p202 = por %p200, %p201
      %p204 = scmp.ne.s32.totalorder %s187, %s203
      %p205 = scmp.eq.s32.totalorder %s22, 0
      %p206 = por %p204, %p205
      %p207 = scmp.le.s32.totalorder 1, %s16
      %p208 = scmp.lt.s32.totalorder %s16, 3
      %p209 = pnand %p207, %p208
      %p210 = pneg %p209
      // Predicated region
      $region9: #{se_block_forward.7} parent=5 // pred_check
        _
      $region10: #{se_block_forward.7} parent=5 // pred_check_branch
        %212 = sbr.rel (%p209) target = $region12
      $region11: #{se_block_forward.7} parent=5 // pred_region
        %s213 = ssub.s32 %s16, 1
        // Predicated region
        $region13: #{se_block_forward.7} parent=11 // pred_check
          %p214 = pneg %p89
        $region14: #{se_block_forward.7} parent=11 // pred_check_branch
          %216 = sbr.rel (%p214) target = $region16
        $region15: #{se_block_forward.7} parent=11 // pred_region
          _
        $region16: #{se_block_forward.7} parent=11 // pred_fallthru
          _
        // Predicated region
        $region17: #{se_block_forward.7} parent=11 // pred_check
          %p217 = pneg %p110
        $region18: #{se_block_forward.7} parent=11 // pred_check_branch
          %219 = sbr.rel (%p217) target = $region20
        $region19: #{se_block_forward.7} parent=11 // pred_region
          _
        $region20: #{se_block_forward.7} parent=11 // pred_fallthru
          _
        // Predicated region
        $region21: #{se_block_forward.7} parent=11 // pred_check
          %p220 = pneg %p131
        $region22: #{se_block_forward.7} parent=11 // pred_check_branch
          %222 = sbr.rel (%p220) target = $region24
        $region23: #{se_block_forward.7} parent=11 // pred_region
          _
        $region24: #{se_block_forward.7} parent=11 // pred_fallthru
          _
        // Predicated region
        $region25: #{se_block_forward.7} parent=11 // pred_check
          %p223 = pneg %p152
        $region26: #{se_block_forward.7} parent=11 // pred_check_branch
          %225 = sbr.rel (%p223) target = $region28
        $region27: #{se_block_forward.7} parent=11 // pred_region
          _
        $region28: #{se_block_forward.7} parent=11 // pred_fallthru
          _
        // Predicated region
        $region29: #{se_block_forward.7} parent=11 // pred_check
          %p226 = pneg %p173
        $region30: #{se_block_forward.7} parent=11 // pred_check_branch
          %228 = sbr.rel (%p226) target = $region32
        $region31: #{se_block_forward.7} parent=11 // pred_region
          _
        $region32: #{se_block_forward.7} parent=11 // pred_fallthru
          _
      $region12: #{se_block_forward.7} parent=5 // pred_fallthru
        _
      %p229 = scmp.lt.s32.totalorder %s16, 2
      // Predicated region
      $region33: #{se_block_forward.7} parent=5 // pred_check
        %p230 = pneg %p229
      $region34: #{se_block_forward.7} parent=5 // pred_check_branch
        %232 = sbr.rel (%p230) target = $region36
      $region35: #{se_block_forward.7} parent=5 // pred_region
        // Predicated region
        $region37: #{se_block_forward.7} parent=35 // pred_check
          %p233 = pneg %p36
        $region38: #{se_block_forward.7} parent=35 // pred_check_branch
          %235 = sbr.rel (%p233) target = $region40
        $region39: #{se_block_forward.7} parent=35 // pred_region
          %s236 = smul.u32 32, %s16
          %p237 = scmp.lt.s32.totalorder %s236, 63
          %s238 = scalar_select %p237, %s236, 63
          %s239 = smul.addr %s238, 4
          %s240 = scalar_lea.vmem %s0, %s239
          %s241 = smul.u32 32, %s16
        $region40: #{se_block_forward.7} parent=35 // pred_fallthru
          _
        // Predicated region
        $region41: #{se_block_forward.7} parent=35 // pred_check
          %p242 = pneg %p62
        $region42: #{se_block_forward.7} parent=35 // pred_check_branch
          %244 = sbr.rel (%p242) target = $region44
        $region43: #{se_block_forward.7} parent=35 // pred_region
          %s245 = smul.u32 32, %s16
          %p246 = scmp.lt.s32.totalorder %s245, 63
          %s247 = scalar_select %p246, %s245, 63
          %s248 = smul.addr %s247, 4
          %s249 = scalar_lea.vmem %s1, %s248
          %s250 = smul.u32 32, %s16
        $region44: #{se_block_forward.7} parent=35 // pred_fallthru
          _
      $region36: #{se_block_forward.7} parent=5 // pred_fallthru
        _
      %p251 = scmp.le.s32.totalorder 1, %s16
      %p252 = scmp.lt.s32.totalorder %s16, 3
      %p253 = pnand %p251, %p252
      %p254 = pneg %p253
      // Predicated region
      $region45: #{se_block_forward.7} parent=5 // pred_check
        _
      $region46: #{se_block_forward.7} parent=5 // pred_check_branch
        %256 = sbr.rel (%p253) target = $region48
      $region47: #{se_block_forward.7} parent=5 // pred_region
        %s257 = ssub.s32 %s16, 1
        %s258 = smul.u32 32, %s21
        %p259 = scmp.lt.s32.totalorder %s258, 63
        %s260 = scalar_select %p259, %s258, 63
        %s261 = smul.addr %s260, 4
        %s262 = scalar_lea.vmem %s0, %s261
        %p263 = pneg %p42
        %p264 = pneg %p39
        %s265 = smul.u32 32, %s21
        %p266 = scmp.lt.s32.totalorder %s265, 63
        %s267 = scalar_select %p266, %s265, 63
        %s268 = smul.addr %s267, 4
        %s269 = scalar_lea.vmem %s1, %s268
        %p270 = pneg %p68
        %p271 = pneg %p65
        %p272 = pneg %p89
        %p273 = pneg %p86
        %p274 = pneg %p110
        %p275 = pneg %p107
        %p276 = pneg %p131
        %p277 = pneg %p128
        %p278 = pneg %p152
        %p279 = pneg %p149
        %p280 = pneg %p173
        %p281 = pneg %p170
        %p282 = pneg %p199
        %p283 = pneg %p196
        %s284 = sand.u32 %s186, 1
        %s285 = scalar_lea.sflag [#allocation3], %s284
        %s286 = sand.u32 %s186, 1
        %s287 = smul.addr %s286, 256
        %s288 = scalar_lea.vmem [#allocation2], %s287
        %s289 = smul.u32 32, %s21
        %p290 = scmp.lt.s32.totalorder %s289, 63
        %s291 = scalar_select %p290, %s289, 63
        %s292 = smul.addr %s291, 4
        %s293 = scalar_lea.vmem %s0, %s292
        %s294 = smul.u32 32, %s21
        %s295 = smul.u32 32, %s21
        %p296 = scmp.lt.s32.totalorder %s295, 63
        %s297 = scalar_select %p296, %s295, 63
        %s298 = smul.addr %s297, 4
        %s299 = scalar_lea.vmem %s1, %s298
        %s300 = smul.u32 32, %s21
        %s301 = smul.u32 32, %s21
        %v303 = vld [vmem:[%s2] sm:$0x1]
        %v304 = vld [vmem:[%s2 + $0x1] sm:$0x1]
        %v305 = vld [vmem:[%s2 + $0x2] sm:$0x1]
        %v306 = vld [vmem:[%s2 + $0x3] sm:$0x1]
        %v307 = vld [vmem:[%s293] sm:$0xf]
        %v308 = vld [vmem:[%s293 + $0x4] sm:$0xf]
        %v309 = vld [vmem:[%s293 + $0x8] sm:$0xf]
        %v310 = vld [vmem:[%s293 + $0xc] sm:$0xf]
        %v311 = vld [vmem:[%s293 + $0x10] sm:$0xf]
        %v312 = vld [vmem:[%s293 + $0x14] sm:$0xf]
        %v313 = vld [vmem:[%s293 + $0x18] sm:$0xf]
        %v314 = vld [vmem:[%s293 + $0x1c] sm:$0xf]
        %v315 = vld [vmem:[%s293 + $0x20] sm:$0xf]
        %v316 = vld [vmem:[%s293 + $0x24] sm:$0xf]
        %v317 = vld [vmem:[%s293 + $0x28] sm:$0xf]
        %v318 = vld [vmem:[%s293 + $0x2c] sm:$0xf]
        %v319 = vld [vmem:[%s293 + $0x30] sm:$0xf]
        %v320 = vld [vmem:[%s293 + $0x34] sm:$0xf]
        %v321 = vld [vmem:[%s293 + $0x38] sm:$0xf]
        %v322 = vld [vmem:[%s293 + $0x3c] sm:$0xf]
        %v323 = vld [vmem:[%s293 + $0x40] sm:$0xf]
        %v324 = vld [vmem:[%s293 + $0x44] sm:$0xf]
        %v325 = vld [vmem:[%s293 + $0x48] sm:$0xf]
        %v326 = vld [vmem:[%s293 + $0x4c] sm:$0xf]
        %v327 = vld [vmem:[%s293 + $0x50] sm:$0xf]
        %v328 = vld [vmem:[%s293 + $0x54] sm:$0xf]
        %v329 = vld [vmem:[%s293 + $0x58] sm:$0xf]
        %v330 = vld [vmem:[%s293 + $0x5c] sm:$0xf]
        %v331 = vld [vmem:[%s293 + $0x60] sm:$0xf]
        %v332 = vld [vmem:[%s293 + $0x64] sm:$0xf]
        %v333 = vld [vmem:[%s293 + $0x68] sm:$0xf]
        %v334 = vld [vmem:[%s293 + $0x6c] sm:$0xf]
        %v335 = vld [vmem:[%s293 + $0x70] sm:$0xf]
        %v336 = vld [vmem:[%s293 + $0x74] sm:$0xf]
        %v337 = vld [vmem:[%s293 + $0x78] sm:$0xf]
        %v338 = vld [vmem:[%s293 + $0x7c] sm:$0xf]
        %v339 = vunpack.c.l.bf16 %v307
        %v340 = vunpack.c.l.bf16 %v308
        %v341 = vunpack.c.l.bf16 %v309
        %v342 = vunpack.c.l.bf16 %v310
        %v343 = vunpack.c.l.bf16 %v311
        %v344 = vunpack.c.l.bf16 %v312
        %v345 = vunpack.c.l.bf16 %v313
        %v346 = vunpack.c.l.bf16 %v314
        %v347 = vunpack.c.l.bf16 %v315
        %v348 = vunpack.c.l.bf16 %v316
        %v349 = vunpack.c.l.bf16 %v317
        %v350 = vunpack.c.l.bf16 %v318
        %v351 = vunpack.c.l.bf16 %v319
        %v352 = vunpack.c.l.bf16 %v320
        %v353 = vunpack.c.l.bf16 %v321
        %v354 = vunpack.c.l.bf16 %v322
        %v355 = vunpack.c.l.bf16 %v323
        %v356 = vunpack.c.l.bf16 %v324
        %v357 = vunpack.c.l.bf16 %v325
        %v358 = vunpack.c.l.bf16 %v326
        %v359 = vunpack.c.l.bf16 %v327
        %v360 = vunpack.c.l.bf16 %v328
        %v361 = vunpack.c.l.bf16 %v329
        %v362 = vunpack.c.l.bf16 %v330
        %v363 = vunpack.c.l.bf16 %v331
        %v364 = vunpack.c.l.bf16 %v332
        %v365 = vunpack.c.l.bf16 %v333
        %v366 = vunpack.c.l.bf16 %v334
        %v367 = vunpack.c.l.bf16 %v335
        %v368 = vunpack.c.l.bf16 %v336
        %v369 = vunpack.c.l.bf16 %v337
        %v370 = vunpack.c.l.bf16 %v338
        %v371 = vlaneseq
        %v372 = vshrl.u32 %v371, 7
        %v373 = vsub.s32 0, %v372
        %v374 = vrot.slane %v303, %v373
        %v375 = vsub.f32 %v339, %v374
        %v376 = vsub.f32 %v340, %v374
        %v377 = vsub.f32 %v341, %v374
        %v378 = vsub.f32 %v342, %v374
        %v379 = vsub.f32 %v343, %v374
        %v380 = vsub.f32 %v344, %v374
        %v381 = vsub.f32 %v345, %v374
        %v382 = vsub.f32 %v346, %v374
        %v383 = vsub.f32 %v347, %v374
        %v384 = vsub.f32 %v348, %v374
        %v385 = vsub.f32 %v349, %v374
        %v386 = vsub.f32 %v350, %v374
        %v387 = vsub.f32 %v351, %v374
        %v388 = vsub.f32 %v352, %v374
        %v389 = vsub.f32 %v353, %v374
        %v390 = vsub.f32 %v354, %v374
        %v391 = vsub.f32 %v355, %v374
        %v392 = vsub.f32 %v356, %v374
        %v393 = vsub.f32 %v357, %v374
        %v394 = vsub.f32 %v358, %v374
        %v395 = vsub.f32 %v359, %v374
        %v396 = vsub.f32 %v360, %v374
        %v397 = vsub.f32 %v361, %v374
        %v398 = vsub.f32 %v362, %v374
        %v399 = vsub.f32 %v363, %v374
        %v400 = vsub.f32 %v364, %v374
        %v401 = vsub.f32 %v365, %v374
        %v402 = vsub.f32 %v366, %v374
        %v403 = vsub.f32 %v367, %v374
        %v404 = vsub.f32 %v368, %v374
        %v405 = vsub.f32 %v369, %v374
        %v406 = vsub.f32 %v370, %v374
        %v407 = vadd.f32 %v304, 1e-05
        %v408 = vrsqrt.pop %v407
        %v409 = vlaneseq
        %v410 = vshrl.u32 %v409, 7
        %v411 = vsub.s32 0, %v410
        %v412 = vrot.slane %v408, %v411
        %v413 = vmul.f32 %v375, %v412
        %v414 = vmul.f32 %v376, %v412
        %v415 = vmul.f32 %v377, %v412
        %v416 = vmul.f32 %v378, %v412
        %v417 = vmul.f32 %v379, %v412
        %v418 = vmul.f32 %v380, %v412
        %v419 = vmul.f32 %v381, %v412
        %v420 = vmul.f32 %v382, %v412
        %v421 = vmul.f32 %v383, %v412
        %v422 = vmul.f32 %v384, %v412
        %v423 = vmul.f32 %v385, %v412
        %v424 = vmul.f32 %v386, %v412
        %v425 = vmul.f32 %v387, %v412
        %v426 = vmul.f32 %v388, %v412
        %v427 = vmul.f32 %v389, %v412
        %v428 = vmul.f32 %v390, %v412
        %v429 = vmul.f32 %v391, %v412
        %v430 = vmul.f32 %v392, %v412
        %v431 = vmul.f32 %v393, %v412
        %v432 = vmul.f32 %v394, %v412
        %v433 = vmul.f32 %v395, %v412
        %v434 = vmul.f32 %v396, %v412
        %v435 = vmul.f32 %v397, %v412
        %v436 = vmul.f32 %v398, %v412
        %v437 = vmul.f32 %v399, %v412
        %v438 = vmul.f32 %v400, %v412
        %v439 = vmul.f32 %v401, %v412
        %v440 = vmul.f32 %v402, %v412
        %v441 = vmul.f32 %v403, %v412
        %v442 = vmul.f32 %v404, %v412
        %v443 = vmul.f32 %v405, %v412
        %v444 = vmul.f32 %v406, %v412
        %v445 = vlaneseq
        %v446 = vshrl.u32 %v445, 7
        %v447 = vsub.s32 0, %v446
        %v448 = vrot.slane %v305, %v447
        %v449 = vmul.f32 %v413, %v448
        %v450 = vmul.f32 %v414, %v448
        %v451 = vmul.f32 %v415, %v448
        %v452 = vmul.f32 %v416, %v448
        %v453 = vmul.f32 %v417, %v448
        %v454 = vmul.f32 %v418, %v448
        %v455 = vmul.f32 %v419, %v448
        %v456 = vmul.f32 %v420, %v448
        %v457 = vmul.f32 %v421, %v448
        %v458 = vmul.f32 %v422, %v448
        %v459 = vmul.f32 %v423, %v448
        %v460 = vmul.f32 %v424, %v448
        %v461 = vmul.f32 %v425, %v448
        %v462 = vmul.f32 %v426, %v448
        %v463 = vmul.f32 %v427, %v448
        %v464 = vmul.f32 %v428, %v448
        %v465 = vmul.f32 %v429, %v448
        %v466 = vmul.f32 %v430, %v448
        %v467 = vmul.f32 %v431, %v448
        %v468 = vmul.f32 %v432, %v448
        %v469 = vmul.f32 %v433, %v448
        %v470 = vmul.f32 %v434, %v448
        %v471 = vmul.f32 %v435, %v448
        %v472 = vmul.f32 %v436, %v448
        %v473 = vmul.f32 %v437, %v448
        %v474 = vmul.f32 %v438, %v448
        %v475 = vmul.f32 %v439, %v448
        %v476 = vmul.f32 %v440, %v448
        %v477 = vmul.f32 %v441, %v448
        %v478 = vmul.f32 %v442, %v448
        %v479 = vmul.f32 %v443, %v448
        %v480 = vmul.f32 %v444, %v448
        %v481 = vlaneseq
        %v482 = vshrl.u32 %v481, 7
        %v483 = vsub.s32 0, %v482
        %v484 = vrot.slane %v306, %v483
        %v485 = vadd.f32 %v449, %v484
        %v486 = vadd.f32 %v450, %v484
        %v487 = vadd.f32 %v451, %v484
        %v488 = vadd.f32 %v452, %v484
        %v489 = vadd.f32 %v453, %v484
        %v490 = vadd.f32 %v454, %v484
        %v491 = vadd.f32 %v455, %v484
        %v492 = vadd.f32 %v456, %v484
        %v493 = vadd.f32 %v457, %v484
        %v494 = vadd.f32 %v458, %v484
        %v495 = vadd.f32 %v459, %v484
        %v496 = vadd.f32 %v460, %v484
        %v497 = vadd.f32 %v461, %v484
        %v498 = vadd.f32 %v462, %v484
        %v499 = vadd.f32 %v463, %v484
        %v500 = vadd.f32 %v464, %v484
        %v501 = vadd.f32 %v465, %v484
        %v502 = vadd.f32 %v466, %v484
        %v503 = vadd.f32 %v467, %v484
        %v504 = vadd.f32 %v468, %v484
        %v505 = vadd.f32 %v469, %v484
        %v506 = vadd.f32 %v470, %v484
        %v507 = vadd.f32 %v471, %v484
        %v508 = vadd.f32 %v472, %v484
        %v509 = vadd.f32 %v473, %v484
        %v510 = vadd.f32 %v474, %v484
        %v511 = vadd.f32 %v475, %v484
        %v512 = vadd.f32 %v476, %v484
        %v513 = vadd.f32 %v477, %v484
        %v514 = vadd.f32 %v478, %v484
        %v515 = vadd.f32 %v479, %v484
        %v516 = vadd.f32 %v480, %v484
        %v517 = vmax.f32 %v485, 0.0
        %v518 = vmax.f32 %v486, 0.0
        %v519 = vmax.f32 %v487, 0.0
        %v520 = vmax.f32 %v488, 0.0
        %v521 = vmax.f32 %v489, 0.0
        %v522 = vmax.f32 %v490, 0.0
        %v523 = vmax.f32 %v491, 0.0
        %v524 = vmax.f32 %v492, 0.0
        %v525 = vmax.f32 %v493, 0.0
        %v526 = vmax.f32 %v494, 0.0
        %v527 = vmax.f32 %v495, 0.0
        %v528 = vmax.f32 %v496, 0.0
        %v529 = vmax.f32 %v497, 0.0
        %v530 = vmax.f32 %v498, 0.0
        %v531 = vmax.f32 %v499, 0.0
        %v532 = vmax.f32 %v500, 0.0
        %v533 = vmax.f32 %v501, 0.0
        %v534 = vmax.f32 %v502, 0.0
        %v535 = vmax.f32 %v503, 0.0
        %v536 = vmax.f32 %v504, 0.0
        %v537 = vmax.f32 %v505, 0.0
        %v538 = vmax.f32 %v506, 0.0
        %v539 = vmax.f32 %v507, 0.0
        %v540 = vmax.f32 %v508, 0.0
        %v541 = vmax.f32 %v509, 0.0
        %v542 = vmax.f32 %v510, 0.0
        %v543 = vmax.f32 %v511, 0.0
        %v544 = vmax.f32 %v512, 0.0
        %v545 = vmax.f32 %v513, 0.0
        %v546 = vmax.f32 %v514, 0.0
        %v547 = vmax.f32 %v515, 0.0
        %v548 = vmax.f32 %v516, 0.0
        %v549 = vadd.f32 %v517, %v518
        %v550 = vadd.f32 %v549, %v519
        %v551 = vadd.f32 %v550, %v520
        %v552 = vadd.f32 %v551, %v521
        %v553 = vadd.f32 %v552, %v522
        %v554 = vadd.f32 %v553, %v523
        %v555 = vadd.f32 %v554, %v524
        %v556 = vadd.f32 %v555, %v525
        %v557 = vadd.f32 %v556, %v526
        %v558 = vadd.f32 %v557, %v527
        %v559 = vadd.f32 %v558, %v528
        %v560 = vadd.f32 %v559, %v529
        %v561 = vadd.f32 %v560, %v530
        %v562 = vadd.f32 %v561, %v531
        %v563 = vadd.f32 %v562, %v532
        %v564 = vadd.f32 %v563, %v533
        %v565 = vadd.f32 %v564, %v534
        %v566 = vadd.f32 %v565, %v535
        %v567 = vadd.f32 %v566, %v536
        %v568 = vadd.f32 %v567, %v537
        %v569 = vadd.f32 %v568, %v538
        %v570 = vadd.f32 %v569, %v539
        %v571 = vadd.f32 %v570, %v540
        %v572 = vadd.f32 %v571, %v541
        %v573 = vadd.f32 %v572, %v542
        %v574 = vadd.f32 %v573, %v543
        %v575 = vadd.f32 %v574, %v544
        %v576 = vadd.f32 %v575, %v545
        %v577 = vadd.f32 %v576, %v546
        %v578 = vadd.f32 %v577, %v547
        %v579 = vadd.f32 %v578, %v548
        %v580 = vrot.slane %v579, 4
        %v581 = vadd.f32 %v579, %v580
        %v582 = vrot.slane %v581, 2
        %v583 = vadd.f32 %v581, %v582
        %v584 = vrot.slane %v583, 1
        %v585 = vadd.f32 %v583, %v584
        %v586 = vmul.f32 %v585, 0.00390625
        %v587 = vpack.c.bf16 %v586, %v586
        %v588 = vld [vmem:[%s3] sm:$0xf]
        %v589 = vld [vmem:[%s3 + $0x4] sm:$0xf]
        %v590 = vld [vmem:[%s3 + $0x8] sm:$0xf]
        %v591 = vld [vmem:[%s3 + $0xc] sm:$0xf]
        %v592 = vld [vmem:[%s3 + $0x10] sm:$0xf]
        %v593 = vld [vmem:[%s3 + $0x14] sm:$0xf]
        %v594 = vld [vmem:[%s3 + $0x18] sm:$0xf]
        %v595 = vld [vmem:[%s3 + $0x1c] sm:$0xf]
        %v596 = vld [vmem:[%s3 + $0x20] sm:$0xf]
        %v597 = vld [vmem:[%s3 + $0x24] sm:$0xf]
        %v598 = vld [vmem:[%s3 + $0x28] sm:$0xf]
        %v599 = vld [vmem:[%s3 + $0x2c] sm:$0xf]
        %v600 = vld [vmem:[%s3 + $0x30] sm:$0xf]
        %v601 = vld [vmem:[%s3 + $0x34] sm:$0xf]
        %v602 = vld [vmem:[%s3 + $0x38] sm:$0xf]
        %v603 = vld [vmem:[%s3 + $0x3c] sm:$0xf]
        %v604 = vld [vmem:[%s4] sm:$0x1]
        %v621 = vunpack.c.l.b16 %v588
        %v622 = vunpack.c.l.b16 %v589
        %v623 = vunpack.c.l.b16 %v590
        %v624 = vunpack.c.l.b16 %v591
        %v625 = vunpack.c.l.b16 %v592
        %v626 = vunpack.c.l.b16 %v593
        %v627 = vunpack.c.l.b16 %v594
        %v628 = vunpack.c.l.b16 %v595
        %v629 = vunpack.c.l.b16 %v596
        %v630 = vunpack.c.l.b16 %v597
        %v631 = vunpack.c.l.b16 %v598
        %v632 = vunpack.c.l.b16 %v599
        %v633 = vunpack.c.l.b16 %v600
        %v634 = vunpack.c.l.b16 %v601
        %v635 = vunpack.c.l.b16 %v602
        %v636 = vunpack.c.l.b16 %v603
        %v637 = vpack.c.b16 %v622, %v621
        %v638 = vpack.c.b16 %v624, %v623
        %v639 = vpack.c.b16 %v626, %v625
        %v640 = vpack.c.b16 %v628, %v627
        %v641 = vpack.c.b16 %v630, %v629
        %v642 = vpack.c.b16 %v632, %v631
        %v643 = vpack.c.b16 %v634, %v633
        %v644 = vpack.c.b16 %v636, %v635
        %653 = vmatprep.subr.bf16.mxu0 0
        %654 = vmatpush1.bf16.msra.mxu0 %v644
        %655 = vmatprep.subr.bf16.mxu0 0
        %656 = vmatpush1.bf16.msra.mxu0 %v643
        %657 = vmatprep.subr.bf16.mxu0 0
        %658 = vmatpush1.bf16.msra.mxu0 %v642
        %659 = vmatprep.subr.bf16.mxu0 0
        %660 = vmatpush1.bf16.msra.mxu0 %v641
        %661 = vmatprep.subr.bf16.mxu0 0
        %662 = vmatpush1.bf16.msra.mxu0 %v640
        %663 = vmatprep.subr.bf16.mxu0 0
        %664 = vmatpush1.bf16.msra.mxu0 %v639
        %665 = vmatprep.subr.bf16.mxu0 0
        %666 = vmatpush1.bf16.msra.mxu0 %v638
        %667 = vmatprep.subr.bf16.mxu0 0
        %668 = vmatpush1.bf16.msra.mxu0 %v637
        %669 = vmatprep.subr.bf16.mxu0 0
        %670 = vmatpush2.bf16.msra.mxu0 0
        %671 = vmatprep.subr.bf16.mxu0 0
        %672 = vmatpush2.bf16.msra.mxu0 0
        %673 = vmatprep.subr.bf16.mxu0 0
        %674 = vmatpush2.bf16.msra.mxu0 0
        %675 = vmatprep.subr.bf16.mxu0 0
        %676 = vmatpush2.bf16.msra.mxu0 0
        %677 = vmatprep.subr.bf16.mxu0 0
        %678 = vmatpush2.bf16.msra.mxu0 0
        %679 = vmatprep.subr.bf16.mxu0 0
        %680 = vmatpush2.bf16.msra.mxu0 0
        %681 = vmatprep.subr.bf16.mxu0 0
        %682 = vmatpush2.bf16.msra.mxu0 0
        %683 = vmatprep.subr.bf16.mxu0 0
        %684 = vmatpush2.bf16.msra.mxu0 0
        %685 = vmatprep.mubr.bf16.mxu0 0
        %686 = vmatmul.mubr.bf16.gmra.mxu0 %v587
        %v687 = vpop.f32.mrf.mxu0
        %v688 = vadd.f32 %v604, %v687
        %v689 = vpop.f32.mrf.mxu0
        %v690 = vpop.f32.mrf.mxu0
        %v691 = vpop.f32.mrf.mxu0
        %692 = vdwg.mxu0
        %v693 = vmax.f32 %v688, 0.0
        %v694 = vpack.c.bf16 %v693, %v693
        %v695 = vld [vmem:[%s5] sm:$0xf]
        %v696 = vld [vmem:[%s5 + $0x4] sm:$0xf]
        %v697 = vld [vmem:[%s5 + $0x8] sm:$0xf]
        %v698 = vld [vmem:[%s5 + $0xc] sm:$0xf]
        %v699 = vld [vmem:[%s5 + $0x10] sm:$0xf]
        %v700 = vld [vmem:[%s5 + $0x14] sm:$0xf]
        %v701 = vld [vmem:[%s5 + $0x18] sm:$0xf]
        %v702 = vld [vmem:[%s5 + $0x1c] sm:$0xf]
        %v703 = vld [vmem:[%s5 + $0x20] sm:$0xf]
        %v704 = vld [vmem:[%s5 + $0x24] sm:$0xf]
        %v705 = vld [vmem:[%s5 + $0x28] sm:$0xf]
        %v706 = vld [vmem:[%s5 + $0x2c] sm:$0xf]
        %v707 = vld [vmem:[%s5 + $0x30] sm:$0xf]
        %v708 = vld [vmem:[%s5 + $0x34] sm:$0xf]
        %v709 = vld [vmem:[%s5 + $0x38] sm:$0xf]
        %v710 = vld [vmem:[%s5 + $0x3c] sm:$0xf]
        %v711 = vld [vmem:[%s6] sm:$0x1]
        %v728 = vunpack.c.l.b16 %v695
        %v729 = vunpack.c.l.b16 %v696
        %v730 = vunpack.c.l.b16 %v697
        %v731 = vunpack.c.l.b16 %v698
        %v732 = vunpack.c.l.b16 %v699
        %v733 = vunpack.c.l.b16 %v700
        %v734 = vunpack.c.l.b16 %v701
        %v735 = vunpack.c.l.b16 %v702
        %v736 = vunpack.c.l.b16 %v703
        %v737 = vunpack.c.l.b16 %v704
        %v738 = vunpack.c.l.b16 %v705
        %v739 = vunpack.c.l.b16 %v706
        %v740 = vunpack.c.l.b16 %v707
        %v741 = vunpack.c.l.b16 %v708
        %v742 = vunpack.c.l.b16 %v709
        %v743 = vunpack.c.l.b16 %v710
        %v744 = vpack.c.b16 %v729, %v728
        %v745 = vpack.c.b16 %v731, %v730
        %v746 = vpack.c.b16 %v733, %v732
        %v747 = vpack.c.b16 %v735, %v734
        %v748 = vpack.c.b16 %v737, %v736
        %v749 = vpack.c.b16 %v739, %v738
        %v750 = vpack.c.b16 %v741, %v740
        %v751 = vpack.c.b16 %v743, %v742
        %760 = vmatprep.subr.bf16.mxu0 0
        %761 = vmatpush1.bf16.msra.mxu0 %v751
        %762 = vmatprep.subr.bf16.mxu0 0
        %763 = vmatpush1.bf16.msra.mxu0 %v750
        %764 = vmatprep.subr.bf16.mxu0 0
        %765 = vmatpush1.bf16.msra.mxu0 %v749
        %766 = vmatprep.subr.bf16.mxu0 0
        %767 = vmatpush1.bf16.msra.mxu0 %v748
        %768 = vmatprep.subr.bf16.mxu0 0
        %769 = vmatpush1.bf16.msra.mxu0 %v747
        %770 = vmatprep.subr.bf16.mxu0 0
        %771 = vmatpush1.bf16.msra.mxu0 %v746
        %772 = vmatprep.subr.bf16.mxu0 0
        %773 = vmatpush1.bf16.msra.mxu0 %v745
        %774 = vmatprep.subr.bf16.mxu0 0
        %775 = vmatpush1.bf16.msra.mxu0 %v744
        %776 = vmatprep.subr.bf16.mxu0 0
        %777 = vmatpush2.bf16.msra.mxu0 0
        %778 = vmatprep.subr.bf16.mxu0 0
        %779 = vmatpush2.bf16.msra.mxu0 0
        %780 = vmatprep.subr.bf16.mxu0 0
        %781 = vmatpush2.bf16.msra.mxu0 0
        %782 = vmatprep.subr.bf16.mxu0 0
        %783 = vmatpush2.bf16.msra.mxu0 0
        %784 = vmatprep.subr.bf16.mxu0 0
        %785 = vmatpush2.bf16.msra.mxu0 0
        %786 = vmatprep.subr.bf16.mxu0 0
        %787 = vmatpush2.bf16.msra.mxu0 0
        %788 = vmatprep.subr.bf16.mxu0 0
        %789 = vmatpush2.bf16.msra.mxu0 0
        %790 = vmatprep.subr.bf16.mxu0 0
        %791 = vmatpush2.bf16.msra.mxu0 0
        %792 = vmatprep.mubr.bf16.mxu0 0
        %793 = vmatmul.mubr.bf16.gmra.mxu0 %v694
        %v794 = vpop.f32.mrf.mxu0
        %v795 = vadd.f32 %v711, %v794
        %v796 = vpop.f32.mrf.mxu0
        %v797 = vpop.f32.mrf.mxu0
        %v798 = vpop.f32.mrf.mxu0
        %799 = vdwg.mxu0
        %v800 = vsub.f32 0.0, %v795
        %v801 = vmul.f32 %v800, 1.442695
        %v802 = vpow.pop %v801
        %v803 = vadd.f32 %v802, 1.0
        %v804 = vrcp.pop %v803
        %v805 = vmul.f32 1.0, %v804
        %v806 = vld [vmem:[%s299] sm:$0xf]
        %v807 = vld [vmem:[%s299 + $0x4] sm:$0xf]
        %v808 = vld [vmem:[%s299 + $0x8] sm:$0xf]
        %v809 = vld [vmem:[%s299 + $0xc] sm:$0xf]
        %v810 = vld [vmem:[%s299 + $0x10] sm:$0xf]
        %v811 = vld [vmem:[%s299 + $0x14] sm:$0xf]
        %v812 = vld [vmem:[%s299 + $0x18] sm:$0xf]
        %v813 = vld [vmem:[%s299 + $0x1c] sm:$0xf]
        %v814 = vld [vmem:[%s299 + $0x20] sm:$0xf]
        %v815 = vld [vmem:[%s299 + $0x24] sm:$0xf]
        %v816 = vld [vmem:[%s299 + $0x28] sm:$0xf]
        %v817 = vld [vmem:[%s299 + $0x2c] sm:$0xf]
        %v818 = vld [vmem:[%s299 + $0x30] sm:$0xf]
        %v819 = vld [vmem:[%s299 + $0x34] sm:$0xf]
        %v820 = vld [vmem:[%s299 + $0x38] sm:$0xf]
        %v821 = vld [vmem:[%s299 + $0x3c] sm:$0xf]
        %v822 = vld [vmem:[%s299 + $0x40] sm:$0xf]
        %v823 = vld [vmem:[%s299 + $0x44] sm:$0xf]
        %v824 = vld [vmem:[%s299 + $0x48] sm:$0xf]
        %v825 = vld [vmem:[%s299 + $0x4c] sm:$0xf]
        %v826 = vld [vmem:[%s299 + $0x50] sm:$0xf]
        %v827 = vld [vmem:[%s299 + $0x54] sm:$0xf]
        %v828 = vld [vmem:[%s299 + $0x58] sm:$0xf]
        %v829 = vld [vmem:[%s299 + $0x5c] sm:$0xf]
        %v830 = vld [vmem:[%s299 + $0x60] sm:$0xf]
        %v831 = vld [vmem:[%s299 + $0x64] sm:$0xf]
        %v832 = vld [vmem:[%s299 + $0x68] sm:$0xf]
        %v833 = vld [vmem:[%s299 + $0x6c] sm:$0xf]
        %v834 = vld [vmem:[%s299 + $0x70] sm:$0xf]
        %v835 = vld [vmem:[%s299 + $0x74] sm:$0xf]
        %v836 = vld [vmem:[%s299 + $0x78] sm:$0xf]
        %v837 = vld [vmem:[%s299 + $0x7c] sm:$0xf]
        %v838 = vunpack.c.l.bf16 %v806
        %v839 = vunpack.c.l.bf16 %v807
        %v840 = vunpack.c.l.bf16 %v808
        %v841 = vunpack.c.l.bf16 %v809
        %v842 = vunpack.c.l.bf16 %v810
        %v843 = vunpack.c.l.bf16 %v811
        %v844 = vunpack.c.l.bf16 %v812
        %v845 = vunpack.c.l.bf16 %v813
        %v846 = vunpack.c.l.bf16 %v814
        %v847 = vunpack.c.l.bf16 %v815
        %v848 = vunpack.c.l.bf16 %v816
        %v849 = vunpack.c.l.bf16 %v817
        %v850 = vunpack.c.l.bf16 %v818
        %v851 = vunpack.c.l.bf16 %v819
        %v852 = vunpack.c.l.bf16 %v820
        %v853 = vunpack.c.l.bf16 %v821
        %v854 = vunpack.c.l.bf16 %v822
        %v855 = vunpack.c.l.bf16 %v823
        %v856 = vunpack.c.l.bf16 %v824
        %v857 = vunpack.c.l.bf16 %v825
        %v858 = vunpack.c.l.bf16 %v826
        %v859 = vunpack.c.l.bf16 %v827
        %v860 = vunpack.c.l.bf16 %v828
        %v861 = vunpack.c.l.bf16 %v829
        %v862 = vunpack.c.l.bf16 %v830
        %v863 = vunpack.c.l.bf16 %v831
        %v864 = vunpack.c.l.bf16 %v832
        %v865 = vunpack.c.l.bf16 %v833
        %v866 = vunpack.c.l.bf16 %v834
        %v867 = vunpack.c.l.bf16 %v835
        %v868 = vunpack.c.l.bf16 %v836
        %v869 = vunpack.c.l.bf16 %v837
        %v870 = vlaneseq
        %v871 = vshrl.u32 %v870, 7
        %v872 = vsub.s32 0, %v871
        %v873 = vrot.slane %v805, %v872
        %v874 = vmul.f32 %v517, %v873
        %v875 = vmul.f32 %v518, %v873
        %v876 = vmul.f32 %v519, %v873
        %v877 = vmul.f32 %v520, %v873
        %v878 = vmul.f32 %v521, %v873
        %v879 = vmul.f32 %v522, %v873
        %v880 = vmul.f32 %v523, %v873
        %v881 = vmul.f32 %v524, %v873
        %v882 = vmul.f32 %v525, %v873
        %v883 = vmul.f32 %v526, %v873
        %v884 = vmul.f32 %v527, %v873
        %v885 = vmul.f32 %v528, %v873
        %v886 = vmul.f32 %v529, %v873
        %v887 = vmul.f32 %v530, %v873
        %v888 = vmul.f32 %v531, %v873
        %v889 = vmul.f32 %v532, %v873
        %v890 = vmul.f32 %v533, %v873
        %v891 = vmul.f32 %v534, %v873
        %v892 = vmul.f32 %v535, %v873
        %v893 = vmul.f32 %v536, %v873
        %v894 = vmul.f32 %v537, %v873
        %v895 = vmul.f32 %v538, %v873
        %v896 = vmul.f32 %v539, %v873
        %v897 = vmul.f32 %v540, %v873
        %v898 = vmul.f32 %v541, %v873
        %v899 = vmul.f32 %v542, %v873
        %v900 = vmul.f32 %v543, %v873
        %v901 = vmul.f32 %v544, %v873
        %v902 = vmul.f32 %v545, %v873
        %v903 = vmul.f32 %v546, %v873
        %v904 = vmul.f32 %v547, %v873
        %v905 = vmul.f32 %v548, %v873
        %v906 = vadd.f32 %v874, %v838
        %v907 = vadd.f32 %v875, %v839
        %v908 = vadd.f32 %v876, %v840
        %v909 = vadd.f32 %v877, %v841
        %v910 = vadd.f32 %v878, %v842
        %v911 = vadd.f32 %v879, %v843
        %v912 = vadd.f32 %v880, %v844
        %v913 = vadd.f32 %v881, %v845
        %v914 = vadd.f32 %v882, %v846
        %v915 = vadd.f32 %v883, %v847
        %v916 = vadd.f32 %v884, %v848
        %v917 = vadd.f32 %v885, %v849
        %v918 = vadd.f32 %v886, %v850
        %v919 = vadd.f32 %v887, %v851
        %v920 = vadd.f32 %v888, %v852
        %v921 = vadd.f32 %v889, %v853
        %v922 = vadd.f32 %v890, %v854
        %v923 = vadd.f32 %v891, %v855
        %v924 = vadd.f32 %v892, %v856
        %v925 = vadd.f32 %v893, %v857
        %v926 = vadd.f32 %v894, %v858
        %v927 = vadd.f32 %v895, %v859
        %v928 = vadd.f32 %v896, %v860
        %v929 = vadd.f32 %v897, %v861
        %v930 = vadd.f32 %v898, %v862
        %v931 = vadd.f32 %v899, %v863
        %v932 = vadd.f32 %v900, %v864
        %v933 = vadd.f32 %v901, %v865
        %v934 = vadd.f32 %v902, %v866
        %v935 = vadd.f32 %v903, %v867
        %v936 = vadd.f32 %v904, %v868
        %v937 = vadd.f32 %v905, %v869
        %v938 = vmax.f32 %v906, 0.0
        %v939 = vmax.f32 %v907, 0.0
        %v940 = vmax.f32 %v908, 0.0
        %v941 = vmax.f32 %v909, 0.0
        %v942 = vmax.f32 %v910, 0.0
        %v943 = vmax.f32 %v911, 0.0
        %v944 = vmax.f32 %v912, 0.0
        %v945 = vmax.f32 %v913, 0.0
        %v946 = vmax.f32 %v914, 0.0
        %v947 = vmax.f32 %v915, 0.0
        %v948 = vmax.f32 %v916, 0.0
        %v949 = vmax.f32 %v917, 0.0
        %v950 = vmax.f32 %v918, 0.0
        %v951 = vmax.f32 %v919, 0.0
        %v952 = vmax.f32 %v920, 0.0
        %v953 = vmax.f32 %v921, 0.0
        %v954 = vmax.f32 %v922, 0.0
        %v955 = vmax.f32 %v923, 0.0
        %v956 = vmax.f32 %v924, 0.0
        %v957 = vmax.f32 %v925, 0.0
        %v958 = vmax.f32 %v926, 0.0
        %v959 = vmax.f32 %v927, 0.0
        %v960 = vmax.f32 %v928, 0.0
        %v961 = vmax.f32 %v929, 0.0
        %v962 = vmax.f32 %v930, 0.0
        %v963 = vmax.f32 %v931, 0.0
        %v964 = vmax.f32 %v932, 0.0
        %v965 = vmax.f32 %v933, 0.0
        %v966 = vmax.f32 %v934, 0.0
        %v967 = vmax.f32 %v935, 0.0
        %v968 = vmax.f32 %v936, 0.0
        %v969 = vmax.f32 %v937, 0.0
        %970 = vst [vmem:[%s288] sm:$0xff] %v938
        %971 = vst [vmem:[%s288 + $0x8] sm:$0xff] %v939
        %972 = vst [vmem:[%s288 + $0x10] sm:$0xff] %v940
        %973 = vst [vmem:[%s288 + $0x18] sm:$0xff] %v941
        %974 = vst [vmem:[%s288 + $0x20] sm:$0xff] %v942
        %975 = vst [vmem:[%s288 + $0x28] sm:$0xff] %v943
        %976 = vst [vmem:[%s288 + $0x30] sm:$0xff] %v944
        %977 = vst [vmem:[%s288 + $0x38] sm:$0xff] %v945
        %978 = vst [vmem:[%s288 + $0x40] sm:$0xff] %v946
        %979 = vst [vmem:[%s288 + $0x48] sm:$0xff] %v947
        %980 = vst [vmem:[%s288 + $0x50] sm:$0xff] %v948
        %981 = vst [vmem:[%s288 + $0x58] sm:$0xff] %v949
        %982 = vst [vmem:[%s288 + $0x60] sm:$0xff] %v950
        %983 = vst [vmem:[%s288 + $0x68] sm:$0xff] %v951
        %984 = vst [vmem:[%s288 + $0x70] sm:$0xff] %v952
        %985 = vst [vmem:[%s288 + $0x78] sm:$0xff] %v953
        %986 = vst [vmem:[%s288 + $0x80] sm:$0xff] %v954
        %987 = vst [vmem:[%s288 + $0x88] sm:$0xff] %v955
        %988 = vst [vmem:[%s288 + $0x90] sm:$0xff] %v956
        %989 = vst [vmem:[%s288 + $0x98] sm:$0xff] %v957
        %990 = vst [vmem:[%s288 + $0xa0] sm:$0xff] %v958
        %991 = vst [vmem:[%s288 + $0xa8] sm:$0xff] %v959
        %992 = vst [vmem:[%s288 + $0xb0] sm:$0xff] %v960
        %993 = vst [vmem:[%s288 + $0xb8] sm:$0xff] %v961
        %994 = vst [vmem:[%s288 + $0xc0] sm:$0xff] %v962
        %995 = vst [vmem:[%s288 + $0xc8] sm:$0xff] %v963
        %996 = vst [vmem:[%s288 + $0xd0] sm:$0xff] %v964
        %997 = vst [vmem:[%s288 + $0xd8] sm:$0xff] %v965
        %998 = vst [vmem:[%s288 + $0xe0] sm:$0xff] %v966
        %999 = vst [vmem:[%s288 + $0xe8] sm:$0xff] %v967
        %1000 = vst [vmem:[%s288 + $0xf0] sm:$0xff] %v968
        %1001 = vst [vmem:[%s288 + $0xf8] sm:$0xff] %v969
        %s1002 = sand.u32 %s186, 1
        %s1003 = scalar_lea.sflag [#allocation3], %s1002
        %s1004 = sand.u32 %s186, 1
        %s1005 = smul.addr %s1004, 256
        %s1006 = scalar_lea.vmem [#allocation2], %s1005
        // Predicated region
        $region49: #{se_block_forward.7} parent=47 // pred_check
          %p1007 = pneg %p196
        $region50: #{se_block_forward.7} parent=47 // pred_check_branch
          %1009 = sbr.rel (%p1007) target = $region52
        $region51: #{se_block_forward.7} parent=47 // pred_region
          %s1010 = smul.u32 32, %s21
          %s1012 = ssub.s32 4096, 4096
          %1013 = vsyncadd %s1003, %s1012
          %s1014 = smul.addr %s1010, 128
          %s1015 = scalar_lea.hbm %s7, %s1014
          %s1016 = sshll.u32 %s1006, 4
          %s1017 = int_to_ptr.vmem [resolvable:$true] %s1016
          %1022 = dma.vmem_to_hbm [thread:$0]  %s1017, 4096, %s1015, %s1003, 128, 128, 8
        $region52: #{se_block_forward.7} parent=47 // pred_fallthru
          _
      $region48: #{se_block_forward.7} parent=5 // pred_fallthru
        _
      %p1023 = scmp.le.s32.totalorder 2, %s16
      // Predicated region
      $region53: #{se_block_forward.7} parent=5 // pred_check
        %p1024 = pneg %p1023
      $region54: #{se_block_forward.7} parent=5 // pred_check_branch
        %1026 = sbr.rel (%p1024) target = $region56
      $region55: #{se_block_forward.7} parent=5 // pred_region
        %s1027 = ssub.s32 %s16, 2
        // Predicated region
        $region57: #{se_block_forward.7} parent=55 // pred_check
          %p1028 = pneg %p202
        $region58: #{se_block_forward.7} parent=55 // pred_check_branch
          %1030 = sbr.rel (%p1028) target = $region60
        $region59: #{se_block_forward.7} parent=55 // pred_region
          %s1031 = sand.u32 %s187, 1
          %s1032 = scalar_lea.sflag [#allocation3], %s1031
          %s1033 = sand.u32 %s187, 1
          %s1034 = smul.addr %s1033, 256
          %s1035 = scalar_lea.vmem [#allocation2], %s1034
          %1036 = dma.done %s1032, 4096
        $region60: #{se_block_forward.7} parent=55 // pred_fallthru
          _
      $region56: #{se_block_forward.7} parent=5 // pred_fallthru
        _
    $region6: #{se_block_forward.7} parent=1 // loop_footer
      %s20 = sadd.s32 1, %s16
    $region7: #{se_block_forward.7} parent=1 // loop_footer_branch
      %15 = sbr.rel target = $region3
    $region8: #{se_block_forward.7} parent=1 // loop_exit
      _
    %1037 = vsyncpa [#allocation3], 1
    %s1038 = scalar_lea.sflag [#allocation3], 1
    %1039 = vsyncpa %s1038, 1

</llo_original>
